<compile_context>
chip_gen: v5e
topology: v5e:2x2
jax: 0.10.0
libtpu: 0.0.40
codegen_flags: <defaults>
</compile_context>

<pallas_src>
import functools

import numpy as np
import jax
import jax.numpy as jnp
from jax.experimental import pallas as pl
from jax.experimental.pallas import tpu as pltpu


# --------------------------------------------------------------------------
# helpers
# --------------------------------------------------------------------------
def _silu(v):
    # swish / SiLU: v * sigmoid(v); exp and reciprocal both live on the EUP slot
    return v * pl.reciprocal(1.0 + jnp.exp(-v), approx=True)


def _ceil_to(n, m):
    return ((n + m - 1) // m) * m


# --------------------------------------------------------------------------
# kernel 1: per-edge projections
#   rbf' = rbf @ W_rbf ; [x_ji | x_kj_raw] = act(x @ [W_ji|W_kj] + [b_ji|b_kj])
#   x_kj = x_kj_raw * rbf'          (x_kj emitted in bf16: it is only ever a
#                                    matmul operand downstream)
# --------------------------------------------------------------------------
def _edge_pre_kernel(x_ref, rbf_ref, wrbf_ref, wjk_ref, bjk_ref,
                     xji_ref, xkj_ref):
    h = xji_ref.shape[1]
    xb = x_ref[...].astype(jnp.bfloat16)
    rbf_p = jnp.dot(rbf_ref[...].astype(jnp.bfloat16), wrbf_ref[...],
                    preferred_element_type=jnp.float32)             # (tE, H)
    z = jnp.dot(xb, wjk_ref[...],
                preferred_element_type=jnp.float32) + bjk_ref[...]  # (tE, 2H)
    xji_ref[...] = _silu(z[:, :h])
    xkj_ref[...] = (_silu(z[:, h:]) * rbf_p).astype(jnp.bfloat16)


# --------------------------------------------------------------------------
# kernel 2: per-triplet tile, fused
#   gather x_kj[idx_kj]  (one-hot bf16 MXU matmul)
#   sp_exp = sbf @ w_sbf_exp        (lin_sbf pre-folded with lane expansion)
#   msg    = (sp_exp * tile(xg, B)) @ W_bil_flat   (single big MXU matmul)
#   x_agg += onehot(idx_ji) @ msg   (scatter-add as bf16 MXU matmul, output
#                                    (E, H) accumulated across grid steps)
# --------------------------------------------------------------------------
def _triplet_kernel(sbf_ref, kj_ref, ji_ref, xkj_ref, wsbf_ref, wbil_ref,
                    agg_ref, *, num_bilinear):
    ti = pl.program_id(0)

    @pl.when(ti == 0)
    def _():
        agg_ref[...] = jnp.zeros_like(agg_ref)

    tile_t = sbf_ref.shape[0]
    e_pad = xkj_ref.shape[0]

    # lin_sbf + per-j lane expansion in one matmul: sp_exp[w, j*H+l] = sbf'[w, j]
    sp_exp = jnp.dot(sbf_ref[...].astype(jnp.bfloat16), wsbf_ref[...],
                     preferred_element_type=jnp.float32)            # (tT, B*H)

    # gather x_kj[idx_kj] via a one-hot matmul (no XLA gather, stays in VMEM)
    lane_e = jax.lax.broadcasted_iota(jnp.int32, (tile_t, e_pad), 1)
    gmask = jnp.where(kj_ref[...] == lane_e, 1.0, 0.0).astype(jnp.bfloat16)
    xg = jnp.dot(gmask, xkj_ref[...],
                 preferred_element_type=jnp.float32)                # (tT, H)

    # y[w, j*H+l] = sbf'[w, j] * xg[w, l]  ->  single (tT, B*H) @ (B*H, H) matmul
    xg_tiled = jnp.concatenate([xg] * num_bilinear, axis=1)         # (tT, B*H)
    y = (sp_exp * xg_tiled).astype(jnp.bfloat16)
    msg = jnp.dot(y, wbil_ref[...],
                  preferred_element_type=jnp.float32)               # (tT, H)

    # scatter-add over idx_ji via a one-hot matmul into the resident accumulator
    sub_e = jax.lax.broadcasted_iota(jnp.int32, (e_pad, tile_t), 0)
    smask = jnp.where(sub_e == ji_ref[...], 1.0, 0.0).astype(jnp.bfloat16)
    agg_ref[...] += jnp.dot(smask, msg.astype(jnp.bfloat16),
                            preferred_element_type=jnp.float32)     # (e_pad, H)


# --------------------------------------------------------------------------
# kernel 3: per-edge residual stack
#   h = x_ji + agg ; before-skip residuals ; h = act(lin(h)) + x ; after-skip
# --------------------------------------------------------------------------
def _edge_post_kernel(x_ref, xji_ref, xagg_ref, w_ref, b_ref, out_ref,
                      *, num_before_skip, num_after_skip):
    x = x_ref[...]
    h = xji_ref[...] + xagg_ref[...]

    def lin(v, k):
        return jnp.dot(v.astype(jnp.bfloat16), w_ref[k],
                       preferred_element_type=jnp.float32) + b_ref[k]

    k = 0
    for _ in range(num_before_skip):
        u = _silu(lin(h, k)); k += 1
        u = _silu(lin(u, k)); k += 1
        h = h + u
    h = _silu(lin(h, k)) + x; k += 1
    for _ in range(num_after_skip):
        u = _silu(lin(h, k)); k += 1
        u = _silu(lin(u, k)); k += 1
        h = h + u
    out_ref[...] = h


# --------------------------------------------------------------------------
# wrapper
# --------------------------------------------------------------------------
def interaction_block_forward(x, rbf, sbf, idx_kj, idx_ji, params,
                              *, num_before_skip, num_after_skip,
                              tile_e=512, tile_t=512):
    """Forward of DimeNet InteractionBlock (swish activation).

    params (all stored in (in, out) layout, i.e. already transposed vs torch):
      w_rbf (NR, H)        w_sbf (NS*NR, B)
      w_ji (H, H), b_ji(H) w_kj (H, H), b_kj (H)
      w_bil (H, B, H)      # same [i, j, l] layout as the torch parameter W
      w_stack (L, H, H), b_stack (L, H)  with L = 2*nbs + 1 + 2*nas, ordered:
        [before_skip lin1/lin2 ...] + [lin] + [after_skip lin1/lin2 ...]
    """
    f32, bf16 = jnp.float32, jnp.bfloat16
    E, H = x.shape
    T = sbf.shape[0]
    NR = params["w_rbf"].shape[0]
    NSNR = params["w_sbf"].shape[0]
    B = params["w_sbf"].shape[1]
    BH = B * H

    # ---- parameter prep (bf16 weights for the MXU, f32 biases) --------------
    w_rbf = params["w_rbf"].astype(bf16)                             # (NR, H)
    # merged ji/kj projection: one N=2H matmul fills the 256-wide MXU
    w_jk = jnp.concatenate([params["w_ji"], params["w_kj"]],
                           axis=1).astype(bf16)                      # (H, 2H)
    b_jk = jnp.concatenate([params["b_ji"], params["b_kj"]]
                           ).astype(f32).reshape(1, 2 * H)
    # lin_sbf folded with per-j lane expansion: w_sbf_exp[k, j*H+l] = w_sbf[k, j]
    w_sbf_exp = jnp.repeat(params["w_sbf"].astype(f32), H,
                           axis=1).astype(bf16)                      # (NSNR, B*H)
    # W[i, j, l] -> flat (j*H + l, i) so msg = Y @ w_bil_flat
    w_bil_flat = jnp.transpose(params["w_bil"].astype(f32),
                               (1, 2, 0)).reshape(BH, H).astype(bf16)
    w_stack = params["w_stack"].astype(bf16)                         # (L, H, H)
    b_stack = params["b_stack"].astype(f32)[:, None, :]              # (L, 1, H)
    L = w_stack.shape[0]

    # ---- padding / tiling ----------------------------------------------------
    tile_e = min(tile_e, _ceil_to(E, 8))       # row dim: multiple of 8
    tile_t = min(tile_t, _ceil_to(T, 128))     # also used as a lane dim: x128
    e_pad, t_pad = _ceil_to(E, tile_e), _ceil_to(T, tile_t)
    nr_pad, nsnr_pad = _ceil_to(NR, 8), _ceil_to(NSNR, 8)

    x_p = jnp.pad(x.astype(f32), ((0, e_pad - E), (0, 0)))
    rbf_p = jnp.pad(rbf.astype(f32), ((0, e_pad - E), (0, nr_pad - NR)))
    sbf_p = jnp.pad(sbf.astype(f32), ((0, t_pad - T), (0, nsnr_pad - NSNR)))
    w_rbf = jnp.pad(w_rbf, ((0, nr_pad - NR), (0, 0)))
    w_sbf_exp = jnp.pad(w_sbf_exp, ((0, nsnr_pad - NSNR), (0, 0)))
    idx_kj_p = jnp.pad(idx_kj.astype(jnp.int32),
                       (0, t_pad - T)).reshape(t_pad, 1)     # column layout
    idx_ji_p = jnp.pad(idx_ji.astype(jnp.int32),
                       (0, t_pad - T)).reshape(1, t_pad)     # row layout

    grid_e, grid_t = e_pad // tile_e, t_pad // tile_t
    cp_par = pltpu.CompilerParams(dimension_semantics=("parallel",))
    cp_arb = pltpu.CompilerParams(dimension_semantics=("arbitrary",))

    def full_spec(shape):
        return pl.BlockSpec(shape, lambda *_: (0,) * len(shape))

    row_e = pl.BlockSpec((tile_e, H), lambda i: (i, 0))

    # ---- stage 1: per-edge projections --------------------------------------
    x_ji, x_kj = pl.pallas_call(
        _edge_pre_kernel,
        out_shape=(jax.ShapeDtypeStruct((e_pad, H), f32),
                   jax.ShapeDtypeStruct((e_pad, H), bf16)),
        grid=(grid_e,),
        in_specs=[row_e,
                  pl.BlockSpec((tile_e, nr_pad), lambda i: (i, 0)),
                  full_spec((nr_pad, H)),
                  full_spec((H, 2 * H)), full_spec((1, 2 * H))],
        out_specs=(row_e, row_e),
        compiler_params=cp_par,
    )(x_p, rbf_p, w_rbf, w_jk, b_jk)

    # ---- stage 2: per-triplet gather + bilinear + scatter-add ---------------
    # x_kj stays resident in VMEM (constant block index); x_agg is an (E, H)
    # f32 accumulator revisited across the triplet-tile grid ("arbitrary").
    x_agg = pl.pallas_call(
        functools.partial(_triplet_kernel, num_bilinear=B),
        out_shape=jax.ShapeDtypeStruct((e_pad, H), f32),
        grid=(grid_t,),
        in_specs=[pl.BlockSpec((tile_t, nsnr_pad), lambda i: (i, 0)),
                  pl.BlockSpec((tile_t, 1), lambda i: (i, 0)),
                  pl.BlockSpec((1, tile_t), lambda i: (0, i)),
                  full_spec((e_pad, H)),
                  full_spec((nsnr_pad, BH)),
                  full_spec((BH, H))],
        out_specs=full_spec((e_pad, H)),
        compiler_params=cp_arb,
    )(sbf_p, idx_kj_p, idx_ji_p, x_kj, w_sbf_exp, w_bil_flat)

    # ---- stage 3: per-edge fused residual stack ------------------------------
    h = pl.pallas_call(
        functools.partial(_edge_post_kernel,
                          num_before_skip=num_before_skip,
                          num_after_skip=num_after_skip),
        out_shape=jax.ShapeDtypeStruct((e_pad, H), f32),
        grid=(grid_e,),
        in_specs=[row_e, row_e, row_e,
                  full_spec((L, H, H)), full_spec((L, 1, H))],
        out_specs=row_e,
        compiler_params=cp_par,
    )(x_p, x_ji, x_agg, w_stack, b_stack)

    return h[:E]


# --------------------------------------------------------------------------
# pure-numpy float64 reference (same math, same weight layout)
# --------------------------------------------------------------------------
def _reference_np(x, rbf, sbf, idx_kj, idx_ji, p, nbs, nas):
    def silu(v):
        return v / (1.0 + np.exp(-v))

    rbf_p = rbf @ p["w_rbf"]
    sbf_p = sbf @ p["w_sbf"]
    x_ji = silu(x @ p["w_ji"] + p["b_ji"])
    x_kj = silu(x @ p["w_kj"] + p["b_kj"]) * rbf_p
    xg = x_kj[idx_kj]
    t = np.einsum("wj,wl,ijl->wi", sbf_p, xg, p["w_bil"])
    agg = np.zeros_like(x)
    np.add.at(agg, idx_ji, t)
    h = x_ji + agg
    k = 0
    for _ in range(nbs):
        u = silu(h @ p["w_stack"][k] + p["b_stack"][k]); k += 1
        u = silu(u @ p["w_stack"][k] + p["b_stack"][k]); k += 1
        h = h + u
    h = silu(h @ p["w_stack"][k] + p["b_stack"][k]) + x; k += 1
    for _ in range(nas):
        u = silu(h @ p["w_stack"][k] + p["b_stack"][k]); k += 1
        u = silu(u @ p["w_stack"][k] + p["b_stack"][k]); k += 1
        h = h + u
    return h


# --------------------------------------------------------------------------
if __name__ == "__main__":
    H = 128               # hidden_channels (lane-dense)
    NB = 8                # num_bilinear
    NS, NRAD = 7, 6       # num_spherical, num_radial
    NBS, NAS = 1, 2       # num_before_skip, num_after_skip
    E, T = 256, 512       # num messages (edges), num triplets

    key = jax.random.PRNGKey(0)
    ks = jax.random.split(key, 14)

    x = 0.5 * jax.random.normal(ks[0], (E, H), jnp.float32)
    rbf = jax.random.normal(ks[1], (E, NRAD), jnp.float32)
    sbf = jax.random.normal(ks[2], (T, NS * NRAD), jnp.float32)
    idx_kj = jax.random.randint(ks[3], (T,), 0, E, jnp.int32)
    idx_ji = jax.random.randint(ks[4], (T,), 0, E, jnp.int32)

    def w_init(k, shape, fan_in):
        return jax.random.normal(k, shape, jnp.float32) / np.sqrt(fan_in)

    L = 2 * NBS + 1 + 2 * NAS
    params = {
        "w_rbf": w_init(ks[5], (NRAD, H), NRAD),
        "w_sbf": w_init(ks[6], (NS * NRAD, NB), NS * NRAD),
        "w_ji": w_init(ks[7], (H, H), H),
        "b_ji": 0.1 * jax.random.normal(ks[8], (H,), jnp.float32),
        "w_kj": w_init(ks[9], (H, H), H),
        "b_kj": 0.1 * jax.random.normal(ks[10], (H,), jnp.float32),
        "w_bil": (2.0 / H) * jax.random.normal(ks[11], (H, NB, H), jnp.float32),
        "w_stack": w_init(ks[12], (L, H, H), H),
        "b_stack": 0.1 * jax.random.normal(ks[13], (L, H), jnp.float32),
    }

    fwd = jax.jit(functools.partial(interaction_block_forward,
                                    num_before_skip=NBS, num_after_skip=NAS))
    out = fwd(x, rbf, sbf, idx_kj, idx_ji, params)
    out = jax.block_until_ready(out)
    assert out.shape == (E, H)

    np_params = {k: np.asarray(v, np.float64) for k, v in params.items()}
    ref = _reference_np(np.asarray(x, np.float64), np.asarray(rbf, np.float64),
                        np.asarray(sbf, np.float64), np.asarray(idx_kj),
                        np.asarray(idx_ji), np_params, NBS, NAS)
    # bf16 MXU operands (f32 accumulation) across ~10 chained matmuls -> 2e-2 tol
    np.testing.assert_allclose(np.asarray(out), ref, rtol=2e-2, atol=2e-2)

    print("KERNEL_OK")
</pallas_src>

<mosaic_0001>
module attributes {stable_mosaic.version = 11 : i64} {
  func.func @_edge_pre_kernel(%arg0: i32, %arg1: memref<256x128xf32, #tpu.memory_space<vmem>>, %arg2: memref<256x8xf32, #tpu.memory_space<vmem>>, %arg3: memref<8x128xbf16, #tpu.memory_space<vmem>>, %arg4: memref<128x256xbf16, #tpu.memory_space<vmem>>, %arg5: memref<1x256xf32, #tpu.memory_space<vmem>>, %arg6: memref<256x128xf32, #tpu.memory_space<vmem>>, %arg7: memref<256x128xbf16, #tpu.memory_space<vmem>>) attributes {dimension_semantics = [#tpu.dimension_semantics<parallel>], iteration_bounds = array<i64: 1>, scalar_prefetch = 0 : i64, scratch_operands = 0 : i64, tpu.core_type = #tpu.core_type<tc>, window_params = [{transform_indices = @transform_0, window_bounds = array<i64: 256, 128>}, {transform_indices = @transform_1, window_bounds = array<i64: 256, 8>}, {pipeline_mode = #tpu.pipeline_mode<synchronous>, transform_indices = @transform_2, window_bounds = array<i64: 8, 128>}, {pipeline_mode = #tpu.pipeline_mode<synchronous>, transform_indices = @transform_3, window_bounds = array<i64: 128, 256>}, {pipeline_mode = #tpu.pipeline_mode<synchronous>, transform_indices = @transform_4, window_bounds = array<i64: 1, 256>}, {transform_indices = @transform_5, window_bounds = array<i64: 256, 128>}, {transform_indices = @transform_6, window_bounds = array<i64: 256, 128>}]} {
    %c0 = arith.constant 0 : index
    %c0_0 = arith.constant 0 : index
    %0 = vector.load %arg1[%c0, %c0_0] : memref<256x128xf32, #tpu.memory_space<vmem>>, vector<256x128xf32>
    %1 = arith.truncf %0 : vector<256x128xf32> to vector<256x128xbf16>
    %c0_1 = arith.constant 0 : index
    %c0_2 = arith.constant 0 : index
    %2 = vector.load %arg2[%c0_1, %c0_2] : memref<256x8xf32, #tpu.memory_space<vmem>>, vector<256x8xf32>
    %3 = arith.truncf %2 : vector<256x8xf32> to vector<256x8xbf16>
    %c0_3 = arith.constant 0 : index
    %c0_4 = arith.constant 0 : index
    %4 = vector.load %arg3[%c0_3, %c0_4] : memref<8x128xbf16, #tpu.memory_space<vmem>>, vector<8x128xbf16>
    %cst = arith.constant dense<0.000000e+00> : vector<256x128xf32>
    %5 = tpu.matmul %3, %4, %cst {dimension_numbers = #tpu.dot_dimension_numbers<[1], [0], [0], [1], [0, 0, 1, 1], [], []>} : vector<256x8xbf16>, vector<8x128xbf16>, vector<256x128xf32> -> vector<256x128xf32>
    %c0_5 = arith.constant 0 : index
    %c0_6 = arith.constant 0 : index
    %6 = vector.load %arg4[%c0_5, %c0_6] : memref<128x256xbf16, #tpu.memory_space<vmem>>, vector<128x256xbf16>
    %cst_7 = arith.constant dense<0.000000e+00> : vector<256x256xf32>
    %7 = tpu.matmul %1, %6, %cst_7 {dimension_numbers = #tpu.dot_dimension_numbers<[1], [0], [0], [1], [0, 0, 1, 1], [], []>} : vector<256x128xbf16>, vector<128x256xbf16>, vector<256x256xf32> -> vector<256x256xf32>
    %c0_8 = arith.constant 0 : index
    %c0_9 = arith.constant 0 : index
    %8 = vector.load %arg5[%c0_8, %c0_9] : memref<1x256xf32, #tpu.memory_space<vmem>>, vector<1x256xf32>
    %9 = vector.broadcast %8 : vector<1x256xf32> to vector<256x256xf32>
    %10 = arith.addf %7, %9 : vector<256x256xf32>
    %11 = vector.extract_strided_slice %10 {offsets = [0, 0], sizes = [256, 128], strides = [1, 1]} : vector<256x256xf32> to vector<256x128xf32>
    %cst_10 = arith.constant 0.000000e+00 : f32
    %12 = vector.broadcast %cst_10 : f32 to vector<256x128xf32>
    %13 = arith.subf %12, %11 : vector<256x128xf32>
    %14 = math.exp %13 : vector<256x128xf32>
    %cst_11 = arith.constant 1.000000e+00 : f32
    %15 = vector.broadcast %cst_11 : f32 to vector<256x128xf32>
    %16 = arith.addf %15, %14 : vector<256x128xf32>
    %17 = tpu.reciprocal %16 {approx = true} : vector<256x128xf32> -> vector<256x128xf32>
    %18 = arith.mulf %11, %17 : vector<256x128xf32>
    %c0_12 = arith.constant 0 : index
    %c0_13 = arith.constant 0 : index
    %19 = vector.load %arg6[%c0_12, %c0_13] : memref<256x128xf32, #tpu.memory_space<vmem>>, vector<256x128xf32>
    tpu.vector_store %arg6[%c0_12, %c0_13], %18 {strides = array<i32>} : memref<256x128xf32, #tpu.memory_space<vmem>>, vector<256x128xf32>,
    %20 = vector.extract_strided_slice %10 {offsets = [0, 128], sizes = [256, 128], strides = [1, 1]} : vector<256x256xf32> to vector<256x128xf32>
    %cst_14 = arith.constant 0.000000e+00 : f32
    %21 = vector.broadcast %cst_14 : f32 to vector<256x128xf32>
    %22 = arith.subf %21, %20 : vector<256x128xf32>
    %23 = math.exp %22 : vector<256x128xf32>
    %cst_15 = arith.constant 1.000000e+00 : f32
    %24 = vector.broadcast %cst_15 : f32 to vector<256x128xf32>
    %25 = arith.addf %24, %23 : vector<256x128xf32>
    %26 = tpu.reciprocal %25 {approx = true} : vector<256x128xf32> -> vector<256x128xf32>
    %27 = arith.mulf %20, %26 : vector<256x128xf32>
    %28 = arith.mulf %27, %5 : vector<256x128xf32>
    %29 = arith.truncf %28 : vector<256x128xf32> to vector<256x128xbf16>
    %c0_16 = arith.constant 0 : index
    %c0_17 = arith.constant 0 : index
    %30 = vector.load %arg7[%c0_16, %c0_17] : memref<256x128xbf16, #tpu.memory_space<vmem>>, vector<256x128xbf16>
    tpu.vector_store %arg7[%c0_16, %c0_17], %29 {strides = array<i32>} : memref<256x128xbf16, #tpu.memory_space<vmem>>, vector<256x128xbf16>,
    return
  }
  func.func @transform_0(%arg0: i32) -> (i32, i32) {
    %c0_i32 = arith.constant 0 : i32
    %c0_i32_0 = arith.constant 0 : i32
    return %arg0, %c0_i32 : i32, i32
  }
  func.func @transform_1(%arg0: i32) -> (i32, i32) {
    %c0_i32 = arith.constant 0 : i32
    %c0_i32_0 = arith.constant 0 : i32
    return %arg0, %c0_i32 : i32, i32
  }
  func.func @transform_2(%arg0: i32) -> (i32, i32) {
    %c0_i32 = arith.constant 0 : i32
    %c0_i32_0 = arith.constant 0 : i32
    %c0_i32_1 = arith.constant 0 : i32
    return %c0_i32, %c0_i32_0 : i32, i32
  }
  func.func @transform_3(%arg0: i32) -> (i32, i32) {
    %c0_i32 = arith.constant 0 : i32
    %c0_i32_0 = arith.constant 0 : i32
    %c0_i32_1 = arith.constant 0 : i32
    return %c0_i32, %c0_i32_0 : i32, i32
  }
  func.func @transform_4(%arg0: i32) -> (i32, i32) {
    %c0_i32 = arith.constant 0 : i32
    %c0_i32_0 = arith.constant 0 : i32
    %c0_i32_1 = arith.constant 0 : i32
    return %c0_i32, %c0_i32_0 : i32, i32
  }
  func.func @transform_5(%arg0: i32) -> (i32, i32) {
    %c0_i32 = arith.constant 0 : i32
    %c0_i32_0 = arith.constant 0 : i32
    return %arg0, %c0_i32 : i32, i32
  }
  func.func @transform_6(%arg0: i32) -> (i32, i32) {
    %c0_i32 = arith.constant 0 : i32
    %c0_i32_0 = arith.constant 0 : i32
    return %arg0, %c0_i32 : i32, i32
  }
}

module attributes {stable_mosaic.version = 11 : i64} {
  func.func @_triplet_kernel(%arg0: i32, %arg1: memref<512x48xf32, #tpu.memory_space<vmem>>, %arg2: memref<512x1xi32, #tpu.memory_space<vmem>>, %arg3: memref<1x512xi32, #tpu.memory_space<vmem>>, %arg4: memref<256x128xbf16, #tpu.memory_space<vmem>>, %arg5: memref<48x1024xbf16, #tpu.memory_space<vmem>>, %arg6: memref<1024x128xbf16, #tpu.memory_space<vmem>>, %arg7: memref<256x128xf32, #tpu.memory_space<vmem>>) attributes {dimension_semantics = [#tpu.dimension_semantics<arbitrary>], iteration_bounds = array<i64: 1>, scalar_prefetch = 0 : i64, scratch_operands = 0 : i64, tpu.core_type = #tpu.core_type<tc>, window_params = [{transform_indices = @transform_0, window_bounds = array<i64: 512, 48>}, {transform_indices = @transform_1, window_bounds = array<i64: 512, 1>}, {transform_indices = @transform_2, window_bounds = array<i64: 1, 512>}, {pipeline_mode = #tpu.pipeline_mode<synchronous>, transform_indices = @transform_3, window_bounds = array<i64: 256, 128>}, {pipeline_mode = #tpu.pipeline_mode<synchronous>, transform_indices = @transform_4, window_bounds = array<i64: 48, 1024>}, {pipeline_mode = #tpu.pipeline_mode<synchronous>, transform_indices = @transform_5, window_bounds = array<i64: 1024, 128>}, {pipeline_mode = #tpu.pipeline_mode<synchronous>, transform_indices = @transform_6, window_bounds = array<i64: 256, 128>}]} {
    %c0_i32 = arith.constant 0 : i32
    %0 = arith.cmpi eq, %arg0, %c0_i32 : i32
    %1 = arith.extui %0 : i1 to i32
    %c0_i32_0 = arith.constant 0 : i32
    %2 = arith.cmpi ne, %1, %c0_i32_0 : i32
    scf.if %2 {
      %cst_23 = arith.constant 0.000000e+00 : f32
      %35 = vector.broadcast %cst_23 : f32 to vector<256x128xf32>
      %c0_24 = arith.constant 0 : index
      %c0_25 = arith.constant 0 : index
      %36 = vector.load %arg7[%c0_24, %c0_25] : memref<256x128xf32, #tpu.memory_space<vmem>>, vector<256x128xf32>
      tpu.vector_store %arg7[%c0_24, %c0_25], %35 {strides = array<i32>} : memref<256x128xf32, #tpu.memory_space<vmem>>, vector<256x128xf32>,
    } else {
    }
    %c0 = arith.constant 0 : index
    %c0_1 = arith.constant 0 : index
    %3 = vector.load %arg1[%c0, %c0_1] : memref<512x48xf32, #tpu.memory_space<vmem>>, vector<512x48xf32>
    %4 = arith.truncf %3 : vector<512x48xf32> to vector<512x48xbf16>
    %c0_2 = arith.constant 0 : index
    %c0_3 = arith.constant 0 : index
    %5 = vector.load %arg5[%c0_2, %c0_3] : memref<48x1024xbf16, #tpu.memory_space<vmem>>, vector<48x1024xbf16>
    %cst = arith.constant dense<0.000000e+00> : vector<512x1024xf32>
    %6 = tpu.matmul %4, %5, %cst {dimension_numbers = #tpu.dot_dimension_numbers<[1], [0], [0], [1], [0, 0, 1, 1], [], []>} : vector<512x48xbf16>, vector<48x1024xbf16>, vector<512x1024xf32> -> vector<512x1024xf32>
    %7 = tpu.iota {dimensions = array<i32: 1>} : vector<512x256xi32>
    %c0_4 = arith.constant 0 : index
    %c0_5 = arith.constant 0 : index
    %8 = vector.load %arg2[%c0_4, %c0_5] : memref<512x1xi32, #tpu.memory_space<vmem>>, vector<512x1xi32>
    %9 = vector.broadcast %8 : vector<512x1xi32> to vector<512x256xi32>
    %10 = arith.cmpi eq, %9, %7 : vector<512x256xi32>
    %cst_6 = arith.constant 1.000000e+00 : f32
    %cst_7 = arith.constant 0.000000e+00 : f32
    %11 = vector.broadcast %cst_6 : f32 to vector<512x256xf32>
    %12 = vector.broadcast %cst_7 : f32 to vector<512x256xf32>
    %13 = arith.select %10, %11, %12 : vector<512x256xi1>, vector<512x256xf32>
    %14 = arith.truncf %13 : vector<512x256xf32> to vector<512x256xbf16>
    %c0_8 = arith.constant 0 : index
    %c0_9 = arith.constant 0 : index
    %15 = vector.load %arg4[%c0_8, %c0_9] : memref<256x128xbf16, #tpu.memory_space<vmem>>, vector<256x128xbf16>
    %cst_10 = arith.constant dense<0.000000e+00> : vector<512x128xf32>
    %16 = tpu.matmul %14, %15, %cst_10 {dimension_numbers = #tpu.dot_dimension_numbers<[1], [0], [0], [1], [0, 0, 1, 1], [], []>} : vector<512x256xbf16>, vector<256x128xbf16>, vector<512x128xf32> -> vector<512x128xf32>
    %17 = tpu.concatenate %16, %16, %16, %16, %16, %16, %16, %16 in 1 : vector<512x128xf32>, vector<512x128xf32>, vector<512x128xf32>, vector<512x128xf32>, vector<512x128xf32>, vector<512x128xf32>, vector<512x128xf32>, vector<512x128xf32> -> vector<512x1024xf32>
    %18 = arith.mulf %6, %17 : vector<512x1024xf32>
    %19 = arith.truncf %18 : vector<512x1024xf32> to vector<512x1024xbf16>
    %c0_11 = arith.constant 0 : index
    %c0_12 = arith.constant 0 : index
    %20 = vector.load %arg6[%c0_11, %c0_12] : memref<1024x128xbf16, #tpu.memory_space<vmem>>, vector<1024x128xbf16>
    %cst_13 = arith.constant dense<0.000000e+00> : vector<512x128xf32>
    %21 = tpu.matmul %19, %20, %cst_13 {dimension_numbers = #tpu.dot_dimension_numbers<[1], [0], [0], [1], [0, 0, 1, 1], [], []>} : vector<512x1024xbf16>, vector<1024x128xbf16>, vector<512x128xf32> -> vector<512x128xf32>
    %22 = tpu.iota {dimensions = array<i32: 0>} : vector<256x512xi32>
    %c0_14 = arith.constant 0 : index
    %c0_15 = arith.constant 0 : index
    %23 = vector.load %arg3[%c0_14, %c0_15] : memref<1x512xi32, #tpu.memory_space<vmem>>, vector<1x512xi32>
    %24 = vector.broadcast %23 : vector<1x512xi32> to vector<256x512xi32>
    %25 = arith.cmpi eq, %22, %24 : vector<256x512xi32>
    %cst_16 = arith.constant 1.000000e+00 : f32
    %cst_17 = arith.constant 0.000000e+00 : f32
    %26 = vector.broadcast %cst_16 : f32 to vector<256x512xf32>
    %27 = vector.broadcast %cst_17 : f32 to vector<256x512xf32>
    %28 = arith.select %25, %26, %27 : vector<256x512xi1>, vector<256x512xf32>
    %29 = arith.truncf %28 : vector<256x512xf32> to vector<256x512xbf16>
    %c0_18 = arith.constant 0 : index
    %c0_19 = arith.constant 0 : index
    %30 = vector.load %arg7[%c0_18, %c0_19] : memref<256x128xf32, #tpu.memory_space<vmem>>, vector<256x128xf32>
    %31 = arith.truncf %21 : vector<512x128xf32> to vector<512x128xbf16>
    %cst_20 = arith.constant dense<0.000000e+00> : vector<256x128xf32>
    %32 = tpu.matmul %29, %31, %cst_20 {dimension_numbers = #tpu.dot_dimension_numbers<[1], [0], [0], [1], [0, 0, 1, 1], [], []>} : vector<256x512xbf16>, vector<512x128xbf16>, vector<256x128xf32> -> vector<256x128xf32>
    %33 = arith.addf %30, %32 : vector<256x128xf32>
    %c0_21 = arith.constant 0 : index
    %c0_22 = arith.constant 0 : index
    %34 = vector.load %arg7[%c0_21, %c0_22] : memref<256x128xf32, #tpu.memory_space<vmem>>, vector<256x128xf32>
    tpu.vector_store %arg7[%c0_21, %c0_22], %33 {strides = array<i32>} : memref<256x128xf32, #tpu.memory_space<vmem>>, vector<256x128xf32>,
    return
  }
  func.func @transform_0(%arg0: i32) -> (i32, i32) {
    %c0_i32 = arith.constant 0 : i32
    %c0_i32_0 = arith.constant 0 : i32
    return %arg0, %c0_i32 : i32, i32
  }
  func.func @transform_1(%arg0: i32) -> (i32, i32) {
    %c0_i32 = arith.constant 0 : i32
    %c0_i32_0 = arith.constant 0 : i32
    return %arg0, %c0_i32 : i32, i32
  }
  func.func @transform_2(%arg0: i32) -> (i32, i32) {
    %c0_i32 = arith.constant 0 : i32
    %c0_i32_0 = arith.constant 0 : i32
    return %c0_i32, %arg0 : i32, i32
  }
  func.func @transform_3(%arg0: i32) -> (i32, i32) {
    %c0_i32 = arith.constant 0 : i32
    %c0_i32_0 = arith.constant 0 : i32
    %c0_i32_1 = arith.constant 0 : i32
    return %c0_i32, %c0_i32_0 : i32, i32
  }
  func.func @transform_4(%arg0: i32) -> (i32, i32) {
    %c0_i32 = arith.constant 0 : i32
    %c0_i32_0 = arith.constant 0 : i32
    %c0_i32_1 = arith.constant 0 : i32
    return %c0_i32, %c0_i32_0 : i32, i32
  }
  func.func @transform_5(%arg0: i32) -> (i32, i32) {
    %c0_i32 = arith.constant 0 : i32
    %c0_i32_0 = arith.constant 0 : i32
    %c0_i32_1 = arith.constant 0 : i32
    return %c0_i32, %c0_i32_0 : i32, i32
  }
  func.func @transform_6(%arg0: i32) -> (i32, i32) {
    %c0_i32 = arith.constant 0 : i32
    %c0_i32_0 = arith.constant 0 : i32
    %c0_i32_1 = arith.constant 0 : i32
    return %c0_i32, %c0_i32_0 : i32, i32
  }
}

module attributes {stable_mosaic.version = 11 : i64} {
  func.func @_edge_post_kernel(%arg0: i32, %arg1: memref<256x128xf32, #tpu.memory_space<vmem>>, %arg2: memref<256x128xf32, #tpu.memory_space<vmem>>, %arg3: memref<256x128xf32, #tpu.memory_space<vmem>>, %arg4: memref<7x128x128xbf16, #tpu.memory_space<vmem>>, %arg5: memref<7x1x128xf32, #tpu.memory_space<vmem>>, %arg6: memref<256x128xf32, #tpu.memory_space<vmem>>) attributes {dimension_semantics = [#tpu.dimension_semantics<parallel>], iteration_bounds = array<i64: 1>, scalar_prefetch = 0 : i64, scratch_operands = 0 : i64, tpu.core_type = #tpu.core_type<tc>, window_params = [{transform_indices = @transform_0, window_bounds = array<i64: 256, 128>}, {transform_indices = @transform_1, window_bounds = array<i64: 256, 128>}, {transform_indices = @transform_2, window_bounds = array<i64: 256, 128>}, {pipeline_mode = #tpu.pipeline_mode<synchronous>, transform_indices = @transform_3, window_bounds = array<i64: 7, 128, 128>}, {pipeline_mode = #tpu.pipeline_mode<synchronous>, transform_indices = @transform_4, window_bounds = array<i64: 7, 1, 128>}, {transform_indices = @transform_5, window_bounds = array<i64: 256, 128>}]} {
    %c0 = arith.constant 0 : index
    %c0_0 = arith.constant 0 : index
    %0 = vector.load %arg1[%c0, %c0_0] : memref<256x128xf32, #tpu.memory_space<vmem>>, vector<256x128xf32>
    %c0_1 = arith.constant 0 : index
    %c0_2 = arith.constant 0 : index
    %1 = vector.load %arg2[%c0_1, %c0_2] : memref<256x128xf32, #tpu.memory_space<vmem>>, vector<256x128xf32>
    %c0_3 = arith.constant 0 : index
    %c0_4 = arith.constant 0 : index
    %2 = vector.load %arg3[%c0_3, %c0_4] : memref<256x128xf32, #tpu.memory_space<vmem>>, vector<256x128xf32>
    %3 = arith.addf %1, %2 : vector<256x128xf32>
    %4 = arith.truncf %3 : vector<256x128xf32> to vector<256x128xbf16>
    %c0_5 = arith.constant 0 : index
    %c0_6 = arith.constant 0 : index
    %c0_7 = arith.constant 0 : index
    %5 = vector.load %arg4[%c0_5, %c0_6, %c0_7] : memref<7x128x128xbf16, #tpu.memory_space<vmem>>, vector<1x128x128xbf16>
    %6 = vector.shape_cast %5 : vector<1x128x128xbf16> to vector<128x128xbf16>
    %cst = arith.constant dense<0.000000e+00> : vector<256x128xf32>
    %7 = tpu.matmul %4, %6, %cst {dimension_numbers = #tpu.dot_dimension_numbers<[1], [0], [0], [1], [0, 0, 1, 1], [], []>} : vector<256x128xbf16>, vector<128x128xbf16>, vector<256x128xf32> -> vector<256x128xf32>
    %c0_8 = arith.constant 0 : index
    %c0_9 = arith.constant 0 : index
    %c0_10 = arith.constant 0 : index
    %8 = vector.load %arg5[%c0_8, %c0_9, %c0_10] : memref<7x1x128xf32, #tpu.memory_space<vmem>>, vector<1x1x128xf32>
    %9 = vector.shape_cast %8 : vector<1x1x128xf32> to vector<1x128xf32>
    %10 = vector.broadcast %9 : vector<1x128xf32> to vector<256x128xf32>
    %11 = arith.addf %7, %10 : vector<256x128xf32>
    %cst_11 = arith.constant 0.000000e+00 : f32
    %12 = vector.broadcast %cst_11 : f32 to vector<256x128xf32>
    %13 = arith.subf %12, %11 : vector<256x128xf32>
    %14 = math.exp %13 : vector<256x128xf32>
    %cst_12 = arith.constant 1.000000e+00 : f32
    %15 = vector.broadcast %cst_12 : f32 to vector<256x128xf32>
    %16 = arith.addf %15, %14 : vector<256x128xf32>
    %17 = tpu.reciprocal %16 {approx = true} : vector<256x128xf32> -> vector<256x128xf32>
    %18 = arith.mulf %11, %17 : vector<256x128xf32>
    %19 = arith.truncf %18 : vector<256x128xf32> to vector<256x128xbf16>
    %c1 = arith.constant 1 : index
    %c0_13 = arith.constant 0 : index
    %c0_14 = arith.constant 0 : index
    %20 = vector.load %arg4[%c1, %c0_13, %c0_14] : memref<7x128x128xbf16, #tpu.memory_space<vmem>>, vector<1x128x128xbf16>
    %21 = vector.shape_cast %20 : vector<1x128x128xbf16> to vector<128x128xbf16>
    %cst_15 = arith.constant dense<0.000000e+00> : vector<256x128xf32>
    %22 = tpu.matmul %19, %21, %cst_15 {dimension_numbers = #tpu.dot_dimension_numbers<[1], [0], [0], [1], [0, 0, 1, 1], [], []>} : vector<256x128xbf16>, vector<128x128xbf16>, vector<256x128xf32> -> vector<256x128xf32>
    %c1_16 = arith.constant 1 : index
    %c0_17 = arith.constant 0 : index
    %c0_18 = arith.constant 0 : index
    %23 = vector.load %arg5[%c1_16, %c0_17, %c0_18] : memref<7x1x128xf32, #tpu.memory_space<vmem>>, vector<1x1x128xf32>
    %24 = vector.shape_cast %23 : vector<1x1x128xf32> to vector<1x128xf32>
    %25 = vector.broadcast %24 : vector<1x128xf32> to vector<256x128xf32>
    %26 = arith.addf %22, %25 : vector<256x128xf32>
    %cst_19 = arith.constant 0.000000e+00 : f32
    %27 = vector.broadcast %cst_19 : f32 to vector<256x128xf32>
    %28 = arith.subf %27, %26 : vector<256x128xf32>
    %29 = math.exp %28 : vector<256x128xf32>
    %cst_20 = arith.constant 1.000000e+00 : f32
    %30 = vector.broadcast %cst_20 : f32 to vector<256x128xf32>
    %31 = arith.addf %30, %29 : vector<256x128xf32>
    %32 = tpu.reciprocal %31 {approx = true} : vector<256x128xf32> -> vector<256x128xf32>
    %33 = arith.mulf %26, %32 : vector<256x128xf32>
    %34 = arith.addf %3, %33 : vector<256x128xf32>
    %35 = arith.truncf %34 : vector<256x128xf32> to vector<256x128xbf16>
    %c2 = arith.constant 2 : index
    %c0_21 = arith.constant 0 : index
    %c0_22 = arith.constant 0 : index
    %36 = vector.load %arg4[%c2, %c0_21, %c0_22] : memref<7x128x128xbf16, #tpu.memory_space<vmem>>, vector<1x128x128xbf16>
    %37 = vector.shape_cast %36 : vector<1x128x128xbf16> to vector<128x128xbf16>
    %cst_23 = arith.constant dense<0.000000e+00> : vector<256x128xf32>
    %38 = tpu.matmul %35, %37, %cst_23 {dimension_numbers = #tpu.dot_dimension_numbers<[1], [0], [0], [1], [0, 0, 1, 1], [], []>} : vector<256x128xbf16>, vector<128x128xbf16>, vector<256x128xf32> -> vector<256x128xf32>
    %c2_24 = arith.constant 2 : index
    %c0_25 = arith.constant 0 : index
    %c0_26 = arith.constant 0 : index
    %39 = vector.load %arg5[%c2_24, %c0_25, %c0_26] : memref<7x1x128xf32, #tpu.memory_space<vmem>>, vector<1x1x128xf32>
    %40 = vector.shape_cast %39 : vector<1x1x128xf32> to vector<1x128xf32>
    %41 = vector.broadcast %40 : vector<1x128xf32> to vector<256x128xf32>
    %42 = arith.addf %38, %41 : vector<256x128xf32>
    %cst_27 = arith.constant 0.000000e+00 : f32
    %43 = vector.broadcast %cst_27 : f32 to vector<256x128xf32>
    %44 = arith.subf %43, %42 : vector<256x128xf32>
    %45 = math.exp %44 : vector<256x128xf32>
    %cst_28 = arith.constant 1.000000e+00 : f32
    %46 = vector.broadcast %cst_28 : f32 to vector<256x128xf32>
    %47 = arith.addf %46, %45 : vector<256x128xf32>
    %48 = tpu.reciprocal %47 {approx = true} : vector<256x128xf32> -> vector<256x128xf32>
    %49 = arith.mulf %42, %48 : vector<256x128xf32>
    %50 = arith.addf %49, %0 : vector<256x128xf32>
    %51 = arith.truncf %50 : vector<256x128xf32> to vector<256x128xbf16>
    %c3 = arith.constant 3 : index
    %c0_29 = arith.constant 0 : index
    %c0_30 = arith.constant 0 : index
    %52 = vector.load %arg4[%c3, %c0_29, %c0_30] : memref<7x128x128xbf16, #tpu.memory_space<vmem>>, vector<1x128x128xbf16>
    %53 = vector.shape_cast %52 : vector<1x128x128xbf16> to vector<128x128xbf16>
    %cst_31 = arith.constant dense<0.000000e+00> : vector<256x128xf32>
    %54 = tpu.matmul %51, %53, %cst_31 {dimension_numbers = #tpu.dot_dimension_numbers<[1], [0], [0], [1], [0, 0, 1, 1], [], []>} : vector<256x128xbf16>, vector<128x128xbf16>, vector<256x128xf32> -> vector<256x128xf32>
    %c3_32 = arith.constant 3 : index
    %c0_33 = arith.constant 0 : index
    %c0_34 = arith.constant 0 : index
    %55 = vector.load %arg5[%c3_32, %c0_33, %c0_34] : memref<7x1x128xf32, #tpu.memory_space<vmem>>, vector<1x1x128xf32>
    %56 = vector.shape_cast %55 : vector<1x1x128xf32> to vector<1x128xf32>
    %57 = vector.broadcast %56 : vector<1x128xf32> to vector<256x128xf32>
    %58 = arith.addf %54, %57 : vector<256x128xf32>
    %cst_35 = arith.constant 0.000000e+00 : f32
    %59 = vector.broadcast %cst_35 : f32 to vector<256x128xf32>
    %60 = arith.subf %59, %58 : vector<256x128xf32>
    %61 = math.exp %60 : vector<256x128xf32>
    %cst_36 = arith.constant 1.000000e+00 : f32
    %62 = vector.broadcast %cst_36 : f32 to vector<256x128xf32>
    %63 = arith.addf %62, %61 : vector<256x128xf32>
    %64 = tpu.reciprocal %63 {approx = true} : vector<256x128xf32> -> vector<256x128xf32>
    %65 = arith.mulf %58, %64 : vector<256x128xf32>
    %66 = arith.truncf %65 : vector<256x128xf32> to vector<256x128xbf16>
    %c4 = arith.constant 4 : index
    %c0_37 = arith.constant 0 : index
    %c0_38 = arith.constant 0 : index
    %67 = vector.load %arg4[%c4, %c0_37, %c0_38] : memref<7x128x128xbf16, #tpu.memory_space<vmem>>, vector<1x128x128xbf16>
    %68 = vector.shape_cast %67 : vector<1x128x128xbf16> to vector<128x128xbf16>
    %cst_39 = arith.constant dense<0.000000e+00> : vector<256x128xf32>
    %69 = tpu.matmul %66, %68, %cst_39 {dimension_numbers = #tpu.dot_dimension_numbers<[1], [0], [0], [1], [0, 0, 1, 1], [], []>} : vector<256x128xbf16>, vector<128x128xbf16>, vector<256x128xf32> -> vector<256x128xf32>
    %c4_40 = arith.constant 4 : index
    %c0_41 = arith.constant 0 : index
    %c0_42 = arith.constant 0 : index
    %70 = vector.load %arg5[%c4_40, %c0_41, %c0_42] : memref<7x1x128xf32, #tpu.memory_space<vmem>>, vector<1x1x128xf32>
    %71 = vector.shape_cast %70 : vector<1x1x128xf32> to vector<1x128xf32>
    %72 = vector.broadcast %71 : vector<1x128xf32> to vector<256x128xf32>
    %73 = arith.addf %69, %72 : vector<256x128xf32>
    %cst_43 = arith.constant 0.000000e+00 : f32
    %74 = vector.broadcast %cst_43 : f32 to vector<256x128xf32>
    %75 = arith.subf %74, %73 : vector<256x128xf32>
    %76 = math.exp %75 : vector<256x128xf32>
    %cst_44 = arith.constant 1.000000e+00 : f32
    %77 = vector.broadcast %cst_44 : f32 to vector<256x128xf32>
    %78 = arith.addf %77, %76 : vector<256x128xf32>
    %79 = tpu.reciprocal %78 {approx = true} : vector<256x128xf32> -> vector<256x128xf32>
    %80 = arith.mulf %73, %79 : vector<256x128xf32>
    %81 = arith.addf %50, %80 : vector<256x128xf32>
    %82 = arith.truncf %81 : vector<256x128xf32> to vector<256x128xbf16>
    %c5 = arith.constant 5 : index
    %c0_45 = arith.constant 0 : index
    %c0_46 = arith.constant 0 : index
    %83 = vector.load %arg4[%c5, %c0_45, %c0_46] : memref<7x128x128xbf16, #tpu.memory_space<vmem>>, vector<1x128x128xbf16>
    %84 = vector.shape_cast %83 : vector<1x128x128xbf16> to vector<128x128xbf16>
    %cst_47 = arith.constant dense<0.000000e+00> : vector<256x128xf32>
    %85 = tpu.matmul %82, %84, %cst_47 {dimension_numbers = #tpu.dot_dimension_numbers<[1], [0], [0], [1], [0, 0, 1, 1], [], []>} : vector<256x128xbf16>, vector<128x128xbf16>, vector<256x128xf32> -> vector<256x128xf32>
    %c5_48 = arith.constant 5 : index
    %c0_49 = arith.constant 0 : index
    %c0_50 = arith.constant 0 : index
    %86 = vector.load %arg5[%c5_48, %c0_49, %c0_50] : memref<7x1x128xf32, #tpu.memory_space<vmem>>, vector<1x1x128xf32>
    %87 = vector.shape_cast %86 : vector<1x1x128xf32> to vector<1x128xf32>
    %88 = vector.broadcast %87 : vector<1x128xf32> to vector<256x128xf32>
    %89 = arith.addf %85, %88 : vector<256x128xf32>
    %cst_51 = arith.constant 0.000000e+00 : f32
    %90 = vector.broadcast %cst_51 : f32 to vector<256x128xf32>
    %91 = arith.subf %90, %89 : vector<256x128xf32>
    %92 = math.exp %91 : vector<256x128xf32>
    %cst_52 = arith.constant 1.000000e+00 : f32
    %93 = vector.broadcast %cst_52 : f32 to vector<256x128xf32>
    %94 = arith.addf %93, %92 : vector<256x128xf32>
    %95 = tpu.reciprocal %94 {approx = true} : vector<256x128xf32> -> vector<256x128xf32>
    %96 = arith.mulf %89, %95 : vector<256x128xf32>
    %97 = arith.truncf %96 : vector<256x128xf32> to vector<256x128xbf16>
    %c6 = arith.constant 6 : index
    %c0_53 = arith.constant 0 : index
    %c0_54 = arith.constant 0 : index
    %98 = vector.load %arg4[%c6, %c0_53, %c0_54] : memref<7x128x128xbf16, #tpu.memory_space<vmem>>, vector<1x128x128xbf16>
    %99 = vector.shape_cast %98 : vector<1x128x128xbf16> to vector<128x128xbf16>
    %cst_55 = arith.constant dense<0.000000e+00> : vector<256x128xf32>
    %100 = tpu.matmul %97, %99, %cst_55 {dimension_numbers = #tpu.dot_dimension_numbers<[1], [0], [0], [1], [0, 0, 1, 1], [], []>} : vector<256x128xbf16>, vector<128x128xbf16>, vector<256x128xf32> -> vector<256x128xf32>
    %c6_56 = arith.constant 6 : index
    %c0_57 = arith.constant 0 : index
    %c0_58 = arith.constant 0 : index
    %101 = vector.load %arg5[%c6_56, %c0_57, %c0_58] : memref<7x1x128xf32, #tpu.memory_space<vmem>>, vector<1x1x128xf32>
    %102 = vector.shape_cast %101 : vector<1x1x128xf32> to vector<1x128xf32>
    %103 = vector.broadcast %102 : vector<1x128xf32> to vector<256x128xf32>
    %104 = arith.addf %100, %103 : vector<256x128xf32>
    %cst_59 = arith.constant 0.000000e+00 : f32
    %105 = vector.broadcast %cst_59 : f32 to vector<256x128xf32>
    %106 = arith.subf %105, %104 : vector<256x128xf32>
    %107 = math.exp %106 : vector<256x128xf32>
    %cst_60 = arith.constant 1.000000e+00 : f32
    %108 = vector.broadcast %cst_60 : f32 to vector<256x128xf32>
    %109 = arith.addf %108, %107 : vector<256x128xf32>
    %110 = tpu.reciprocal %109 {approx = true} : vector<256x128xf32> -> vector<256x128xf32>
    %111 = arith.mulf %104, %110 : vector<256x128xf32>
    %112 = arith.addf %81, %111 : vector<256x128xf32>
    %c0_61 = arith.constant 0 : index
    %c0_62 = arith.constant 0 : index
    %113 = vector.load %arg6[%c0_61, %c0_62] : memref<256x128xf32, #tpu.memory_space<vmem>>, vector<256x128xf32>
    tpu.vector_store %arg6[%c0_61, %c0_62], %112 {strides = array<i32>} : memref<256x128xf32, #tpu.memory_space<vmem>>, vector<256x128xf32>,
    return
  }
  func.func @transform_0(%arg0: i32) -> (i32, i32) {
    %c0_i32 = arith.constant 0 : i32
    %c0_i32_0 = arith.constant 0 : i32
    return %arg0, %c0_i32 : i32, i32
  }
  func.func @transform_1(%arg0: i32) -> (i32, i32) {
    %c0_i32 = arith.constant 0 : i32
    %c0_i32_0 = arith.constant 0 : i32
    return %arg0, %c0_i32 : i32, i32
  }
  func.func @transform_2(%arg0: i32) -> (i32, i32) {
    %c0_i32 = arith.constant 0 : i32
    %c0_i32_0 = arith.constant 0 : i32
    return %arg0, %c0_i32 : i32, i32
  }
  func.func @transform_3(%arg0: i32) -> (i32, i32, i32) {
    %c0_i32 = arith.constant 0 : i32
    %c0_i32_0 = arith.constant 0 : i32
    %c0_i32_1 = arith.constant 0 : i32
    %c0_i32_2 = arith.constant 0 : i32
    return %c0_i32, %c0_i32_0, %c0_i32_1 : i32, i32, i32
  }
  func.func @transform_4(%arg0: i32) -> (i32, i32, i32) {
    %c0_i32 = arith.constant 0 : i32
    %c0_i32_0 = arith.constant 0 : i32
    %c0_i32_1 = arith.constant 0 : i32
    %c0_i32_2 = arith.constant 0 : i32
    return %c0_i32, %c0_i32_0, %c0_i32_1 : i32, i32, i32
  }
  func.func @transform_5(%arg0: i32) -> (i32, i32) {
    %c0_i32 = arith.constant 0 : i32
    %c0_i32_0 = arith.constant 0 : i32
    return %arg0, %c0_i32 : i32, i32
  }
}

</mosaic_0001>

<llo_original>
// kernel: interaction_block_forward.3
$region0: #{interaction_block_forward.3}
  #allocation0 [shape = 'u32[]', space=smem, size = 0x4, offset = 0x4, fixed_abs, tag = 'smem constant byte address 0x4 - core index']
  #allocation1 [shape = 'u32[72,128]{1,0:T(1,128)}', space=vmem, size = 0x9000, scoped, tag = 'internal scratch']
  %s0 = inlined_call_operand.hbm [shape: f32[256,128], index: 0, kind: input, shape index: {}]
  %s1 = inlined_call_operand.vmem [shape: f32[256,8], index: 1, kind: input, shape index: {}]
  %s2 = inlined_call_operand.vmem [shape: bf16[8,128], index: 2, kind: input, shape index: {}]
  %s3 = inlined_call_operand.vmem [shape: bf16[128,256], index: 3, kind: input, shape index: {}]
  %s4 = inlined_call_operand.vmem [shape: f32[1,256], index: 4, kind: input, shape index: {}]
  %s5 = inlined_call_operand.vmem [shape: f32[256,128], index: 5, kind: output, shape index: {0}]
  %s6 = inlined_call_operand.vmem [shape: bf16[256,128], index: 6, kind: output, shape index: {1}]
  %7 = xla_tuple %s5, %s6
  %s8 = sld [smem:[#allocation0]]
  $region42: #{interaction_block_forward.3} parent=0
    _
  %s10 = ssub.s32 1, %s8
  %s11 = scalar_select 0, %s10, %s8
  $region1: #{interaction_block_forward.3} parent=0
    #allocation2 [shape = 'u8[131072]{0}', space=vmem, size = 0x20000, scoped, tag = 'input window, operand 0, single buffered']
    #allocation3 [shape = 's32[1]{0}', space=sflag, size = 0x4, scoped, tag = 'scoped memory for interaction_block_forward.3']
    %12 = vsyncpa [#allocation3], 0
    // Predicated region
    $region2: #{interaction_block_forward.3} parent=1 // pred_check
      _
    $region3: #{interaction_block_forward.3} parent=1 // pred_check_branch
      %14 = sbr.rel (0) target = $region5
    $region4: #{interaction_block_forward.3} parent=1 // pred_region
      %16 = vsyncadd [#allocation3], 0
      %s17 = sshll.u32 %s0, 4
      %s18 = int_to_ptr.hbm [resolvable:$true] %s17
      %s19 = sshll.u32 [#allocation2], 4
      %s20 = int_to_ptr.vmem [resolvable:$true] %s19
      %25 = dma.hbm_to_vmem [thread:$0]  %s18, 4096, %s20, [#allocation3], 128, 128, 8
    $region5: #{interaction_block_forward.3} parent=1 // pred_fallthru
      _
    // Predicated region
    $region6: #{interaction_block_forward.3} parent=1 // pred_check
      _
    $region7: #{interaction_block_forward.3} parent=1 // pred_check_branch
      %27 = sbr.rel (0) target = $region9
    $region8: #{interaction_block_forward.3} parent=1 // pred_region
      _
    $region9: #{interaction_block_forward.3} parent=1 // pred_fallthru
      _
    // Predicated region
    $region10: #{interaction_block_forward.3} parent=1 // pred_check
      _
    $region11: #{interaction_block_forward.3} parent=1 // pred_check_branch
      %29 = sbr.rel (0) target = $region13
    $region12: #{interaction_block_forward.3} parent=1 // pred_region
      _
    $region13: #{interaction_block_forward.3} parent=1 // pred_fallthru
      _
    // Predicated region
    $region14: #{interaction_block_forward.3} parent=1 // pred_check
      _
    $region15: #{interaction_block_forward.3} parent=1 // pred_check_branch
      %31 = sbr.rel (0) target = $region17
    $region16: #{interaction_block_forward.3} parent=1 // pred_region
      _
    $region17: #{interaction_block_forward.3} parent=1 // pred_fallthru
      _
    // Predicated region
    $region18: #{interaction_block_forward.3} parent=1 // pred_check
      _
    $region19: #{interaction_block_forward.3} parent=1 // pred_check_branch
      %33 = sbr.rel (0) target = $region21
    $region20: #{interaction_block_forward.3} parent=1 // pred_region
      _
    $region21: #{interaction_block_forward.3} parent=1 // pred_fallthru
      _
    // Predicated region
    $region22: #{interaction_block_forward.3} parent=1 // pred_check
      _
    $region23: #{interaction_block_forward.3} parent=1 // pred_check_branch
      %35 = sbr.rel (0) target = $region25
    $region24: #{interaction_block_forward.3} parent=1 // pred_region
      %37 = dma.done [#allocation3], 4096
    $region25: #{interaction_block_forward.3} parent=1 // pred_fallthru
      _
    %v39 = vld [vmem:[#allocation2] sm:$0xff]
    %v40 = vld [vmem:[#allocation2 + $0x8] sm:$0xff]
    %v41 = vld [vmem:[#allocation2 + $0x10] sm:$0xff]
    %v42 = vld [vmem:[#allocation2 + $0x18] sm:$0xff]
    %v43 = vld [vmem:[#allocation2 + $0x20] sm:$0xff]
    %v44 = vld [vmem:[#allocation2 + $0x28] sm:$0xff]
    %v45 = vld [vmem:[#allocation2 + $0x30] sm:$0xff]
    %v46 = vld [vmem:[#allocation2 + $0x38] sm:$0xff]
    %v47 = vld [vmem:[#allocation2 + $0x40] sm:$0xff]
    %v48 = vld [vmem:[#allocation2 + $0x48] sm:$0xff]
    %v49 = vld [vmem:[#allocation2 + $0x50] sm:$0xff]
    %v50 = vld [vmem:[#allocation2 + $0x58] sm:$0xff]
    %v51 = vld [vmem:[#allocation2 + $0x60] sm:$0xff]
    %v52 = vld [vmem:[#allocation2 + $0x68] sm:$0xff]
    %v53 = vld [vmem:[#allocation2 + $0x70] sm:$0xff]
    %v54 = vld [vmem:[#allocation2 + $0x78] sm:$0xff]
    %v55 = vld [vmem:[#allocation2 + $0x80] sm:$0xff]
    %v56 = vld [vmem:[#allocation2 + $0x88] sm:$0xff]
    %v57 = vld [vmem:[#allocation2 + $0x90] sm:$0xff]
    %v58 = vld [vmem:[#allocation2 + $0x98] sm:$0xff]
    %v59 = vld [vmem:[#allocation2 + $0xa0] sm:$0xff]
    %v60 = vld [vmem:[#allocation2 + $0xa8] sm:$0xff]
    %v61 = vld [vmem:[#allocation2 + $0xb0] sm:$0xff]
    %v62 = vld [vmem:[#allocation2 + $0xb8] sm:$0xff]
    %v63 = vld [vmem:[#allocation2 + $0xc0] sm:$0xff]
    %v64 = vld [vmem:[#allocation2 + $0xc8] sm:$0xff]
    %v65 = vld [vmem:[#allocation2 + $0xd0] sm:$0xff]
    %v66 = vld [vmem:[#allocation2 + $0xd8] sm:$0xff]
    %v67 = vld [vmem:[#allocation2 + $0xe0] sm:$0xff]
    %v68 = vld [vmem:[#allocation2 + $0xe8] sm:$0xff]
    %v69 = vld [vmem:[#allocation2 + $0xf0] sm:$0xff]
    %v70 = vld [vmem:[#allocation2 + $0xf8] sm:$0xff]
    %v71 = vpack.c.bf16 %v40, %v39
    %v72 = vpack.c.bf16 %v42, %v41
    %v73 = vpack.c.bf16 %v44, %v43
    %v74 = vpack.c.bf16 %v46, %v45
    %v75 = vpack.c.bf16 %v48, %v47
    %v76 = vpack.c.bf16 %v50, %v49
    %v77 = vpack.c.bf16 %v52, %v51
    %v78 = vpack.c.bf16 %v54, %v53
    %v79 = vpack.c.bf16 %v56, %v55
    %v80 = vpack.c.bf16 %v58, %v57
    %v81 = vpack.c.bf16 %v60, %v59
    %v82 = vpack.c.bf16 %v62, %v61
    %v83 = vpack.c.bf16 %v64, %v63
    %v84 = vpack.c.bf16 %v66, %v65
    %v85 = vpack.c.bf16 %v68, %v67
    %v86 = vpack.c.bf16 %v70, %v69
    %v87 = vld [vmem:[%s1] sm:$0xff]
    %v88 = vld [vmem:[%s1 + $0x8] sm:$0xff]
    %v89 = vld [vmem:[%s1 + $0x10] sm:$0xff]
    %v90 = vld [vmem:[%s1 + $0x18] sm:$0xff]
    %v91 = vld [vmem:[%s1 + $0x20] sm:$0xff]
    %v92 = vld [vmem:[%s1 + $0x28] sm:$0xff]
    %v93 = vld [vmem:[%s1 + $0x30] sm:$0xff]
    %v94 = vld [vmem:[%s1 + $0x38] sm:$0xff]
    %v95 = vld [vmem:[%s1 + $0x40] sm:$0xff]
    %v96 = vld [vmem:[%s1 + $0x48] sm:$0xff]
    %v97 = vld [vmem:[%s1 + $0x50] sm:$0xff]
    %v98 = vld [vmem:[%s1 + $0x58] sm:$0xff]
    %v99 = vld [vmem:[%s1 + $0x60] sm:$0xff]
    %v100 = vld [vmem:[%s1 + $0x68] sm:$0xff]
    %v101 = vld [vmem:[%s1 + $0x70] sm:$0xff]
    %v102 = vld [vmem:[%s1 + $0x78] sm:$0xff]
    %v103 = vld [vmem:[%s1 + $0x80] sm:$0xff]
    %v104 = vld [vmem:[%s1 + $0x88] sm:$0xff]
    %v105 = vld [vmem:[%s1 + $0x90] sm:$0xff]
    %v106 = vld [vmem:[%s1 + $0x98] sm:$0xff]
    %v107 = vld [vmem:[%s1 + $0xa0] sm:$0xff]
    %v108 = vld [vmem:[%s1 + $0xa8] sm:$0xff]
    %v109 = vld [vmem:[%s1 + $0xb0] sm:$0xff]
    %v110 = vld [vmem:[%s1 + $0xb8] sm:$0xff]
    %v111 = vld [vmem:[%s1 + $0xc0] sm:$0xff]
    %v112 = vld [vmem:[%s1 + $0xc8] sm:$0xff]
    %v113 = vld [vmem:[%s1 + $0xd0] sm:$0xff]
    %v114 = vld [vmem:[%s1 + $0xd8] sm:$0xff]
    %v115 = vld [vmem:[%s1 + $0xe0] sm:$0xff]
    %v116 = vld [vmem:[%s1 + $0xe8] sm:$0xff]
    %v117 = vld [vmem:[%s1 + $0xf0] sm:$0xff]
    %v118 = vld [vmem:[%s1 + $0xf8] sm:$0xff]
    %v119 = vpack.c.bf16 %v88, %v87
    %v120 = vpack.c.bf16 %v90, %v89
    %v121 = vpack.c.bf16 %v92, %v91
    %v122 = vpack.c.bf16 %v94, %v93
    %v123 = vpack.c.bf16 %v96, %v95
    %v124 = vpack.c.bf16 %v98, %v97
    %v125 = vpack.c.bf16 %v100, %v99
    %v126 = vpack.c.bf16 %v102, %v101
    %v127 = vpack.c.bf16 %v104, %v103
    %v128 = vpack.c.bf16 %v106, %v105
    %v129 = vpack.c.bf16 %v108, %v107
    %v130 = vpack.c.bf16 %v110, %v109
    %v131 = vpack.c.bf16 %v112, %v111
    %v132 = vpack.c.bf16 %v114, %v113
    %v133 = vpack.c.bf16 %v116, %v115
    %v134 = vpack.c.bf16 %v118, %v117
    %v135 = vld [vmem:[%s2] sm:$0xf]
    %vm136 = vcmask 64512
    %v138 = vsel %vm136, %v119, 0
    %v141 = vsel %vm136, %v120, 0
    %v144 = vsel %vm136, %v121, 0
    %v147 = vsel %vm136, %v122, 0
    %v150 = vsel %vm136, %v123, 0
    %v153 = vsel %vm136, %v124, 0
    %v156 = vsel %vm136, %v125, 0
    %v159 = vsel %vm136, %v126, 0
    %v162 = vsel %vm136, %v127, 0
    %v165 = vsel %vm136, %v128, 0
    %v168 = vsel %vm136, %v129, 0
    %v171 = vsel %vm136, %v130, 0
    %v174 = vsel %vm136, %v131, 0
    %v177 = vsel %vm136, %v132, 0
    %v180 = vsel %vm136, %v133, 0
    %v183 = vsel %vm136, %v134, 0
    %vm185 = vcmask 1043456
    %v187 = vsel %vm185, %v135, 0
    %189 = vmatpush.bf16.msra.mxu0 0
    %190 = vmatpush.bf16.msra.mxu0 0
    %191 = vmatpush.bf16.msra.mxu0 0
    %192 = vmatpush.bf16.msra.mxu0 0
    %193 = vmatpush.bf16.msra.mxu0 0
    %194 = vmatpush.bf16.msra.mxu0 0
    %195 = vmatpush.bf16.msra.mxu0 0
    %196 = vmatpush.bf16.msra.mxu0 %v187
    %197 = vmatmul.bf16.gmra.mxu0 %v138
    %v198 = vpop.f32.mrf.mxu0
    %v199 = vadd.f32 0.0, %v198
    %v200 = vpop.f32.mrf.mxu0
    %v201 = vadd.f32 0.0, %v200
    %202 = vmatmul.bf16.gmra.mxu0 %v141
    %v203 = vpop.f32.mrf.mxu0
    %v204 = vadd.f32 0.0, %v203
    %v205 = vpop.f32.mrf.mxu0
    %v206 = vadd.f32 0.0, %v205
    %207 = vmatmul.bf16.gmra.mxu0 %v144
    %v208 = vpop.f32.mrf.mxu0
    %v209 = vadd.f32 0.0, %v208
    %v210 = vpop.f32.mrf.mxu0
    %v211 = vadd.f32 0.0, %v210
    %212 = vmatmul.bf16.gmra.mxu0 %v147
    %v213 = vpop.f32.mrf.mxu0
    %v214 = vadd.f32 0.0, %v213
    %v215 = vpop.f32.mrf.mxu0
    %v216 = vadd.f32 0.0, %v215
    %217 = vmatmul.bf16.gmra.mxu0 %v150
    %v218 = vpop.f32.mrf.mxu0
    %v219 = vadd.f32 0.0, %v218
    %v220 = vpop.f32.mrf.mxu0
    %v221 = vadd.f32 0.0, %v220
    %222 = vmatmul.bf16.gmra.mxu0 %v153
    %v223 = vpop.f32.mrf.mxu0
    %v224 = vadd.f32 0.0, %v223
    %v225 = vpop.f32.mrf.mxu0
    %v226 = vadd.f32 0.0, %v225
    %227 = vmatmul.bf16.gmra.mxu0 %v156
    %v228 = vpop.f32.mrf.mxu0
    %v229 = vadd.f32 0.0, %v228
    %v230 = vpop.f32.mrf.mxu0
    %v231 = vadd.f32 0.0, %v230
    %232 = vmatmul.bf16.gmra.mxu0 %v159
    %v233 = vpop.f32.mrf.mxu0
    %v234 = vadd.f32 0.0, %v233
    %v235 = vpop.f32.mrf.mxu0
    %v236 = vadd.f32 0.0, %v235
    %237 = vmatmul.bf16.gmra.mxu0 %v162
    %v238 = vpop.f32.mrf.mxu0
    %v239 = vadd.f32 0.0, %v238
    %v240 = vpop.f32.mrf.mxu0
    %v241 = vadd.f32 0.0, %v240
    %242 = vmatmul.bf16.gmra.mxu0 %v165
    %v243 = vpop.f32.mrf.mxu0
    %v244 = vadd.f32 0.0, %v243
    %v245 = vpop.f32.mrf.mxu0
    %v246 = vadd.f32 0.0, %v245
    %247 = vmatmul.bf16.gmra.mxu0 %v168
    %v248 = vpop.f32.mrf.mxu0
    %v249 = vadd.f32 0.0, %v248
    %v250 = vpop.f32.mrf.mxu0
    %v251 = vadd.f32 0.0, %v250
    %252 = vmatmul.bf16.gmra.mxu0 %v171
    %v253 = vpop.f32.mrf.mxu0
    %v254 = vadd.f32 0.0, %v253
    %v255 = vpop.f32.mrf.mxu0
    %v256 = vadd.f32 0.0, %v255
    %257 = vmatmul.bf16.gmra.mxu0 %v174
    %v258 = vpop.f32.mrf.mxu0
    %v259 = vadd.f32 0.0, %v258
    %v260 = vpop.f32.mrf.mxu0
    %v261 = vadd.f32 0.0, %v260
    %262 = vmatmul.bf16.gmra.mxu0 %v177
    %v263 = vpop.f32.mrf.mxu0
    %v264 = vadd.f32 0.0, %v263
    %v265 = vpop.f32.mrf.mxu0
    %v266 = vadd.f32 0.0, %v265
    %267 = vmatmul.bf16.gmra.mxu0 %v180
    %v268 = vpop.f32.mrf.mxu0
    %v269 = vadd.f32 0.0, %v268
    %v270 = vpop.f32.mrf.mxu0
    %v271 = vadd.f32 0.0, %v270
    %272 = vmatmul.bf16.gmra.mxu0 %v183
    %v273 = vpop.f32.mrf.mxu0
    %v274 = vadd.f32 0.0, %v273
    %v275 = vpop.f32.mrf.mxu0
    %v276 = vadd.f32 0.0, %v275
    %277 = vdwg.mxu0
    %v278 = vld [vmem:[%s3] sm:$0xff]
    %v279 = vld [vmem:[%s3 + $0x8] sm:$0xff]
    %v280 = vld [vmem:[%s3 + $0x10] sm:$0xff]
    %v281 = vld [vmem:[%s3 + $0x18] sm:$0xff]
    %v282 = vld [vmem:[%s3 + $0x20] sm:$0xff]
    %v283 = vld [vmem:[%s3 + $0x28] sm:$0xff]
    %v284 = vld [vmem:[%s3 + $0x30] sm:$0xff]
    %v285 = vld [vmem:[%s3 + $0x38] sm:$0xff]
    %v286 = vld [vmem:[%s3 + $0x40] sm:$0xff]
    %v287 = vld [vmem:[%s3 + $0x48] sm:$0xff]
    %v288 = vld [vmem:[%s3 + $0x50] sm:$0xff]
    %v289 = vld [vmem:[%s3 + $0x58] sm:$0xff]
    %v290 = vld [vmem:[%s3 + $0x60] sm:$0xff]
    %v291 = vld [vmem:[%s3 + $0x68] sm:$0xff]
    %v292 = vld [vmem:[%s3 + $0x70] sm:$0xff]
    %v293 = vld [vmem:[%s3 + $0x78] sm:$0xff]
    %v294 = vld [vmem:[%s4] sm:$0x3]
    %v296 = vperm.slane %v294, 0
    %v297 = vperm.slane %v294, 1
    %v316 = vunpack.c.l.b16 %v278
    %v317 = vunpack.c.h.b16 %v278
    %v318 = vunpack.c.l.b16 %v279
    %v319 = vunpack.c.h.b16 %v279
    %v320 = vunpack.c.l.b16 %v280
    %v321 = vunpack.c.h.b16 %v280
    %v322 = vunpack.c.l.b16 %v281
    %v323 = vunpack.c.h.b16 %v281
    %v324 = vunpack.c.l.b16 %v282
    %v325 = vunpack.c.h.b16 %v282
    %v326 = vunpack.c.l.b16 %v283
    %v327 = vunpack.c.h.b16 %v283
    %v328 = vunpack.c.l.b16 %v284
    %v329 = vunpack.c.h.b16 %v284
    %v330 = vunpack.c.l.b16 %v285
    %v331 = vunpack.c.h.b16 %v285
    %v332 = vunpack.c.l.b16 %v286
    %v333 = vunpack.c.h.b16 %v286
    %v334 = vunpack.c.l.b16 %v287
    %v335 = vunpack.c.h.b16 %v287
    %v336 = vunpack.c.l.b16 %v288
    %v337 = vunpack.c.h.b16 %v288
    %v338 = vunpack.c.l.b16 %v289
    %v339 = vunpack.c.h.b16 %v289
    %v340 = vunpack.c.l.b16 %v290
    %v341 = vunpack.c.h.b16 %v290
    %v342 = vunpack.c.l.b16 %v291
    %v343 = vunpack.c.h.b16 %v291
    %v344 = vunpack.c.l.b16 %v292
    %v345 = vunpack.c.h.b16 %v292
    %v346 = vunpack.c.l.b16 %v293
    %v347 = vunpack.c.h.b16 %v293
    %v348 = vpack.c.b16 %v318, %v316
    %v349 = vpack.c.b16 %v319, %v317
    %v350 = vpack.c.b16 %v322, %v320
    %v351 = vpack.c.b16 %v323, %v321
    %v352 = vpack.c.b16 %v326, %v324
    %v353 = vpack.c.b16 %v327, %v325
    %v354 = vpack.c.b16 %v330, %v328
    %v355 = vpack.c.b16 %v331, %v329
    %v356 = vpack.c.b16 %v334, %v332
    %v357 = vpack.c.b16 %v335, %v333
    %v358 = vpack.c.b16 %v338, %v336
    %v359 = vpack.c.b16 %v339, %v337
    %v360 = vpack.c.b16 %v342, %v340
    %v361 = vpack.c.b16 %v343, %v341
    %v362 = vpack.c.b16 %v346, %v344
    %v363 = vpack.c.b16 %v347, %v345
    %380 = vmatpush.bf16.msra.mxu0 %v362
    %381 = vmatpush.bf16.msra.mxu0 %v360
    %382 = vmatpush.bf16.msra.mxu0 %v358
    %383 = vmatpush.bf16.msra.mxu0 %v356
    %384 = vmatpush.bf16.msra.mxu0 %v354
    %385 = vmatpush.bf16.msra.mxu0 %v352
    %386 = vmatpush.bf16.msra.mxu0 %v350
    %387 = vmatpush.bf16.msra.mxu0 %v348
    %388 = vmatmul.bf16.gmra.mxu0 %v71
    %v389 = vpop.f32.mrf.mxu0
    %v390 = vadd.f32 %v296, %v389
    %v391 = vpop.f32.mrf.mxu0
    %v392 = vadd.f32 %v296, %v391
    %393 = vmatmul.bf16.gmra.mxu0 %v72
    %v394 = vpop.f32.mrf.mxu0
    %v395 = vadd.f32 %v296, %v394
    %v396 = vpop.f32.mrf.mxu0
    %v397 = vadd.f32 %v296, %v396
    %398 = vmatmul.bf16.gmra.mxu0 %v73
    %v399 = vpop.f32.mrf.mxu0
    %v400 = vadd.f32 %v296, %v399
    %v401 = vpop.f32.mrf.mxu0
    %v402 = vadd.f32 %v296, %v401
    %403 = vmatmul.bf16.gmra.mxu0 %v74
    %v404 = vpop.f32.mrf.mxu0
    %v405 = vadd.f32 %v296, %v404
    %v406 = vpop.f32.mrf.mxu0
    %v407 = vadd.f32 %v296, %v406
    %408 = vmatmul.bf16.gmra.mxu0 %v75
    %v409 = vpop.f32.mrf.mxu0
    %v410 = vadd.f32 %v296, %v409
    %v411 = vpop.f32.mrf.mxu0
    %v412 = vadd.f32 %v296, %v411
    %413 = vmatmul.bf16.gmra.mxu0 %v76
    %v414 = vpop.f32.mrf.mxu0
    %v415 = vadd.f32 %v296, %v414
    %v416 = vpop.f32.mrf.mxu0
    %v417 = vadd.f32 %v296, %v416
    %418 = vmatmul.bf16.gmra.mxu0 %v77
    %v419 = vpop.f32.mrf.mxu0
    %v420 = vadd.f32 %v296, %v419
    %v421 = vpop.f32.mrf.mxu0
    %v422 = vadd.f32 %v296, %v421
    %423 = vmatmul.bf16.gmra.mxu0 %v78
    %v424 = vpop.f32.mrf.mxu0
    %v425 = vadd.f32 %v296, %v424
    %v426 = vpop.f32.mrf.mxu0
    %v427 = vadd.f32 %v296, %v426
    %428 = vmatmul.bf16.gmra.mxu0 %v79
    %v429 = vpop.f32.mrf.mxu0
    %v430 = vadd.f32 %v296, %v429
    %v431 = vpop.f32.mrf.mxu0
    %v432 = vadd.f32 %v296, %v431
    %433 = vmatmul.bf16.gmra.mxu0 %v80
    %v434 = vpop.f32.mrf.mxu0
    %v435 = vadd.f32 %v296, %v434
    %v436 = vpop.f32.mrf.mxu0
    %v437 = vadd.f32 %v296, %v436
    %438 = vmatmul.bf16.gmra.mxu0 %v81
    %v439 = vpop.f32.mrf.mxu0
    %v440 = vadd.f32 %v296, %v439
    %v441 = vpop.f32.mrf.mxu0
    %v442 = vadd.f32 %v296, %v441
    %443 = vmatmul.bf16.gmra.mxu0 %v82
    %v444 = vpop.f32.mrf.mxu0
    %v445 = vadd.f32 %v296, %v444
    %v446 = vpop.f32.mrf.mxu0
    %v447 = vadd.f32 %v296, %v446
    %448 = vmatmul.bf16.gmra.mxu0 %v83
    %v449 = vpop.f32.mrf.mxu0
    %v450 = vadd.f32 %v296, %v449
    %v451 = vpop.f32.mrf.mxu0
    %v452 = vadd.f32 %v296, %v451
    %453 = vmatmul.bf16.gmra.mxu0 %v84
    %v454 = vpop.f32.mrf.mxu0
    %v455 = vadd.f32 %v296, %v454
    %v456 = vpop.f32.mrf.mxu0
    %v457 = vadd.f32 %v296, %v456
    %458 = vmatmul.bf16.gmra.mxu0 %v85
    %v459 = vpop.f32.mrf.mxu0
    %v460 = vadd.f32 %v296, %v459
    %v461 = vpop.f32.mrf.mxu0
    %v462 = vadd.f32 %v296, %v461
    %463 = vmatmul.bf16.gmra.mxu0 %v86
    %v464 = vpop.f32.mrf.mxu0
    %v465 = vadd.f32 %v296, %v464
    %v466 = vpop.f32.mrf.mxu0
    %v467 = vadd.f32 %v296, %v466
    %468 = vdwg.mxu0
    %469 = vmatpush.bf16.msra.mxu0 %v363
    %470 = vmatpush.bf16.msra.mxu0 %v361
    %471 = vmatpush.bf16.msra.mxu0 %v359
    %472 = vmatpush.bf16.msra.mxu0 %v357
    %473 = vmatpush.bf16.msra.mxu0 %v355
    %474 = vmatpush.bf16.msra.mxu0 %v353
    %475 = vmatpush.bf16.msra.mxu0 %v351
    %476 = vmatpush.bf16.msra.mxu0 %v349
    %477 = vmatmul.bf16.gmra.mxu0 %v71
    %v478 = vpop.f32.mrf.mxu0
    %v479 = vadd.f32 %v297, %v478
    %v480 = vpop.f32.mrf.mxu0
    %v481 = vadd.f32 %v297, %v480
    %482 = vmatmul.bf16.gmra.mxu0 %v72
    %v483 = vpop.f32.mrf.mxu0
    %v484 = vadd.f32 %v297, %v483
    %v485 = vpop.f32.mrf.mxu0
    %v486 = vadd.f32 %v297, %v485
    %487 = vmatmul.bf16.gmra.mxu0 %v73
    %v488 = vpop.f32.mrf.mxu0
    %v489 = vadd.f32 %v297, %v488
    %v490 = vpop.f32.mrf.mxu0
    %v491 = vadd.f32 %v297, %v490
    %492 = vmatmul.bf16.gmra.mxu0 %v74
    %v493 = vpop.f32.mrf.mxu0
    %v494 = vadd.f32 %v297, %v493
    %v495 = vpop.f32.mrf.mxu0
    %v496 = vadd.f32 %v297, %v495
    %497 = vmatmul.bf16.gmra.mxu0 %v75
    %v498 = vpop.f32.mrf.mxu0
    %v499 = vadd.f32 %v297, %v498
    %v500 = vpop.f32.mrf.mxu0
    %v501 = vadd.f32 %v297, %v500
    %502 = vmatmul.bf16.gmra.mxu0 %v76
    %v503 = vpop.f32.mrf.mxu0
    %v504 = vadd.f32 %v297, %v503
    %v505 = vpop.f32.mrf.mxu0
    %v506 = vadd.f32 %v297, %v505
    %507 = vmatmul.bf16.gmra.mxu0 %v77
    %v508 = vpop.f32.mrf.mxu0
    %v509 = vadd.f32 %v297, %v508
    %v510 = vpop.f32.mrf.mxu0
    %v511 = vadd.f32 %v297, %v510
    %512 = vmatmul.bf16.gmra.mxu0 %v78
    %v513 = vpop.f32.mrf.mxu0
    %v514 = vadd.f32 %v297, %v513
    %v515 = vpop.f32.mrf.mxu0
    %v516 = vadd.f32 %v297, %v515
    %517 = vmatmul.bf16.gmra.mxu0 %v79
    %v518 = vpop.f32.mrf.mxu0
    %v519 = vadd.f32 %v297, %v518
    %v520 = vpop.f32.mrf.mxu0
    %v521 = vadd.f32 %v297, %v520
    %522 = vmatmul.bf16.gmra.mxu0 %v80
    %v523 = vpop.f32.mrf.mxu0
    %v524 = vadd.f32 %v297, %v523
    %v525 = vpop.f32.mrf.mxu0
    %v526 = vadd.f32 %v297, %v525
    %527 = vmatmul.bf16.gmra.mxu0 %v81
    %v528 = vpop.f32.mrf.mxu0
    %v529 = vadd.f32 %v297, %v528
    %v530 = vpop.f32.mrf.mxu0
    %v531 = vadd.f32 %v297, %v530
    %532 = vmatmul.bf16.gmra.mxu0 %v82
    %v533 = vpop.f32.mrf.mxu0
    %v534 = vadd.f32 %v297, %v533
    %v535 = vpop.f32.mrf.mxu0
    %v536 = vadd.f32 %v297, %v535
    %537 = vmatmul.bf16.gmra.mxu0 %v83
    %v538 = vpop.f32.mrf.mxu0
    %v539 = vadd.f32 %v297, %v538
    %v540 = vpop.f32.mrf.mxu0
    %v541 = vadd.f32 %v297, %v540
    %542 = vmatmul.bf16.gmra.mxu0 %v84
    %v543 = vpop.f32.mrf.mxu0
    %v544 = vadd.f32 %v297, %v543
    %v545 = vpop.f32.mrf.mxu0
    %v546 = vadd.f32 %v297, %v545
    %547 = vmatmul.bf16.gmra.mxu0 %v85
    %v548 = vpop.f32.mrf.mxu0
    %v549 = vadd.f32 %v297, %v548
    %v550 = vpop.f32.mrf.mxu0
    %v551 = vadd.f32 %v297, %v550
    %552 = vmatmul.bf16.gmra.mxu0 %v86
    %v553 = vpop.f32.mrf.mxu0
    %v554 = vadd.f32 %v297, %v553
    %v555 = vpop.f32.mrf.mxu0
    %v556 = vadd.f32 %v297, %v555
    %557 = vdwg.mxu0
    %v558 = vsub.f32 0.0, %v390
    %v559 = vsub.f32 0.0, %v392
    %v560 = vsub.f32 0.0, %v395
    %v561 = vsub.f32 0.0, %v397
    %v562 = vsub.f32 0.0, %v400
    %v563 = vsub.f32 0.0, %v402
    %v564 = vsub.f32 0.0, %v405
    %v565 = vsub.f32 0.0, %v407
    %v566 = vsub.f32 0.0, %v410
    %v567 = vsub.f32 0.0, %v412
    %v568 = vsub.f32 0.0, %v415
    %v569 = vsub.f32 0.0, %v417
    %v570 = vsub.f32 0.0, %v420
    %v571 = vsub.f32 0.0, %v422
    %v572 = vsub.f32 0.0, %v425
    %v573 = vsub.f32 0.0, %v427
    %v574 = vsub.f32 0.0, %v430
    %v575 = vsub.f32 0.0, %v432
    %v576 = vsub.f32 0.0, %v435
    %v577 = vsub.f32 0.0, %v437
    %v578 = vsub.f32 0.0, %v440
    %v579 = vsub.f32 0.0, %v442
    %v580 = vsub.f32 0.0, %v445
    %v581 = vsub.f32 0.0, %v447
    %v582 = vsub.f32 0.0, %v450
    %v583 = vsub.f32 0.0, %v452
    %v584 = vsub.f32 0.0, %v455
    %v585 = vsub.f32 0.0, %v457
    %v586 = vsub.f32 0.0, %v460
    %v587 = vsub.f32 0.0, %v462
    %v588 = vsub.f32 0.0, %v465
    %v589 = vsub.f32 0.0, %v467
    %v590 = vmul.f32 %v558, 1.442695
    %v591 = vpow.pop %v590
    %v592 = vmul.f32 %v559, 1.442695
    %v593 = vpow.pop %v592
    %v594 = vmul.f32 %v560, 1.442695
    %v595 = vpow.pop %v594
    %v596 = vmul.f32 %v561, 1.442695
    %v597 = vpow.pop %v596
    %v598 = vmul.f32 %v562, 1.442695
    %v599 = vpow.pop %v598
    %v600 = vmul.f32 %v563, 1.442695
    %v601 = vpow.pop %v600
    %v602 = vmul.f32 %v564, 1.442695
    %v603 = vpow.pop %v602
    %v604 = vmul.f32 %v565, 1.442695
    %v605 = vpow.pop %v604
    %v606 = vmul.f32 %v566, 1.442695
    %v607 = vpow.pop %v606
    %v608 = vmul.f32 %v567, 1.442695
    %v609 = vpow.pop %v608
    %v610 = vmul.f32 %v568, 1.442695
    %v611 = vpow.pop %v610
    %v612 = vmul.f32 %v569, 1.442695
    %v613 = vpow.pop %v612
    %v614 = vmul.f32 %v570, 1.442695
    %v615 = vpow.pop %v614
    %v616 = vmul.f32 %v571, 1.442695
    %v617 = vpow.pop %v616
    %v618 = vmul.f32 %v572, 1.442695
    %v619 = vpow.pop %v618
    %v620 = vmul.f32 %v573, 1.442695
    %v621 = vpow.pop %v620
    %v622 = vmul.f32 %v574, 1.442695
    %v623 = vpow.pop %v622
    %v624 = vmul.f32 %v575, 1.442695
    %v625 = vpow.pop %v624
    %v626 = vmul.f32 %v576, 1.442695
    %v627 = vpow.pop %v626
    %v628 = vmul.f32 %v577, 1.442695
    %v629 = vpow.pop %v628
    %v630 = vmul.f32 %v578, 1.442695
    %v631 = vpow.pop %v630
    %v632 = vmul.f32 %v579, 1.442695
    %v633 = vpow.pop %v632
    %v634 = vmul.f32 %v580, 1.442695
    %v635 = vpow.pop %v634
    %v636 = vmul.f32 %v581, 1.442695
    %v637 = vpow.pop %v636
    %v638 = vmul.f32 %v582, 1.442695
    %v639 = vpow.pop %v638
    %v640 = vmul.f32 %v583, 1.442695
    %v641 = vpow.pop %v640
    %v642 = vmul.f32 %v584, 1.442695
    %v643 = vpow.pop %v642
    %v644 = vmul.f32 %v585, 1.442695
    %v645 = vpow.pop %v644
    %v646 = vmul.f32 %v586, 1.442695
    %v647 = vpow.pop %v646
    %v648 = vmul.f32 %v587, 1.442695
    %v649 = vpow.pop %v648
    %v650 = vmul.f32 %v588, 1.442695
    %v651 = vpow.pop %v650
    %v652 = vmul.f32 %v589, 1.442695
    %v653 = vpow.pop %v652
    %v654 = vadd.f32 %v591, 1.0
    %v655 = vadd.f32 %v593, 1.0
    %v656 = vadd.f32 %v595, 1.0
    %v657 = vadd.f32 %v597, 1.0
    %v658 = vadd.f32 %v599, 1.0
    %v659 = vadd.f32 %v601, 1.0
    %v660 = vadd.f32 %v603, 1.0
    %v661 = vadd.f32 %v605, 1.0
    %v662 = vadd.f32 %v607, 1.0
    %v663 = vadd.f32 %v609, 1.0
    %v664 = vadd.f32 %v611, 1.0
    %v665 = vadd.f32 %v613, 1.0
    %v666 = vadd.f32 %v615, 1.0
    %v667 = vadd.f32 %v617, 1.0
    %v668 = vadd.f32 %v619, 1.0
    %v669 = vadd.f32 %v621, 1.0
    %v670 = vadd.f32 %v623, 1.0
    %v671 = vadd.f32 %v625, 1.0
    %v672 = vadd.f32 %v627, 1.0
    %v673 = vadd.f32 %v629, 1.0
    %v674 = vadd.f32 %v631, 1.0
    %v675 = vadd.f32 %v633, 1.0
    %v676 = vadd.f32 %v635, 1.0
    %v677 = vadd.f32 %v637, 1.0
    %v678 = vadd.f32 %v639, 1.0
    %v679 = vadd.f32 %v641, 1.0
    %v680 = vadd.f32 %v643, 1.0
    %v681 = vadd.f32 %v645, 1.0
    %v682 = vadd.f32 %v647, 1.0
    %v683 = vadd.f32 %v649, 1.0
    %v684 = vadd.f32 %v651, 1.0
    %v685 = vadd.f32 %v653, 1.0
    %v686 = vrcp.pop %v654
    %v687 = vrcp.pop %v655
    %v688 = vrcp.pop %v656
    %v689 = vrcp.pop %v657
    %v690 = vrcp.pop %v658
    %v691 = vrcp.pop %v659
    %v692 = vrcp.pop %v660
    %v693 = vrcp.pop %v661
    %v694 = vrcp.pop %v662
    %v695 = vrcp.pop %v663
    %v696 = vrcp.pop %v664
    %v697 = vrcp.pop %v665
    %v698 = vrcp.pop %v666
    %v699 = vrcp.pop %v667
    %v700 = vrcp.pop %v668
    %v701 = vrcp.pop %v669
    %v702 = vrcp.pop %v670
    %v703 = vrcp.pop %v671
    %v704 = vrcp.pop %v672
    %v705 = vrcp.pop %v673
    %v706 = vrcp.pop %v674
    %v707 = vrcp.pop %v675
    %v708 = vrcp.pop %v676
    %v709 = vrcp.pop %v677
    %v710 = vrcp.pop %v678
    %v711 = vrcp.pop %v679
    %v712 = vrcp.pop %v680
    %v713 = vrcp.pop %v681
    %v714 = vrcp.pop %v682
    %v715 = vrcp.pop %v683
    %v716 = vrcp.pop %v684
    %v717 = vrcp.pop %v685
    %v718 = vmul.f32 %v390, %v686
    %v719 = vmul.f32 %v392, %v687
    %v720 = vmul.f32 %v395, %v688
    %v721 = vmul.f32 %v397, %v689
    %v722 = vmul.f32 %v400, %v690
    %v723 = vmul.f32 %v402, %v691
    %v724 = vmul.f32 %v405, %v692
    %v725 = vmul.f32 %v407, %v693
    %v726 = vmul.f32 %v410, %v694
    %v727 = vmul.f32 %v412, %v695
    %v728 = vmul.f32 %v415, %v696
    %v729 = vmul.f32 %v417, %v697
    %v730 = vmul.f32 %v420, %v698
    %v731 = vmul.f32 %v422, %v699
    %v732 = vmul.f32 %v425, %v700
    %v733 = vmul.f32 %v427, %v701
    %v734 = vmul.f32 %v430, %v702
    %v735 = vmul.f32 %v432, %v703
    %v736 = vmul.f32 %v435, %v704
    %v737 = vmul.f32 %v437, %v705
    %v738 = vmul.f32 %v440, %v706
    %v739 = vmul.f32 %v442, %v707
    %v740 = vmul.f32 %v445, %v708
    %v741 = vmul.f32 %v447, %v709
    %v742 = vmul.f32 %v450, %v710
    %v743 = vmul.f32 %v452, %v711
    %v744 = vmul.f32 %v455, %v712
    %v745 = vmul.f32 %v457, %v713
    %v746 = vmul.f32 %v460, %v714
    %v747 = vmul.f32 %v462, %v715
    %v748 = vmul.f32 %v465, %v716
    %v749 = vmul.f32 %v467, %v717
    %750 = vst [vmem:[%s5] sm:$0xff] %v718
    %751 = vst [vmem:[%s5 + $0x8] sm:$0xff] %v719
    %752 = vst [vmem:[%s5 + $0x10] sm:$0xff] %v720
    %753 = vst [vmem:[%s5 + $0x18] sm:$0xff] %v721
    %754 = vst [vmem:[%s5 + $0x20] sm:$0xff] %v722
    %755 = vst [vmem:[%s5 + $0x28] sm:$0xff] %v723
    %756 = vst [vmem:[%s5 + $0x30] sm:$0xff] %v724
    %757 = vst [vmem:[%s5 + $0x38] sm:$0xff] %v725
    %758 = vst [vmem:[%s5 + $0x40] sm:$0xff] %v726
    %759 = vst [vmem:[%s5 + $0x48] sm:$0xff] %v727
    %760 = vst [vmem:[%s5 + $0x50] sm:$0xff] %v728
    %761 = vst [vmem:[%s5 + $0x58] sm:$0xff] %v729
    %762 = vst [vmem:[%s5 + $0x60] sm:$0xff] %v730
    %763 = vst [vmem:[%s5 + $0x68] sm:$0xff] %v731
    %764 = vst [vmem:[%s5 + $0x70] sm:$0xff] %v732
    %765 = vst [vmem:[%s5 + $0x78] sm:$0xff] %v733
    %766 = vst [vmem:[%s5 + $0x80] sm:$0xff] %v734
    %767 = vst [vmem:[%s5 + $0x88] sm:$0xff] %v735
    %768 = vst [vmem:[%s5 + $0x90] sm:$0xff] %v736
    %769 = vst [vmem:[%s5 + $0x98] sm:$0xff] %v737
    %770 = vst [vmem:[%s5 + $0xa0] sm:$0xff] %v738
    %771 = vst [vmem:[%s5 + $0xa8] sm:$0xff] %v739
    %772 = vst [vmem:[%s5 + $0xb0] sm:$0xff] %v740
    %773 = vst [vmem:[%s5 + $0xb8] sm:$0xff] %v741
    %774 = vst [vmem:[%s5 + $0xc0] sm:$0xff] %v742
    %775 = vst [vmem:[%s5 + $0xc8] sm:$0xff] %v743
    %776 = vst [vmem:[%s5 + $0xd0] sm:$0xff] %v744
    %777 = vst [vmem:[%s5 + $0xd8] sm:$0xff] %v745
    %778 = vst [vmem:[%s5 + $0xe0] sm:$0xff] %v746
    %779 = vst [vmem:[%s5 + $0xe8] sm:$0xff] %v747
    %780 = vst [vmem:[%s5 + $0xf0] sm:$0xff] %v748
    %781 = vst [vmem:[%s5 + $0xf8] sm:$0xff] %v749
    %v782 = vsub.f32 0.0, %v479
    %v783 = vsub.f32 0.0, %v481
    %v784 = vsub.f32 0.0, %v484
    %v785 = vsub.f32 0.0, %v486
    %v786 = vsub.f32 0.0, %v489
    %v787 = vsub.f32 0.0, %v491
    %v788 = vsub.f32 0.0, %v494
    %v789 = vsub.f32 0.0, %v496
    %v790 = vsub.f32 0.0, %v499
    %v791 = vsub.f32 0.0, %v501
    %v792 = vsub.f32 0.0, %v504
    %v793 = vsub.f32 0.0, %v506
    %v794 = vsub.f32 0.0, %v509
    %v795 = vsub.f32 0.0, %v511
    %v796 = vsub.f32 0.0, %v514
    %v797 = vsub.f32 0.0, %v516
    %v798 = vsub.f32 0.0, %v519
    %v799 = vsub.f32 0.0, %v521
    %v800 = vsub.f32 0.0, %v524
    %v801 = vsub.f32 0.0, %v526
    %v802 = vsub.f32 0.0, %v529
    %v803 = vsub.f32 0.0, %v531
    %v804 = vsub.f32 0.0, %v534
    %v805 = vsub.f32 0.0, %v536
    %v806 = vsub.f32 0.0, %v539
    %v807 = vsub.f32 0.0, %v541
    %v808 = vsub.f32 0.0, %v544
    %v809 = vsub.f32 0.0, %v546
    %v810 = vsub.f32 0.0, %v549
    %v811 = vsub.f32 0.0, %v551
    %v812 = vsub.f32 0.0, %v554
    %v813 = vsub.f32 0.0, %v556
    %v814 = vmul.f32 %v782, 1.442695
    %v815 = vpow.pop %v814
    %v816 = vmul.f32 %v783, 1.442695
    %v817 = vpow.pop %v816
    %v818 = vmul.f32 %v784, 1.442695
    %v819 = vpow.pop %v818
    %v820 = vmul.f32 %v785, 1.442695
    %v821 = vpow.pop %v820
    %v822 = vmul.f32 %v786, 1.442695
    %v823 = vpow.pop %v822
    %v824 = vmul.f32 %v787, 1.442695
    %v825 = vpow.pop %v824
    %v826 = vmul.f32 %v788, 1.442695
    %v827 = vpow.pop %v826
    %v828 = vmul.f32 %v789, 1.442695
    %v829 = vpow.pop %v828
    %v830 = vmul.f32 %v790, 1.442695
    %v831 = vpow.pop %v830
    %v832 = vmul.f32 %v791, 1.442695
    %v833 = vpow.pop %v832
    %v834 = vmul.f32 %v792, 1.442695
    %v835 = vpow.pop %v834
    %v836 = vmul.f32 %v793, 1.442695
    %v837 = vpow.pop %v836
    %v838 = vmul.f32 %v794, 1.442695
    %v839 = vpow.pop %v838
    %v840 = vmul.f32 %v795, 1.442695
    %v841 = vpow.pop %v840
    %v842 = vmul.f32 %v796, 1.442695
    %v843 = vpow.pop %v842
    %v844 = vmul.f32 %v797, 1.442695
    %v845 = vpow.pop %v844
    %v846 = vmul.f32 %v798, 1.442695
    %v847 = vpow.pop %v846
    %v848 = vmul.f32 %v799, 1.442695
    %v849 = vpow.pop %v848
    %v850 = vmul.f32 %v800, 1.442695
    %v851 = vpow.pop %v850
    %v852 = vmul.f32 %v801, 1.442695
    %v853 = vpow.pop %v852
    %v854 = vmul.f32 %v802, 1.442695
    %v855 = vpow.pop %v854
    %v856 = vmul.f32 %v803, 1.442695
    %v857 = vpow.pop %v856
    %v858 = vmul.f32 %v804, 1.442695
    %v859 = vpow.pop %v858
    %v860 = vmul.f32 %v805, 1.442695
    %v861 = vpow.pop %v860
    %v862 = vmul.f32 %v806, 1.442695
    %v863 = vpow.pop %v862
    %v864 = vmul.f32 %v807, 1.442695
    %v865 = vpow.pop %v864
    %v866 = vmul.f32 %v808, 1.442695
    %v867 = vpow.pop %v866
    %v868 = vmul.f32 %v809, 1.442695
    %v869 = vpow.pop %v868
    %v870 = vmul.f32 %v810, 1.442695
    %v871 = vpow.pop %v870
    %v872 = vmul.f32 %v811, 1.442695
    %v873 = vpow.pop %v872
    %v874 = vmul.f32 %v812, 1.442695
    %v875 = vpow.pop %v874
    %v876 = vmul.f32 %v813, 1.442695
    %v877 = vpow.pop %v876
    %v878 = vadd.f32 %v815, 1.0
    %v879 = vadd.f32 %v817, 1.0
    %v880 = vadd.f32 %v819, 1.0
    %v881 = vadd.f32 %v821, 1.0
    %v882 = vadd.f32 %v823, 1.0
    %v883 = vadd.f32 %v825, 1.0
    %v884 = vadd.f32 %v827, 1.0
    %v885 = vadd.f32 %v829, 1.0
    %v886 = vadd.f32 %v831, 1.0
    %v887 = vadd.f32 %v833, 1.0
    %v888 = vadd.f32 %v835, 1.0
    %v889 = vadd.f32 %v837, 1.0
    %v890 = vadd.f32 %v839, 1.0
    %v891 = vadd.f32 %v841, 1.0
    %v892 = vadd.f32 %v843, 1.0
    %v893 = vadd.f32 %v845, 1.0
    %v894 = vadd.f32 %v847, 1.0
    %v895 = vadd.f32 %v849, 1.0
    %v896 = vadd.f32 %v851, 1.0
    %v897 = vadd.f32 %v853, 1.0
    %v898 = vadd.f32 %v855, 1.0
    %v899 = vadd.f32 %v857, 1.0
    %v900 = vadd.f32 %v859, 1.0
    %v901 = vadd.f32 %v861, 1.0
    %v902 = vadd.f32 %v863, 1.0
    %v903 = vadd.f32 %v865, 1.0
    %v904 = vadd.f32 %v867, 1.0
    %v905 = vadd.f32 %v869, 1.0
    %v906 = vadd.f32 %v871, 1.0
    %v907 = vadd.f32 %v873, 1.0
    %v908 = vadd.f32 %v875, 1.0
    %v909 = vadd.f32 %v877, 1.0
    %v910 = vrcp.pop %v878
    %v911 = vrcp.pop %v879
    %v912 = vrcp.pop %v880
    %v913 = vrcp.pop %v881
    %v914 = vrcp.pop %v882
    %v915 = vrcp.pop %v883
    %v916 = vrcp.pop %v884
    %v917 = vrcp.pop %v885
    %v918 = vrcp.pop %v886
    %v919 = vrcp.pop %v887
    %v920 = vrcp.pop %v888
    %v921 = vrcp.pop %v889
    %v922 = vrcp.pop %v890
    %v923 = vrcp.pop %v891
    %v924 = vrcp.pop %v892
    %v925 = vrcp.pop %v893
    %v926 = vrcp.pop %v894
    %v927 = vrcp.pop %v895
    %v928 = vrcp.pop %v896
    %v929 = vrcp.pop %v897
    %v930 = vrcp.pop %v898
    %v931 = vrcp.pop %v899
    %v932 = vrcp.pop %v900
    %v933 = vrcp.pop %v901
    %v934 = vrcp.pop %v902
    %v935 = vrcp.pop %v903
    %v936 = vrcp.pop %v904
    %v937 = vrcp.pop %v905
    %v938 = vrcp.pop %v906
    %v939 = vrcp.pop %v907
    %v940 = vrcp.pop %v908
    %v941 = vrcp.pop %v909
    %v942 = vmul.f32 %v479, %v910
    %v943 = vmul.f32 %v481, %v911
    %v944 = vmul.f32 %v484, %v912
    %v945 = vmul.f32 %v486, %v913
    %v946 = vmul.f32 %v489, %v914
    %v947 = vmul.f32 %v491, %v915
    %v948 = vmul.f32 %v494, %v916
    %v949 = vmul.f32 %v496, %v917
    %v950 = vmul.f32 %v499, %v918
    %v951 = vmul.f32 %v501, %v919
    %v952 = vmul.f32 %v504, %v920
    %v953 = vmul.f32 %v506, %v921
    %v954 = vmul.f32 %v509, %v922
    %v955 = vmul.f32 %v511, %v923
    %v956 = vmul.f32 %v514, %v924
    %v957 = vmul.f32 %v516, %v925
    %v958 = vmul.f32 %v519, %v926
    %v959 = vmul.f32 %v521, %v927
    %v960 = vmul.f32 %v524, %v928
    %v961 = vmul.f32 %v526, %v929
    %v962 = vmul.f32 %v529, %v930
    %v963 = vmul.f32 %v531, %v931
    %v964 = vmul.f32 %v534, %v932
    %v965 = vmul.f32 %v536, %v933
    %v966 = vmul.f32 %v539, %v934
    %v967 = vmul.f32 %v541, %v935
    %v968 = vmul.f32 %v544, %v936
    %v969 = vmul.f32 %v546, %v937
    %v970 = vmul.f32 %v549, %v938
    %v971 = vmul.f32 %v551, %v939
    %v972 = vmul.f32 %v554, %v940
    %v973 = vmul.f32 %v556, %v941
    %v974 = vmul.f32 %v942, %v199
    %v975 = vmul.f32 %v943, %v201
    %v976 = vmul.f32 %v944, %v204
    %v977 = vmul.f32 %v945, %v206
    %v978 = vmul.f32 %v946, %v209
    %v979 = vmul.f32 %v947, %v211
    %v980 = vmul.f32 %v948, %v214
    %v981 = vmul.f32 %v949, %v216
    %v982 = vmul.f32 %v950, %v219
    %v983 = vmul.f32 %v951, %v221
    %v984 = vmul.f32 %v952, %v224
    %v985 = vmul.f32 %v953, %v226
    %v986 = vmul.f32 %v954, %v229
    %v987 = vmul.f32 %v955, %v231
    %v988 = vmul.f32 %v956, %v234
    %v989 = vmul.f32 %v957, %v236
    %v990 = vmul.f32 %v958, %v239
    %v991 = vmul.f32 %v959, %v241
    %v992 = vmul.f32 %v960, %v244
    %v993 = vmul.f32 %v961, %v246
    %v994 = vmul.f32 %v962, %v249
    %v995 = vmul.f32 %v963, %v251
    %v996 = vmul.f32 %v964, %v254
    %v997 = vmul.f32 %v965, %v256
    %v998 = vmul.f32 %v966, %v259
    %v999 = vmul.f32 %v967, %v261
    %v1000 = vmul.f32 %v968, %v264
    %v1001 = vmul.f32 %v969, %v266
    %v1002 = vmul.f32 %v970, %v269
    %v1003 = vmul.f32 %v971, %v271
    %v1004 = vmul.f32 %v972, %v274
    %v1005 = vmul.f32 %v973, %v276
    %v1006 = vpack.c.bf16 %v974, %v974
    %v1007 = vpack.c.bf16 %v975, %v975
    %v1008 = vpack.c.bf16 %v976, %v976
    %v1009 = vpack.c.bf16 %v977, %v977
    %v1010 = vpack.c.bf16 %v978, %v978
    %v1011 = vpack.c.bf16 %v979, %v979
    %v1012 = vpack.c.bf16 %v980, %v980
    %v1013 = vpack.c.bf16 %v981, %v981
    %v1014 = vpack.c.bf16 %v982, %v982
    %v1015 = vpack.c.bf16 %v983, %v983
    %v1016 = vpack.c.bf16 %v984, %v984
    %v1017 = vpack.c.bf16 %v985, %v985
    %v1018 = vpack.c.bf16 %v986, %v986
    %v1019 = vpack.c.bf16 %v987, %v987
    %v1020 = vpack.c.bf16 %v988, %v988
    %v1021 = vpack.c.bf16 %v989, %v989
    %v1022 = vpack.c.bf16 %v990, %v990
    %v1023 = vpack.c.bf16 %v991, %v991
    %v1024 = vpack.c.bf16 %v992, %v992
    %v1025 = vpack.c.bf16 %v993, %v993
    %v1026 = vpack.c.bf16 %v994, %v994
    %v1027 = vpack.c.bf16 %v995, %v995
    %v1028 = vpack.c.bf16 %v996, %v996
    %v1029 = vpack.c.bf16 %v997, %v997
    %v1030 = vpack.c.bf16 %v998, %v998
    %v1031 = vpack.c.bf16 %v999, %v999
    %v1032 = vpack.c.bf16 %v1000, %v1000
    %v1033 = vpack.c.bf16 %v1001, %v1001
    %v1034 = vpack.c.bf16 %v1002, %v1002
    %v1035 = vpack.c.bf16 %v1003, %v1003
    %v1036 = vpack.c.bf16 %v1004, %v1004
    %v1037 = vpack.c.bf16 %v1005, %v1005
    %1038 = vst [vmem:[%s6] sm:$0xf] %v1006
    %1039 = vst [vmem:[%s6 + $0x4] sm:$0xf] %v1007
    %1040 = vst [vmem:[%s6 + $0x8] sm:$0xf] %v1008
    %1041 = vst [vmem:[%s6 + $0xc] sm:$0xf] %v1009
    %1042 = vst [vmem:[%s6 + $0x10] sm:$0xf] %v1010
    %1043 = vst [vmem:[%s6 + $0x14] sm:$0xf] %v1011
    %1044 = vst [vmem:[%s6 + $0x18] sm:$0xf] %v1012
    %1045 = vst [vmem:[%s6 + $0x1c] sm:$0xf] %v1013
    %1046 = vst [vmem:[%s6 + $0x20] sm:$0xf] %v1014
    %1047 = vst [vmem:[%s6 + $0x24] sm:$0xf] %v1015
    %1048 = vst [vmem:[%s6 + $0x28] sm:$0xf] %v1016
    %1049 = vst [vmem:[%s6 + $0x2c] sm:$0xf] %v1017
    %1050 = vst [vmem:[%s6 + $0x30] sm:$0xf] %v1018
    %1051 = vst [vmem:[%s6 + $0x34] sm:$0xf] %v1019
    %1052 = vst [vmem:[%s6 + $0x38] sm:$0xf] %v1020
    %1053 = vst [vmem:[%s6 + $0x3c] sm:$0xf] %v1021
    %1054 = vst [vmem:[%s6 + $0x40] sm:$0xf] %v1022
    %1055 = vst [vmem:[%s6 + $0x44] sm:$0xf] %v1023
    %1056 = vst [vmem:[%s6 + $0x48] sm:$0xf] %v1024
    %1057 = vst [vmem:[%s6 + $0x4c] sm:$0xf] %v1025
    %1058 = vst [vmem:[%s6 + $0x50] sm:$0xf] %v1026
    %1059 = vst [vmem:[%s6 + $0x54] sm:$0xf] %v1027
    %1060 = vst [vmem:[%s6 + $0x58] sm:$0xf] %v1028
    %1061 = vst [vmem:[%s6 + $0x5c] sm:$0xf] %v1029
    %1062 = vst [vmem:[%s6 + $0x60] sm:$0xf] %v1030
    %1063 = vst [vmem:[%s6 + $0x64] sm:$0xf] %v1031
    %1064 = vst [vmem:[%s6 + $0x68] sm:$0xf] %v1032
    %1065 = vst [vmem:[%s6 + $0x6c] sm:$0xf] %v1033
    %1066 = vst [vmem:[%s6 + $0x70] sm:$0xf] %v1034
    %1067 = vst [vmem:[%s6 + $0x74] sm:$0xf] %v1035
    %1068 = vst [vmem:[%s6 + $0x78] sm:$0xf] %v1036
    %1069 = vst [vmem:[%s6 + $0x7c] sm:$0xf] %v1037
    // Predicated region
    $region26: #{interaction_block_forward.3} parent=1 // pred_check
      _
    $region27: #{interaction_block_forward.3} parent=1 // pred_check_branch
      %1071 = sbr.rel (0) target = $region29
    $region28: #{interaction_block_forward.3} parent=1 // pred_region
      _
    $region29: #{interaction_block_forward.3} parent=1 // pred_fallthru
      _
    // Predicated region
    $region30: #{interaction_block_forward.3} parent=1 // pred_check
      _
    $region31: #{interaction_block_forward.3} parent=1 // pred_check_branch
      %1073 = sbr.rel (0) target = $region33
    $region32: #{interaction_block_forward.3} parent=1 // pred_region
      _
    $region33: #{interaction_block_forward.3} parent=1 // pred_fallthru
      _
    // Predicated region
    $region34: #{interaction_block_forward.3} parent=1 // pred_check
      _
    $region35: #{interaction_block_forward.3} parent=1 // pred_check_branch
      %1075 = sbr.rel (0) target = $region37
    $region36: #{interaction_block_forward.3} parent=1 // pred_region
      _
    $region37: #{interaction_block_forward.3} parent=1 // pred_fallthru
      _
    // Predicated region
    $region38: #{interaction_block_forward.3} parent=1 // pred_check
      _
    $region39: #{interaction_block_forward.3} parent=1 // pred_check_branch
      %1077 = sbr.rel (0) target = $region41
    $region40: #{interaction_block_forward.3} parent=1 // pred_region
      _
    $region41: #{interaction_block_forward.3} parent=1 // pred_fallthru
      _
    %1078 = vsyncpa [#allocation3], 1

// kernel: interaction_block_forward.5
$region0: #{interaction_block_forward.5}
  #allocation0 [shape = 'u32[]', space=smem, size = 0x4, offset = 0x4, fixed_abs, tag = 'smem constant byte address 0x4 - core index']
  #allocation1 [shape = 'u32[72,128]{1,0:T(1,128)}', space=vmem, size = 0x9000, scoped, tag = 'internal scratch']
  %s0 = inlined_call_operand.vmem [shape: f32[256,128], index: 0, kind: input, shape index: {}]
  %s1 = inlined_call_operand.vmem [shape: f32[256,128], index: 1, kind: input, shape index: {}]
  %s2 = inlined_call_operand.vmem [shape: f32[256,128], index: 2, kind: input, shape index: {}]
  %s3 = inlined_call_operand.vmem [shape: bf16[7,128,128], index: 3, kind: input, shape index: {}]
  %s4 = inlined_call_operand.vmem [shape: f32[7,1,128], index: 4, kind: input, shape index: {}]
  %s5 = inlined_call_operand.hbm [shape: f32[256,128], index: 5, kind: output, shape index: {}]
  %s6 = sld [smem:[#allocation0]]
  $region30: #{interaction_block_forward.5} parent=0
    _
  %s8 = ssub.s32 1, %s6
  %s9 = scalar_select 0, %s8, %s6
  $region1: #{interaction_block_forward.5} parent=0
    #allocation2 [shape = 'u8[131072]{0}', space=vmem, size = 0x20000, scoped, tag = 'output window, operand 0, single buffered']
    #allocation3 [shape = 's32[1]{0}', space=sflag, size = 0x4, scoped, tag = 'scoped memory for interaction_block_forward.5']
    %10 = vsyncpa [#allocation3], 0
    // Predicated region
    $region2: #{interaction_block_forward.5} parent=1 // pred_check
      _
    $region3: #{interaction_block_forward.5} parent=1 // pred_check_branch
      %12 = sbr.rel (0) target = $region5
    $region4: #{interaction_block_forward.5} parent=1 // pred_region
      _
    $region5: #{interaction_block_forward.5} parent=1 // pred_fallthru
      _
    // Predicated region
    $region6: #{interaction_block_forward.5} parent=1 // pred_check
      _
    $region7: #{interaction_block_forward.5} parent=1 // pred_check_branch
      %14 = sbr.rel (0) target = $region9
    $region8: #{interaction_block_forward.5} parent=1 // pred_region
      _
    $region9: #{interaction_block_forward.5} parent=1 // pred_fallthru
      _
    // Predicated region
    $region10: #{interaction_block_forward.5} parent=1 // pred_check
      _
    $region11: #{interaction_block_forward.5} parent=1 // pred_check_branch
      %16 = sbr.rel (0) target = $region13
    $region12: #{interaction_block_forward.5} parent=1 // pred_region
      _
    $region13: #{interaction_block_forward.5} parent=1 // pred_fallthru
      _
    // Predicated region
    $region14: #{interaction_block_forward.5} parent=1 // pred_check
      _
    $region15: #{interaction_block_forward.5} parent=1 // pred_check_branch
      %18 = sbr.rel (0) target = $region17
    $region16: #{interaction_block_forward.5} parent=1 // pred_region
      _
    $region17: #{interaction_block_forward.5} parent=1 // pred_fallthru
      _
    // Predicated region
    $region18: #{interaction_block_forward.5} parent=1 // pred_check
      _
    $region19: #{interaction_block_forward.5} parent=1 // pred_check_branch
      %20 = sbr.rel (0) target = $region21
    $region20: #{interaction_block_forward.5} parent=1 // pred_region
      _
    $region21: #{interaction_block_forward.5} parent=1 // pred_fallthru
      _
    %v21 = vld [vmem:[%s0] sm:$0xff]
    %v22 = vld [vmem:[%s0 + $0x8] sm:$0xff]
    %v23 = vld [vmem:[%s0 + $0x10] sm:$0xff]
    %v24 = vld [vmem:[%s0 + $0x18] sm:$0xff]
    %v25 = vld [vmem:[%s0 + $0x20] sm:$0xff]
    %v26 = vld [vmem:[%s0 + $0x28] sm:$0xff]
    %v27 = vld [vmem:[%s0 + $0x30] sm:$0xff]
    %v28 = vld [vmem:[%s0 + $0x38] sm:$0xff]
    %v29 = vld [vmem:[%s0 + $0x40] sm:$0xff]
    %v30 = vld [vmem:[%s0 + $0x48] sm:$0xff]
    %v31 = vld [vmem:[%s0 + $0x50] sm:$0xff]
    %v32 = vld [vmem:[%s0 + $0x58] sm:$0xff]
    %v33 = vld [vmem:[%s0 + $0x60] sm:$0xff]
    %v34 = vld [vmem:[%s0 + $0x68] sm:$0xff]
    %v35 = vld [vmem:[%s0 + $0x70] sm:$0xff]
    %v36 = vld [vmem:[%s0 + $0x78] sm:$0xff]
    %v37 = vld [vmem:[%s0 + $0x80] sm:$0xff]
    %v38 = vld [vmem:[%s0 + $0x88] sm:$0xff]
    %v39 = vld [vmem:[%s0 + $0x90] sm:$0xff]
    %v40 = vld [vmem:[%s0 + $0x98] sm:$0xff]
    %v41 = vld [vmem:[%s0 + $0xa0] sm:$0xff]
    %v42 = vld [vmem:[%s0 + $0xa8] sm:$0xff]
    %v43 = vld [vmem:[%s0 + $0xb0] sm:$0xff]
    %v44 = vld [vmem:[%s0 + $0xb8] sm:$0xff]
    %v45 = vld [vmem:[%s0 + $0xc0] sm:$0xff]
    %v46 = vld [vmem:[%s0 + $0xc8] sm:$0xff]
    %v47 = vld [vmem:[%s0 + $0xd0] sm:$0xff]
    %v48 = vld [vmem:[%s0 + $0xd8] sm:$0xff]
    %v49 = vld [vmem:[%s0 + $0xe0] sm:$0xff]
    %v50 = vld [vmem:[%s0 + $0xe8] sm:$0xff]
    %v51 = vld [vmem:[%s0 + $0xf0] sm:$0xff]
    %v52 = vld [vmem:[%s0 + $0xf8] sm:$0xff]
    %v53 = vld [vmem:[%s1] sm:$0xff]
    %v54 = vld [vmem:[%s1 + $0x8] sm:$0xff]
    %v55 = vld [vmem:[%s1 + $0x10] sm:$0xff]
    %v56 = vld [vmem:[%s1 + $0x18] sm:$0xff]
    %v57 = vld [vmem:[%s1 + $0x20] sm:$0xff]
    %v58 = vld [vmem:[%s1 + $0x28] sm:$0xff]
    %v59 = vld [vmem:[%s1 + $0x30] sm:$0xff]
    %v60 = vld [vmem:[%s1 + $0x38] sm:$0xff]
    %v61 = vld [vmem:[%s1 + $0x40] sm:$0xff]
    %v62 = vld [vmem:[%s1 + $0x48] sm:$0xff]
    %v63 = vld [vmem:[%s1 + $0x50] sm:$0xff]
    %v64 = vld [vmem:[%s1 + $0x58] sm:$0xff]
    %v65 = vld [vmem:[%s1 + $0x60] sm:$0xff]
    %v66 = vld [vmem:[%s1 + $0x68] sm:$0xff]
    %v67 = vld [vmem:[%s1 + $0x70] sm:$0xff]
    %v68 = vld [vmem:[%s1 + $0x78] sm:$0xff]
    %v69 = vld [vmem:[%s1 + $0x80] sm:$0xff]
    %v70 = vld [vmem:[%s1 + $0x88] sm:$0xff]
    %v71 = vld [vmem:[%s1 + $0x90] sm:$0xff]
    %v72 = vld [vmem:[%s1 + $0x98] sm:$0xff]
    %v73 = vld [vmem:[%s1 + $0xa0] sm:$0xff]
    %v74 = vld [vmem:[%s1 + $0xa8] sm:$0xff]
    %v75 = vld [vmem:[%s1 + $0xb0] sm:$0xff]
    %v76 = vld [vmem:[%s1 + $0xb8] sm:$0xff]
    %v77 = vld [vmem:[%s1 + $0xc0] sm:$0xff]
    %v78 = vld [vmem:[%s1 + $0xc8] sm:$0xff]
    %v79 = vld [vmem:[%s1 + $0xd0] sm:$0xff]
    %v80 = vld [vmem:[%s1 + $0xd8] sm:$0xff]
    %v81 = vld [vmem:[%s1 + $0xe0] sm:$0xff]
    %v82 = vld [vmem:[%s1 + $0xe8] sm:$0xff]
    %v83 = vld [vmem:[%s1 + $0xf0] sm:$0xff]
    %v84 = vld [vmem:[%s1 + $0xf8] sm:$0xff]
    %v85 = vld [vmem:[%s2] sm:$0xff]
    %v86 = vld [vmem:[%s2 + $0x8] sm:$0xff]
    %v87 = vld [vmem:[%s2 + $0x10] sm:$0xff]
    %v88 = vld [vmem:[%s2 + $0x18] sm:$0xff]
    %v89 = vld [vmem:[%s2 + $0x20] sm:$0xff]
    %v90 = vld [vmem:[%s2 + $0x28] sm:$0xff]
    %v91 = vld [vmem:[%s2 + $0x30] sm:$0xff]
    %v92 = vld [vmem:[%s2 + $0x38] sm:$0xff]
    %v93 = vld [vmem:[%s2 + $0x40] sm:$0xff]
    %v94 = vld [vmem:[%s2 + $0x48] sm:$0xff]
    %v95 = vld [vmem:[%s2 + $0x50] sm:$0xff]
    %v96 = vld [vmem:[%s2 + $0x58] sm:$0xff]
    %v97 = vld [vmem:[%s2 + $0x60] sm:$0xff]
    %v98 = vld [vmem:[%s2 + $0x68] sm:$0xff]
    %v99 = vld [vmem:[%s2 + $0x70] sm:$0xff]
    %v100 = vld [vmem:[%s2 + $0x78] sm:$0xff]
    %v101 = vld [vmem:[%s2 + $0x80] sm:$0xff]
    %v102 = vld [vmem:[%s2 + $0x88] sm:$0xff]
    %v103 = vld [vmem:[%s2 + $0x90] sm:$0xff]
    %v104 = vld [vmem:[%s2 + $0x98] sm:$0xff]
    %v105 = vld [vmem:[%s2 + $0xa0] sm:$0xff]
    %v106 = vld [vmem:[%s2 + $0xa8] sm:$0xff]
    %v107 = vld [vmem:[%s2 + $0xb0] sm:$0xff]
    %v108 = vld [vmem:[%s2 + $0xb8] sm:$0xff]
    %v109 = vld [vmem:[%s2 + $0xc0] sm:$0xff]
    %v110 = vld [vmem:[%s2 + $0xc8] sm:$0xff]
    %v111 = vld [vmem:[%s2 + $0xd0] sm:$0xff]
    %v112 = vld [vmem:[%s2 + $0xd8] sm:$0xff]
    %v113 = vld [vmem:[%s2 + $0xe0] sm:$0xff]
    %v114 = vld [vmem:[%s2 + $0xe8] sm:$0xff]
    %v115 = vld [vmem:[%s2 + $0xf0] sm:$0xff]
    %v116 = vld [vmem:[%s2 + $0xf8] sm:$0xff]
    %v117 = vadd.f32 %v53, %v85
    %v118 = vadd.f32 %v54, %v86
    %v119 = vadd.f32 %v55, %v87
    %v120 = vadd.f32 %v56, %v88
    %v121 = vadd.f32 %v57, %v89
    %v122 = vadd.f32 %v58, %v90
    %v123 = vadd.f32 %v59, %v91
    %v124 = vadd.f32 %v60, %v92
    %v125 = vadd.f32 %v61, %v93
    %v126 = vadd.f32 %v62, %v94
    %v127 = vadd.f32 %v63, %v95
    %v128 = vadd.f32 %v64, %v96
    %v129 = vadd.f32 %v65, %v97
    %v130 = vadd.f32 %v66, %v98
    %v131 = vadd.f32 %v67, %v99
    %v132 = vadd.f32 %v68, %v100
    %v133 = vadd.f32 %v69, %v101
    %v134 = vadd.f32 %v70, %v102
    %v135 = vadd.f32 %v71, %v103
    %v136 = vadd.f32 %v72, %v104
    %v137 = vadd.f32 %v73, %v105
    %v138 = vadd.f32 %v74, %v106
    %v139 = vadd.f32 %v75, %v107
    %v140 = vadd.f32 %v76, %v108
    %v141 = vadd.f32 %v77, %v109
    %v142 = vadd.f32 %v78, %v110
    %v143 = vadd.f32 %v79, %v111
    %v144 = vadd.f32 %v80, %v112
    %v145 = vadd.f32 %v81, %v113
    %v146 = vadd.f32 %v82, %v114
    %v147 = vadd.f32 %v83, %v115
    %v148 = vadd.f32 %v84, %v116
    %v149 = vpack.c.bf16 %v118, %v117
    %v150 = vpack.c.bf16 %v120, %v119
    %v151 = vpack.c.bf16 %v122, %v121
    %v152 = vpack.c.bf16 %v124, %v123
    %v153 = vpack.c.bf16 %v126, %v125
    %v154 = vpack.c.bf16 %v128, %v127
    %v155 = vpack.c.bf16 %v130, %v129
    %v156 = vpack.c.bf16 %v132, %v131
    %v157 = vpack.c.bf16 %v134, %v133
    %v158 = vpack.c.bf16 %v136, %v135
    %v159 = vpack.c.bf16 %v138, %v137
    %v160 = vpack.c.bf16 %v140, %v139
    %v161 = vpack.c.bf16 %v142, %v141
    %v162 = vpack.c.bf16 %v144, %v143
    %v163 = vpack.c.bf16 %v146, %v145
    %v164 = vpack.c.bf16 %v148, %v147
    %v165 = vld [vmem:[%s3] sm:$0xf]
    %v166 = vld [vmem:[%s3 + $0x4] sm:$0xf]
    %v167 = vld [vmem:[%s3 + $0x8] sm:$0xf]
    %v168 = vld [vmem:[%s3 + $0xc] sm:$0xf]
    %v169 = vld [vmem:[%s3 + $0x10] sm:$0xf]
    %v170 = vld [vmem:[%s3 + $0x14] sm:$0xf]
    %v171 = vld [vmem:[%s3 + $0x18] sm:$0xf]
    %v172 = vld [vmem:[%s3 + $0x1c] sm:$0xf]
    %v173 = vld [vmem:[%s3 + $0x20] sm:$0xf]
    %v174 = vld [vmem:[%s3 + $0x24] sm:$0xf]
    %v175 = vld [vmem:[%s3 + $0x28] sm:$0xf]
    %v176 = vld [vmem:[%s3 + $0x2c] sm:$0xf]
    %v177 = vld [vmem:[%s3 + $0x30] sm:$0xf]
    %v178 = vld [vmem:[%s3 + $0x34] sm:$0xf]
    %v179 = vld [vmem:[%s3 + $0x38] sm:$0xf]
    %v180 = vld [vmem:[%s3 + $0x3c] sm:$0xf]
    %v181 = vld [vmem:[%s4] sm:$0x1]
    %v183 = vperm.slane %v181, 0
    %v201 = vunpack.c.l.b16 %v165
    %v202 = vunpack.c.l.b16 %v166
    %v203 = vunpack.c.l.b16 %v167
    %v204 = vunpack.c.l.b16 %v168
    %v205 = vunpack.c.l.b16 %v169
    %v206 = vunpack.c.l.b16 %v170
    %v207 = vunpack.c.l.b16 %v171
    %v208 = vunpack.c.l.b16 %v172
    %v209 = vunpack.c.l.b16 %v173
    %v210 = vunpack.c.l.b16 %v174
    %v211 = vunpack.c.l.b16 %v175
    %v212 = vunpack.c.l.b16 %v176
    %v213 = vunpack.c.l.b16 %v177
    %v214 = vunpack.c.l.b16 %v178
    %v215 = vunpack.c.l.b16 %v179
    %v216 = vunpack.c.l.b16 %v180
    %v217 = vpack.c.b16 %v202, %v201
    %v218 = vpack.c.b16 %v204, %v203
    %v219 = vpack.c.b16 %v206, %v205
    %v220 = vpack.c.b16 %v208, %v207
    %v221 = vpack.c.b16 %v210, %v209
    %v222 = vpack.c.b16 %v212, %v211
    %v223 = vpack.c.b16 %v214, %v213
    %v224 = vpack.c.b16 %v216, %v215
    %233 = vmatpush.bf16.msra.mxu0 %v224
    %234 = vmatpush.bf16.msra.mxu0 %v223
    %235 = vmatpush.bf16.msra.mxu0 %v222
    %236 = vmatpush.bf16.msra.mxu0 %v221
    %237 = vmatpush.bf16.msra.mxu0 %v220
    %238 = vmatpush.bf16.msra.mxu0 %v219
    %239 = vmatpush.bf16.msra.mxu0 %v218
    %240 = vmatpush.bf16.msra.mxu0 %v217
    %241 = vmatmul.bf16.gmra.mxu0 %v149
    %v242 = vpop.f32.mrf.mxu0
    %v243 = vadd.f32 %v183, %v242
    %v244 = vpop.f32.mrf.mxu0
    %v245 = vadd.f32 %v183, %v244
    %246 = vmatmul.bf16.gmra.mxu0 %v150
    %v247 = vpop.f32.mrf.mxu0
    %v248 = vadd.f32 %v183, %v247
    %v249 = vpop.f32.mrf.mxu0
    %v250 = vadd.f32 %v183, %v249
    %251 = vmatmul.bf16.gmra.mxu0 %v151
    %v252 = vpop.f32.mrf.mxu0
    %v253 = vadd.f32 %v183, %v252
    %v254 = vpop.f32.mrf.mxu0
    %v255 = vadd.f32 %v183, %v254
    %256 = vmatmul.bf16.gmra.mxu0 %v152
    %v257 = vpop.f32.mrf.mxu0
    %v258 = vadd.f32 %v183, %v257
    %v259 = vpop.f32.mrf.mxu0
    %v260 = vadd.f32 %v183, %v259
    %261 = vmatmul.bf16.gmra.mxu0 %v153
    %v262 = vpop.f32.mrf.mxu0
    %v263 = vadd.f32 %v183, %v262
    %v264 = vpop.f32.mrf.mxu0
    %v265 = vadd.f32 %v183, %v264
    %266 = vmatmul.bf16.gmra.mxu0 %v154
    %v267 = vpop.f32.mrf.mxu0
    %v268 = vadd.f32 %v183, %v267
    %v269 = vpop.f32.mrf.mxu0
    %v270 = vadd.f32 %v183, %v269
    %271 = vmatmul.bf16.gmra.mxu0 %v155
    %v272 = vpop.f32.mrf.mxu0
    %v273 = vadd.f32 %v183, %v272
    %v274 = vpop.f32.mrf.mxu0
    %v275 = vadd.f32 %v183, %v274
    %276 = vmatmul.bf16.gmra.mxu0 %v156
    %v277 = vpop.f32.mrf.mxu0
    %v278 = vadd.f32 %v183, %v277
    %v279 = vpop.f32.mrf.mxu0
    %v280 = vadd.f32 %v183, %v279
    %281 = vmatmul.bf16.gmra.mxu0 %v157
    %v282 = vpop.f32.mrf.mxu0
    %v283 = vadd.f32 %v183, %v282
    %v284 = vpop.f32.mrf.mxu0
    %v285 = vadd.f32 %v183, %v284
    %286 = vmatmul.bf16.gmra.mxu0 %v158
    %v287 = vpop.f32.mrf.mxu0
    %v288 = vadd.f32 %v183, %v287
    %v289 = vpop.f32.mrf.mxu0
    %v290 = vadd.f32 %v183, %v289
    %291 = vmatmul.bf16.gmra.mxu0 %v159
    %v292 = vpop.f32.mrf.mxu0
    %v293 = vadd.f32 %v183, %v292
    %v294 = vpop.f32.mrf.mxu0
    %v295 = vadd.f32 %v183, %v294
    %296 = vmatmul.bf16.gmra.mxu0 %v160
    %v297 = vpop.f32.mrf.mxu0
    %v298 = vadd.f32 %v183, %v297
    %v299 = vpop.f32.mrf.mxu0
    %v300 = vadd.f32 %v183, %v299
    %301 = vmatmul.bf16.gmra.mxu0 %v161
    %v302 = vpop.f32.mrf.mxu0
    %v303 = vadd.f32 %v183, %v302
    %v304 = vpop.f32.mrf.mxu0
    %v305 = vadd.f32 %v183, %v304
    %306 = vmatmul.bf16.gmra.mxu0 %v162
    %v307 = vpop.f32.mrf.mxu0
    %v308 = vadd.f32 %v183, %v307
    %v309 = vpop.f32.mrf.mxu0
    %v310 = vadd.f32 %v183, %v309
    %311 = vmatmul.bf16.gmra.mxu0 %v163
    %v312 = vpop.f32.mrf.mxu0
    %v313 = vadd.f32 %v183, %v312
    %v314 = vpop.f32.mrf.mxu0
    %v315 = vadd.f32 %v183, %v314
    %316 = vmatmul.bf16.gmra.mxu0 %v164
    %v317 = vpop.f32.mrf.mxu0
    %v318 = vadd.f32 %v183, %v317
    %v319 = vpop.f32.mrf.mxu0
    %v320 = vadd.f32 %v183, %v319
    %321 = vdwg.mxu0
    %v322 = vsub.f32 0.0, %v243
    %v323 = vsub.f32 0.0, %v245
    %v324 = vsub.f32 0.0, %v248
    %v325 = vsub.f32 0.0, %v250
    %v326 = vsub.f32 0.0, %v253
    %v327 = vsub.f32 0.0, %v255
    %v328 = vsub.f32 0.0, %v258
    %v329 = vsub.f32 0.0, %v260
    %v330 = vsub.f32 0.0, %v263
    %v331 = vsub.f32 0.0, %v265
    %v332 = vsub.f32 0.0, %v268
    %v333 = vsub.f32 0.0, %v270
    %v334 = vsub.f32 0.0, %v273
    %v335 = vsub.f32 0.0, %v275
    %v336 = vsub.f32 0.0, %v278
    %v337 = vsub.f32 0.0, %v280
    %v338 = vsub.f32 0.0, %v283
    %v339 = vsub.f32 0.0, %v285
    %v340 = vsub.f32 0.0, %v288
    %v341 = vsub.f32 0.0, %v290
    %v342 = vsub.f32 0.0, %v293
    %v343 = vsub.f32 0.0, %v295
    %v344 = vsub.f32 0.0, %v298
    %v345 = vsub.f32 0.0, %v300
    %v346 = vsub.f32 0.0, %v303
    %v347 = vsub.f32 0.0, %v305
    %v348 = vsub.f32 0.0, %v308
    %v349 = vsub.f32 0.0, %v310
    %v350 = vsub.f32 0.0, %v313
    %v351 = vsub.f32 0.0, %v315
    %v352 = vsub.f32 0.0, %v318
    %v353 = vsub.f32 0.0, %v320
    %v354 = vmul.f32 %v322, 1.442695
    %v355 = vpow.pop %v354
    %v356 = vmul.f32 %v323, 1.442695
    %v357 = vpow.pop %v356
    %v358 = vmul.f32 %v324, 1.442695
    %v359 = vpow.pop %v358
    %v360 = vmul.f32 %v325, 1.442695
    %v361 = vpow.pop %v360
    %v362 = vmul.f32 %v326, 1.442695
    %v363 = vpow.pop %v362
    %v364 = vmul.f32 %v327, 1.442695
    %v365 = vpow.pop %v364
    %v366 = vmul.f32 %v328, 1.442695
    %v367 = vpow.pop %v366
    %v368 = vmul.f32 %v329, 1.442695
    %v369 = vpow.pop %v368
    %v370 = vmul.f32 %v330, 1.442695
    %v371 = vpow.pop %v370
    %v372 = vmul.f32 %v331, 1.442695
    %v373 = vpow.pop %v372
    %v374 = vmul.f32 %v332, 1.442695
    %v375 = vpow.pop %v374
    %v376 = vmul.f32 %v333, 1.442695
    %v377 = vpow.pop %v376
    %v378 = vmul.f32 %v334, 1.442695
    %v379 = vpow.pop %v378
    %v380 = vmul.f32 %v335, 1.442695
    %v381 = vpow.pop %v380
    %v382 = vmul.f32 %v336, 1.442695
    %v383 = vpow.pop %v382
    %v384 = vmul.f32 %v337, 1.442695
    %v385 = vpow.pop %v384
    %v386 = vmul.f32 %v338, 1.442695
    %v387 = vpow.pop %v386
    %v388 = vmul.f32 %v339, 1.442695
    %v389 = vpow.pop %v388
    %v390 = vmul.f32 %v340, 1.442695
    %v391 = vpow.pop %v390
    %v392 = vmul.f32 %v341, 1.442695
    %v393 = vpow.pop %v392
    %v394 = vmul.f32 %v342, 1.442695
    %v395 = vpow.pop %v394
    %v396 = vmul.f32 %v343, 1.442695
    %v397 = vpow.pop %v396
    %v398 = vmul.f32 %v344, 1.442695
    %v399 = vpow.pop %v398
    %v400 = vmul.f32 %v345, 1.442695
    %v401 = vpow.pop %v400
    %v402 = vmul.f32 %v346, 1.442695
    %v403 = vpow.pop %v402
    %v404 = vmul.f32 %v347, 1.442695
    %v405 = vpow.pop %v404
    %v406 = vmul.f32 %v348, 1.442695
    %v407 = vpow.pop %v406
    %v408 = vmul.f32 %v349, 1.442695
    %v409 = vpow.pop %v408
    %v410 = vmul.f32 %v350, 1.442695
    %v411 = vpow.pop %v410
    %v412 = vmul.f32 %v351, 1.442695
    %v413 = vpow.pop %v412
    %v414 = vmul.f32 %v352, 1.442695
    %v415 = vpow.pop %v414
    %v416 = vmul.f32 %v353, 1.442695
    %v417 = vpow.pop %v416
    %v418 = vadd.f32 %v355, 1.0
    %v419 = vadd.f32 %v357, 1.0
    %v420 = vadd.f32 %v359, 1.0
    %v421 = vadd.f32 %v361, 1.0
    %v422 = vadd.f32 %v363, 1.0
    %v423 = vadd.f32 %v365, 1.0
    %v424 = vadd.f32 %v367, 1.0
    %v425 = vadd.f32 %v369, 1.0
    %v426 = vadd.f32 %v371, 1.0
    %v427 = vadd.f32 %v373, 1.0
    %v428 = vadd.f32 %v375, 1.0
    %v429 = vadd.f32 %v377, 1.0
    %v430 = vadd.f32 %v379, 1.0
    %v431 = vadd.f32 %v381, 1.0
    %v432 = vadd.f32 %v383, 1.0
    %v433 = vadd.f32 %v385, 1.0
    %v434 = vadd.f32 %v387, 1.0
    %v435 = vadd.f32 %v389, 1.0
    %v436 = vadd.f32 %v391, 1.0
    %v437 = vadd.f32 %v393, 1.0
    %v438 = vadd.f32 %v395, 1.0
    %v439 = vadd.f32 %v397, 1.0
    %v440 = vadd.f32 %v399, 1.0
    %v441 = vadd.f32 %v401, 1.0
    %v442 = vadd.f32 %v403, 1.0
    %v443 = vadd.f32 %v405, 1.0
    %v444 = vadd.f32 %v407, 1.0
    %v445 = vadd.f32 %v409, 1.0
    %v446 = vadd.f32 %v411, 1.0
    %v447 = vadd.f32 %v413, 1.0
    %v448 = vadd.f32 %v415, 1.0
    %v449 = vadd.f32 %v417, 1.0
    %v450 = vrcp.pop %v418
    %v451 = vrcp.pop %v419
    %v452 = vrcp.pop %v420
    %v453 = vrcp.pop %v421
    %v454 = vrcp.pop %v422
    %v455 = vrcp.pop %v423
    %v456 = vrcp.pop %v424
    %v457 = vrcp.pop %v425
    %v458 = vrcp.pop %v426
    %v459 = vrcp.pop %v427
    %v460 = vrcp.pop %v428
    %v461 = vrcp.pop %v429
    %v462 = vrcp.pop %v430
    %v463 = vrcp.pop %v431
    %v464 = vrcp.pop %v432
    %v465 = vrcp.pop %v433
    %v466 = vrcp.pop %v434
    %v467 = vrcp.pop %v435
    %v468 = vrcp.pop %v436
    %v469 = vrcp.pop %v437
    %v470 = vrcp.pop %v438
    %v471 = vrcp.pop %v439
    %v472 = vrcp.pop %v440
    %v473 = vrcp.pop %v441
    %v474 = vrcp.pop %v442
    %v475 = vrcp.pop %v443
    %v476 = vrcp.pop %v444
    %v477 = vrcp.pop %v445
    %v478 = vrcp.pop %v446
    %v479 = vrcp.pop %v447
    %v480 = vrcp.pop %v448
    %v481 = vrcp.pop %v449
    %v482 = vmul.f32 %v243, %v450
    %v483 = vmul.f32 %v245, %v451
    %v484 = vmul.f32 %v248, %v452
    %v485 = vmul.f32 %v250, %v453
    %v486 = vmul.f32 %v253, %v454
    %v487 = vmul.f32 %v255, %v455
    %v488 = vmul.f32 %v258, %v456
    %v489 = vmul.f32 %v260, %v457
    %v490 = vmul.f32 %v263, %v458
    %v491 = vmul.f32 %v265, %v459
    %v492 = vmul.f32 %v268, %v460
    %v493 = vmul.f32 %v270, %v461
    %v494 = vmul.f32 %v273, %v462
    %v495 = vmul.f32 %v275, %v463
    %v496 = vmul.f32 %v278, %v464
    %v497 = vmul.f32 %v280, %v465
    %v498 = vmul.f32 %v283, %v466
    %v499 = vmul.f32 %v285, %v467
    %v500 = vmul.f32 %v288, %v468
    %v501 = vmul.f32 %v290, %v469
    %v502 = vmul.f32 %v293, %v470
    %v503 = vmul.f32 %v295, %v471
    %v504 = vmul.f32 %v298, %v472
    %v505 = vmul.f32 %v300, %v473
    %v506 = vmul.f32 %v303, %v474
    %v507 = vmul.f32 %v305, %v475
    %v508 = vmul.f32 %v308, %v476
    %v509 = vmul.f32 %v310, %v477
    %v510 = vmul.f32 %v313, %v478
    %v511 = vmul.f32 %v315, %v479
    %v512 = vmul.f32 %v318, %v480
    %v513 = vmul.f32 %v320, %v481
    %v514 = vpack.c.bf16 %v483, %v482
    %v515 = vpack.c.bf16 %v485, %v484
    %v516 = vpack.c.bf16 %v487, %v486
    %v517 = vpack.c.bf16 %v489, %v488
    %v518 = vpack.c.bf16 %v491, %v490
    %v519 = vpack.c.bf16 %v493, %v492
    %v520 = vpack.c.bf16 %v495, %v494
    %v521 = vpack.c.bf16 %v497, %v496
    %v522 = vpack.c.bf16 %v499, %v498
    %v523 = vpack.c.bf16 %v501, %v500
    %v524 = vpack.c.bf16 %v503, %v502
    %v525 = vpack.c.bf16 %v505, %v504
    %v526 = vpack.c.bf16 %v507, %v506
    %v527 = vpack.c.bf16 %v509, %v508
    %v528 = vpack.c.bf16 %v511, %v510
    %v529 = vpack.c.bf16 %v513, %v512
    %s530 = scalar_lea.vmem %s3, 64
    %v531 = vld [vmem:[%s530] sm:$0xf]
    %v532 = vld [vmem:[%s530 + $0x4] sm:$0xf]
    %v533 = vld [vmem:[%s530 + $0x8] sm:$0xf]
    %v534 = vld [vmem:[%s530 + $0xc] sm:$0xf]
    %v535 = vld [vmem:[%s530 + $0x10] sm:$0xf]
    %v536 = vld [vmem:[%s530 + $0x14] sm:$0xf]
    %v537 = vld [vmem:[%s530 + $0x18] sm:$0xf]
    %v538 = vld [vmem:[%s530 + $0x1c] sm:$0xf]
    %v539 = vld [vmem:[%s530 + $0x20] sm:$0xf]
    %v540 = vld [vmem:[%s530 + $0x24] sm:$0xf]
    %v541 = vld [vmem:[%s530 + $0x28] sm:$0xf]
    %v542 = vld [vmem:[%s530 + $0x2c] sm:$0xf]
    %v543 = vld [vmem:[%s530 + $0x30] sm:$0xf]
    %v544 = vld [vmem:[%s530 + $0x34] sm:$0xf]
    %v545 = vld [vmem:[%s530 + $0x38] sm:$0xf]
    %v546 = vld [vmem:[%s530 + $0x3c] sm:$0xf]
    %s547 = scalar_lea.vmem %s4, 1
    %v548 = vld [vmem:[%s547] sm:$0x1]
    %v550 = vperm.slane %v548, 0
    %v568 = vunpack.c.l.b16 %v531
    %v569 = vunpack.c.l.b16 %v532
    %v570 = vunpack.c.l.b16 %v533
    %v571 = vunpack.c.l.b16 %v534
    %v572 = vunpack.c.l.b16 %v535
    %v573 = vunpack.c.l.b16 %v536
    %v574 = vunpack.c.l.b16 %v537
    %v575 = vunpack.c.l.b16 %v538
    %v576 = vunpack.c.l.b16 %v539
    %v577 = vunpack.c.l.b16 %v540
    %v578 = vunpack.c.l.b16 %v541
    %v579 = vunpack.c.l.b16 %v542
    %v580 = vunpack.c.l.b16 %v543
    %v581 = vunpack.c.l.b16 %v544
    %v582 = vunpack.c.l.b16 %v545
    %v583 = vunpack.c.l.b16 %v546
    %v584 = vpack.c.b16 %v569, %v568
    %v585 = vpack.c.b16 %v571, %v570
    %v586 = vpack.c.b16 %v573, %v572
    %v587 = vpack.c.b16 %v575, %v574
    %v588 = vpack.c.b16 %v577, %v576
    %v589 = vpack.c.b16 %v579, %v578
    %v590 = vpack.c.b16 %v581, %v580
    %v591 = vpack.c.b16 %v583, %v582
    %600 = vmatpush.bf16.msra.mxu0 %v591
    %601 = vmatpush.bf16.msra.mxu0 %v590
    %602 = vmatpush.bf16.msra.mxu0 %v589
    %603 = vmatpush.bf16.msra.mxu0 %v588
    %604 = vmatpush.bf16.msra.mxu0 %v587
    %605 = vmatpush.bf16.msra.mxu0 %v586
    %606 = vmatpush.bf16.msra.mxu0 %v585
    %607 = vmatpush.bf16.msra.mxu0 %v584
    %608 = vmatmul.bf16.gmra.mxu0 %v514
    %v609 = vpop.f32.mrf.mxu0
    %v610 = vadd.f32 %v550, %v609
    %v611 = vpop.f32.mrf.mxu0
    %v612 = vadd.f32 %v550, %v611
    %613 = vmatmul.bf16.gmra.mxu0 %v515
    %v614 = vpop.f32.mrf.mxu0
    %v615 = vadd.f32 %v550, %v614
    %v616 = vpop.f32.mrf.mxu0
    %v617 = vadd.f32 %v550, %v616
    %618 = vmatmul.bf16.gmra.mxu0 %v516
    %v619 = vpop.f32.mrf.mxu0
    %v620 = vadd.f32 %v550, %v619
    %v621 = vpop.f32.mrf.mxu0
    %v622 = vadd.f32 %v550, %v621
    %623 = vmatmul.bf16.gmra.mxu0 %v517
    %v624 = vpop.f32.mrf.mxu0
    %v625 = vadd.f32 %v550, %v624
    %v626 = vpop.f32.mrf.mxu0
    %v627 = vadd.f32 %v550, %v626
    %628 = vmatmul.bf16.gmra.mxu0 %v518
    %v629 = vpop.f32.mrf.mxu0
    %v630 = vadd.f32 %v550, %v629
    %v631 = vpop.f32.mrf.mxu0
    %v632 = vadd.f32 %v550, %v631
    %633 = vmatmul.bf16.gmra.mxu0 %v519
    %v634 = vpop.f32.mrf.mxu0
    %v635 = vadd.f32 %v550, %v634
    %v636 = vpop.f32.mrf.mxu0
    %v637 = vadd.f32 %v550, %v636
    %638 = vmatmul.bf16.gmra.mxu0 %v520
    %v639 = vpop.f32.mrf.mxu0
    %v640 = vadd.f32 %v550, %v639
    %v641 = vpop.f32.mrf.mxu0
    %v642 = vadd.f32 %v550, %v641
    %643 = vmatmul.bf16.gmra.mxu0 %v521
    %v644 = vpop.f32.mrf.mxu0
    %v645 = vadd.f32 %v550, %v644
    %v646 = vpop.f32.mrf.mxu0
    %v647 = vadd.f32 %v550, %v646
    %648 = vmatmul.bf16.gmra.mxu0 %v522
    %v649 = vpop.f32.mrf.mxu0
    %v650 = vadd.f32 %v550, %v649
    %v651 = vpop.f32.mrf.mxu0
    %v652 = vadd.f32 %v550, %v651
    %653 = vmatmul.bf16.gmra.mxu0 %v523
    %v654 = vpop.f32.mrf.mxu0
    %v655 = vadd.f32 %v550, %v654
    %v656 = vpop.f32.mrf.mxu0
    %v657 = vadd.f32 %v550, %v656
    %658 = vmatmul.bf16.gmra.mxu0 %v524
    %v659 = vpop.f32.mrf.mxu0
    %v660 = vadd.f32 %v550, %v659
    %v661 = vpop.f32.mrf.mxu0
    %v662 = vadd.f32 %v550, %v661
    %663 = vmatmul.bf16.gmra.mxu0 %v525
    %v664 = vpop.f32.mrf.mxu0
    %v665 = vadd.f32 %v550, %v664
    %v666 = vpop.f32.mrf.mxu0
    %v667 = vadd.f32 %v550, %v666
    %668 = vmatmul.bf16.gmra.mxu0 %v526
    %v669 = vpop.f32.mrf.mxu0
    %v670 = vadd.f32 %v550, %v669
    %v671 = vpop.f32.mrf.mxu0
    %v672 = vadd.f32 %v550, %v671
    %673 = vmatmul.bf16.gmra.mxu0 %v527
    %v674 = vpop.f32.mrf.mxu0
    %v675 = vadd.f32 %v550, %v674
    %v676 = vpop.f32.mrf.mxu0
    %v677 = vadd.f32 %v550, %v676
    %678 = vmatmul.bf16.gmra.mxu0 %v528
    %v679 = vpop.f32.mrf.mxu0
    %v680 = vadd.f32 %v550, %v679
    %v681 = vpop.f32.mrf.mxu0
    %v682 = vadd.f32 %v550, %v681
    %683 = vmatmul.bf16.gmra.mxu0 %v529
    %v684 = vpop.f32.mrf.mxu0
    %v685 = vadd.f32 %v550, %v684
    %v686 = vpop.f32.mrf.mxu0
    %v687 = vadd.f32 %v550, %v686
    %688 = vdwg.mxu0
    %v689 = vsub.f32 0.0, %v610
    %v690 = vsub.f32 0.0, %v612
    %v691 = vsub.f32 0.0, %v615
    %v692 = vsub.f32 0.0, %v617
    %v693 = vsub.f32 0.0, %v620
    %v694 = vsub.f32 0.0, %v622
    %v695 = vsub.f32 0.0, %v625
    %v696 = vsub.f32 0.0, %v627
    %v697 = vsub.f32 0.0, %v630
    %v698 = vsub.f32 0.0, %v632
    %v699 = vsub.f32 0.0, %v635
    %v700 = vsub.f32 0.0, %v637
    %v701 = vsub.f32 0.0, %v640
    %v702 = vsub.f32 0.0, %v642
    %v703 = vsub.f32 0.0, %v645
    %v704 = vsub.f32 0.0, %v647
    %v705 = vsub.f32 0.0, %v650
    %v706 = vsub.f32 0.0, %v652
    %v707 = vsub.f32 0.0, %v655
    %v708 = vsub.f32 0.0, %v657
    %v709 = vsub.f32 0.0, %v660
    %v710 = vsub.f32 0.0, %v662
    %v711 = vsub.f32 0.0, %v665
    %v712 = vsub.f32 0.0, %v667
    %v713 = vsub.f32 0.0, %v670
    %v714 = vsub.f32 0.0, %v672
    %v715 = vsub.f32 0.0, %v675
    %v716 = vsub.f32 0.0, %v677
    %v717 = vsub.f32 0.0, %v680
    %v718 = vsub.f32 0.0, %v682
    %v719 = vsub.f32 0.0, %v685
    %v720 = vsub.f32 0.0, %v687
    %v721 = vmul.f32 %v689, 1.442695
    %v722 = vpow.pop %v721
    %v723 = vmul.f32 %v690, 1.442695
    %v724 = vpow.pop %v723
    %v725 = vmul.f32 %v691, 1.442695
    %v726 = vpow.pop %v725
    %v727 = vmul.f32 %v692, 1.442695
    %v728 = vpow.pop %v727
    %v729 = vmul.f32 %v693, 1.442695
    %v730 = vpow.pop %v729
    %v731 = vmul.f32 %v694, 1.442695
    %v732 = vpow.pop %v731
    %v733 = vmul.f32 %v695, 1.442695
    %v734 = vpow.pop %v733
    %v735 = vmul.f32 %v696, 1.442695
    %v736 = vpow.pop %v735
    %v737 = vmul.f32 %v697, 1.442695
    %v738 = vpow.pop %v737
    %v739 = vmul.f32 %v698, 1.442695
    %v740 = vpow.pop %v739
    %v741 = vmul.f32 %v699, 1.442695
    %v742 = vpow.pop %v741
    %v743 = vmul.f32 %v700, 1.442695
    %v744 = vpow.pop %v743
    %v745 = vmul.f32 %v701, 1.442695
    %v746 = vpow.pop %v745
    %v747 = vmul.f32 %v702, 1.442695
    %v748 = vpow.pop %v747
    %v749 = vmul.f32 %v703, 1.442695
    %v750 = vpow.pop %v749
    %v751 = vmul.f32 %v704, 1.442695
    %v752 = vpow.pop %v751
    %v753 = vmul.f32 %v705, 1.442695
    %v754 = vpow.pop %v753
    %v755 = vmul.f32 %v706, 1.442695
    %v756 = vpow.pop %v755
    %v757 = vmul.f32 %v707, 1.442695
    %v758 = vpow.pop %v757
    %v759 = vmul.f32 %v708, 1.442695
    %v760 = vpow.pop %v759
    %v761 = vmul.f32 %v709, 1.442695
    %v762 = vpow.pop %v761
    %v763 = vmul.f32 %v710, 1.442695
    %v764 = vpow.pop %v763
    %v765 = vmul.f32 %v711, 1.442695
    %v766 = vpow.pop %v765
    %v767 = vmul.f32 %v712, 1.442695
    %v768 = vpow.pop %v767
    %v769 = vmul.f32 %v713, 1.442695
    %v770 = vpow.pop %v769
    %v771 = vmul.f32 %v714, 1.442695
    %v772 = vpow.pop %v771
    %v773 = vmul.f32 %v715, 1.442695
    %v774 = vpow.pop %v773
    %v775 = vmul.f32 %v716, 1.442695
    %v776 = vpow.pop %v775
    %v777 = vmul.f32 %v717, 1.442695
    %v778 = vpow.pop %v777
    %v779 = vmul.f32 %v718, 1.442695
    %v780 = vpow.pop %v779
    %v781 = vmul.f32 %v719, 1.442695
    %v782 = vpow.pop %v781
    %v783 = vmul.f32 %v720, 1.442695
    %v784 = vpow.pop %v783
    %v785 = vadd.f32 %v722, 1.0
    %v786 = vadd.f32 %v724, 1.0
    %v787 = vadd.f32 %v726, 1.0
    %v788 = vadd.f32 %v728, 1.0
    %v789 = vadd.f32 %v730, 1.0
    %v790 = vadd.f32 %v732, 1.0
    %v791 = vadd.f32 %v734, 1.0
    %v792 = vadd.f32 %v736, 1.0
    %v793 = vadd.f32 %v738, 1.0
    %v794 = vadd.f32 %v740, 1.0
    %v795 = vadd.f32 %v742, 1.0
    %v796 = vadd.f32 %v744, 1.0
    %v797 = vadd.f32 %v746, 1.0
    %v798 = vadd.f32 %v748, 1.0
    %v799 = vadd.f32 %v750, 1.0
    %v800 = vadd.f32 %v752, 1.0
    %v801 = vadd.f32 %v754, 1.0
    %v802 = vadd.f32 %v756, 1.0
    %v803 = vadd.f32 %v758, 1.0
    %v804 = vadd.f32 %v760, 1.0
    %v805 = vadd.f32 %v762, 1.0
    %v806 = vadd.f32 %v764, 1.0
    %v807 = vadd.f32 %v766, 1.0
    %v808 = vadd.f32 %v768, 1.0
    %v809 = vadd.f32 %v770, 1.0
    %v810 = vadd.f32 %v772, 1.0
    %v811 = vadd.f32 %v774, 1.0
    %v812 = vadd.f32 %v776, 1.0
    %v813 = vadd.f32 %v778, 1.0
    %v814 = vadd.f32 %v780, 1.0
    %v815 = vadd.f32 %v782, 1.0
    %v816 = vadd.f32 %v784, 1.0
    %v817 = vrcp.pop %v785
    %v818 = vrcp.pop %v786
    %v819 = vrcp.pop %v787
    %v820 = vrcp.pop %v788
    %v821 = vrcp.pop %v789
    %v822 = vrcp.pop %v790
    %v823 = vrcp.pop %v791
    %v824 = vrcp.pop %v792
    %v825 = vrcp.pop %v793
    %v826 = vrcp.pop %v794
    %v827 = vrcp.pop %v795
    %v828 = vrcp.pop %v796
    %v829 = vrcp.pop %v797
    %v830 = vrcp.pop %v798
    %v831 = vrcp.pop %v799
    %v832 = vrcp.pop %v800
    %v833 = vrcp.pop %v801
    %v834 = vrcp.pop %v802
    %v835 = vrcp.pop %v803
    %v836 = vrcp.pop %v804
    %v837 = vrcp.pop %v805
    %v838 = vrcp.pop %v806
    %v839 = vrcp.pop %v807
    %v840 = vrcp.pop %v808
    %v841 = vrcp.pop %v809
    %v842 = vrcp.pop %v810
    %v843 = vrcp.pop %v811
    %v844 = vrcp.pop %v812
    %v845 = vrcp.pop %v813
    %v846 = vrcp.pop %v814
    %v847 = vrcp.pop %v815
    %v848 = vrcp.pop %v816
    %v849 = vmul.f32 %v610, %v817
    %v850 = vmul.f32 %v612, %v818
    %v851 = vmul.f32 %v615, %v819
    %v852 = vmul.f32 %v617, %v820
    %v853 = vmul.f32 %v620, %v821
    %v854 = vmul.f32 %v622, %v822
    %v855 = vmul.f32 %v625, %v823
    %v856 = vmul.f32 %v627, %v824
    %v857 = vmul.f32 %v630, %v825
    %v858 = vmul.f32 %v632, %v826
    %v859 = vmul.f32 %v635, %v827
    %v860 = vmul.f32 %v637, %v828
    %v861 = vmul.f32 %v640, %v829
    %v862 = vmul.f32 %v642, %v830
    %v863 = vmul.f32 %v645, %v831
    %v864 = vmul.f32 %v647, %v832
    %v865 = vmul.f32 %v650, %v833
    %v866 = vmul.f32 %v652, %v834
    %v867 = vmul.f32 %v655, %v835
    %v868 = vmul.f32 %v657, %v836
    %v869 = vmul.f32 %v660, %v837
    %v870 = vmul.f32 %v662, %v838
    %v871 = vmul.f32 %v665, %v839
    %v872 = vmul.f32 %v667, %v840
    %v873 = vmul.f32 %v670, %v841
    %v874 = vmul.f32 %v672, %v842
    %v875 = vmul.f32 %v675, %v843
    %v876 = vmul.f32 %v677, %v844
    %v877 = vmul.f32 %v680, %v845
    %v878 = vmul.f32 %v682, %v846
    %v879 = vmul.f32 %v685, %v847
    %v880 = vmul.f32 %v687, %v848
    %v881 = vadd.f32 %v117, %v849
    %v882 = vadd.f32 %v118, %v850
    %v883 = vadd.f32 %v119, %v851
    %v884 = vadd.f32 %v120, %v852
    %v885 = vadd.f32 %v121, %v853
    %v886 = vadd.f32 %v122, %v854
    %v887 = vadd.f32 %v123, %v855
    %v888 = vadd.f32 %v124, %v856
    %v889 = vadd.f32 %v125, %v857
    %v890 = vadd.f32 %v126, %v858
    %v891 = vadd.f32 %v127, %v859
    %v892 = vadd.f32 %v128, %v860
    %v893 = vadd.f32 %v129, %v861
    %v894 = vadd.f32 %v130, %v862
    %v895 = vadd.f32 %v131, %v863
    %v896 = vadd.f32 %v132, %v864
    %v897 = vadd.f32 %v133, %v865
    %v898 = vadd.f32 %v134, %v866
    %v899 = vadd.f32 %v135, %v867
    %v900 = vadd.f32 %v136, %v868
    %v901 = vadd.f32 %v137, %v869
    %v902 = vadd.f32 %v138, %v870
    %v903 = vadd.f32 %v139, %v871
    %v904 = vadd.f32 %v140, %v872
    %v905 = vadd.f32 %v141, %v873
    %v906 = vadd.f32 %v142, %v874
    %v907 = vadd.f32 %v143, %v875
    %v908 = vadd.f32 %v144, %v876
    %v909 = vadd.f32 %v145, %v877
    %v910 = vadd.f32 %v146, %v878
    %v911 = vadd.f32 %v147, %v879
    %v912 = vadd.f32 %v148, %v880
    %v913 = vpack.c.bf16 %v882, %v881
    %v914 = vpack.c.bf16 %v884, %v883
    %v915 = vpack.c.bf16 %v886, %v885
    %v916 = vpack.c.bf16 %v888, %v887
    %v917 = vpack.c.bf16 %v890, %v889
    %v918 = vpack.c.bf16 %v892, %v891
    %v919 = vpack.c.bf16 %v894, %v893
    %v920 = vpack.c.bf16 %v896, %v895
    %v921 = vpack.c.bf16 %v898, %v897
    %v922 = vpack.c.bf16 %v900, %v899
    %v923 = vpack.c.bf16 %v902, %v901
    %v924 = vpack.c.bf16 %v904, %v903
    %v925 = vpack.c.bf16 %v906, %v905
    %v926 = vpack.c.bf16 %v908, %v907
    %v927 = vpack.c.bf16 %v910, %v909
    %v928 = vpack.c.bf16 %v912, %v911
    %s929 = scalar_lea.vmem %s3, 128
    %v930 = vld [vmem:[%s929] sm:$0xf]
    %v931 = vld [vmem:[%s929 + $0x4] sm:$0xf]
    %v932 = vld [vmem:[%s929 + $0x8] sm:$0xf]
    %v933 = vld [vmem:[%s929 + $0xc] sm:$0xf]
    %v934 = vld [vmem:[%s929 + $0x10] sm:$0xf]
    %v935 = vld [vmem:[%s929 + $0x14] sm:$0xf]
    %v936 = vld [vmem:[%s929 + $0x18] sm:$0xf]
    %v937 = vld [vmem:[%s929 + $0x1c] sm:$0xf]
    %v938 = vld [vmem:[%s929 + $0x20] sm:$0xf]
    %v939 = vld [vmem:[%s929 + $0x24] sm:$0xf]
    %v940 = vld [vmem:[%s929 + $0x28] sm:$0xf]
    %v941 = vld [vmem:[%s929 + $0x2c] sm:$0xf]
    %v942 = vld [vmem:[%s929 + $0x30] sm:$0xf]
    %v943 = vld [vmem:[%s929 + $0x34] sm:$0xf]
    %v944 = vld [vmem:[%s929 + $0x38] sm:$0xf]
    %v945 = vld [vmem:[%s929 + $0x3c] sm:$0xf]
    %s946 = scalar_lea.vmem %s4, 2
    %v947 = vld [vmem:[%s946] sm:$0x1]
    %v949 = vperm.slane %v947, 0
    %v967 = vunpack.c.l.b16 %v930
    %v968 = vunpack.c.l.b16 %v931
    %v969 = vunpack.c.l.b16 %v932
    %v970 = vunpack.c.l.b16 %v933
    %v971 = vunpack.c.l.b16 %v934
    %v972 = vunpack.c.l.b16 %v935
    %v973 = vunpack.c.l.b16 %v936
    %v974 = vunpack.c.l.b16 %v937
    %v975 = vunpack.c.l.b16 %v938
    %v976 = vunpack.c.l.b16 %v939
    %v977 = vunpack.c.l.b16 %v940
    %v978 = vunpack.c.l.b16 %v941
    %v979 = vunpack.c.l.b16 %v942
    %v980 = vunpack.c.l.b16 %v943
    %v981 = vunpack.c.l.b16 %v944
    %v982 = vunpack.c.l.b16 %v945
    %v983 = vpack.c.b16 %v968, %v967
    %v984 = vpack.c.b16 %v970, %v969
    %v985 = vpack.c.b16 %v972, %v971
    %v986 = vpack.c.b16 %v974, %v973
    %v987 = vpack.c.b16 %v976, %v975
    %v988 = vpack.c.b16 %v978, %v977
    %v989 = vpack.c.b16 %v980, %v979
    %v990 = vpack.c.b16 %v982, %v981
    %999 = vmatpush.bf16.msra.mxu0 %v990
    %1000 = vmatpush.bf16.msra.mxu0 %v989
    %1001 = vmatpush.bf16.msra.mxu0 %v988
    %1002 = vmatpush.bf16.msra.mxu0 %v987
    %1003 = vmatpush.bf16.msra.mxu0 %v986
    %1004 = vmatpush.bf16.msra.mxu0 %v985
    %1005 = vmatpush.bf16.msra.mxu0 %v984
    %1006 = vmatpush.bf16.msra.mxu0 %v983
    %1007 = vmatmul.bf16.gmra.mxu0 %v913
    %v1008 = vpop.f32.mrf.mxu0
    %v1009 = vadd.f32 %v949, %v1008
    %v1010 = vpop.f32.mrf.mxu0
    %v1011 = vadd.f32 %v949, %v1010
    %1012 = vmatmul.bf16.gmra.mxu0 %v914
    %v1013 = vpop.f32.mrf.mxu0
    %v1014 = vadd.f32 %v949, %v1013
    %v1015 = vpop.f32.mrf.mxu0
    %v1016 = vadd.f32 %v949, %v1015
    %1017 = vmatmul.bf16.gmra.mxu0 %v915
    %v1018 = vpop.f32.mrf.mxu0
    %v1019 = vadd.f32 %v949, %v1018
    %v1020 = vpop.f32.mrf.mxu0
    %v1021 = vadd.f32 %v949, %v1020
    %1022 = vmatmul.bf16.gmra.mxu0 %v916
    %v1023 = vpop.f32.mrf.mxu0
    %v1024 = vadd.f32 %v949, %v1023
    %v1025 = vpop.f32.mrf.mxu0
    %v1026 = vadd.f32 %v949, %v1025
    %1027 = vmatmul.bf16.gmra.mxu0 %v917
    %v1028 = vpop.f32.mrf.mxu0
    %v1029 = vadd.f32 %v949, %v1028
    %v1030 = vpop.f32.mrf.mxu0
    %v1031 = vadd.f32 %v949, %v1030
    %1032 = vmatmul.bf16.gmra.mxu0 %v918
    %v1033 = vpop.f32.mrf.mxu0
    %v1034 = vadd.f32 %v949, %v1033
    %v1035 = vpop.f32.mrf.mxu0
    %v1036 = vadd.f32 %v949, %v1035
    %1037 = vmatmul.bf16.gmra.mxu0 %v919
    %v1038 = vpop.f32.mrf.mxu0
    %v1039 = vadd.f32 %v949, %v1038
    %v1040 = vpop.f32.mrf.mxu0
    %v1041 = vadd.f32 %v949, %v1040
    %1042 = vmatmul.bf16.gmra.mxu0 %v920
    %v1043 = vpop.f32.mrf.mxu0
    %v1044 = vadd.f32 %v949, %v1043
    %v1045 = vpop.f32.mrf.mxu0
    %v1046 = vadd.f32 %v949, %v1045
    %1047 = vmatmul.bf16.gmra.mxu0 %v921
    %v1048 = vpop.f32.mrf.mxu0
    %v1049 = vadd.f32 %v949, %v1048
    %v1050 = vpop.f32.mrf.mxu0
    %v1051 = vadd.f32 %v949, %v1050
    %1052 = vmatmul.bf16.gmra.mxu0 %v922
    %v1053 = vpop.f32.mrf.mxu0
    %v1054 = vadd.f32 %v949, %v1053
    %v1055 = vpop.f32.mrf.mxu0
    %v1056 = vadd.f32 %v949, %v1055
    %1057 = vmatmul.bf16.gmra.mxu0 %v923
    %v1058 = vpop.f32.mrf.mxu0
    %v1059 = vadd.f32 %v949, %v1058
    %v1060 = vpop.f32.mrf.mxu0
    %v1061 = vadd.f32 %v949, %v1060
    %1062 = vmatmul.bf16.gmra.mxu0 %v924
    %v1063 = vpop.f32.mrf.mxu0
    %v1064 = vadd.f32 %v949, %v1063
    %v1065 = vpop.f32.mrf.mxu0
    %v1066 = vadd.f32 %v949, %v1065
    %1067 = vmatmul.bf16.gmra.mxu0 %v925
    %v1068 = vpop.f32.mrf.mxu0
    %v1069 = vadd.f32 %v949, %v1068
    %v1070 = vpop.f32.mrf.mxu0
    %v1071 = vadd.f32 %v949, %v1070
    %1072 = vmatmul.bf16.gmra.mxu0 %v926
    %v1073 = vpop.f32.mrf.mxu0
    %v1074 = vadd.f32 %v949, %v1073
    %v1075 = vpop.f32.mrf.mxu0
    %v1076 = vadd.f32 %v949, %v1075
    %1077 = vmatmul.bf16.gmra.mxu0 %v927
    %v1078 = vpop.f32.mrf.mxu0
    %v1079 = vadd.f32 %v949, %v1078
    %v1080 = vpop.f32.mrf.mxu0
    %v1081 = vadd.f32 %v949, %v1080
    %1082 = vmatmul.bf16.gmra.mxu0 %v928
    %v1083 = vpop.f32.mrf.mxu0
    %v1084 = vadd.f32 %v949, %v1083
    %v1085 = vpop.f32.mrf.mxu0
    %v1086 = vadd.f32 %v949, %v1085
    %1087 = vdwg.mxu0
    %v1088 = vsub.f32 0.0, %v1009
    %v1089 = vsub.f32 0.0, %v1011
    %v1090 = vsub.f32 0.0, %v1014
    %v1091 = vsub.f32 0.0, %v1016
    %v1092 = vsub.f32 0.0, %v1019
    %v1093 = vsub.f32 0.0, %v1021
    %v1094 = vsub.f32 0.0, %v1024
    %v1095 = vsub.f32 0.0, %v1026
    %v1096 = vsub.f32 0.0, %v1029
    %v1097 = vsub.f32 0.0, %v1031
    %v1098 = vsub.f32 0.0, %v1034
    %v1099 = vsub.f32 0.0, %v1036
    %v1100 = vsub.f32 0.0, %v1039
    %v1101 = vsub.f32 0.0, %v1041
    %v1102 = vsub.f32 0.0, %v1044
    %v1103 = vsub.f32 0.0, %v1046
    %v1104 = vsub.f32 0.0, %v1049
    %v1105 = vsub.f32 0.0, %v1051
    %v1106 = vsub.f32 0.0, %v1054
    %v1107 = vsub.f32 0.0, %v1056
    %v1108 = vsub.f32 0.0, %v1059
    %v1109 = vsub.f32 0.0, %v1061
    %v1110 = vsub.f32 0.0, %v1064
    %v1111 = vsub.f32 0.0, %v1066
    %v1112 = vsub.f32 0.0, %v1069
    %v1113 = vsub.f32 0.0, %v1071
    %v1114 = vsub.f32 0.0, %v1074
    %v1115 = vsub.f32 0.0, %v1076
    %v1116 = vsub.f32 0.0, %v1079
    %v1117 = vsub.f32 0.0, %v1081
    %v1118 = vsub.f32 0.0, %v1084
    %v1119 = vsub.f32 0.0, %v1086
    %v1120 = vmul.f32 %v1088, 1.442695
    %v1121 = vpow.pop %v1120
    %v1122 = vmul.f32 %v1089, 1.442695
    %v1123 = vpow.pop %v1122
    %v1124 = vmul.f32 %v1090, 1.442695
    %v1125 = vpow.pop %v1124
    %v1126 = vmul.f32 %v1091, 1.442695
    %v1127 = vpow.pop %v1126
    %v1128 = vmul.f32 %v1092, 1.442695
    %v1129 = vpow.pop %v1128
    %v1130 = vmul.f32 %v1093, 1.442695
    %v1131 = vpow.pop %v1130
    %v1132 = vmul.f32 %v1094, 1.442695
    %v1133 = vpow.pop %v1132
    %v1134 = vmul.f32 %v1095, 1.442695
    %v1135 = vpow.pop %v1134
    %v1136 = vmul.f32 %v1096, 1.442695
    %v1137 = vpow.pop %v1136
    %v1138 = vmul.f32 %v1097, 1.442695
    %v1139 = vpow.pop %v1138
    %v1140 = vmul.f32 %v1098, 1.442695
    %v1141 = vpow.pop %v1140
    %v1142 = vmul.f32 %v1099, 1.442695
    %v1143 = vpow.pop %v1142
    %v1144 = vmul.f32 %v1100, 1.442695
    %v1145 = vpow.pop %v1144
    %v1146 = vmul.f32 %v1101, 1.442695
    %v1147 = vpow.pop %v1146
    %v1148 = vmul.f32 %v1102, 1.442695
    %v1149 = vpow.pop %v1148
    %v1150 = vmul.f32 %v1103, 1.442695
    %v1151 = vpow.pop %v1150
    %v1152 = vmul.f32 %v1104, 1.442695
    %v1153 = vpow.pop %v1152
    %v1154 = vmul.f32 %v1105, 1.442695
    %v1155 = vpow.pop %v1154
    %v1156 = vmul.f32 %v1106, 1.442695
    %v1157 = vpow.pop %v1156
    %v1158 = vmul.f32 %v1107, 1.442695
    %v1159 = vpow.pop %v1158
    %v1160 = vmul.f32 %v1108, 1.442695
    %v1161 = vpow.pop %v1160
    %v1162 = vmul.f32 %v1109, 1.442695
    %v1163 = vpow.pop %v1162
    %v1164 = vmul.f32 %v1110, 1.442695
    %v1165 = vpow.pop %v1164
    %v1166 = vmul.f32 %v1111, 1.442695
    %v1167 = vpow.pop %v1166
    %v1168 = vmul.f32 %v1112, 1.442695
    %v1169 = vpow.pop %v1168
    %v1170 = vmul.f32 %v1113, 1.442695
    %v1171 = vpow.pop %v1170
    %v1172 = vmul.f32 %v1114, 1.442695
    %v1173 = vpow.pop %v1172
    %v1174 = vmul.f32 %v1115, 1.442695
    %v1175 = vpow.pop %v1174
    %v1176 = vmul.f32 %v1116, 1.442695
    %v1177 = vpow.pop %v1176
    %v1178 = vmul.f32 %v1117, 1.442695
    %v1179 = vpow.pop %v1178
    %v1180 = vmul.f32 %v1118, 1.442695
    %v1181 = vpow.pop %v1180
    %v1182 = vmul.f32 %v1119, 1.442695
    %v1183 = vpow.pop %v1182
    %v1184 = vadd.f32 %v1121, 1.0
    %v1185 = vadd.f32 %v1123, 1.0
    %v1186 = vadd.f32 %v1125, 1.0
    %v1187 = vadd.f32 %v1127, 1.0
    %v1188 = vadd.f32 %v1129, 1.0
    %v1189 = vadd.f32 %v1131, 1.0
    %v1190 = vadd.f32 %v1133, 1.0
    %v1191 = vadd.f32 %v1135, 1.0
    %v1192 = vadd.f32 %v1137, 1.0
    %v1193 = vadd.f32 %v1139, 1.0
    %v1194 = vadd.f32 %v1141, 1.0
    %v1195 = vadd.f32 %v1143, 1.0
    %v1196 = vadd.f32 %v1145, 1.0
    %v1197 = vadd.f32 %v1147, 1.0
    %v1198 = vadd.f32 %v1149, 1.0
    %v1199 = vadd.f32 %v1151, 1.0
    %v1200 = vadd.f32 %v1153, 1.0
    %v1201 = vadd.f32 %v1155, 1.0
    %v1202 = vadd.f32 %v1157, 1.0
    %v1203 = vadd.f32 %v1159, 1.0
    %v1204 = vadd.f32 %v1161, 1.0
    %v1205 = vadd.f32 %v1163, 1.0
    %v1206 = vadd.f32 %v1165, 1.0
    %v1207 = vadd.f32 %v1167, 1.0
    %v1208 = vadd.f32 %v1169, 1.0
    %v1209 = vadd.f32 %v1171, 1.0
    %v1210 = vadd.f32 %v1173, 1.0
    %v1211 = vadd.f32 %v1175, 1.0
    %v1212 = vadd.f32 %v1177, 1.0
    %v1213 = vadd.f32 %v1179, 1.0
    %v1214 = vadd.f32 %v1181, 1.0
    %v1215 = vadd.f32 %v1183, 1.0
    %v1216 = vrcp.pop %v1184
    %v1217 = vrcp.pop %v1185
    %v1218 = vrcp.pop %v1186
    %v1219 = vrcp.pop %v1187
    %v1220 = vrcp.pop %v1188
    %v1221 = vrcp.pop %v1189
    %v1222 = vrcp.pop %v1190
    %v1223 = vrcp.pop %v1191
    %v1224 = vrcp.pop %v1192
    %v1225 = vrcp.pop %v1193
    %v1226 = vrcp.pop %v1194
    %v1227 = vrcp.pop %v1195
    %v1228 = vrcp.pop %v1196
    %v1229 = vrcp.pop %v1197
    %v1230 = vrcp.pop %v1198
    %v1231 = vrcp.pop %v1199
    %v1232 = vrcp.pop %v1200
    %v1233 = vrcp.pop %v1201
    %v1234 = vrcp.pop %v1202
    %v1235 = vrcp.pop %v1203
    %v1236 = vrcp.pop %v1204
    %v1237 = vrcp.pop %v1205
    %v1238 = vrcp.pop %v1206
    %v1239 = vrcp.pop %v1207
    %v1240 = vrcp.pop %v1208
    %v1241 = vrcp.pop %v1209
    %v1242 = vrcp.pop %v1210
    %v1243 = vrcp.pop %v1211
    %v1244 = vrcp.pop %v1212
    %v1245 = vrcp.pop %v1213
    %v1246 = vrcp.pop %v1214
    %v1247 = vrcp.pop %v1215
    %v1248 = vmul.f32 %v1009, %v1216
    %v1249 = vmul.f32 %v1011, %v1217
    %v1250 = vmul.f32 %v1014, %v1218
    %v1251 = vmul.f32 %v1016, %v1219
    %v1252 = vmul.f32 %v1019, %v1220
    %v1253 = vmul.f32 %v1021, %v1221
    %v1254 = vmul.f32 %v1024, %v1222
    %v1255 = vmul.f32 %v1026, %v1223
    %v1256 = vmul.f32 %v1029, %v1224
    %v1257 = vmul.f32 %v1031, %v1225
    %v1258 = vmul.f32 %v1034, %v1226
    %v1259 = vmul.f32 %v1036, %v1227
    %v1260 = vmul.f32 %v1039, %v1228
    %v1261 = vmul.f32 %v1041, %v1229
    %v1262 = vmul.f32 %v1044, %v1230
    %v1263 = vmul.f32 %v1046, %v1231
    %v1264 = vmul.f32 %v1049, %v1232
    %v1265 = vmul.f32 %v1051, %v1233
    %v1266 = vmul.f32 %v1054, %v1234
    %v1267 = vmul.f32 %v1056, %v1235
    %v1268 = vmul.f32 %v1059, %v1236
    %v1269 = vmul.f32 %v1061, %v1237
    %v1270 = vmul.f32 %v1064, %v1238
    %v1271 = vmul.f32 %v1066, %v1239
    %v1272 = vmul.f32 %v1069, %v1240
    %v1273 = vmul.f32 %v1071, %v1241
    %v1274 = vmul.f32 %v1074, %v1242
    %v1275 = vmul.f32 %v1076, %v1243
    %v1276 = vmul.f32 %v1079, %v1244
    %v1277 = vmul.f32 %v1081, %v1245
    %v1278 = vmul.f32 %v1084, %v1246
    %v1279 = vmul.f32 %v1086, %v1247
    %v1280 = vadd.f32 %v1248, %v21
    %v1281 = vadd.f32 %v1249, %v22
    %v1282 = vadd.f32 %v1250, %v23
    %v1283 = vadd.f32 %v1251, %v24
    %v1284 = vadd.f32 %v1252, %v25
    %v1285 = vadd.f32 %v1253, %v26
    %v1286 = vadd.f32 %v1254, %v27
    %v1287 = vadd.f32 %v1255, %v28
    %v1288 = vadd.f32 %v1256, %v29
    %v1289 = vadd.f32 %v1257, %v30
    %v1290 = vadd.f32 %v1258, %v31
    %v1291 = vadd.f32 %v1259, %v32
    %v1292 = vadd.f32 %v1260, %v33
    %v1293 = vadd.f32 %v1261, %v34
    %v1294 = vadd.f32 %v1262, %v35
    %v1295 = vadd.f32 %v1263, %v36
    %v1296 = vadd.f32 %v1264, %v37
    %v1297 = vadd.f32 %v1265, %v38
    %v1298 = vadd.f32 %v1266, %v39
    %v1299 = vadd.f32 %v1267, %v40
    %v1300 = vadd.f32 %v1268, %v41
    %v1301 = vadd.f32 %v1269, %v42
    %v1302 = vadd.f32 %v1270, %v43
    %v1303 = vadd.f32 %v1271, %v44
    %v1304 = vadd.f32 %v1272, %v45
    %v1305 = vadd.f32 %v1273, %v46
    %v1306 = vadd.f32 %v1274, %v47
    %v1307 = vadd.f32 %v1275, %v48
    %v1308 = vadd.f32 %v1276, %v49
    %v1309 = vadd.f32 %v1277, %v50
    %v1310 = vadd.f32 %v1278, %v51
    %v1311 = vadd.f32 %v1279, %v52
    %v1312 = vpack.c.bf16 %v1281, %v1280
    %v1313 = vpack.c.bf16 %v1283, %v1282
    %v1314 = vpack.c.bf16 %v1285, %v1284
    %v1315 = vpack.c.bf16 %v1287, %v1286
    %v1316 = vpack.c.bf16 %v1289, %v1288
    %v1317 = vpack.c.bf16 %v1291, %v1290
    %v1318 = vpack.c.bf16 %v1293, %v1292
    %v1319 = vpack.c.bf16 %v1295, %v1294
    %v1320 = vpack.c.bf16 %v1297, %v1296
    %v1321 = vpack.c.bf16 %v1299, %v1298
    %v1322 = vpack.c.bf16 %v1301, %v1300
    %v1323 = vpack.c.bf16 %v1303, %v1302
    %v1324 = vpack.c.bf16 %v1305, %v1304
    %v1325 = vpack.c.bf16 %v1307, %v1306
    %v1326 = vpack.c.bf16 %v1309, %v1308
    %v1327 = vpack.c.bf16 %v1311, %v1310
    %s1328 = scalar_lea.vmem %s3, 192
    %v1329 = vld [vmem:[%s1328] sm:$0xf]
    %v1330 = vld [vmem:[%s1328 + $0x4] sm:$0xf]
    %v1331 = vld [vmem:[%s1328 + $0x8] sm:$0xf]
    %v1332 = vld [vmem:[%s1328 + $0xc] sm:$0xf]
    %v1333 = vld [vmem:[%s1328 + $0x10] sm:$0xf]
    %v1334 = vld [vmem:[%s1328 + $0x14] sm:$0xf]
    %v1335 = vld [vmem:[%s1328 + $0x18] sm:$0xf]
    %v1336 = vld [vmem:[%s1328 + $0x1c] sm:$0xf]
    %v1337 = vld [vmem:[%s1328 + $0x20] sm:$0xf]
    %v1338 = vld [vmem:[%s1328 + $0x24] sm:$0xf]
    %v1339 = vld [vmem:[%s1328 + $0x28] sm:$0xf]
    %v1340 = vld [vmem:[%s1328 + $0x2c] sm:$0xf]
    %v1341 = vld [vmem:[%s1328 + $0x30] sm:$0xf]
    %v1342 = vld [vmem:[%s1328 + $0x34] sm:$0xf]
    %v1343 = vld [vmem:[%s1328 + $0x38] sm:$0xf]
    %v1344 = vld [vmem:[%s1328 + $0x3c] sm:$0xf]
    %s1345 = scalar_lea.vmem %s4, 3
    %v1346 = vld [vmem:[%s1345] sm:$0x1]
    %v1348 = vperm.slane %v1346, 0
    %v1366 = vunpack.c.l.b16 %v1329
    %v1367 = vunpack.c.l.b16 %v1330
    %v1368 = vunpack.c.l.b16 %v1331
    %v1369 = vunpack.c.l.b16 %v1332
    %v1370 = vunpack.c.l.b16 %v1333
    %v1371 = vunpack.c.l.b16 %v1334
    %v1372 = vunpack.c.l.b16 %v1335
    %v1373 = vunpack.c.l.b16 %v1336
    %v1374 = vunpack.c.l.b16 %v1337
    %v1375 = vunpack.c.l.b16 %v1338
    %v1376 = vunpack.c.l.b16 %v1339
    %v1377 = vunpack.c.l.b16 %v1340
    %v1378 = vunpack.c.l.b16 %v1341
    %v1379 = vunpack.c.l.b16 %v1342
    %v1380 = vunpack.c.l.b16 %v1343
    %v1381 = vunpack.c.l.b16 %v1344
    %v1382 = vpack.c.b16 %v1367, %v1366
    %v1383 = vpack.c.b16 %v1369, %v1368
    %v1384 = vpack.c.b16 %v1371, %v1370
    %v1385 = vpack.c.b16 %v1373, %v1372
    %v1386 = vpack.c.b16 %v1375, %v1374
    %v1387 = vpack.c.b16 %v1377, %v1376
    %v1388 = vpack.c.b16 %v1379, %v1378
    %v1389 = vpack.c.b16 %v1381, %v1380
    %1398 = vmatpush.bf16.msra.mxu0 %v1389
    %1399 = vmatpush.bf16.msra.mxu0 %v1388
    %1400 = vmatpush.bf16.msra.mxu0 %v1387
    %1401 = vmatpush.bf16.msra.mxu0 %v1386
    %1402 = vmatpush.bf16.msra.mxu0 %v1385
    %1403 = vmatpush.bf16.msra.mxu0 %v1384
    %1404 = vmatpush.bf16.msra.mxu0 %v1383
    %1405 = vmatpush.bf16.msra.mxu0 %v1382
    %1406 = vmatmul.bf16.gmra.mxu0 %v1312
    %v1407 = vpop.f32.mrf.mxu0
    %v1408 = vadd.f32 %v1348, %v1407
    %v1409 = vpop.f32.mrf.mxu0
    %v1410 = vadd.f32 %v1348, %v1409
    %1411 = vmatmul.bf16.gmra.mxu0 %v1313
    %v1412 = vpop.f32.mrf.mxu0
    %v1413 = vadd.f32 %v1348, %v1412
    %v1414 = vpop.f32.mrf.mxu0
    %v1415 = vadd.f32 %v1348, %v1414
    %1416 = vmatmul.bf16.gmra.mxu0 %v1314
    %v1417 = vpop.f32.mrf.mxu0
    %v1418 = vadd.f32 %v1348, %v1417
    %v1419 = vpop.f32.mrf.mxu0
    %v1420 = vadd.f32 %v1348, %v1419
    %1421 = vmatmul.bf16.gmra.mxu0 %v1315
    %v1422 = vpop.f32.mrf.mxu0
    %v1423 = vadd.f32 %v1348, %v1422
    %v1424 = vpop.f32.mrf.mxu0
    %v1425 = vadd.f32 %v1348, %v1424
    %1426 = vmatmul.bf16.gmra.mxu0 %v1316
    %v1427 = vpop.f32.mrf.mxu0
    %v1428 = vadd.f32 %v1348, %v1427
    %v1429 = vpop.f32.mrf.mxu0
    %v1430 = vadd.f32 %v1348, %v1429
    %1431 = vmatmul.bf16.gmra.mxu0 %v1317
    %v1432 = vpop.f32.mrf.mxu0
    %v1433 = vadd.f32 %v1348, %v1432
    %v1434 = vpop.f32.mrf.mxu0
    %v1435 = vadd.f32 %v1348, %v1434
    %1436 = vmatmul.bf16.gmra.mxu0 %v1318
    %v1437 = vpop.f32.mrf.mxu0
    %v1438 = vadd.f32 %v1348, %v1437
    %v1439 = vpop.f32.mrf.mxu0
    %v1440 = vadd.f32 %v1348, %v1439
    %1441 = vmatmul.bf16.gmra.mxu0 %v1319
    %v1442 = vpop.f32.mrf.mxu0
    %v1443 = vadd.f32 %v1348, %v1442
    %v1444 = vpop.f32.mrf.mxu0
    %v1445 = vadd.f32 %v1348, %v1444
    %1446 = vmatmul.bf16.gmra.mxu0 %v1320
    %v1447 = vpop.f32.mrf.mxu0
    %v1448 = vadd.f32 %v1348, %v1447
    %v1449 = vpop.f32.mrf.mxu0
    %v1450 = vadd.f32 %v1348, %v1449
    %1451 = vmatmul.bf16.gmra.mxu0 %v1321
    %v1452 = vpop.f32.mrf.mxu0
    %v1453 = vadd.f32 %v1348, %v1452
    %v1454 = vpop.f32.mrf.mxu0
    %v1455 = vadd.f32 %v1348, %v1454
    %1456 = vmatmul.bf16.gmra.mxu0 %v1322
    %v1457 = vpop.f32.mrf.mxu0
    %v1458 = vadd.f32 %v1348, %v1457
    %v1459 = vpop.f32.mrf.mxu0
    %v1460 = vadd.f32 %v1348, %v1459
    %1461 = vmatmul.bf16.gmra.mxu0 %v1323
    %v1462 = vpop.f32.mrf.mxu0
    %v1463 = vadd.f32 %v1348, %v1462
    %v1464 = vpop.f32.mrf.mxu0
    %v1465 = vadd.f32 %v1348, %v1464
    %1466 = vmatmul.bf16.gmra.mxu0 %v1324
    %v1467 = vpop.f32.mrf.mxu0
    %v1468 = vadd.f32 %v1348, %v1467
    %v1469 = vpop.f32.mrf.mxu0
    %v1470 = vadd.f32 %v1348, %v1469
    %1471 = vmatmul.bf16.gmra.mxu0 %v1325
    %v1472 = vpop.f32.mrf.mxu0
    %v1473 = vadd.f32 %v1348, %v1472
    %v1474 = vpop.f32.mrf.mxu0
    %v1475 = vadd.f32 %v1348, %v1474
    %1476 = vmatmul.bf16.gmra.mxu0 %v1326
    %v1477 = vpop.f32.mrf.mxu0
    %v1478 = vadd.f32 %v1348, %v1477
    %v1479 = vpop.f32.mrf.mxu0
    %v1480 = vadd.f32 %v1348, %v1479
    %1481 = vmatmul.bf16.gmra.mxu0 %v1327
    %v1482 = vpop.f32.mrf.mxu0
    %v1483 = vadd.f32 %v1348, %v1482
    %v1484 = vpop.f32.mrf.mxu0
    %v1485 = vadd.f32 %v1348, %v1484
    %1486 = vdwg.mxu0
    %v1487 = vsub.f32 0.0, %v1408
    %v1488 = vsub.f32 0.0, %v1410
    %v1489 = vsub.f32 0.0, %v1413
    %v1490 = vsub.f32 0.0, %v1415
    %v1491 = vsub.f32 0.0, %v1418
    %v1492 = vsub.f32 0.0, %v1420
    %v1493 = vsub.f32 0.0, %v1423
    %v1494 = vsub.f32 0.0, %v1425
    %v1495 = vsub.f32 0.0, %v1428
    %v1496 = vsub.f32 0.0, %v1430
    %v1497 = vsub.f32 0.0, %v1433
    %v1498 = vsub.f32 0.0, %v1435
    %v1499 = vsub.f32 0.0, %v1438
    %v1500 = vsub.f32 0.0, %v1440
    %v1501 = vsub.f32 0.0, %v1443
    %v1502 = vsub.f32 0.0, %v1445
    %v1503 = vsub.f32 0.0, %v1448
    %v1504 = vsub.f32 0.0, %v1450
    %v1505 = vsub.f32 0.0, %v1453
    %v1506 = vsub.f32 0.0, %v1455
    %v1507 = vsub.f32 0.0, %v1458
    %v1508 = vsub.f32 0.0, %v1460
    %v1509 = vsub.f32 0.0, %v1463
    %v1510 = vsub.f32 0.0, %v1465
    %v1511 = vsub.f32 0.0, %v1468
    %v1512 = vsub.f32 0.0, %v1470
    %v1513 = vsub.f32 0.0, %v1473
    %v1514 = vsub.f32 0.0, %v1475
    %v1515 = vsub.f32 0.0, %v1478
    %v1516 = vsub.f32 0.0, %v1480
    %v1517 = vsub.f32 0.0, %v1483
    %v1518 = vsub.f32 0.0, %v1485
    %v1519 = vmul.f32 %v1487, 1.442695
    %v1520 = vpow.pop %v1519
    %v1521 = vmul.f32 %v1488, 1.442695
    %v1522 = vpow.pop %v1521
    %v1523 = vmul.f32 %v1489, 1.442695
    %v1524 = vpow.pop %v1523
    %v1525 = vmul.f32 %v1490, 1.442695
    %v1526 = vpow.pop %v1525
    %v1527 = vmul.f32 %v1491, 1.442695
    %v1528 = vpow.pop %v1527
    %v1529 = vmul.f32 %v1492, 1.442695
    %v1530 = vpow.pop %v1529
    %v1531 = vmul.f32 %v1493, 1.442695
    %v1532 = vpow.pop %v1531
    %v1533 = vmul.f32 %v1494, 1.442695
    %v1534 = vpow.pop %v1533
    %v1535 = vmul.f32 %v1495, 1.442695
    %v1536 = vpow.pop %v1535
    %v1537 = vmul.f32 %v1496, 1.442695
    %v1538 = vpow.pop %v1537
    %v1539 = vmul.f32 %v1497, 1.442695
    %v1540 = vpow.pop %v1539
    %v1541 = vmul.f32 %v1498, 1.442695
    %v1542 = vpow.pop %v1541
    %v1543 = vmul.f32 %v1499, 1.442695
    %v1544 = vpow.pop %v1543
    %v1545 = vmul.f32 %v1500, 1.442695
    %v1546 = vpow.pop %v1545
    %v1547 = vmul.f32 %v1501, 1.442695
    %v1548 = vpow.pop %v1547
    %v1549 = vmul.f32 %v1502, 1.442695
    %v1550 = vpow.pop %v1549
    %v1551 = vmul.f32 %v1503, 1.442695
    %v1552 = vpow.pop %v1551
    %v1553 = vmul.f32 %v1504, 1.442695
    %v1554 = vpow.pop %v1553
    %v1555 = vmul.f32 %v1505, 1.442695
    %v1556 = vpow.pop %v1555
    %v1557 = vmul.f32 %v1506, 1.442695
    %v1558 = vpow.pop %v1557
    %v1559 = vmul.f32 %v1507, 1.442695
    %v1560 = vpow.pop %v1559
    %v1561 = vmul.f32 %v1508, 1.442695
    %v1562 = vpow.pop %v1561
    %v1563 = vmul.f32 %v1509, 1.442695
    %v1564 = vpow.pop %v1563
    %v1565 = vmul.f32 %v1510, 1.442695
    %v1566 = vpow.pop %v1565
    %v1567 = vmul.f32 %v1511, 1.442695
    %v1568 = vpow.pop %v1567
    %v1569 = vmul.f32 %v1512, 1.442695
    %v1570 = vpow.pop %v1569
    %v1571 = vmul.f32 %v1513, 1.442695
    %v1572 = vpow.pop %v1571
    %v1573 = vmul.f32 %v1514, 1.442695
    %v1574 = vpow.pop %v1573
    %v1575 = vmul.f32 %v1515, 1.442695
    %v1576 = vpow.pop %v1575
    %v1577 = vmul.f32 %v1516, 1.442695
    %v1578 = vpow.pop %v1577
    %v1579 = vmul.f32 %v1517, 1.442695
    %v1580 = vpow.pop %v1579
    %v1581 = vmul.f32 %v1518, 1.442695
    %v1582 = vpow.pop %v1581
    %v1583 = vadd.f32 %v1520, 1.0
    %v1584 = vadd.f32 %v1522, 1.0
    %v1585 = vadd.f32 %v1524, 1.0
    %v1586 = vadd.f32 %v1526, 1.0
    %v1587 = vadd.f32 %v1528, 1.0
    %v1588 = vadd.f32 %v1530, 1.0
    %v1589 = vadd.f32 %v1532, 1.0
    %v1590 = vadd.f32 %v1534, 1.0
    %v1591 = vadd.f32 %v1536, 1.0
    %v1592 = vadd.f32 %v1538, 1.0
    %v1593 = vadd.f32 %v1540, 1.0
    %v1594 = vadd.f32 %v1542, 1.0
    %v1595 = vadd.f32 %v1544, 1.0
    %v1596 = vadd.f32 %v1546, 1.0
    %v1597 = vadd.f32 %v1548, 1.0
    %v1598 = vadd.f32 %v1550, 1.0
    %v1599 = vadd.f32 %v1552, 1.0
    %v1600 = vadd.f32 %v1554, 1.0
    %v1601 = vadd.f32 %v1556, 1.0
    %v1602 = vadd.f32 %v1558, 1.0
    %v1603 = vadd.f32 %v1560, 1.0
    %v1604 = vadd.f32 %v1562, 1.0
    %v1605 = vadd.f32 %v1564, 1.0
    %v1606 = vadd.f32 %v1566, 1.0
    %v1607 = vadd.f32 %v1568, 1.0
    %v1608 = vadd.f32 %v1570, 1.0
    %v1609 = vadd.f32 %v1572, 1.0
    %v1610 = vadd.f32 %v1574, 1.0
    %v1611 = vadd.f32 %v1576, 1.0
    %v1612 = vadd.f32 %v1578, 1.0
    %v1613 = vadd.f32 %v1580, 1.0
    %v1614 = vadd.f32 %v1582, 1.0
    %v1615 = vrcp.pop %v1583
    %v1616 = vrcp.pop %v1584
    %v1617 = vrcp.pop %v1585
    %v1618 = vrcp.pop %v1586
    %v1619 = vrcp.pop %v1587
    %v1620 = vrcp.pop %v1588
    %v1621 = vrcp.pop %v1589
    %v1622 = vrcp.pop %v1590
    %v1623 = vrcp.pop %v1591
    %v1624 = vrcp.pop %v1592
    %v1625 = vrcp.pop %v1593
    %v1626 = vrcp.pop %v1594
    %v1627 = vrcp.pop %v1595
    %v1628 = vrcp.pop %v1596
    %v1629 = vrcp.pop %v1597
    %v1630 = vrcp.pop %v1598
    %v1631 = vrcp.pop %v1599
    %v1632 = vrcp.pop %v1600
    %v1633 = vrcp.pop %v1601
    %v1634 = vrcp.pop %v1602
    %v1635 = vrcp.pop %v1603
    %v1636 = vrcp.pop %v1604
    %v1637 = vrcp.pop %v1605
    %v1638 = vrcp.pop %v1606
    %v1639 = vrcp.pop %v1607
    %v1640 = vrcp.pop %v1608
    %v1641 = vrcp.pop %v1609
    %v1642 = vrcp.pop %v1610
    %v1643 = vrcp.pop %v1611
    %v1644 = vrcp.pop %v1612
    %v1645 = vrcp.pop %v1613
    %v1646 = vrcp.pop %v1614
    %v1647 = vmul.f32 %v1408, %v1615
    %v1648 = vmul.f32 %v1410, %v1616
    %v1649 = vmul.f32 %v1413, %v1617
    %v1650 = vmul.f32 %v1415, %v1618
    %v1651 = vmul.f32 %v1418, %v1619
    %v1652 = vmul.f32 %v1420, %v1620
    %v1653 = vmul.f32 %v1423, %v1621
    %v1654 = vmul.f32 %v1425, %v1622
    %v1655 = vmul.f32 %v1428, %v1623
    %v1656 = vmul.f32 %v1430, %v1624
    %v1657 = vmul.f32 %v1433, %v1625
    %v1658 = vmul.f32 %v1435, %v1626
    %v1659 = vmul.f32 %v1438, %v1627
    %v1660 = vmul.f32 %v1440, %v1628
    %v1661 = vmul.f32 %v1443, %v1629
    %v1662 = vmul.f32 %v1445, %v1630
    %v1663 = vmul.f32 %v1448, %v1631
    %v1664 = vmul.f32 %v1450, %v1632
    %v1665 = vmul.f32 %v1453, %v1633
    %v1666 = vmul.f32 %v1455, %v1634
    %v1667 = vmul.f32 %v1458, %v1635
    %v1668 = vmul.f32 %v1460, %v1636
    %v1669 = vmul.f32 %v1463, %v1637
    %v1670 = vmul.f32 %v1465, %v1638
    %v1671 = vmul.f32 %v1468, %v1639
    %v1672 = vmul.f32 %v1470, %v1640
    %v1673 = vmul.f32 %v1473, %v1641
    %v1674 = vmul.f32 %v1475, %v1642
    %v1675 = vmul.f32 %v1478, %v1643
    %v1676 = vmul.f32 %v1480, %v1644
    %v1677 = vmul.f32 %v1483, %v1645
    %v1678 = vmul.f32 %v1485, %v1646
    %v1679 = vpack.c.bf16 %v1648, %v1647
    %v1680 = vpack.c.bf16 %v1650, %v1649
    %v1681 = vpack.c.bf16 %v1652, %v1651
    %v1682 = vpack.c.bf16 %v1654, %v1653
    %v1683 = vpack.c.bf16 %v1656, %v1655
    %v1684 = vpack.c.bf16 %v1658, %v1657
    %v1685 = vpack.c.bf16 %v1660, %v1659
    %v1686 = vpack.c.bf16 %v1662, %v1661
    %v1687 = vpack.c.bf16 %v1664, %v1663
    %v1688 = vpack.c.bf16 %v1666, %v1665
    %v1689 = vpack.c.bf16 %v1668, %v1667
    %v1690 = vpack.c.bf16 %v1670, %v1669
    %v1691 = vpack.c.bf16 %v1672, %v1671
    %v1692 = vpack.c.bf16 %v1674, %v1673
    %v1693 = vpack.c.bf16 %v1676, %v1675
    %v1694 = vpack.c.bf16 %v1678, %v1677
    %s1695 = scalar_lea.vmem %s3, 256
    %v1696 = vld [vmem:[%s1695] sm:$0xf]
    %v1697 = vld [vmem:[%s1695 + $0x4] sm:$0xf]
    %v1698 = vld [vmem:[%s1695 + $0x8] sm:$0xf]
    %v1699 = vld [vmem:[%s1695 + $0xc] sm:$0xf]
    %v1700 = vld [vmem:[%s1695 + $0x10] sm:$0xf]
    %v1701 = vld [vmem:[%s1695 + $0x14] sm:$0xf]
    %v1702 = vld [vmem:[%s1695 + $0x18] sm:$0xf]
    %v1703 = vld [vmem:[%s1695 + $0x1c] sm:$0xf]
    %v1704 = vld [vmem:[%s1695 + $0x20] sm:$0xf]
    %v1705 = vld [vmem:[%s1695 + $0x24] sm:$0xf]
    %v1706 = vld [vmem:[%s1695 + $0x28] sm:$0xf]
    %v1707 = vld [vmem:[%s1695 + $0x2c] sm:$0xf]
    %v1708 = vld [vmem:[%s1695 + $0x30] sm:$0xf]
    %v1709 = vld [vmem:[%s1695 + $0x34] sm:$0xf]
    %v1710 = vld [vmem:[%s1695 + $0x38] sm:$0xf]
    %v1711 = vld [vmem:[%s1695 + $0x3c] sm:$0xf]
    %s1712 = scalar_lea.vmem %s4, 4
    %v1713 = vld [vmem:[%s1712] sm:$0x1]
    %v1715 = vperm.slane %v1713, 0
    %v1733 = vunpack.c.l.b16 %v1696
    %v1734 = vunpack.c.l.b16 %v1697
    %v1735 = vunpack.c.l.b16 %v1698
    %v1736 = vunpack.c.l.b16 %v1699
    %v1737 = vunpack.c.l.b16 %v1700
    %v1738 = vunpack.c.l.b16 %v1701
    %v1739 = vunpack.c.l.b16 %v1702
    %v1740 = vunpack.c.l.b16 %v1703
    %v1741 = vunpack.c.l.b16 %v1704
    %v1742 = vunpack.c.l.b16 %v1705
    %v1743 = vunpack.c.l.b16 %v1706
    %v1744 = vunpack.c.l.b16 %v1707
    %v1745 = vunpack.c.l.b16 %v1708
    %v1746 = vunpack.c.l.b16 %v1709
    %v1747 = vunpack.c.l.b16 %v1710
    %v1748 = vunpack.c.l.b16 %v1711
    %v1749 = vpack.c.b16 %v1734, %v1733
    %v1750 = vpack.c.b16 %v1736, %v1735
    %v1751 = vpack.c.b16 %v1738, %v1737
    %v1752 = vpack.c.b16 %v1740, %v1739
    %v1753 = vpack.c.b16 %v1742, %v1741
    %v1754 = vpack.c.b16 %v1744, %v1743
    %v1755 = vpack.c.b16 %v1746, %v1745
    %v1756 = vpack.c.b16 %v1748, %v1747
    %1765 = vmatpush.bf16.msra.mxu0 %v1756
    %1766 = vmatpush.bf16.msra.mxu0 %v1755
    %1767 = vmatpush.bf16.msra.mxu0 %v1754
    %1768 = vmatpush.bf16.msra.mxu0 %v1753
    %1769 = vmatpush.bf16.msra.mxu0 %v1752
    %1770 = vmatpush.bf16.msra.mxu0 %v1751
    %1771 = vmatpush.bf16.msra.mxu0 %v1750
    %1772 = vmatpush.bf16.msra.mxu0 %v1749
    %1773 = vmatmul.bf16.gmra.mxu0 %v1679
    %v1774 = vpop.f32.mrf.mxu0
    %v1775 = vadd.f32 %v1715, %v1774
    %v1776 = vpop.f32.mrf.mxu0
    %v1777 = vadd.f32 %v1715, %v1776
    %1778 = vmatmul.bf16.gmra.mxu0 %v1680
    %v1779 = vpop.f32.mrf.mxu0
    %v1780 = vadd.f32 %v1715, %v1779
    %v1781 = vpop.f32.mrf.mxu0
    %v1782 = vadd.f32 %v1715, %v1781
    %1783 = vmatmul.bf16.gmra.mxu0 %v1681
    %v1784 = vpop.f32.mrf.mxu0
    %v1785 = vadd.f32 %v1715, %v1784
    %v1786 = vpop.f32.mrf.mxu0
    %v1787 = vadd.f32 %v1715, %v1786
    %1788 = vmatmul.bf16.gmra.mxu0 %v1682
    %v1789 = vpop.f32.mrf.mxu0
    %v1790 = vadd.f32 %v1715, %v1789
    %v1791 = vpop.f32.mrf.mxu0
    %v1792 = vadd.f32 %v1715, %v1791
    %1793 = vmatmul.bf16.gmra.mxu0 %v1683
    %v1794 = vpop.f32.mrf.mxu0
    %v1795 = vadd.f32 %v1715, %v1794
    %v1796 = vpop.f32.mrf.mxu0
    %v1797 = vadd.f32 %v1715, %v1796
    %1798 = vmatmul.bf16.gmra.mxu0 %v1684
    %v1799 = vpop.f32.mrf.mxu0
    %v1800 = vadd.f32 %v1715, %v1799
    %v1801 = vpop.f32.mrf.mxu0
    %v1802 = vadd.f32 %v1715, %v1801
    %1803 = vmatmul.bf16.gmra.mxu0 %v1685
    %v1804 = vpop.f32.mrf.mxu0
    %v1805 = vadd.f32 %v1715, %v1804
    %v1806 = vpop.f32.mrf.mxu0
    %v1807 = vadd.f32 %v1715, %v1806
    %1808 = vmatmul.bf16.gmra.mxu0 %v1686
    %v1809 = vpop.f32.mrf.mxu0
    %v1810 = vadd.f32 %v1715, %v1809
    %v1811 = vpop.f32.mrf.mxu0
    %v1812 = vadd.f32 %v1715, %v1811
    %1813 = vmatmul.bf16.gmra.mxu0 %v1687
    %v1814 = vpop.f32.mrf.mxu0
    %v1815 = vadd.f32 %v1715, %v1814
    %v1816 = vpop.f32.mrf.mxu0
    %v1817 = vadd.f32 %v1715, %v1816
    %1818 = vmatmul.bf16.gmra.mxu0 %v1688
    %v1819 = vpop.f32.mrf.mxu0
    %v1820 = vadd.f32 %v1715, %v1819
    %v1821 = vpop.f32.mrf.mxu0
    %v1822 = vadd.f32 %v1715, %v1821
    %1823 = vmatmul.bf16.gmra.mxu0 %v1689
    %v1824 = vpop.f32.mrf.mxu0
    %v1825 = vadd.f32 %v1715, %v1824
    %v1826 = vpop.f32.mrf.mxu0
    %v1827 = vadd.f32 %v1715, %v1826
    %1828 = vmatmul.bf16.gmra.mxu0 %v1690
    %v1829 = vpop.f32.mrf.mxu0
    %v1830 = vadd.f32 %v1715, %v1829
    %v1831 = vpop.f32.mrf.mxu0
    %v1832 = vadd.f32 %v1715, %v1831
    %1833 = vmatmul.bf16.gmra.mxu0 %v1691
    %v1834 = vpop.f32.mrf.mxu0
    %v1835 = vadd.f32 %v1715, %v1834
    %v1836 = vpop.f32.mrf.mxu0
    %v1837 = vadd.f32 %v1715, %v1836
    %1838 = vmatmul.bf16.gmra.mxu0 %v1692
    %v1839 = vpop.f32.mrf.mxu0
    %v1840 = vadd.f32 %v1715, %v1839
    %v1841 = vpop.f32.mrf.mxu0
    %v1842 = vadd.f32 %v1715, %v1841
    %1843 = vmatmul.bf16.gmra.mxu0 %v1693
    %v1844 = vpop.f32.mrf.mxu0
    %v1845 = vadd.f32 %v1715, %v1844
    %v1846 = vpop.f32.mrf.mxu0
    %v1847 = vadd.f32 %v1715, %v1846
    %1848 = vmatmul.bf16.gmra.mxu0 %v1694
    %v1849 = vpop.f32.mrf.mxu0
    %v1850 = vadd.f32 %v1715, %v1849
    %v1851 = vpop.f32.mrf.mxu0
    %v1852 = vadd.f32 %v1715, %v1851
    %1853 = vdwg.mxu0
    %v1854 = vsub.f32 0.0, %v1775
    %v1855 = vsub.f32 0.0, %v1777
    %v1856 = vsub.f32 0.0, %v1780
    %v1857 = vsub.f32 0.0, %v1782
    %v1858 = vsub.f32 0.0, %v1785
    %v1859 = vsub.f32 0.0, %v1787
    %v1860 = vsub.f32 0.0, %v1790
    %v1861 = vsub.f32 0.0, %v1792
    %v1862 = vsub.f32 0.0, %v1795
    %v1863 = vsub.f32 0.0, %v1797
    %v1864 = vsub.f32 0.0, %v1800
    %v1865 = vsub.f32 0.0, %v1802
    %v1866 = vsub.f32 0.0, %v1805
    %v1867 = vsub.f32 0.0, %v1807
    %v1868 = vsub.f32 0.0, %v1810
    %v1869 = vsub.f32 0.0, %v1812
    %v1870 = vsub.f32 0.0, %v1815
    %v1871 = vsub.f32 0.0, %v1817
    %v1872 = vsub.f32 0.0, %v1820
    %v1873 = vsub.f32 0.0, %v1822
    %v1874 = vsub.f32 0.0, %v1825
    %v1875 = vsub.f32 0.0, %v1827
    %v1876 = vsub.f32 0.0, %v1830
    %v1877 = vsub.f32 0.0, %v1832
    %v1878 = vsub.f32 0.0, %v1835
    %v1879 = vsub.f32 0.0, %v1837
    %v1880 = vsub.f32 0.0, %v1840
    %v1881 = vsub.f32 0.0, %v1842
    %v1882 = vsub.f32 0.0, %v1845
    %v1883 = vsub.f32 0.0, %v1847
    %v1884 = vsub.f32 0.0, %v1850
    %v1885 = vsub.f32 0.0, %v1852
    %v1886 = vmul.f32 %v1854, 1.442695
    %v1887 = vpow.pop %v1886
    %v1888 = vmul.f32 %v1855, 1.442695
    %v1889 = vpow.pop %v1888
    %v1890 = vmul.f32 %v1856, 1.442695
    %v1891 = vpow.pop %v1890
    %v1892 = vmul.f32 %v1857, 1.442695
    %v1893 = vpow.pop %v1892
    %v1894 = vmul.f32 %v1858, 1.442695
    %v1895 = vpow.pop %v1894
    %v1896 = vmul.f32 %v1859, 1.442695
    %v1897 = vpow.pop %v1896
    %v1898 = vmul.f32 %v1860, 1.442695
    %v1899 = vpow.pop %v1898
    %v1900 = vmul.f32 %v1861, 1.442695
    %v1901 = vpow.pop %v1900
    %v1902 = vmul.f32 %v1862, 1.442695
    %v1903 = vpow.pop %v1902
    %v1904 = vmul.f32 %v1863, 1.442695
    %v1905 = vpow.pop %v1904
    %v1906 = vmul.f32 %v1864, 1.442695
    %v1907 = vpow.pop %v1906
    %v1908 = vmul.f32 %v1865, 1.442695
    %v1909 = vpow.pop %v1908
    %v1910 = vmul.f32 %v1866, 1.442695
    %v1911 = vpow.pop %v1910
    %v1912 = vmul.f32 %v1867, 1.442695
    %v1913 = vpow.pop %v1912
    %v1914 = vmul.f32 %v1868, 1.442695
    %v1915 = vpow.pop %v1914
    %v1916 = vmul.f32 %v1869, 1.442695
    %v1917 = vpow.pop %v1916
    %v1918 = vmul.f32 %v1870, 1.442695
    %v1919 = vpow.pop %v1918
    %v1920 = vmul.f32 %v1871, 1.442695
    %v1921 = vpow.pop %v1920
    %v1922 = vmul.f32 %v1872, 1.442695
    %v1923 = vpow.pop %v1922
    %v1924 = vmul.f32 %v1873, 1.442695
    %v1925 = vpow.pop %v1924
    %v1926 = vmul.f32 %v1874, 1.442695
    %v1927 = vpow.pop %v1926
    %v1928 = vmul.f32 %v1875, 1.442695
    %v1929 = vpow.pop %v1928
    %v1930 = vmul.f32 %v1876, 1.442695
    %v1931 = vpow.pop %v1930
    %v1932 = vmul.f32 %v1877, 1.442695
    %v1933 = vpow.pop %v1932
    %v1934 = vmul.f32 %v1878, 1.442695
    %v1935 = vpow.pop %v1934
    %v1936 = vmul.f32 %v1879, 1.442695
    %v1937 = vpow.pop %v1936
    %v1938 = vmul.f32 %v1880, 1.442695
    %v1939 = vpow.pop %v1938
    %v1940 = vmul.f32 %v1881, 1.442695
    %v1941 = vpow.pop %v1940
    %v1942 = vmul.f32 %v1882, 1.442695
    %v1943 = vpow.pop %v1942
    %v1944 = vmul.f32 %v1883, 1.442695
    %v1945 = vpow.pop %v1944
    %v1946 = vmul.f32 %v1884, 1.442695
    %v1947 = vpow.pop %v1946
    %v1948 = vmul.f32 %v1885, 1.442695
    %v1949 = vpow.pop %v1948
    %v1950 = vadd.f32 %v1887, 1.0
    %v1951 = vadd.f32 %v1889, 1.0
    %v1952 = vadd.f32 %v1891, 1.0
    %v1953 = vadd.f32 %v1893, 1.0
    %v1954 = vadd.f32 %v1895, 1.0
    %v1955 = vadd.f32 %v1897, 1.0
    %v1956 = vadd.f32 %v1899, 1.0
    %v1957 = vadd.f32 %v1901, 1.0
    %v1958 = vadd.f32 %v1903, 1.0
    %v1959 = vadd.f32 %v1905, 1.0
    %v1960 = vadd.f32 %v1907, 1.0
    %v1961 = vadd.f32 %v1909, 1.0
    %v1962 = vadd.f32 %v1911, 1.0
    %v1963 = vadd.f32 %v1913, 1.0
    %v1964 = vadd.f32 %v1915, 1.0
    %v1965 = vadd.f32 %v1917, 1.0
    %v1966 = vadd.f32 %v1919, 1.0
    %v1967 = vadd.f32 %v1921, 1.0
    %v1968 = vadd.f32 %v1923, 1.0
    %v1969 = vadd.f32 %v1925, 1.0
    %v1970 = vadd.f32 %v1927, 1.0
    %v1971 = vadd.f32 %v1929, 1.0
    %v1972 = vadd.f32 %v1931, 1.0
    %v1973 = vadd.f32 %v1933, 1.0
    %v1974 = vadd.f32 %v1935, 1.0
    %v1975 = vadd.f32 %v1937, 1.0
    %v1976 = vadd.f32 %v1939, 1.0
    %v1977 = vadd.f32 %v1941, 1.0
    %v1978 = vadd.f32 %v1943, 1.0
    %v1979 = vadd.f32 %v1945, 1.0
    %v1980 = vadd.f32 %v1947, 1.0
    %v1981 = vadd.f32 %v1949, 1.0
    %v1982 = vrcp.pop %v1950
    %v1983 = vrcp.pop %v1951
    %v1984 = vrcp.pop %v1952
    %v1985 = vrcp.pop %v1953
    %v1986 = vrcp.pop %v1954
    %v1987 = vrcp.pop %v1955
    %v1988 = vrcp.pop %v1956
    %v1989 = vrcp.pop %v1957
    %v1990 = vrcp.pop %v1958
    %v1991 = vrcp.pop %v1959
    %v1992 = vrcp.pop %v1960
    %v1993 = vrcp.pop %v1961
    %v1994 = vrcp.pop %v1962
    %v1995 = vrcp.pop %v1963
    %v1996 = vrcp.pop %v1964
    %v1997 = vrcp.pop %v1965
    %v1998 = vrcp.pop %v1966
    %v1999 = vrcp.pop %v1967
    %v2000 = vrcp.pop %v1968
    %v2001 = vrcp.pop %v1969
    %v2002 = vrcp.pop %v1970
    %v2003 = vrcp.pop %v1971
    %v2004 = vrcp.pop %v1972
    %v2005 = vrcp.pop %v1973
    %v2006 = vrcp.pop %v1974
    %v2007 = vrcp.pop %v1975
    %v2008 = vrcp.pop %v1976
    %v2009 = vrcp.pop %v1977
    %v2010 = vrcp.pop %v1978
    %v2011 = vrcp.pop %v1979
    %v2012 = vrcp.pop %v1980
    %v2013 = vrcp.pop %v1981
    %v2014 = vmul.f32 %v1775, %v1982
    %v2015 = vmul.f32 %v1777, %v1983
    %v2016 = vmul.f32 %v1780, %v1984
    %v2017 = vmul.f32 %v1782, %v1985
    %v2018 = vmul.f32 %v1785, %v1986
    %v2019 = vmul.f32 %v1787, %v1987
    %v2020 = vmul.f32 %v1790, %v1988
    %v2021 = vmul.f32 %v1792, %v1989
    %v2022 = vmul.f32 %v1795, %v1990
    %v2023 = vmul.f32 %v1797, %v1991
    %v2024 = vmul.f32 %v1800, %v1992
    %v2025 = vmul.f32 %v1802, %v1993
    %v2026 = vmul.f32 %v1805, %v1994
    %v2027 = vmul.f32 %v1807, %v1995
    %v2028 = vmul.f32 %v1810, %v1996
    %v2029 = vmul.f32 %v1812, %v1997
    %v2030 = vmul.f32 %v1815, %v1998
    %v2031 = vmul.f32 %v1817, %v1999
    %v2032 = vmul.f32 %v1820, %v2000
    %v2033 = vmul.f32 %v1822, %v2001
    %v2034 = vmul.f32 %v1825, %v2002
    %v2035 = vmul.f32 %v1827, %v2003
    %v2036 = vmul.f32 %v1830, %v2004
    %v2037 = vmul.f32 %v1832, %v2005
    %v2038 = vmul.f32 %v1835, %v2006
    %v2039 = vmul.f32 %v1837, %v2007
    %v2040 = vmul.f32 %v1840, %v2008
    %v2041 = vmul.f32 %v1842, %v2009
    %v2042 = vmul.f32 %v1845, %v2010
    %v2043 = vmul.f32 %v1847, %v2011
    %v2044 = vmul.f32 %v1850, %v2012
    %v2045 = vmul.f32 %v1852, %v2013
    %v2046 = vadd.f32 %v1280, %v2014
    %v2047 = vadd.f32 %v1281, %v2015
    %v2048 = vadd.f32 %v1282, %v2016
    %v2049 = vadd.f32 %v1283, %v2017
    %v2050 = vadd.f32 %v1284, %v2018
    %v2051 = vadd.f32 %v1285, %v2019
    %v2052 = vadd.f32 %v1286, %v2020
    %v2053 = vadd.f32 %v1287, %v2021
    %v2054 = vadd.f32 %v1288, %v2022
    %v2055 = vadd.f32 %v1289, %v2023
    %v2056 = vadd.f32 %v1290, %v2024
    %v2057 = vadd.f32 %v1291, %v2025
    %v2058 = vadd.f32 %v1292, %v2026
    %v2059 = vadd.f32 %v1293, %v2027
    %v2060 = vadd.f32 %v1294, %v2028
    %v2061 = vadd.f32 %v1295, %v2029
    %v2062 = vadd.f32 %v1296, %v2030
    %v2063 = vadd.f32 %v1297, %v2031
    %v2064 = vadd.f32 %v1298, %v2032
    %v2065 = vadd.f32 %v1299, %v2033
    %v2066 = vadd.f32 %v1300, %v2034
    %v2067 = vadd.f32 %v1301, %v2035
    %v2068 = vadd.f32 %v1302, %v2036
    %v2069 = vadd.f32 %v1303, %v2037
    %v2070 = vadd.f32 %v1304, %v2038
    %v2071 = vadd.f32 %v1305, %v2039
    %v2072 = vadd.f32 %v1306, %v2040
    %v2073 = vadd.f32 %v1307, %v2041
    %v2074 = vadd.f32 %v1308, %v2042
    %v2075 = vadd.f32 %v1309, %v2043
    %v2076 = vadd.f32 %v1310, %v2044
    %v2077 = vadd.f32 %v1311, %v2045
    %v2078 = vpack.c.bf16 %v2047, %v2046
    %v2079 = vpack.c.bf16 %v2049, %v2048
    %v2080 = vpack.c.bf16 %v2051, %v2050
    %v2081 = vpack.c.bf16 %v2053, %v2052
    %v2082 = vpack.c.bf16 %v2055, %v2054
    %v2083 = vpack.c.bf16 %v2057, %v2056
    %v2084 = vpack.c.bf16 %v2059, %v2058
    %v2085 = vpack.c.bf16 %v2061, %v2060
    %v2086 = vpack.c.bf16 %v2063, %v2062
    %v2087 = vpack.c.bf16 %v2065, %v2064
    %v2088 = vpack.c.bf16 %v2067, %v2066
    %v2089 = vpack.c.bf16 %v2069, %v2068
    %v2090 = vpack.c.bf16 %v2071, %v2070
    %v2091 = vpack.c.bf16 %v2073, %v2072
    %v2092 = vpack.c.bf16 %v2075, %v2074
    %v2093 = vpack.c.bf16 %v2077, %v2076
    %s2094 = scalar_lea.vmem %s3, 320
    %v2095 = vld [vmem:[%s2094] sm:$0xf]
    %v2096 = vld [vmem:[%s2094 + $0x4] sm:$0xf]
    %v2097 = vld [vmem:[%s2094 + $0x8] sm:$0xf]
    %v2098 = vld [vmem:[%s2094 + $0xc] sm:$0xf]
    %v2099 = vld [vmem:[%s2094 + $0x10] sm:$0xf]
    %v2100 = vld [vmem:[%s2094 + $0x14] sm:$0xf]
    %v2101 = vld [vmem:[%s2094 + $0x18] sm:$0xf]
    %v2102 = vld [vmem:[%s2094 + $0x1c] sm:$0xf]
    %v2103 = vld [vmem:[%s2094 + $0x20] sm:$0xf]
    %v2104 = vld [vmem:[%s2094 + $0x24] sm:$0xf]
    %v2105 = vld [vmem:[%s2094 + $0x28] sm:$0xf]
    %v2106 = vld [vmem:[%s2094 + $0x2c] sm:$0xf]
    %v2107 = vld [vmem:[%s2094 + $0x30] sm:$0xf]
    %v2108 = vld [vmem:[%s2094 + $0x34] sm:$0xf]
    %v2109 = vld [vmem:[%s2094 + $0x38] sm:$0xf]
    %v2110 = vld [vmem:[%s2094 + $0x3c] sm:$0xf]
    %s2111 = scalar_lea.vmem %s4, 5
    %v2112 = vld [vmem:[%s2111] sm:$0x1]
    %v2114 = vperm.slane %v2112, 0
    %v2132 = vunpack.c.l.b16 %v2095
    %v2133 = vunpack.c.l.b16 %v2096
    %v2134 = vunpack.c.l.b16 %v2097
    %v2135 = vunpack.c.l.b16 %v2098
    %v2136 = vunpack.c.l.b16 %v2099
    %v2137 = vunpack.c.l.b16 %v2100
    %v2138 = vunpack.c.l.b16 %v2101
    %v2139 = vunpack.c.l.b16 %v2102
    %v2140 = vunpack.c.l.b16 %v2103
    %v2141 = vunpack.c.l.b16 %v2104
    %v2142 = vunpack.c.l.b16 %v2105
    %v2143 = vunpack.c.l.b16 %v2106
    %v2144 = vunpack.c.l.b16 %v2107
    %v2145 = vunpack.c.l.b16 %v2108
    %v2146 = vunpack.c.l.b16 %v2109
    %v2147 = vunpack.c.l.b16 %v2110
    %v2148 = vpack.c.b16 %v2133, %v2132
    %v2149 = vpack.c.b16 %v2135, %v2134
    %v2150 = vpack.c.b16 %v2137, %v2136
    %v2151 = vpack.c.b16 %v2139, %v2138
    %v2152 = vpack.c.b16 %v2141, %v2140
    %v2153 = vpack.c.b16 %v2143, %v2142
    %v2154 = vpack.c.b16 %v2145, %v2144
    %v2155 = vpack.c.b16 %v2147, %v2146
    %2164 = vmatpush.bf16.msra.mxu0 %v2155
    %2165 = vmatpush.bf16.msra.mxu0 %v2154
    %2166 = vmatpush.bf16.msra.mxu0 %v2153
    %2167 = vmatpush.bf16.msra.mxu0 %v2152
    %2168 = vmatpush.bf16.msra.mxu0 %v2151
    %2169 = vmatpush.bf16.msra.mxu0 %v2150
    %2170 = vmatpush.bf16.msra.mxu0 %v2149
    %2171 = vmatpush.bf16.msra.mxu0 %v2148
    %2172 = vmatmul.bf16.gmra.mxu0 %v2078
    %v2173 = vpop.f32.mrf.mxu0
    %v2174 = vadd.f32 %v2114, %v2173
    %v2175 = vpop.f32.mrf.mxu0
    %v2176 = vadd.f32 %v2114, %v2175
    %2177 = vmatmul.bf16.gmra.mxu0 %v2079
    %v2178 = vpop.f32.mrf.mxu0
    %v2179 = vadd.f32 %v2114, %v2178
    %v2180 = vpop.f32.mrf.mxu0
    %v2181 = vadd.f32 %v2114, %v2180
    %2182 = vmatmul.bf16.gmra.mxu0 %v2080
    %v2183 = vpop.f32.mrf.mxu0
    %v2184 = vadd.f32 %v2114, %v2183
    %v2185 = vpop.f32.mrf.mxu0
    %v2186 = vadd.f32 %v2114, %v2185
    %2187 = vmatmul.bf16.gmra.mxu0 %v2081
    %v2188 = vpop.f32.mrf.mxu0
    %v2189 = vadd.f32 %v2114, %v2188
    %v2190 = vpop.f32.mrf.mxu0
    %v2191 = vadd.f32 %v2114, %v2190
    %2192 = vmatmul.bf16.gmra.mxu0 %v2082
    %v2193 = vpop.f32.mrf.mxu0
    %v2194 = vadd.f32 %v2114, %v2193
    %v2195 = vpop.f32.mrf.mxu0
    %v2196 = vadd.f32 %v2114, %v2195
    %2197 = vmatmul.bf16.gmra.mxu0 %v2083
    %v2198 = vpop.f32.mrf.mxu0
    %v2199 = vadd.f32 %v2114, %v2198
    %v2200 = vpop.f32.mrf.mxu0
    %v2201 = vadd.f32 %v2114, %v2200
    %2202 = vmatmul.bf16.gmra.mxu0 %v2084
    %v2203 = vpop.f32.mrf.mxu0
    %v2204 = vadd.f32 %v2114, %v2203
    %v2205 = vpop.f32.mrf.mxu0
    %v2206 = vadd.f32 %v2114, %v2205
    %2207 = vmatmul.bf16.gmra.mxu0 %v2085
    %v2208 = vpop.f32.mrf.mxu0
    %v2209 = vadd.f32 %v2114, %v2208
    %v2210 = vpop.f32.mrf.mxu0
    %v2211 = vadd.f32 %v2114, %v2210
    %2212 = vmatmul.bf16.gmra.mxu0 %v2086
    %v2213 = vpop.f32.mrf.mxu0
    %v2214 = vadd.f32 %v2114, %v2213
    %v2215 = vpop.f32.mrf.mxu0
    %v2216 = vadd.f32 %v2114, %v2215
    %2217 = vmatmul.bf16.gmra.mxu0 %v2087
    %v2218 = vpop.f32.mrf.mxu0
    %v2219 = vadd.f32 %v2114, %v2218
    %v2220 = vpop.f32.mrf.mxu0
    %v2221 = vadd.f32 %v2114, %v2220
    %2222 = vmatmul.bf16.gmra.mxu0 %v2088
    %v2223 = vpop.f32.mrf.mxu0
    %v2224 = vadd.f32 %v2114, %v2223
    %v2225 = vpop.f32.mrf.mxu0
    %v2226 = vadd.f32 %v2114, %v2225
    %2227 = vmatmul.bf16.gmra.mxu0 %v2089
    %v2228 = vpop.f32.mrf.mxu0
    %v2229 = vadd.f32 %v2114, %v2228
    %v2230 = vpop.f32.mrf.mxu0
    %v2231 = vadd.f32 %v2114, %v2230
    %2232 = vmatmul.bf16.gmra.mxu0 %v2090
    %v2233 = vpop.f32.mrf.mxu0
    %v2234 = vadd.f32 %v2114, %v2233
    %v2235 = vpop.f32.mrf.mxu0
    %v2236 = vadd.f32 %v2114, %v2235
    %2237 = vmatmul.bf16.gmra.mxu0 %v2091
    %v2238 = vpop.f32.mrf.mxu0
    %v2239 = vadd.f32 %v2114, %v2238
    %v2240 = vpop.f32.mrf.mxu0
    %v2241 = vadd.f32 %v2114, %v2240
    %2242 = vmatmul.bf16.gmra.mxu0 %v2092
    %v2243 = vpop.f32.mrf.mxu0
    %v2244 = vadd.f32 %v2114, %v2243
    %v2245 = vpop.f32.mrf.mxu0
    %v2246 = vadd.f32 %v2114, %v2245
    %2247 = vmatmul.bf16.gmra.mxu0 %v2093
    %v2248 = vpop.f32.mrf.mxu0
    %v2249 = vadd.f32 %v2114, %v2248
    %v2250 = vpop.f32.mrf.mxu0
    %v2251 = vadd.f32 %v2114, %v2250
    %2252 = vdwg.mxu0
    %v2253 = vsub.f32 0.0, %v2174
    %v2254 = vsub.f32 0.0, %v2176
    %v2255 = vsub.f32 0.0, %v2179
    %v2256 = vsub.f32 0.0, %v2181
    %v2257 = vsub.f32 0.0, %v2184
    %v2258 = vsub.f32 0.0, %v2186
    %v2259 = vsub.f32 0.0, %v2189
    %v2260 = vsub.f32 0.0, %v2191
    %v2261 = vsub.f32 0.0, %v2194
    %v2262 = vsub.f32 0.0, %v2196
    %v2263 = vsub.f32 0.0, %v2199
    %v2264 = vsub.f32 0.0, %v2201
    %v2265 = vsub.f32 0.0, %v2204
    %v2266 = vsub.f32 0.0, %v2206
    %v2267 = vsub.f32 0.0, %v2209
    %v2268 = vsub.f32 0.0, %v2211
    %v2269 = vsub.f32 0.0, %v2214
    %v2270 = vsub.f32 0.0, %v2216
    %v2271 = vsub.f32 0.0, %v2219
    %v2272 = vsub.f32 0.0, %v2221
    %v2273 = vsub.f32 0.0, %v2224
    %v2274 = vsub.f32 0.0, %v2226
    %v2275 = vsub.f32 0.0, %v2229
    %v2276 = vsub.f32 0.0, %v2231
    %v2277 = vsub.f32 0.0, %v2234
    %v2278 = vsub.f32 0.0, %v2236
    %v2279 = vsub.f32 0.0, %v2239
    %v2280 = vsub.f32 0.0, %v2241
    %v2281 = vsub.f32 0.0, %v2244
    %v2282 = vsub.f32 0.0, %v2246
    %v2283 = vsub.f32 0.0, %v2249
    %v2284 = vsub.f32 0.0, %v2251
    %v2285 = vmul.f32 %v2253, 1.442695
    %v2286 = vpow.pop %v2285
    %v2287 = vmul.f32 %v2254, 1.442695
    %v2288 = vpow.pop %v2287
    %v2289 = vmul.f32 %v2255, 1.442695
    %v2290 = vpow.pop %v2289
    %v2291 = vmul.f32 %v2256, 1.442695
    %v2292 = vpow.pop %v2291
    %v2293 = vmul.f32 %v2257, 1.442695
    %v2294 = vpow.pop %v2293
    %v2295 = vmul.f32 %v2258, 1.442695
    %v2296 = vpow.pop %v2295
    %v2297 = vmul.f32 %v2259, 1.442695
    %v2298 = vpow.pop %v2297
    %v2299 = vmul.f32 %v2260, 1.442695
    %v2300 = vpow.pop %v2299
    %v2301 = vmul.f32 %v2261, 1.442695
    %v2302 = vpow.pop %v2301
    %v2303 = vmul.f32 %v2262, 1.442695
    %v2304 = vpow.pop %v2303
    %v2305 = vmul.f32 %v2263, 1.442695
    %v2306 = vpow.pop %v2305
    %v2307 = vmul.f32 %v2264, 1.442695
    %v2308 = vpow.pop %v2307
    %v2309 = vmul.f32 %v2265, 1.442695
    %v2310 = vpow.pop %v2309
    %v2311 = vmul.f32 %v2266, 1.442695
    %v2312 = vpow.pop %v2311
    %v2313 = vmul.f32 %v2267, 1.442695
    %v2314 = vpow.pop %v2313
    %v2315 = vmul.f32 %v2268, 1.442695
    %v2316 = vpow.pop %v2315
    %v2317 = vmul.f32 %v2269, 1.442695
    %v2318 = vpow.pop %v2317
    %v2319 = vmul.f32 %v2270, 1.442695
    %v2320 = vpow.pop %v2319
    %v2321 = vmul.f32 %v2271, 1.442695
    %v2322 = vpow.pop %v2321
    %v2323 = vmul.f32 %v2272, 1.442695
    %v2324 = vpow.pop %v2323
    %v2325 = vmul.f32 %v2273, 1.442695
    %v2326 = vpow.pop %v2325
    %v2327 = vmul.f32 %v2274, 1.442695
    %v2328 = vpow.pop %v2327
    %v2329 = vmul.f32 %v2275, 1.442695
    %v2330 = vpow.pop %v2329
    %v2331 = vmul.f32 %v2276, 1.442695
    %v2332 = vpow.pop %v2331
    %v2333 = vmul.f32 %v2277, 1.442695
    %v2334 = vpow.pop %v2333
    %v2335 = vmul.f32 %v2278, 1.442695
    %v2336 = vpow.pop %v2335
    %v2337 = vmul.f32 %v2279, 1.442695
    %v2338 = vpow.pop %v2337
    %v2339 = vmul.f32 %v2280, 1.442695
    %v2340 = vpow.pop %v2339
    %v2341 = vmul.f32 %v2281, 1.442695
    %v2342 = vpow.pop %v2341
    %v2343 = vmul.f32 %v2282, 1.442695
    %v2344 = vpow.pop %v2343
    %v2345 = vmul.f32 %v2283, 1.442695
    %v2346 = vpow.pop %v2345
    %v2347 = vmul.f32 %v2284, 1.442695
    %v2348 = vpow.pop %v2347
    %v2349 = vadd.f32 %v2286, 1.0
    %v2350 = vadd.f32 %v2288, 1.0
    %v2351 = vadd.f32 %v2290, 1.0
    %v2352 = vadd.f32 %v2292, 1.0
    %v2353 = vadd.f32 %v2294, 1.0
    %v2354 = vadd.f32 %v2296, 1.0
    %v2355 = vadd.f32 %v2298, 1.0
    %v2356 = vadd.f32 %v2300, 1.0
    %v2357 = vadd.f32 %v2302, 1.0
    %v2358 = vadd.f32 %v2304, 1.0
    %v2359 = vadd.f32 %v2306, 1.0
    %v2360 = vadd.f32 %v2308, 1.0
    %v2361 = vadd.f32 %v2310, 1.0
    %v2362 = vadd.f32 %v2312, 1.0
    %v2363 = vadd.f32 %v2314, 1.0
    %v2364 = vadd.f32 %v2316, 1.0
    %v2365 = vadd.f32 %v2318, 1.0
    %v2366 = vadd.f32 %v2320, 1.0
    %v2367 = vadd.f32 %v2322, 1.0
    %v2368 = vadd.f32 %v2324, 1.0
    %v2369 = vadd.f32 %v2326, 1.0
    %v2370 = vadd.f32 %v2328, 1.0
    %v2371 = vadd.f32 %v2330, 1.0
    %v2372 = vadd.f32 %v2332, 1.0
    %v2373 = vadd.f32 %v2334, 1.0
    %v2374 = vadd.f32 %v2336, 1.0
    %v2375 = vadd.f32 %v2338, 1.0
    %v2376 = vadd.f32 %v2340, 1.0
    %v2377 = vadd.f32 %v2342, 1.0
    %v2378 = vadd.f32 %v2344, 1.0
    %v2379 = vadd.f32 %v2346, 1.0
    %v2380 = vadd.f32 %v2348, 1.0
    %v2381 = vrcp.pop %v2349
    %v2382 = vrcp.pop %v2350
    %v2383 = vrcp.pop %v2351
    %v2384 = vrcp.pop %v2352
    %v2385 = vrcp.pop %v2353
    %v2386 = vrcp.pop %v2354
    %v2387 = vrcp.pop %v2355
    %v2388 = vrcp.pop %v2356
    %v2389 = vrcp.pop %v2357
    %v2390 = vrcp.pop %v2358
    %v2391 = vrcp.pop %v2359
    %v2392 = vrcp.pop %v2360
    %v2393 = vrcp.pop %v2361
    %v2394 = vrcp.pop %v2362
    %v2395 = vrcp.pop %v2363
    %v2396 = vrcp.pop %v2364
    %v2397 = vrcp.pop %v2365
    %v2398 = vrcp.pop %v2366
    %v2399 = vrcp.pop %v2367
    %v2400 = vrcp.pop %v2368
    %v2401 = vrcp.pop %v2369
    %v2402 = vrcp.pop %v2370
    %v2403 = vrcp.pop %v2371
    %v2404 = vrcp.pop %v2372
    %v2405 = vrcp.pop %v2373
    %v2406 = vrcp.pop %v2374
    %v2407 = vrcp.pop %v2375
    %v2408 = vrcp.pop %v2376
    %v2409 = vrcp.pop %v2377
    %v2410 = vrcp.pop %v2378
    %v2411 = vrcp.pop %v2379
    %v2412 = vrcp.pop %v2380
    %v2413 = vmul.f32 %v2174, %v2381
    %v2414 = vmul.f32 %v2176, %v2382
    %v2415 = vmul.f32 %v2179, %v2383
    %v2416 = vmul.f32 %v2181, %v2384
    %v2417 = vmul.f32 %v2184, %v2385
    %v2418 = vmul.f32 %v2186, %v2386
    %v2419 = vmul.f32 %v2189, %v2387
    %v2420 = vmul.f32 %v2191, %v2388
    %v2421 = vmul.f32 %v2194, %v2389
    %v2422 = vmul.f32 %v2196, %v2390
    %v2423 = vmul.f32 %v2199, %v2391
    %v2424 = vmul.f32 %v2201, %v2392
    %v2425 = vmul.f32 %v2204, %v2393
    %v2426 = vmul.f32 %v2206, %v2394
    %v2427 = vmul.f32 %v2209, %v2395
    %v2428 = vmul.f32 %v2211, %v2396
    %v2429 = vmul.f32 %v2214, %v2397
    %v2430 = vmul.f32 %v2216, %v2398
    %v2431 = vmul.f32 %v2219, %v2399
    %v2432 = vmul.f32 %v2221, %v2400
    %v2433 = vmul.f32 %v2224, %v2401
    %v2434 = vmul.f32 %v2226, %v2402
    %v2435 = vmul.f32 %v2229, %v2403
    %v2436 = vmul.f32 %v2231, %v2404
    %v2437 = vmul.f32 %v2234, %v2405
    %v2438 = vmul.f32 %v2236, %v2406
    %v2439 = vmul.f32 %v2239, %v2407
    %v2440 = vmul.f32 %v2241, %v2408
    %v2441 = vmul.f32 %v2244, %v2409
    %v2442 = vmul.f32 %v2246, %v2410
    %v2443 = vmul.f32 %v2249, %v2411
    %v2444 = vmul.f32 %v2251, %v2412
    %v2445 = vpack.c.bf16 %v2414, %v2413
    %v2446 = vpack.c.bf16 %v2416, %v2415
    %v2447 = vpack.c.bf16 %v2418, %v2417
    %v2448 = vpack.c.bf16 %v2420, %v2419
    %v2449 = vpack.c.bf16 %v2422, %v2421
    %v2450 = vpack.c.bf16 %v2424, %v2423
    %v2451 = vpack.c.bf16 %v2426, %v2425
    %v2452 = vpack.c.bf16 %v2428, %v2427
    %v2453 = vpack.c.bf16 %v2430, %v2429
    %v2454 = vpack.c.bf16 %v2432, %v2431
    %v2455 = vpack.c.bf16 %v2434, %v2433
    %v2456 = vpack.c.bf16 %v2436, %v2435
    %v2457 = vpack.c.bf16 %v2438, %v2437
    %v2458 = vpack.c.bf16 %v2440, %v2439
    %v2459 = vpack.c.bf16 %v2442, %v2441
    %v2460 = vpack.c.bf16 %v2444, %v2443
    %s2461 = scalar_lea.vmem %s3, 384
    %v2462 = vld [vmem:[%s2461] sm:$0xf]
    %v2463 = vld [vmem:[%s2461 + $0x4] sm:$0xf]
    %v2464 = vld [vmem:[%s2461 + $0x8] sm:$0xf]
    %v2465 = vld [vmem:[%s2461 + $0xc] sm:$0xf]
    %v2466 = vld [vmem:[%s2461 + $0x10] sm:$0xf]
    %v2467 = vld [vmem:[%s2461 + $0x14] sm:$0xf]
    %v2468 = vld [vmem:[%s2461 + $0x18] sm:$0xf]
    %v2469 = vld [vmem:[%s2461 + $0x1c] sm:$0xf]
    %v2470 = vld [vmem:[%s2461 + $0x20] sm:$0xf]
    %v2471 = vld [vmem:[%s2461 + $0x24] sm:$0xf]
    %v2472 = vld [vmem:[%s2461 + $0x28] sm:$0xf]
    %v2473 = vld [vmem:[%s2461 + $0x2c] sm:$0xf]
    %v2474 = vld [vmem:[%s2461 + $0x30] sm:$0xf]
    %v2475 = vld [vmem:[%s2461 + $0x34] sm:$0xf]
    %v2476 = vld [vmem:[%s2461 + $0x38] sm:$0xf]
    %v2477 = vld [vmem:[%s2461 + $0x3c] sm:$0xf]
    %s2478 = scalar_lea.vmem %s4, 6
    %v2479 = vld [vmem:[%s2478] sm:$0x1]
    %v2481 = vperm.slane %v2479, 0
    %v2499 = vunpack.c.l.b16 %v2462
    %v2500 = vunpack.c.l.b16 %v2463
    %v2501 = vunpack.c.l.b16 %v2464
    %v2502 = vunpack.c.l.b16 %v2465
    %v2503 = vunpack.c.l.b16 %v2466
    %v2504 = vunpack.c.l.b16 %v2467
    %v2505 = vunpack.c.l.b16 %v2468
    %v2506 = vunpack.c.l.b16 %v2469
    %v2507 = vunpack.c.l.b16 %v2470
    %v2508 = vunpack.c.l.b16 %v2471
    %v2509 = vunpack.c.l.b16 %v2472
    %v2510 = vunpack.c.l.b16 %v2473
    %v2511 = vunpack.c.l.b16 %v2474
    %v2512 = vunpack.c.l.b16 %v2475
    %v2513 = vunpack.c.l.b16 %v2476
    %v2514 = vunpack.c.l.b16 %v2477
    %v2515 = vpack.c.b16 %v2500, %v2499
    %v2516 = vpack.c.b16 %v2502, %v2501
    %v2517 = vpack.c.b16 %v2504, %v2503
    %v2518 = vpack.c.b16 %v2506, %v2505
    %v2519 = vpack.c.b16 %v2508, %v2507
    %v2520 = vpack.c.b16 %v2510, %v2509
    %v2521 = vpack.c.b16 %v2512, %v2511
    %v2522 = vpack.c.b16 %v2514, %v2513
    %2531 = vmatpush.bf16.msra.mxu0 %v2522
    %2532 = vmatpush.bf16.msra.mxu0 %v2521
    %2533 = vmatpush.bf16.msra.mxu0 %v2520
    %2534 = vmatpush.bf16.msra.mxu0 %v2519
    %2535 = vmatpush.bf16.msra.mxu0 %v2518
    %2536 = vmatpush.bf16.msra.mxu0 %v2517
    %2537 = vmatpush.bf16.msra.mxu0 %v2516
    %2538 = vmatpush.bf16.msra.mxu0 %v2515
    %2539 = vmatmul.bf16.gmra.mxu0 %v2445
    %v2540 = vpop.f32.mrf.mxu0
    %v2541 = vadd.f32 %v2481, %v2540
    %v2542 = vpop.f32.mrf.mxu0
    %v2543 = vadd.f32 %v2481, %v2542
    %2544 = vmatmul.bf16.gmra.mxu0 %v2446
    %v2545 = vpop.f32.mrf.mxu0
    %v2546 = vadd.f32 %v2481, %v2545
    %v2547 = vpop.f32.mrf.mxu0
    %v2548 = vadd.f32 %v2481, %v2547
    %2549 = vmatmul.bf16.gmra.mxu0 %v2447
    %v2550 = vpop.f32.mrf.mxu0
    %v2551 = vadd.f32 %v2481, %v2550
    %v2552 = vpop.f32.mrf.mxu0
    %v2553 = vadd.f32 %v2481, %v2552
    %2554 = vmatmul.bf16.gmra.mxu0 %v2448
    %v2555 = vpop.f32.mrf.mxu0
    %v2556 = vadd.f32 %v2481, %v2555
    %v2557 = vpop.f32.mrf.mxu0
    %v2558 = vadd.f32 %v2481, %v2557
    %2559 = vmatmul.bf16.gmra.mxu0 %v2449
    %v2560 = vpop.f32.mrf.mxu0
    %v2561 = vadd.f32 %v2481, %v2560
    %v2562 = vpop.f32.mrf.mxu0
    %v2563 = vadd.f32 %v2481, %v2562
    %2564 = vmatmul.bf16.gmra.mxu0 %v2450
    %v2565 = vpop.f32.mrf.mxu0
    %v2566 = vadd.f32 %v2481, %v2565
    %v2567 = vpop.f32.mrf.mxu0
    %v2568 = vadd.f32 %v2481, %v2567
    %2569 = vmatmul.bf16.gmra.mxu0 %v2451
    %v2570 = vpop.f32.mrf.mxu0
    %v2571 = vadd.f32 %v2481, %v2570
    %v2572 = vpop.f32.mrf.mxu0
    %v2573 = vadd.f32 %v2481, %v2572
    %2574 = vmatmul.bf16.gmra.mxu0 %v2452
    %v2575 = vpop.f32.mrf.mxu0
    %v2576 = vadd.f32 %v2481, %v2575
    %v2577 = vpop.f32.mrf.mxu0
    %v2578 = vadd.f32 %v2481, %v2577
    %2579 = vmatmul.bf16.gmra.mxu0 %v2453
    %v2580 = vpop.f32.mrf.mxu0
    %v2581 = vadd.f32 %v2481, %v2580
    %v2582 = vpop.f32.mrf.mxu0
    %v2583 = vadd.f32 %v2481, %v2582
    %2584 = vmatmul.bf16.gmra.mxu0 %v2454
    %v2585 = vpop.f32.mrf.mxu0
    %v2586 = vadd.f32 %v2481, %v2585
    %v2587 = vpop.f32.mrf.mxu0
    %v2588 = vadd.f32 %v2481, %v2587
    %2589 = vmatmul.bf16.gmra.mxu0 %v2455
    %v2590 = vpop.f32.mrf.mxu0
    %v2591 = vadd.f32 %v2481, %v2590
    %v2592 = vpop.f32.mrf.mxu0
    %v2593 = vadd.f32 %v2481, %v2592
    %2594 = vmatmul.bf16.gmra.mxu0 %v2456
    %v2595 = vpop.f32.mrf.mxu0
    %v2596 = vadd.f32 %v2481, %v2595
    %v2597 = vpop.f32.mrf.mxu0
    %v2598 = vadd.f32 %v2481, %v2597
    %2599 = vmatmul.bf16.gmra.mxu0 %v2457
    %v2600 = vpop.f32.mrf.mxu0
    %v2601 = vadd.f32 %v2481, %v2600
    %v2602 = vpop.f32.mrf.mxu0
    %v2603 = vadd.f32 %v2481, %v2602
    %2604 = vmatmul.bf16.gmra.mxu0 %v2458
    %v2605 = vpop.f32.mrf.mxu0
    %v2606 = vadd.f32 %v2481, %v2605
    %v2607 = vpop.f32.mrf.mxu0
    %v2608 = vadd.f32 %v2481, %v2607
    %2609 = vmatmul.bf16.gmra.mxu0 %v2459
    %v2610 = vpop.f32.mrf.mxu0
    %v2611 = vadd.f32 %v2481, %v2610
    %v2612 = vpop.f32.mrf.mxu0
    %v2613 = vadd.f32 %v2481, %v2612
    %2614 = vmatmul.bf16.gmra.mxu0 %v2460
    %v2615 = vpop.f32.mrf.mxu0
    %v2616 = vadd.f32 %v2481, %v2615
    %v2617 = vpop.f32.mrf.mxu0
    %v2618 = vadd.f32 %v2481, %v2617
    %2619 = vdwg.mxu0
    %v2620 = vsub.f32 0.0, %v2541
    %v2621 = vsub.f32 0.0, %v2543
    %v2622 = vsub.f32 0.0, %v2546
    %v2623 = vsub.f32 0.0, %v2548
    %v2624 = vsub.f32 0.0, %v2551
    %v2625 = vsub.f32 0.0, %v2553
    %v2626 = vsub.f32 0.0, %v2556
    %v2627 = vsub.f32 0.0, %v2558
    %v2628 = vsub.f32 0.0, %v2561
    %v2629 = vsub.f32 0.0, %v2563
    %v2630 = vsub.f32 0.0, %v2566
    %v2631 = vsub.f32 0.0, %v2568
    %v2632 = vsub.f32 0.0, %v2571
    %v2633 = vsub.f32 0.0, %v2573
    %v2634 = vsub.f32 0.0, %v2576
    %v2635 = vsub.f32 0.0, %v2578
    %v2636 = vsub.f32 0.0, %v2581
    %v2637 = vsub.f32 0.0, %v2583
    %v2638 = vsub.f32 0.0, %v2586
    %v2639 = vsub.f32 0.0, %v2588
    %v2640 = vsub.f32 0.0, %v2591
    %v2641 = vsub.f32 0.0, %v2593
    %v2642 = vsub.f32 0.0, %v2596
    %v2643 = vsub.f32 0.0, %v2598
    %v2644 = vsub.f32 0.0, %v2601
    %v2645 = vsub.f32 0.0, %v2603
    %v2646 = vsub.f32 0.0, %v2606
    %v2647 = vsub.f32 0.0, %v2608
    %v2648 = vsub.f32 0.0, %v2611
    %v2649 = vsub.f32 0.0, %v2613
    %v2650 = vsub.f32 0.0, %v2616
    %v2651 = vsub.f32 0.0, %v2618
    %v2652 = vmul.f32 %v2620, 1.442695
    %v2653 = vpow.pop %v2652
    %v2654 = vmul.f32 %v2621, 1.442695
    %v2655 = vpow.pop %v2654
    %v2656 = vmul.f32 %v2622, 1.442695
    %v2657 = vpow.pop %v2656
    %v2658 = vmul.f32 %v2623, 1.442695
    %v2659 = vpow.pop %v2658
    %v2660 = vmul.f32 %v2624, 1.442695
    %v2661 = vpow.pop %v2660
    %v2662 = vmul.f32 %v2625, 1.442695
    %v2663 = vpow.pop %v2662
    %v2664 = vmul.f32 %v2626, 1.442695
    %v2665 = vpow.pop %v2664
    %v2666 = vmul.f32 %v2627, 1.442695
    %v2667 = vpow.pop %v2666
    %v2668 = vmul.f32 %v2628, 1.442695
    %v2669 = vpow.pop %v2668
    %v2670 = vmul.f32 %v2629, 1.442695
    %v2671 = vpow.pop %v2670
    %v2672 = vmul.f32 %v2630, 1.442695
    %v2673 = vpow.pop %v2672
    %v2674 = vmul.f32 %v2631, 1.442695
    %v2675 = vpow.pop %v2674
    %v2676 = vmul.f32 %v2632, 1.442695
    %v2677 = vpow.pop %v2676
    %v2678 = vmul.f32 %v2633, 1.442695
    %v2679 = vpow.pop %v2678
    %v2680 = vmul.f32 %v2634, 1.442695
    %v2681 = vpow.pop %v2680
    %v2682 = vmul.f32 %v2635, 1.442695
    %v2683 = vpow.pop %v2682
    %v2684 = vmul.f32 %v2636, 1.442695
    %v2685 = vpow.pop %v2684
    %v2686 = vmul.f32 %v2637, 1.442695
    %v2687 = vpow.pop %v2686
    %v2688 = vmul.f32 %v2638, 1.442695
    %v2689 = vpow.pop %v2688
    %v2690 = vmul.f32 %v2639, 1.442695
    %v2691 = vpow.pop %v2690
    %v2692 = vmul.f32 %v2640, 1.442695
    %v2693 = vpow.pop %v2692
    %v2694 = vmul.f32 %v2641, 1.442695
    %v2695 = vpow.pop %v2694
    %v2696 = vmul.f32 %v2642, 1.442695
    %v2697 = vpow.pop %v2696
    %v2698 = vmul.f32 %v2643, 1.442695
    %v2699 = vpow.pop %v2698
    %v2700 = vmul.f32 %v2644, 1.442695
    %v2701 = vpow.pop %v2700
    %v2702 = vmul.f32 %v2645, 1.442695
    %v2703 = vpow.pop %v2702
    %v2704 = vmul.f32 %v2646, 1.442695
    %v2705 = vpow.pop %v2704
    %v2706 = vmul.f32 %v2647, 1.442695
    %v2707 = vpow.pop %v2706
    %v2708 = vmul.f32 %v2648, 1.442695
    %v2709 = vpow.pop %v2708
    %v2710 = vmul.f32 %v2649, 1.442695
    %v2711 = vpow.pop %v2710
    %v2712 = vmul.f32 %v2650, 1.442695
    %v2713 = vpow.pop %v2712
    %v2714 = vmul.f32 %v2651, 1.442695
    %v2715 = vpow.pop %v2714
    %v2716 = vadd.f32 %v2653, 1.0
    %v2717 = vadd.f32 %v2655, 1.0
    %v2718 = vadd.f32 %v2657, 1.0
    %v2719 = vadd.f32 %v2659, 1.0
    %v2720 = vadd.f32 %v2661, 1.0
    %v2721 = vadd.f32 %v2663, 1.0
    %v2722 = vadd.f32 %v2665, 1.0
    %v2723 = vadd.f32 %v2667, 1.0
    %v2724 = vadd.f32 %v2669, 1.0
    %v2725 = vadd.f32 %v2671, 1.0
    %v2726 = vadd.f32 %v2673, 1.0
    %v2727 = vadd.f32 %v2675, 1.0
    %v2728 = vadd.f32 %v2677, 1.0
    %v2729 = vadd.f32 %v2679, 1.0
    %v2730 = vadd.f32 %v2681, 1.0
    %v2731 = vadd.f32 %v2683, 1.0
    %v2732 = vadd.f32 %v2685, 1.0
    %v2733 = vadd.f32 %v2687, 1.0
    %v2734 = vadd.f32 %v2689, 1.0
    %v2735 = vadd.f32 %v2691, 1.0
    %v2736 = vadd.f32 %v2693, 1.0
    %v2737 = vadd.f32 %v2695, 1.0
    %v2738 = vadd.f32 %v2697, 1.0
    %v2739 = vadd.f32 %v2699, 1.0
    %v2740 = vadd.f32 %v2701, 1.0
    %v2741 = vadd.f32 %v2703, 1.0
    %v2742 = vadd.f32 %v2705, 1.0
    %v2743 = vadd.f32 %v2707, 1.0
    %v2744 = vadd.f32 %v2709, 1.0
    %v2745 = vadd.f32 %v2711, 1.0
    %v2746 = vadd.f32 %v2713, 1.0
    %v2747 = vadd.f32 %v2715, 1.0
    %v2748 = vrcp.pop %v2716
    %v2749 = vrcp.pop %v2717
    %v2750 = vrcp.pop %v2718
    %v2751 = vrcp.pop %v2719
    %v2752 = vrcp.pop %v2720
    %v2753 = vrcp.pop %v2721
    %v2754 = vrcp.pop %v2722
    %v2755 = vrcp.pop %v2723
    %v2756 = vrcp.pop %v2724
    %v2757 = vrcp.pop %v2725
    %v2758 = vrcp.pop %v2726
    %v2759 = vrcp.pop %v2727
    %v2760 = vrcp.pop %v2728
    %v2761 = vrcp.pop %v2729
    %v2762 = vrcp.pop %v2730
    %v2763 = vrcp.pop %v2731
    %v2764 = vrcp.pop %v2732
    %v2765 = vrcp.pop %v2733
    %v2766 = vrcp.pop %v2734
    %v2767 = vrcp.pop %v2735
    %v2768 = vrcp.pop %v2736
    %v2769 = vrcp.pop %v2737
    %v2770 = vrcp.pop %v2738
    %v2771 = vrcp.pop %v2739
    %v2772 = vrcp.pop %v2740
    %v2773 = vrcp.pop %v2741
    %v2774 = vrcp.pop %v2742
    %v2775 = vrcp.pop %v2743
    %v2776 = vrcp.pop %v2744
    %v2777 = vrcp.pop %v2745
    %v2778 = vrcp.pop %v2746
    %v2779 = vrcp.pop %v2747
    %v2780 = vmul.f32 %v2541, %v2748
    %v2781 = vmul.f32 %v2543, %v2749
    %v2782 = vmul.f32 %v2546, %v2750
    %v2783 = vmul.f32 %v2548, %v2751
    %v2784 = vmul.f32 %v2551, %v2752
    %v2785 = vmul.f32 %v2553, %v2753
    %v2786 = vmul.f32 %v2556, %v2754
    %v2787 = vmul.f32 %v2558, %v2755
    %v2788 = vmul.f32 %v2561, %v2756
    %v2789 = vmul.f32 %v2563, %v2757
    %v2790 = vmul.f32 %v2566, %v2758
    %v2791 = vmul.f32 %v2568, %v2759
    %v2792 = vmul.f32 %v2571, %v2760
    %v2793 = vmul.f32 %v2573, %v2761
    %v2794 = vmul.f32 %v2576, %v2762
    %v2795 = vmul.f32 %v2578, %v2763
    %v2796 = vmul.f32 %v2581, %v2764
    %v2797 = vmul.f32 %v2583, %v2765
    %v2798 = vmul.f32 %v2586, %v2766
    %v2799 = vmul.f32 %v2588, %v2767
    %v2800 = vmul.f32 %v2591, %v2768
    %v2801 = vmul.f32 %v2593, %v2769
    %v2802 = vmul.f32 %v2596, %v2770
    %v2803 = vmul.f32 %v2598, %v2771
    %v2804 = vmul.f32 %v2601, %v2772
    %v2805 = vmul.f32 %v2603, %v2773
    %v2806 = vmul.f32 %v2606, %v2774
    %v2807 = vmul.f32 %v2608, %v2775
    %v2808 = vmul.f32 %v2611, %v2776
    %v2809 = vmul.f32 %v2613, %v2777
    %v2810 = vmul.f32 %v2616, %v2778
    %v2811 = vmul.f32 %v2618, %v2779
    %v2812 = vadd.f32 %v2046, %v2780
    %v2813 = vadd.f32 %v2047, %v2781
    %v2814 = vadd.f32 %v2048, %v2782
    %v2815 = vadd.f32 %v2049, %v2783
    %v2816 = vadd.f32 %v2050, %v2784
    %v2817 = vadd.f32 %v2051, %v2785
    %v2818 = vadd.f32 %v2052, %v2786
    %v2819 = vadd.f32 %v2053, %v2787
    %v2820 = vadd.f32 %v2054, %v2788
    %v2821 = vadd.f32 %v2055, %v2789
    %v2822 = vadd.f32 %v2056, %v2790
    %v2823 = vadd.f32 %v2057, %v2791
    %v2824 = vadd.f32 %v2058, %v2792
    %v2825 = vadd.f32 %v2059, %v2793
    %v2826 = vadd.f32 %v2060, %v2794
    %v2827 = vadd.f32 %v2061, %v2795
    %v2828 = vadd.f32 %v2062, %v2796
    %v2829 = vadd.f32 %v2063, %v2797
    %v2830 = vadd.f32 %v2064, %v2798
    %v2831 = vadd.f32 %v2065, %v2799
    %v2832 = vadd.f32 %v2066, %v2800
    %v2833 = vadd.f32 %v2067, %v2801
    %v2834 = vadd.f32 %v2068, %v2802
    %v2835 = vadd.f32 %v2069, %v2803
    %v2836 = vadd.f32 %v2070, %v2804
    %v2837 = vadd.f32 %v2071, %v2805
    %v2838 = vadd.f32 %v2072, %v2806
    %v2839 = vadd.f32 %v2073, %v2807
    %v2840 = vadd.f32 %v2074, %v2808
    %v2841 = vadd.f32 %v2075, %v2809
    %v2842 = vadd.f32 %v2076, %v2810
    %v2843 = vadd.f32 %v2077, %v2811
    %2844 = vst [vmem:[#allocation2] sm:$0xff] %v2812
    %2845 = vst [vmem:[#allocation2 + $0x8] sm:$0xff] %v2813
    %2846 = vst [vmem:[#allocation2 + $0x10] sm:$0xff] %v2814
    %2847 = vst [vmem:[#allocation2 + $0x18] sm:$0xff] %v2815
    %2848 = vst [vmem:[#allocation2 + $0x20] sm:$0xff] %v2816
    %2849 = vst [vmem:[#allocation2 + $0x28] sm:$0xff] %v2817
    %2850 = vst [vmem:[#allocation2 + $0x30] sm:$0xff] %v2818
    %2851 = vst [vmem:[#allocation2 + $0x38] sm:$0xff] %v2819
    %2852 = vst [vmem:[#allocation2 + $0x40] sm:$0xff] %v2820
    %2853 = vst [vmem:[#allocation2 + $0x48] sm:$0xff] %v2821
    %2854 = vst [vmem:[#allocation2 + $0x50] sm:$0xff] %v2822
    %2855 = vst [vmem:[#allocation2 + $0x58] sm:$0xff] %v2823
    %2856 = vst [vmem:[#allocation2 + $0x60] sm:$0xff] %v2824
    %2857 = vst [vmem:[#allocation2 + $0x68] sm:$0xff] %v2825
    %2858 = vst [vmem:[#allocation2 + $0x70] sm:$0xff] %v2826
    %2859 = vst [vmem:[#allocation2 + $0x78] sm:$0xff] %v2827
    %2860 = vst [vmem:[#allocation2 + $0x80] sm:$0xff] %v2828
    %2861 = vst [vmem:[#allocation2 + $0x88] sm:$0xff] %v2829
    %2862 = vst [vmem:[#allocation2 + $0x90] sm:$0xff] %v2830
    %2863 = vst [vmem:[#allocation2 + $0x98] sm:$0xff] %v2831
    %2864 = vst [vmem:[#allocation2 + $0xa0] sm:$0xff] %v2832
    %2865 = vst [vmem:[#allocation2 + $0xa8] sm:$0xff] %v2833
    %2866 = vst [vmem:[#allocation2 + $0xb0] sm:$0xff] %v2834
    %2867 = vst [vmem:[#allocation2 + $0xb8] sm:$0xff] %v2835
    %2868 = vst [vmem:[#allocation2 + $0xc0] sm:$0xff] %v2836
    %2869 = vst [vmem:[#allocation2 + $0xc8] sm:$0xff] %v2837
    %2870 = vst [vmem:[#allocation2 + $0xd0] sm:$0xff] %v2838
    %2871 = vst [vmem:[#allocation2 + $0xd8] sm:$0xff] %v2839
    %2872 = vst [vmem:[#allocation2 + $0xe0] sm:$0xff] %v2840
    %2873 = vst [vmem:[#allocation2 + $0xe8] sm:$0xff] %v2841
    %2874 = vst [vmem:[#allocation2 + $0xf0] sm:$0xff] %v2842
    %2875 = vst [vmem:[#allocation2 + $0xf8] sm:$0xff] %v2843
    // Predicated region
    $region22: #{interaction_block_forward.5} parent=1 // pred_check
      _
    $region23: #{interaction_block_forward.5} parent=1 // pred_check_branch
      %2877 = sbr.rel (0) target = $region25
    $region24: #{interaction_block_forward.5} parent=1 // pred_region
      %2879 = vsyncadd [#allocation3], 0
      %s2880 = sshll.u32 [#allocation2], 4
      %s2881 = int_to_ptr.vmem [resolvable:$true] %s2880
      %s2882 = sshll.u32 %s5, 4
      %s2883 = int_to_ptr.hbm [resolvable:$true] %s2882
      %2888 = dma.vmem_to_hbm [thread:$0]  %s2881, 4096, %s2883, [#allocation3], 128, 128, 8
    $region25: #{interaction_block_forward.5} parent=1 // pred_fallthru
      _
    // Predicated region
    $region26: #{interaction_block_forward.5} parent=1 // pred_check
      _
    $region27: #{interaction_block_forward.5} parent=1 // pred_check_branch
      %2890 = sbr.rel (0) target = $region29
    $region28: #{interaction_block_forward.5} parent=1 // pred_region
      %2892 = dma.done [#allocation3], 4096
    $region29: #{interaction_block_forward.5} parent=1 // pred_fallthru
      _
    %2893 = vsyncpa [#allocation3], 1

// kernel: interaction_block_forward.4
$region0: #{interaction_block_forward.4}
  #allocation0 [shape = 'u32[]', space=smem, size = 0x4, offset = 0x4, fixed_abs, tag = 'smem constant byte address 0x4 - core index']
  #allocation1 [shape = 'u32[72,128]{1,0:T(1,128)}', space=vmem, size = 0x9000, scoped, tag = 'internal scratch']
  %s0 = inlined_call_operand.vmem [shape: f32[512,48], index: 0, kind: input, shape index: {}]
  %s1 = inlined_call_operand.vmem [shape: s32[512,1], index: 1, kind: input, shape index: {}]
  %s2 = inlined_call_operand.vmem [shape: s32[1,512], index: 2, kind: input, shape index: {}]
  %s3 = inlined_call_operand.vmem [shape: bf16[256,128], index: 3, kind: input, shape index: {}]
  %s4 = inlined_call_operand.vmem [shape: bf16[48,1024], index: 4, kind: input, shape index: {}]
  %s5 = inlined_call_operand.vmem [shape: bf16[1024,128], index: 5, kind: input, shape index: {}]
  %s6 = inlined_call_operand.vmem [shape: f32[256,128], index: 6, kind: output, shape index: {}]
  %s7 = sld [smem:[#allocation0]]
  $region38: #{interaction_block_forward.4} parent=0
    _
  %s9 = ssub.s32 1, %s7
  %s10 = scalar_select 0, %s9, %s7
  // Predicated region
  $region2: #{interaction_block_forward.4} parent=0 // pred_check
    _
  $region3: #{interaction_block_forward.4} parent=0 // pred_check_branch
    %12 = sbr.rel (0) target = $region5
  $region4: #{interaction_block_forward.4} parent=0 // pred_region
    _
  $region5: #{interaction_block_forward.4} parent=0 // pred_fallthru
    _
  // Predicated region
  $region6: #{interaction_block_forward.4} parent=0 // pred_check
    _
  $region7: #{interaction_block_forward.4} parent=0 // pred_check_branch
    %14 = sbr.rel (0) target = $region9
  $region8: #{interaction_block_forward.4} parent=0 // pred_region
    _
  $region9: #{interaction_block_forward.4} parent=0 // pred_fallthru
    _
  // Predicated region
  $region10: #{interaction_block_forward.4} parent=0 // pred_check
    _
  $region11: #{interaction_block_forward.4} parent=0 // pred_check_branch
    %16 = sbr.rel (0) target = $region13
  $region12: #{interaction_block_forward.4} parent=0 // pred_region
    _
  $region13: #{interaction_block_forward.4} parent=0 // pred_fallthru
    _
  // Predicated region
  $region14: #{interaction_block_forward.4} parent=0 // pred_check
    _
  $region15: #{interaction_block_forward.4} parent=0 // pred_check_branch
    %18 = sbr.rel (0) target = $region17
  $region16: #{interaction_block_forward.4} parent=0 // pred_region
    _
  $region17: #{interaction_block_forward.4} parent=0 // pred_fallthru
    _
  // Predicated region
  $region18: #{interaction_block_forward.4} parent=0 // pred_check
    _
  $region19: #{interaction_block_forward.4} parent=0 // pred_check_branch
    %20 = sbr.rel (0) target = $region21
  $region20: #{interaction_block_forward.4} parent=0 // pred_region
    _
  $region21: #{interaction_block_forward.4} parent=0 // pred_fallthru
    _
  // Predicated region
  $region22: #{interaction_block_forward.4} parent=0 // pred_check
    _
  $region23: #{interaction_block_forward.4} parent=0 // pred_check_branch
    %22 = sbr.rel (0) target = $region25
  $region24: #{interaction_block_forward.4} parent=0 // pred_region
    _
  $region25: #{interaction_block_forward.4} parent=0 // pred_fallthru
    _
  %p24 = scmp.eq.s32.totalorder 0, 0
  // Predicated region
  $region26: #{interaction_block_forward.4} parent=0 // pred_check
    %p25 = pneg %p24
  $region27: #{interaction_block_forward.4} parent=0 // pred_check_branch
    %27 = sbr.rel (%p25) target = $region29
  $region28: #{interaction_block_forward.4} parent=0 // pred_region
    %28 = vst [vmem:[%s6] sm:$0xff] 0.0
    %29 = vst [vmem:[%s6 + $0x8] sm:$0xff] 0.0
    %30 = vst [vmem:[%s6 + $0x10] sm:$0xff] 0.0
    %31 = vst [vmem:[%s6 + $0x18] sm:$0xff] 0.0
    %32 = vst [vmem:[%s6 + $0x20] sm:$0xff] 0.0
    %33 = vst [vmem:[%s6 + $0x28] sm:$0xff] 0.0
    %34 = vst [vmem:[%s6 + $0x30] sm:$0xff] 0.0
    %35 = vst [vmem:[%s6 + $0x38] sm:$0xff] 0.0
    %36 = vst [vmem:[%s6 + $0x40] sm:$0xff] 0.0
    %37 = vst [vmem:[%s6 + $0x48] sm:$0xff] 0.0
    %38 = vst [vmem:[%s6 + $0x50] sm:$0xff] 0.0
    %39 = vst [vmem:[%s6 + $0x58] sm:$0xff] 0.0
    %40 = vst [vmem:[%s6 + $0x60] sm:$0xff] 0.0
    %41 = vst [vmem:[%s6 + $0x68] sm:$0xff] 0.0
    %42 = vst [vmem:[%s6 + $0x70] sm:$0xff] 0.0
    %43 = vst [vmem:[%s6 + $0x78] sm:$0xff] 0.0
    %44 = vst [vmem:[%s6 + $0x80] sm:$0xff] 0.0
    %45 = vst [vmem:[%s6 + $0x88] sm:$0xff] 0.0
    %46 = vst [vmem:[%s6 + $0x90] sm:$0xff] 0.0
    %47 = vst [vmem:[%s6 + $0x98] sm:$0xff] 0.0
    %48 = vst [vmem:[%s6 + $0xa0] sm:$0xff] 0.0
    %49 = vst [vmem:[%s6 + $0xa8] sm:$0xff] 0.0
    %50 = vst [vmem:[%s6 + $0xb0] sm:$0xff] 0.0
    %51 = vst [vmem:[%s6 + $0xb8] sm:$0xff] 0.0
    %52 = vst [vmem:[%s6 + $0xc0] sm:$0xff] 0.0
    %53 = vst [vmem:[%s6 + $0xc8] sm:$0xff] 0.0
    %54 = vst [vmem:[%s6 + $0xd0] sm:$0xff] 0.0
    %55 = vst [vmem:[%s6 + $0xd8] sm:$0xff] 0.0
    %56 = vst [vmem:[%s6 + $0xe0] sm:$0xff] 0.0
    %57 = vst [vmem:[%s6 + $0xe8] sm:$0xff] 0.0
    %58 = vst [vmem:[%s6 + $0xf0] sm:$0xff] 0.0
    %59 = vst [vmem:[%s6 + $0xf8] sm:$0xff] 0.0
  $region29: #{interaction_block_forward.4} parent=0 // pred_fallthru
    _
  %v60 = vld [vmem:[%s0] sm:$0xff]
  %v61 = vld [vmem:[%s0 + $0x8] sm:$0xff]
  %v62 = vld [vmem:[%s0 + $0x10] sm:$0xff]
  %v63 = vld [vmem:[%s0 + $0x18] sm:$0xff]
  %v64 = vld [vmem:[%s0 + $0x20] sm:$0xff]
  %v65 = vld [vmem:[%s0 + $0x28] sm:$0xff]
  %v66 = vld [vmem:[%s0 + $0x30] sm:$0xff]
  %v67 = vld [vmem:[%s0 + $0x38] sm:$0xff]
  %v68 = vld [vmem:[%s0 + $0x40] sm:$0xff]
  %v69 = vld [vmem:[%s0 + $0x48] sm:$0xff]
  %v70 = vld [vmem:[%s0 + $0x50] sm:$0xff]
  %v71 = vld [vmem:[%s0 + $0x58] sm:$0xff]
  %v72 = vld [vmem:[%s0 + $0x60] sm:$0xff]
  %v73 = vld [vmem:[%s0 + $0x68] sm:$0xff]
  %v74 = vld [vmem:[%s0 + $0x70] sm:$0xff]
  %v75 = vld [vmem:[%s0 + $0x78] sm:$0xff]
  %v76 = vld [vmem:[%s0 + $0x80] sm:$0xff]
  %v77 = vld [vmem:[%s0 + $0x88] sm:$0xff]
  %v78 = vld [vmem:[%s0 + $0x90] sm:$0xff]
  %v79 = vld [vmem:[%s0 + $0x98] sm:$0xff]
  %v80 = vld [vmem:[%s0 + $0xa0] sm:$0xff]
  %v81 = vld [vmem:[%s0 + $0xa8] sm:$0xff]
  %v82 = vld [vmem:[%s0 + $0xb0] sm:$0xff]
  %v83 = vld [vmem:[%s0 + $0xb8] sm:$0xff]
  %v84 = vld [vmem:[%s0 + $0xc0] sm:$0xff]
  %v85 = vld [vmem:[%s0 + $0xc8] sm:$0xff]
  %v86 = vld [vmem:[%s0 + $0xd0] sm:$0xff]
  %v87 = vld [vmem:[%s0 + $0xd8] sm:$0xff]
  %v88 = vld [vmem:[%s0 + $0xe0] sm:$0xff]
  %v89 = vld [vmem:[%s0 + $0xe8] sm:$0xff]
  %v90 = vld [vmem:[%s0 + $0xf0] sm:$0xff]
  %v91 = vld [vmem:[%s0 + $0xf8] sm:$0xff]
  %v92 = vld [vmem:[%s0 + $0x100] sm:$0xff]
  %v93 = vld [vmem:[%s0 + $0x108] sm:$0xff]
  %v94 = vld [vmem:[%s0 + $0x110] sm:$0xff]
  %v95 = vld [vmem:[%s0 + $0x118] sm:$0xff]
  %v96 = vld [vmem:[%s0 + $0x120] sm:$0xff]
  %v97 = vld [vmem:[%s0 + $0x128] sm:$0xff]
  %v98 = vld [vmem:[%s0 + $0x130] sm:$0xff]
  %v99 = vld [vmem:[%s0 + $0x138] sm:$0xff]
  %v100 = vld [vmem:[%s0 + $0x140] sm:$0xff]
  %v101 = vld [vmem:[%s0 + $0x148] sm:$0xff]
  %v102 = vld [vmem:[%s0 + $0x150] sm:$0xff]
  %v103 = vld [vmem:[%s0 + $0x158] sm:$0xff]
  %v104 = vld [vmem:[%s0 + $0x160] sm:$0xff]
  %v105 = vld [vmem:[%s0 + $0x168] sm:$0xff]
  %v106 = vld [vmem:[%s0 + $0x170] sm:$0xff]
  %v107 = vld [vmem:[%s0 + $0x178] sm:$0xff]
  %v108 = vld [vmem:[%s0 + $0x180] sm:$0xff]
  %v109 = vld [vmem:[%s0 + $0x188] sm:$0xff]
  %v110 = vld [vmem:[%s0 + $0x190] sm:$0xff]
  %v111 = vld [vmem:[%s0 + $0x198] sm:$0xff]
  %v112 = vld [vmem:[%s0 + $0x1a0] sm:$0xff]
  %v113 = vld [vmem:[%s0 + $0x1a8] sm:$0xff]
  %v114 = vld [vmem:[%s0 + $0x1b0] sm:$0xff]
  %v115 = vld [vmem:[%s0 + $0x1b8] sm:$0xff]
  %v116 = vld [vmem:[%s0 + $0x1c0] sm:$0xff]
  %v117 = vld [vmem:[%s0 + $0x1c8] sm:$0xff]
  %v118 = vld [vmem:[%s0 + $0x1d0] sm:$0xff]
  %v119 = vld [vmem:[%s0 + $0x1d8] sm:$0xff]
  %v120 = vld [vmem:[%s0 + $0x1e0] sm:$0xff]
  %v121 = vld [vmem:[%s0 + $0x1e8] sm:$0xff]
  %v122 = vld [vmem:[%s0 + $0x1f0] sm:$0xff]
  %v123 = vld [vmem:[%s0 + $0x1f8] sm:$0xff]
  %v124 = vpack.c.bf16 %v61, %v60
  %v125 = vpack.c.bf16 %v63, %v62
  %v126 = vpack.c.bf16 %v65, %v64
  %v127 = vpack.c.bf16 %v67, %v66
  %v128 = vpack.c.bf16 %v69, %v68
  %v129 = vpack.c.bf16 %v71, %v70
  %v130 = vpack.c.bf16 %v73, %v72
  %v131 = vpack.c.bf16 %v75, %v74
  %v132 = vpack.c.bf16 %v77, %v76
  %v133 = vpack.c.bf16 %v79, %v78
  %v134 = vpack.c.bf16 %v81, %v80
  %v135 = vpack.c.bf16 %v83, %v82
  %v136 = vpack.c.bf16 %v85, %v84
  %v137 = vpack.c.bf16 %v87, %v86
  %v138 = vpack.c.bf16 %v89, %v88
  %v139 = vpack.c.bf16 %v91, %v90
  %v140 = vpack.c.bf16 %v93, %v92
  %v141 = vpack.c.bf16 %v95, %v94
  %v142 = vpack.c.bf16 %v97, %v96
  %v143 = vpack.c.bf16 %v99, %v98
  %v144 = vpack.c.bf16 %v101, %v100
  %v145 = vpack.c.bf16 %v103, %v102
  %v146 = vpack.c.bf16 %v105, %v104
  %v147 = vpack.c.bf16 %v107, %v106
  %v148 = vpack.c.bf16 %v109, %v108
  %v149 = vpack.c.bf16 %v111, %v110
  %v150 = vpack.c.bf16 %v113, %v112
  %v151 = vpack.c.bf16 %v115, %v114
  %v152 = vpack.c.bf16 %v117, %v116
  %v153 = vpack.c.bf16 %v119, %v118
  %v154 = vpack.c.bf16 %v121, %v120
  %v155 = vpack.c.bf16 %v123, %v122
  %v156 = vld [vmem:[%s4] sm:$0xff]
  %v157 = vld [vmem:[%s4 + $0x8] sm:$0xff]
  %v158 = vld [vmem:[%s4 + $0x10] sm:$0xff]
  %v159 = vld [vmem:[%s4 + $0x18] sm:$0xff]
  %v160 = vld [vmem:[%s4 + $0x20] sm:$0xff]
  %v161 = vld [vmem:[%s4 + $0x28] sm:$0xff]
  %v162 = vld [vmem:[%s4 + $0x30] sm:$0xff]
  %v163 = vld [vmem:[%s4 + $0x38] sm:$0xff]
  %v164 = vld [vmem:[%s4 + $0x40] sm:$0xff]
  %v165 = vld [vmem:[%s4 + $0x48] sm:$0xff]
  %v166 = vld [vmem:[%s4 + $0x50] sm:$0xff]
  %v167 = vld [vmem:[%s4 + $0x58] sm:$0xff]
  %v168 = vld [vmem:[%s4 + $0x60] sm:$0xff]
  %v169 = vld [vmem:[%s4 + $0x68] sm:$0xff]
  %v170 = vld [vmem:[%s4 + $0x70] sm:$0xff]
  %v171 = vld [vmem:[%s4 + $0x78] sm:$0xff]
  %v172 = vld [vmem:[%s4 + $0x80] sm:$0xff]
  %v173 = vld [vmem:[%s4 + $0x88] sm:$0xff]
  %v174 = vld [vmem:[%s4 + $0x90] sm:$0xff]
  %v175 = vld [vmem:[%s4 + $0x98] sm:$0xff]
  %v176 = vld [vmem:[%s4 + $0xa0] sm:$0xff]
  %v177 = vld [vmem:[%s4 + $0xa8] sm:$0xff]
  %v178 = vld [vmem:[%s4 + $0xb0] sm:$0xff]
  %v179 = vld [vmem:[%s4 + $0xb8] sm:$0xff]
  %v204 = vunpack.c.l.b16 %v156
  %v205 = vunpack.c.h.b16 %v156
  %v206 = vunpack.c.l.b16 %v157
  %v207 = vunpack.c.h.b16 %v157
  %v208 = vunpack.c.l.b16 %v158
  %v209 = vunpack.c.h.b16 %v158
  %v210 = vunpack.c.l.b16 %v159
  %v211 = vunpack.c.h.b16 %v159
  %v212 = vunpack.c.l.b16 %v160
  %v213 = vunpack.c.h.b16 %v160
  %v214 = vunpack.c.l.b16 %v161
  %v215 = vunpack.c.h.b16 %v161
  %v216 = vunpack.c.l.b16 %v162
  %v217 = vunpack.c.h.b16 %v162
  %v218 = vunpack.c.l.b16 %v163
  %v219 = vunpack.c.h.b16 %v163
  %v220 = vunpack.c.l.b16 %v164
  %v221 = vunpack.c.h.b16 %v164
  %v222 = vunpack.c.l.b16 %v165
  %v223 = vunpack.c.h.b16 %v165
  %v224 = vunpack.c.l.b16 %v166
  %v225 = vunpack.c.h.b16 %v166
  %v226 = vunpack.c.l.b16 %v167
  %v227 = vunpack.c.h.b16 %v167
  %v228 = vunpack.c.l.b16 %v168
  %v229 = vunpack.c.h.b16 %v168
  %v230 = vunpack.c.l.b16 %v169
  %v231 = vunpack.c.h.b16 %v169
  %v232 = vunpack.c.l.b16 %v170
  %v233 = vunpack.c.h.b16 %v170
  %v234 = vunpack.c.l.b16 %v171
  %v235 = vunpack.c.h.b16 %v171
  %v236 = vunpack.c.l.b16 %v172
  %v237 = vunpack.c.h.b16 %v172
  %v238 = vunpack.c.l.b16 %v173
  %v239 = vunpack.c.h.b16 %v173
  %v240 = vunpack.c.l.b16 %v174
  %v241 = vunpack.c.h.b16 %v174
  %v242 = vunpack.c.l.b16 %v175
  %v243 = vunpack.c.h.b16 %v175
  %v244 = vunpack.c.l.b16 %v176
  %v245 = vunpack.c.h.b16 %v176
  %v246 = vunpack.c.l.b16 %v177
  %v247 = vunpack.c.h.b16 %v177
  %v248 = vunpack.c.l.b16 %v178
  %v249 = vunpack.c.h.b16 %v178
  %v250 = vunpack.c.l.b16 %v179
  %v251 = vunpack.c.h.b16 %v179
  %v252 = vpack.c.b16 %v212, %v204
  %v253 = vpack.c.b16 %v213, %v205
  %v254 = vpack.c.b16 %v214, %v206
  %v255 = vpack.c.b16 %v215, %v207
  %v256 = vpack.c.b16 %v216, %v208
  %v257 = vpack.c.b16 %v217, %v209
  %v258 = vpack.c.b16 %v218, %v210
  %v259 = vpack.c.b16 %v219, %v211
  %v260 = vpack.c.b16 %v228, %v220
  %v261 = vpack.c.b16 %v229, %v221
  %v262 = vpack.c.b16 %v230, %v222
  %v263 = vpack.c.b16 %v231, %v223
  %v264 = vpack.c.b16 %v232, %v224
  %v265 = vpack.c.b16 %v233, %v225
  %v266 = vpack.c.b16 %v234, %v226
  %v267 = vpack.c.b16 %v235, %v227
  %v268 = vpack.c.b16 %v244, %v236
  %v269 = vpack.c.b16 %v245, %v237
  %v270 = vpack.c.b16 %v246, %v238
  %v271 = vpack.c.b16 %v247, %v239
  %v272 = vpack.c.b16 %v248, %v240
  %v273 = vpack.c.b16 %v249, %v241
  %v274 = vpack.c.b16 %v250, %v242
  %v275 = vpack.c.b16 %v251, %v243
  %vm300 = vcmask 392192
  %v302 = vsel %vm300, %v124, 0
  %v305 = vsel %vm300, %v125, 0
  %v308 = vsel %vm300, %v126, 0
  %v311 = vsel %vm300, %v127, 0
  %v314 = vsel %vm300, %v128, 0
  %v317 = vsel %vm300, %v129, 0
  %v320 = vsel %vm300, %v130, 0
  %v323 = vsel %vm300, %v131, 0
  %v326 = vsel %vm300, %v132, 0
  %v329 = vsel %vm300, %v133, 0
  %v332 = vsel %vm300, %v134, 0
  %v335 = vsel %vm300, %v135, 0
  %v338 = vsel %vm300, %v136, 0
  %v341 = vsel %vm300, %v137, 0
  %v344 = vsel %vm300, %v138, 0
  %v347 = vsel %vm300, %v139, 0
  %v350 = vsel %vm300, %v140, 0
  %v353 = vsel %vm300, %v141, 0
  %v356 = vsel %vm300, %v142, 0
  %v359 = vsel %vm300, %v143, 0
  %v362 = vsel %vm300, %v144, 0
  %v365 = vsel %vm300, %v145, 0
  %v368 = vsel %vm300, %v146, 0
  %v371 = vsel %vm300, %v147, 0
  %v374 = vsel %vm300, %v148, 0
  %v377 = vsel %vm300, %v149, 0
  %v380 = vsel %vm300, %v150, 0
  %v383 = vsel %vm300, %v151, 0
  %v386 = vsel %vm300, %v152, 0
  %v389 = vsel %vm300, %v153, 0
  %v392 = vsel %vm300, %v154, 0
  %v395 = vsel %vm300, %v155, 0
  %397 = vmatpush.bf16.msra.mxu0 0
  %398 = vmatpush.bf16.msra.mxu0 0
  %399 = vmatpush.bf16.msra.mxu0 0
  %400 = vmatpush.bf16.msra.mxu0 0
  %401 = vmatpush.bf16.msra.mxu0 0
  %402 = vmatpush.bf16.msra.mxu0 %v268
  %403 = vmatpush.bf16.msra.mxu0 %v260
  %404 = vmatpush.bf16.msra.mxu0 %v252
  %405 = vmatmul.bf16.gmra.mxu0 %v302
  %v406 = vpop.f32.mrf.mxu0
  %v407 = vadd.f32 0.0, %v406
  %v408 = vpop.f32.mrf.mxu0
  %v409 = vadd.f32 0.0, %v408
  %410 = vmatmul.bf16.gmra.mxu0 %v305
  %v411 = vpop.f32.mrf.mxu0
  %v412 = vadd.f32 0.0, %v411
  %v413 = vpop.f32.mrf.mxu0
  %v414 = vadd.f32 0.0, %v413
  %415 = vmatmul.bf16.gmra.mxu0 %v308
  %v416 = vpop.f32.mrf.mxu0
  %v417 = vadd.f32 0.0, %v416
  %v418 = vpop.f32.mrf.mxu0
  %v419 = vadd.f32 0.0, %v418
  %420 = vmatmul.bf16.gmra.mxu0 %v311
  %v421 = vpop.f32.mrf.mxu0
  %v422 = vadd.f32 0.0, %v421
  %v423 = vpop.f32.mrf.mxu0
  %v424 = vadd.f32 0.0, %v423
  %425 = vmatmul.bf16.gmra.mxu0 %v314
  %v426 = vpop.f32.mrf.mxu0
  %v427 = vadd.f32 0.0, %v426
  %v428 = vpop.f32.mrf.mxu0
  %v429 = vadd.f32 0.0, %v428
  %430 = vmatmul.bf16.gmra.mxu0 %v317
  %v431 = vpop.f32.mrf.mxu0
  %v432 = vadd.f32 0.0, %v431
  %v433 = vpop.f32.mrf.mxu0
  %v434 = vadd.f32 0.0, %v433
  %435 = vmatmul.bf16.gmra.mxu0 %v320
  %v436 = vpop.f32.mrf.mxu0
  %v437 = vadd.f32 0.0, %v436
  %v438 = vpop.f32.mrf.mxu0
  %v439 = vadd.f32 0.0, %v438
  %440 = vmatmul.bf16.gmra.mxu0 %v323
  %v441 = vpop.f32.mrf.mxu0
  %v442 = vadd.f32 0.0, %v441
  %v443 = vpop.f32.mrf.mxu0
  %v444 = vadd.f32 0.0, %v443
  %445 = vmatmul.bf16.gmra.mxu0 %v326
  %v446 = vpop.f32.mrf.mxu0
  %v447 = vadd.f32 0.0, %v446
  %v448 = vpop.f32.mrf.mxu0
  %v449 = vadd.f32 0.0, %v448
  %450 = vmatmul.bf16.gmra.mxu0 %v329
  %v451 = vpop.f32.mrf.mxu0
  %v452 = vadd.f32 0.0, %v451
  %v453 = vpop.f32.mrf.mxu0
  %v454 = vadd.f32 0.0, %v453
  %455 = vmatmul.bf16.gmra.mxu0 %v332
  %v456 = vpop.f32.mrf.mxu0
  %v457 = vadd.f32 0.0, %v456
  %v458 = vpop.f32.mrf.mxu0
  %v459 = vadd.f32 0.0, %v458
  %460 = vmatmul.bf16.gmra.mxu0 %v335
  %v461 = vpop.f32.mrf.mxu0
  %v462 = vadd.f32 0.0, %v461
  %v463 = vpop.f32.mrf.mxu0
  %v464 = vadd.f32 0.0, %v463
  %465 = vmatmul.bf16.gmra.mxu0 %v338
  %v466 = vpop.f32.mrf.mxu0
  %v467 = vadd.f32 0.0, %v466
  %v468 = vpop.f32.mrf.mxu0
  %v469 = vadd.f32 0.0, %v468
  %470 = vmatmul.bf16.gmra.mxu0 %v341
  %v471 = vpop.f32.mrf.mxu0
  %v472 = vadd.f32 0.0, %v471
  %v473 = vpop.f32.mrf.mxu0
  %v474 = vadd.f32 0.0, %v473
  %475 = vmatmul.bf16.gmra.mxu0 %v344
  %v476 = vpop.f32.mrf.mxu0
  %v477 = vadd.f32 0.0, %v476
  %v478 = vpop.f32.mrf.mxu0
  %v479 = vadd.f32 0.0, %v478
  %480 = vmatmul.bf16.gmra.mxu0 %v347
  %v481 = vpop.f32.mrf.mxu0
  %v482 = vadd.f32 0.0, %v481
  %v483 = vpop.f32.mrf.mxu0
  %v484 = vadd.f32 0.0, %v483
  %485 = vmatmul.bf16.gmra.mxu0 %v350
  %v486 = vpop.f32.mrf.mxu0
  %v487 = vadd.f32 0.0, %v486
  %v488 = vpop.f32.mrf.mxu0
  %v489 = vadd.f32 0.0, %v488
  %490 = vmatmul.bf16.gmra.mxu0 %v353
  %v491 = vpop.f32.mrf.mxu0
  %v492 = vadd.f32 0.0, %v491
  %v493 = vpop.f32.mrf.mxu0
  %v494 = vadd.f32 0.0, %v493
  %495 = vmatmul.bf16.gmra.mxu0 %v356
  %v496 = vpop.f32.mrf.mxu0
  %v497 = vadd.f32 0.0, %v496
  %v498 = vpop.f32.mrf.mxu0
  %v499 = vadd.f32 0.0, %v498
  %500 = vmatmul.bf16.gmra.mxu0 %v359
  %v501 = vpop.f32.mrf.mxu0
  %v502 = vadd.f32 0.0, %v501
  %v503 = vpop.f32.mrf.mxu0
  %v504 = vadd.f32 0.0, %v503
  %505 = vmatmul.bf16.gmra.mxu0 %v362
  %v506 = vpop.f32.mrf.mxu0
  %v507 = vadd.f32 0.0, %v506
  %v508 = vpop.f32.mrf.mxu0
  %v509 = vadd.f32 0.0, %v508
  %510 = vmatmul.bf16.gmra.mxu0 %v365
  %v511 = vpop.f32.mrf.mxu0
  %v512 = vadd.f32 0.0, %v511
  %v513 = vpop.f32.mrf.mxu0
  %v514 = vadd.f32 0.0, %v513
  %515 = vmatmul.bf16.gmra.mxu0 %v368
  %v516 = vpop.f32.mrf.mxu0
  %v517 = vadd.f32 0.0, %v516
  %v518 = vpop.f32.mrf.mxu0
  %v519 = vadd.f32 0.0, %v518
  %520 = vmatmul.bf16.gmra.mxu0 %v371
  %v521 = vpop.f32.mrf.mxu0
  %v522 = vadd.f32 0.0, %v521
  %v523 = vpop.f32.mrf.mxu0
  %v524 = vadd.f32 0.0, %v523
  %525 = vmatmul.bf16.gmra.mxu0 %v374
  %v526 = vpop.f32.mrf.mxu0
  %v527 = vadd.f32 0.0, %v526
  %v528 = vpop.f32.mrf.mxu0
  %v529 = vadd.f32 0.0, %v528
  %530 = vmatmul.bf16.gmra.mxu0 %v377
  %v531 = vpop.f32.mrf.mxu0
  %v532 = vadd.f32 0.0, %v531
  %v533 = vpop.f32.mrf.mxu0
  %v534 = vadd.f32 0.0, %v533
  %535 = vmatmul.bf16.gmra.mxu0 %v380
  %v536 = vpop.f32.mrf.mxu0
  %v537 = vadd.f32 0.0, %v536
  %v538 = vpop.f32.mrf.mxu0
  %v539 = vadd.f32 0.0, %v538
  %540 = vmatmul.bf16.gmra.mxu0 %v383
  %v541 = vpop.f32.mrf.mxu0
  %v542 = vadd.f32 0.0, %v541
  %v543 = vpop.f32.mrf.mxu0
  %v544 = vadd.f32 0.0, %v543
  %545 = vmatmul.bf16.gmra.mxu0 %v386
  %v546 = vpop.f32.mrf.mxu0
  %v547 = vadd.f32 0.0, %v546
  %v548 = vpop.f32.mrf.mxu0
  %v549 = vadd.f32 0.0, %v548
  %550 = vmatmul.bf16.gmra.mxu0 %v389
  %v551 = vpop.f32.mrf.mxu0
  %v552 = vadd.f32 0.0, %v551
  %v553 = vpop.f32.mrf.mxu0
  %v554 = vadd.f32 0.0, %v553
  %555 = vmatmul.bf16.gmra.mxu0 %v392
  %v556 = vpop.f32.mrf.mxu0
  %v557 = vadd.f32 0.0, %v556
  %v558 = vpop.f32.mrf.mxu0
  %v559 = vadd.f32 0.0, %v558
  %560 = vmatmul.bf16.gmra.mxu0 %v395
  %v561 = vpop.f32.mrf.mxu0
  %v562 = vadd.f32 0.0, %v561
  %v563 = vpop.f32.mrf.mxu0
  %v564 = vadd.f32 0.0, %v563
  %565 = vdwg.mxu0
  %566 = vmatpush.bf16.msra.mxu0 0
  %567 = vmatpush.bf16.msra.mxu0 0
  %568 = vmatpush.bf16.msra.mxu0 0
  %569 = vmatpush.bf16.msra.mxu0 0
  %570 = vmatpush.bf16.msra.mxu0 0
  %571 = vmatpush.bf16.msra.mxu0 %v269
  %572 = vmatpush.bf16.msra.mxu0 %v261
  %573 = vmatpush.bf16.msra.mxu0 %v253
  %574 = vmatmul.bf16.gmra.mxu0 %v302
  %v575 = vpop.f32.mrf.mxu0
  %v576 = vadd.f32 0.0, %v575
  %v577 = vpop.f32.mrf.mxu0
  %v578 = vadd.f32 0.0, %v577
  %579 = vmatmul.bf16.gmra.mxu0 %v305
  %v580 = vpop.f32.mrf.mxu0
  %v581 = vadd.f32 0.0, %v580
  %v582 = vpop.f32.mrf.mxu0
  %v583 = vadd.f32 0.0, %v582
  %584 = vmatmul.bf16.gmra.mxu0 %v308
  %v585 = vpop.f32.mrf.mxu0
  %v586 = vadd.f32 0.0, %v585
  %v587 = vpop.f32.mrf.mxu0
  %v588 = vadd.f32 0.0, %v587
  %589 = vmatmul.bf16.gmra.mxu0 %v311
  %v590 = vpop.f32.mrf.mxu0
  %v591 = vadd.f32 0.0, %v590
  %v592 = vpop.f32.mrf.mxu0
  %v593 = vadd.f32 0.0, %v592
  %594 = vmatmul.bf16.gmra.mxu0 %v314
  %v595 = vpop.f32.mrf.mxu0
  %v596 = vadd.f32 0.0, %v595
  %v597 = vpop.f32.mrf.mxu0
  %v598 = vadd.f32 0.0, %v597
  %599 = vmatmul.bf16.gmra.mxu0 %v317
  %v600 = vpop.f32.mrf.mxu0
  %v601 = vadd.f32 0.0, %v600
  %v602 = vpop.f32.mrf.mxu0
  %v603 = vadd.f32 0.0, %v602
  %604 = vmatmul.bf16.gmra.mxu0 %v320
  %v605 = vpop.f32.mrf.mxu0
  %v606 = vadd.f32 0.0, %v605
  %v607 = vpop.f32.mrf.mxu0
  %v608 = vadd.f32 0.0, %v607
  %609 = vmatmul.bf16.gmra.mxu0 %v323
  %v610 = vpop.f32.mrf.mxu0
  %v611 = vadd.f32 0.0, %v610
  %v612 = vpop.f32.mrf.mxu0
  %v613 = vadd.f32 0.0, %v612
  %614 = vmatmul.bf16.gmra.mxu0 %v326
  %v615 = vpop.f32.mrf.mxu0
  %v616 = vadd.f32 0.0, %v615
  %v617 = vpop.f32.mrf.mxu0
  %v618 = vadd.f32 0.0, %v617
  %619 = vmatmul.bf16.gmra.mxu0 %v329
  %v620 = vpop.f32.mrf.mxu0
  %v621 = vadd.f32 0.0, %v620
  %v622 = vpop.f32.mrf.mxu0
  %v623 = vadd.f32 0.0, %v622
  %624 = vmatmul.bf16.gmra.mxu0 %v332
  %v625 = vpop.f32.mrf.mxu0
  %v626 = vadd.f32 0.0, %v625
  %v627 = vpop.f32.mrf.mxu0
  %v628 = vadd.f32 0.0, %v627
  %629 = vmatmul.bf16.gmra.mxu0 %v335
  %v630 = vpop.f32.mrf.mxu0
  %v631 = vadd.f32 0.0, %v630
  %v632 = vpop.f32.mrf.mxu0
  %v633 = vadd.f32 0.0, %v632
  %634 = vmatmul.bf16.gmra.mxu0 %v338
  %v635 = vpop.f32.mrf.mxu0
  %v636 = vadd.f32 0.0, %v635
  %v637 = vpop.f32.mrf.mxu0
  %v638 = vadd.f32 0.0, %v637
  %639 = vmatmul.bf16.gmra.mxu0 %v341
  %v640 = vpop.f32.mrf.mxu0
  %v641 = vadd.f32 0.0, %v640
  %v642 = vpop.f32.mrf.mxu0
  %v643 = vadd.f32 0.0, %v642
  %644 = vmatmul.bf16.gmra.mxu0 %v344
  %v645 = vpop.f32.mrf.mxu0
  %v646 = vadd.f32 0.0, %v645
  %v647 = vpop.f32.mrf.mxu0
  %v648 = vadd.f32 0.0, %v647
  %649 = vmatmul.bf16.gmra.mxu0 %v347
  %v650 = vpop.f32.mrf.mxu0
  %v651 = vadd.f32 0.0, %v650
  %v652 = vpop.f32.mrf.mxu0
  %v653 = vadd.f32 0.0, %v652
  %654 = vmatmul.bf16.gmra.mxu0 %v350
  %v655 = vpop.f32.mrf.mxu0
  %v656 = vadd.f32 0.0, %v655
  %v657 = vpop.f32.mrf.mxu0
  %v658 = vadd.f32 0.0, %v657
  %659 = vmatmul.bf16.gmra.mxu0 %v353
  %v660 = vpop.f32.mrf.mxu0
  %v661 = vadd.f32 0.0, %v660
  %v662 = vpop.f32.mrf.mxu0
  %v663 = vadd.f32 0.0, %v662
  %664 = vmatmul.bf16.gmra.mxu0 %v356
  %v665 = vpop.f32.mrf.mxu0
  %v666 = vadd.f32 0.0, %v665
  %v667 = vpop.f32.mrf.mxu0
  %v668 = vadd.f32 0.0, %v667
  %669 = vmatmul.bf16.gmra.mxu0 %v359
  %v670 = vpop.f32.mrf.mxu0
  %v671 = vadd.f32 0.0, %v670
  %v672 = vpop.f32.mrf.mxu0
  %v673 = vadd.f32 0.0, %v672
  %674 = vmatmul.bf16.gmra.mxu0 %v362
  %v675 = vpop.f32.mrf.mxu0
  %v676 = vadd.f32 0.0, %v675
  %v677 = vpop.f32.mrf.mxu0
  %v678 = vadd.f32 0.0, %v677
  %679 = vmatmul.bf16.gmra.mxu0 %v365
  %v680 = vpop.f32.mrf.mxu0
  %v681 = vadd.f32 0.0, %v680
  %v682 = vpop.f32.mrf.mxu0
  %v683 = vadd.f32 0.0, %v682
  %684 = vmatmul.bf16.gmra.mxu0 %v368
  %v685 = vpop.f32.mrf.mxu0
  %v686 = vadd.f32 0.0, %v685
  %v687 = vpop.f32.mrf.mxu0
  %v688 = vadd.f32 0.0, %v687
  %689 = vmatmul.bf16.gmra.mxu0 %v371
  %v690 = vpop.f32.mrf.mxu0
  %v691 = vadd.f32 0.0, %v690
  %v692 = vpop.f32.mrf.mxu0
  %v693 = vadd.f32 0.0, %v692
  %694 = vmatmul.bf16.gmra.mxu0 %v374
  %v695 = vpop.f32.mrf.mxu0
  %v696 = vadd.f32 0.0, %v695
  %v697 = vpop.f32.mrf.mxu0
  %v698 = vadd.f32 0.0, %v697
  %699 = vmatmul.bf16.gmra.mxu0 %v377
  %v700 = vpop.f32.mrf.mxu0
  %v701 = vadd.f32 0.0, %v700
  %v702 = vpop.f32.mrf.mxu0
  %v703 = vadd.f32 0.0, %v702
  %704 = vmatmul.bf16.gmra.mxu0 %v380
  %v705 = vpop.f32.mrf.mxu0
  %v706 = vadd.f32 0.0, %v705
  %v707 = vpop.f32.mrf.mxu0
  %v708 = vadd.f32 0.0, %v707
  %709 = vmatmul.bf16.gmra.mxu0 %v383
  %v710 = vpop.f32.mrf.mxu0
  %v711 = vadd.f32 0.0, %v710
  %v712 = vpop.f32.mrf.mxu0
  %v713 = vadd.f32 0.0, %v712
  %714 = vmatmul.bf16.gmra.mxu0 %v386
  %v715 = vpop.f32.mrf.mxu0
  %v716 = vadd.f32 0.0, %v715
  %v717 = vpop.f32.mrf.mxu0
  %v718 = vadd.f32 0.0, %v717
  %719 = vmatmul.bf16.gmra.mxu0 %v389
  %v720 = vpop.f32.mrf.mxu0
  %v721 = vadd.f32 0.0, %v720
  %v722 = vpop.f32.mrf.mxu0
  %v723 = vadd.f32 0.0, %v722
  %724 = vmatmul.bf16.gmra.mxu0 %v392
  %v725 = vpop.f32.mrf.mxu0
  %v726 = vadd.f32 0.0, %v725
  %v727 = vpop.f32.mrf.mxu0
  %v728 = vadd.f32 0.0, %v727
  %729 = vmatmul.bf16.gmra.mxu0 %v395
  %v730 = vpop.f32.mrf.mxu0
  %v731 = vadd.f32 0.0, %v730
  %v732 = vpop.f32.mrf.mxu0
  %v733 = vadd.f32 0.0, %v732
  %734 = vdwg.mxu0
  %735 = vmatpush.bf16.msra.mxu0 0
  %736 = vmatpush.bf16.msra.mxu0 0
  %737 = vmatpush.bf16.msra.mxu0 0
  %738 = vmatpush.bf16.msra.mxu0 0
  %739 = vmatpush.bf16.msra.mxu0 0
  %740 = vmatpush.bf16.msra.mxu0 %v270
  %741 = vmatpush.bf16.msra.mxu0 %v262
  %742 = vmatpush.bf16.msra.mxu0 %v254
  %743 = vmatmul.bf16.gmra.mxu0 %v302
  %v744 = vpop.f32.mrf.mxu0
  %v745 = vadd.f32 0.0, %v744
  %v746 = vpop.f32.mrf.mxu0
  %v747 = vadd.f32 0.0, %v746
  %748 = vmatmul.bf16.gmra.mxu0 %v305
  %v749 = vpop.f32.mrf.mxu0
  %v750 = vadd.f32 0.0, %v749
  %v751 = vpop.f32.mrf.mxu0
  %v752 = vadd.f32 0.0, %v751
  %753 = vmatmul.bf16.gmra.mxu0 %v308
  %v754 = vpop.f32.mrf.mxu0
  %v755 = vadd.f32 0.0, %v754
  %v756 = vpop.f32.mrf.mxu0
  %v757 = vadd.f32 0.0, %v756
  %758 = vmatmul.bf16.gmra.mxu0 %v311
  %v759 = vpop.f32.mrf.mxu0
  %v760 = vadd.f32 0.0, %v759
  %v761 = vpop.f32.mrf.mxu0
  %v762 = vadd.f32 0.0, %v761
  %763 = vmatmul.bf16.gmra.mxu0 %v314
  %v764 = vpop.f32.mrf.mxu0
  %v765 = vadd.f32 0.0, %v764
  %v766 = vpop.f32.mrf.mxu0
  %v767 = vadd.f32 0.0, %v766
  %768 = vmatmul.bf16.gmra.mxu0 %v317
  %v769 = vpop.f32.mrf.mxu0
  %v770 = vadd.f32 0.0, %v769
  %v771 = vpop.f32.mrf.mxu0
  %v772 = vadd.f32 0.0, %v771
  %773 = vmatmul.bf16.gmra.mxu0 %v320
  %v774 = vpop.f32.mrf.mxu0
  %v775 = vadd.f32 0.0, %v774
  %v776 = vpop.f32.mrf.mxu0
  %v777 = vadd.f32 0.0, %v776
  %778 = vmatmul.bf16.gmra.mxu0 %v323
  %v779 = vpop.f32.mrf.mxu0
  %v780 = vadd.f32 0.0, %v779
  %v781 = vpop.f32.mrf.mxu0
  %v782 = vadd.f32 0.0, %v781
  %783 = vmatmul.bf16.gmra.mxu0 %v326
  %v784 = vpop.f32.mrf.mxu0
  %v785 = vadd.f32 0.0, %v784
  %v786 = vpop.f32.mrf.mxu0
  %v787 = vadd.f32 0.0, %v786
  %788 = vmatmul.bf16.gmra.mxu0 %v329
  %v789 = vpop.f32.mrf.mxu0
  %v790 = vadd.f32 0.0, %v789
  %v791 = vpop.f32.mrf.mxu0
  %v792 = vadd.f32 0.0, %v791
  %793 = vmatmul.bf16.gmra.mxu0 %v332
  %v794 = vpop.f32.mrf.mxu0
  %v795 = vadd.f32 0.0, %v794
  %v796 = vpop.f32.mrf.mxu0
  %v797 = vadd.f32 0.0, %v796
  %798 = vmatmul.bf16.gmra.mxu0 %v335
  %v799 = vpop.f32.mrf.mxu0
  %v800 = vadd.f32 0.0, %v799
  %v801 = vpop.f32.mrf.mxu0
  %v802 = vadd.f32 0.0, %v801
  %803 = vmatmul.bf16.gmra.mxu0 %v338
  %v804 = vpop.f32.mrf.mxu0
  %v805 = vadd.f32 0.0, %v804
  %v806 = vpop.f32.mrf.mxu0
  %v807 = vadd.f32 0.0, %v806
  %808 = vmatmul.bf16.gmra.mxu0 %v341
  %v809 = vpop.f32.mrf.mxu0
  %v810 = vadd.f32 0.0, %v809
  %v811 = vpop.f32.mrf.mxu0
  %v812 = vadd.f32 0.0, %v811
  %813 = vmatmul.bf16.gmra.mxu0 %v344
  %v814 = vpop.f32.mrf.mxu0
  %v815 = vadd.f32 0.0, %v814
  %v816 = vpop.f32.mrf.mxu0
  %v817 = vadd.f32 0.0, %v816
  %818 = vmatmul.bf16.gmra.mxu0 %v347
  %v819 = vpop.f32.mrf.mxu0
  %v820 = vadd.f32 0.0, %v819
  %v821 = vpop.f32.mrf.mxu0
  %v822 = vadd.f32 0.0, %v821
  %823 = vmatmul.bf16.gmra.mxu0 %v350
  %v824 = vpop.f32.mrf.mxu0
  %v825 = vadd.f32 0.0, %v824
  %v826 = vpop.f32.mrf.mxu0
  %v827 = vadd.f32 0.0, %v826
  %828 = vmatmul.bf16.gmra.mxu0 %v353
  %v829 = vpop.f32.mrf.mxu0
  %v830 = vadd.f32 0.0, %v829
  %v831 = vpop.f32.mrf.mxu0
  %v832 = vadd.f32 0.0, %v831
  %833 = vmatmul.bf16.gmra.mxu0 %v356
  %v834 = vpop.f32.mrf.mxu0
  %v835 = vadd.f32 0.0, %v834
  %v836 = vpop.f32.mrf.mxu0
  %v837 = vadd.f32 0.0, %v836
  %838 = vmatmul.bf16.gmra.mxu0 %v359
  %v839 = vpop.f32.mrf.mxu0
  %v840 = vadd.f32 0.0, %v839
  %v841 = vpop.f32.mrf.mxu0
  %v842 = vadd.f32 0.0, %v841
  %843 = vmatmul.bf16.gmra.mxu0 %v362
  %v844 = vpop.f32.mrf.mxu0
  %v845 = vadd.f32 0.0, %v844
  %v846 = vpop.f32.mrf.mxu0
  %v847 = vadd.f32 0.0, %v846
  %848 = vmatmul.bf16.gmra.mxu0 %v365
  %v849 = vpop.f32.mrf.mxu0
  %v850 = vadd.f32 0.0, %v849
  %v851 = vpop.f32.mrf.mxu0
  %v852 = vadd.f32 0.0, %v851
  %853 = vmatmul.bf16.gmra.mxu0 %v368
  %v854 = vpop.f32.mrf.mxu0
  %v855 = vadd.f32 0.0, %v854
  %v856 = vpop.f32.mrf.mxu0
  %v857 = vadd.f32 0.0, %v856
  %858 = vmatmul.bf16.gmra.mxu0 %v371
  %v859 = vpop.f32.mrf.mxu0
  %v860 = vadd.f32 0.0, %v859
  %v861 = vpop.f32.mrf.mxu0
  %v862 = vadd.f32 0.0, %v861
  %863 = vmatmul.bf16.gmra.mxu0 %v374
  %v864 = vpop.f32.mrf.mxu0
  %v865 = vadd.f32 0.0, %v864
  %v866 = vpop.f32.mrf.mxu0
  %v867 = vadd.f32 0.0, %v866
  %868 = vmatmul.bf16.gmra.mxu0 %v377
  %v869 = vpop.f32.mrf.mxu0
  %v870 = vadd.f32 0.0, %v869
  %v871 = vpop.f32.mrf.mxu0
  %v872 = vadd.f32 0.0, %v871
  %873 = vmatmul.bf16.gmra.mxu0 %v380
  %v874 = vpop.f32.mrf.mxu0
  %v875 = vadd.f32 0.0, %v874
  %v876 = vpop.f32.mrf.mxu0
  %v877 = vadd.f32 0.0, %v876
  %878 = vmatmul.bf16.gmra.mxu0 %v383
  %v879 = vpop.f32.mrf.mxu0
  %v880 = vadd.f32 0.0, %v879
  %v881 = vpop.f32.mrf.mxu0
  %v882 = vadd.f32 0.0, %v881
  %883 = vmatmul.bf16.gmra.mxu0 %v386
  %v884 = vpop.f32.mrf.mxu0
  %v885 = vadd.f32 0.0, %v884
  %v886 = vpop.f32.mrf.mxu0
  %v887 = vadd.f32 0.0, %v886
  %888 = vmatmul.bf16.gmra.mxu0 %v389
  %v889 = vpop.f32.mrf.mxu0
  %v890 = vadd.f32 0.0, %v889
  %v891 = vpop.f32.mrf.mxu0
  %v892 = vadd.f32 0.0, %v891
  %893 = vmatmul.bf16.gmra.mxu0 %v392
  %v894 = vpop.f32.mrf.mxu0
  %v895 = vadd.f32 0.0, %v894
  %v896 = vpop.f32.mrf.mxu0
  %v897 = vadd.f32 0.0, %v896
  %898 = vmatmul.bf16.gmra.mxu0 %v395
  %v899 = vpop.f32.mrf.mxu0
  %v900 = vadd.f32 0.0, %v899
  %v901 = vpop.f32.mrf.mxu0
  %v902 = vadd.f32 0.0, %v901
  %903 = vdwg.mxu0
  %904 = vmatpush.bf16.msra.mxu0 0
  %905 = vmatpush.bf16.msra.mxu0 0
  %906 = vmatpush.bf16.msra.mxu0 0
  %907 = vmatpush.bf16.msra.mxu0 0
  %908 = vmatpush.bf16.msra.mxu0 0
  %909 = vmatpush.bf16.msra.mxu0 %v271
  %910 = vmatpush.bf16.msra.mxu0 %v263
  %911 = vmatpush.bf16.msra.mxu0 %v255
  %912 = vmatmul.bf16.gmra.mxu0 %v302
  %v913 = vpop.f32.mrf.mxu0
  %v914 = vadd.f32 0.0, %v913
  %v915 = vpop.f32.mrf.mxu0
  %v916 = vadd.f32 0.0, %v915
  %917 = vmatmul.bf16.gmra.mxu0 %v305
  %v918 = vpop.f32.mrf.mxu0
  %v919 = vadd.f32 0.0, %v918
  %v920 = vpop.f32.mrf.mxu0
  %v921 = vadd.f32 0.0, %v920
  %922 = vmatmul.bf16.gmra.mxu0 %v308
  %v923 = vpop.f32.mrf.mxu0
  %v924 = vadd.f32 0.0, %v923
  %v925 = vpop.f32.mrf.mxu0
  %v926 = vadd.f32 0.0, %v925
  %927 = vmatmul.bf16.gmra.mxu0 %v311
  %v928 = vpop.f32.mrf.mxu0
  %v929 = vadd.f32 0.0, %v928
  %v930 = vpop.f32.mrf.mxu0
  %v931 = vadd.f32 0.0, %v930
  %932 = vmatmul.bf16.gmra.mxu0 %v314
  %v933 = vpop.f32.mrf.mxu0
  %v934 = vadd.f32 0.0, %v933
  %v935 = vpop.f32.mrf.mxu0
  %v936 = vadd.f32 0.0, %v935
  %937 = vmatmul.bf16.gmra.mxu0 %v317
  %v938 = vpop.f32.mrf.mxu0
  %v939 = vadd.f32 0.0, %v938
  %v940 = vpop.f32.mrf.mxu0
  %v941 = vadd.f32 0.0, %v940
  %942 = vmatmul.bf16.gmra.mxu0 %v320
  %v943 = vpop.f32.mrf.mxu0
  %v944 = vadd.f32 0.0, %v943
  %v945 = vpop.f32.mrf.mxu0
  %v946 = vadd.f32 0.0, %v945
  %947 = vmatmul.bf16.gmra.mxu0 %v323
  %v948 = vpop.f32.mrf.mxu0
  %v949 = vadd.f32 0.0, %v948
  %v950 = vpop.f32.mrf.mxu0
  %v951 = vadd.f32 0.0, %v950
  %952 = vmatmul.bf16.gmra.mxu0 %v326
  %v953 = vpop.f32.mrf.mxu0
  %v954 = vadd.f32 0.0, %v953
  %v955 = vpop.f32.mrf.mxu0
  %v956 = vadd.f32 0.0, %v955
  %957 = vmatmul.bf16.gmra.mxu0 %v329
  %v958 = vpop.f32.mrf.mxu0
  %v959 = vadd.f32 0.0, %v958
  %v960 = vpop.f32.mrf.mxu0
  %v961 = vadd.f32 0.0, %v960
  %962 = vmatmul.bf16.gmra.mxu0 %v332
  %v963 = vpop.f32.mrf.mxu0
  %v964 = vadd.f32 0.0, %v963
  %v965 = vpop.f32.mrf.mxu0
  %v966 = vadd.f32 0.0, %v965
  %967 = vmatmul.bf16.gmra.mxu0 %v335
  %v968 = vpop.f32.mrf.mxu0
  %v969 = vadd.f32 0.0, %v968
  %v970 = vpop.f32.mrf.mxu0
  %v971 = vadd.f32 0.0, %v970
  %972 = vmatmul.bf16.gmra.mxu0 %v338
  %v973 = vpop.f32.mrf.mxu0
  %v974 = vadd.f32 0.0, %v973
  %v975 = vpop.f32.mrf.mxu0
  %v976 = vadd.f32 0.0, %v975
  %977 = vmatmul.bf16.gmra.mxu0 %v341
  %v978 = vpop.f32.mrf.mxu0
  %v979 = vadd.f32 0.0, %v978
  %v980 = vpop.f32.mrf.mxu0
  %v981 = vadd.f32 0.0, %v980
  %982 = vmatmul.bf16.gmra.mxu0 %v344
  %v983 = vpop.f32.mrf.mxu0
  %v984 = vadd.f32 0.0, %v983
  %v985 = vpop.f32.mrf.mxu0
  %v986 = vadd.f32 0.0, %v985
  %987 = vmatmul.bf16.gmra.mxu0 %v347
  %v988 = vpop.f32.mrf.mxu0
  %v989 = vadd.f32 0.0, %v988
  %v990 = vpop.f32.mrf.mxu0
  %v991 = vadd.f32 0.0, %v990
  %992 = vmatmul.bf16.gmra.mxu0 %v350
  %v993 = vpop.f32.mrf.mxu0
  %v994 = vadd.f32 0.0, %v993
  %v995 = vpop.f32.mrf.mxu0
  %v996 = vadd.f32 0.0, %v995
  %997 = vmatmul.bf16.gmra.mxu0 %v353
  %v998 = vpop.f32.mrf.mxu0
  %v999 = vadd.f32 0.0, %v998
  %v1000 = vpop.f32.mrf.mxu0
  %v1001 = vadd.f32 0.0, %v1000
  %1002 = vmatmul.bf16.gmra.mxu0 %v356
  %v1003 = vpop.f32.mrf.mxu0
  %v1004 = vadd.f32 0.0, %v1003
  %v1005 = vpop.f32.mrf.mxu0
  %v1006 = vadd.f32 0.0, %v1005
  %1007 = vmatmul.bf16.gmra.mxu0 %v359
  %v1008 = vpop.f32.mrf.mxu0
  %v1009 = vadd.f32 0.0, %v1008
  %v1010 = vpop.f32.mrf.mxu0
  %v1011 = vadd.f32 0.0, %v1010
  %1012 = vmatmul.bf16.gmra.mxu0 %v362
  %v1013 = vpop.f32.mrf.mxu0
  %v1014 = vadd.f32 0.0, %v1013
  %v1015 = vpop.f32.mrf.mxu0
  %v1016 = vadd.f32 0.0, %v1015
  %1017 = vmatmul.bf16.gmra.mxu0 %v365
  %v1018 = vpop.f32.mrf.mxu0
  %v1019 = vadd.f32 0.0, %v1018
  %v1020 = vpop.f32.mrf.mxu0
  %v1021 = vadd.f32 0.0, %v1020
  %1022 = vmatmul.bf16.gmra.mxu0 %v368
  %v1023 = vpop.f32.mrf.mxu0
  %v1024 = vadd.f32 0.0, %v1023
  %v1025 = vpop.f32.mrf.mxu0
  %v1026 = vadd.f32 0.0, %v1025
  %1027 = vmatmul.bf16.gmra.mxu0 %v371
  %v1028 = vpop.f32.mrf.mxu0
  %v1029 = vadd.f32 0.0, %v1028
  %v1030 = vpop.f32.mrf.mxu0
  %v1031 = vadd.f32 0.0, %v1030
  %1032 = vmatmul.bf16.gmra.mxu0 %v374
  %v1033 = vpop.f32.mrf.mxu0
  %v1034 = vadd.f32 0.0, %v1033
  %v1035 = vpop.f32.mrf.mxu0
  %v1036 = vadd.f32 0.0, %v1035
  %1037 = vmatmul.bf16.gmra.mxu0 %v377
  %v1038 = vpop.f32.mrf.mxu0
  %v1039 = vadd.f32 0.0, %v1038
  %v1040 = vpop.f32.mrf.mxu0
  %v1041 = vadd.f32 0.0, %v1040
  %1042 = vmatmul.bf16.gmra.mxu0 %v380
  %v1043 = vpop.f32.mrf.mxu0
  %v1044 = vadd.f32 0.0, %v1043
  %v1045 = vpop.f32.mrf.mxu0
  %v1046 = vadd.f32 0.0, %v1045
  %1047 = vmatmul.bf16.gmra.mxu0 %v383
  %v1048 = vpop.f32.mrf.mxu0
  %v1049 = vadd.f32 0.0, %v1048
  %v1050 = vpop.f32.mrf.mxu0
  %v1051 = vadd.f32 0.0, %v1050
  %1052 = vmatmul.bf16.gmra.mxu0 %v386
  %v1053 = vpop.f32.mrf.mxu0
  %v1054 = vadd.f32 0.0, %v1053
  %v1055 = vpop.f32.mrf.mxu0
  %v1056 = vadd.f32 0.0, %v1055
  %1057 = vmatmul.bf16.gmra.mxu0 %v389
  %v1058 = vpop.f32.mrf.mxu0
  %v1059 = vadd.f32 0.0, %v1058
  %v1060 = vpop.f32.mrf.mxu0
  %v1061 = vadd.f32 0.0, %v1060
  %1062 = vmatmul.bf16.gmra.mxu0 %v392
  %v1063 = vpop.f32.mrf.mxu0
  %v1064 = vadd.f32 0.0, %v1063
  %v1065 = vpop.f32.mrf.mxu0
  %v1066 = vadd.f32 0.0, %v1065
  %1067 = vmatmul.bf16.gmra.mxu0 %v395
  %v1068 = vpop.f32.mrf.mxu0
  %v1069 = vadd.f32 0.0, %v1068
  %v1070 = vpop.f32.mrf.mxu0
  %v1071 = vadd.f32 0.0, %v1070
  %1072 = vdwg.mxu0
  %1073 = vmatpush.bf16.msra.mxu0 0
  %1074 = vmatpush.bf16.msra.mxu0 0
  %1075 = vmatpush.bf16.msra.mxu0 0
  %1076 = vmatpush.bf16.msra.mxu0 0
  %1077 = vmatpush.bf16.msra.mxu0 0
  %1078 = vmatpush.bf16.msra.mxu0 %v272
  %1079 = vmatpush.bf16.msra.mxu0 %v264
  %1080 = vmatpush.bf16.msra.mxu0 %v256
  %1081 = vmatmul.bf16.gmra.mxu0 %v302
  %v1082 = vpop.f32.mrf.mxu0
  %v1083 = vadd.f32 0.0, %v1082
  %v1084 = vpop.f32.mrf.mxu0
  %v1085 = vadd.f32 0.0, %v1084
  %1086 = vmatmul.bf16.gmra.mxu0 %v305
  %v1087 = vpop.f32.mrf.mxu0
  %v1088 = vadd.f32 0.0, %v1087
  %v1089 = vpop.f32.mrf.mxu0
  %v1090 = vadd.f32 0.0, %v1089
  %1091 = vmatmul.bf16.gmra.mxu0 %v308
  %v1092 = vpop.f32.mrf.mxu0
  %v1093 = vadd.f32 0.0, %v1092
  %v1094 = vpop.f32.mrf.mxu0
  %v1095 = vadd.f32 0.0, %v1094
  %1096 = vmatmul.bf16.gmra.mxu0 %v311
  %v1097 = vpop.f32.mrf.mxu0
  %v1098 = vadd.f32 0.0, %v1097
  %v1099 = vpop.f32.mrf.mxu0
  %v1100 = vadd.f32 0.0, %v1099
  %1101 = vmatmul.bf16.gmra.mxu0 %v314
  %v1102 = vpop.f32.mrf.mxu0
  %v1103 = vadd.f32 0.0, %v1102
  %v1104 = vpop.f32.mrf.mxu0
  %v1105 = vadd.f32 0.0, %v1104
  %1106 = vmatmul.bf16.gmra.mxu0 %v317
  %v1107 = vpop.f32.mrf.mxu0
  %v1108 = vadd.f32 0.0, %v1107
  %v1109 = vpop.f32.mrf.mxu0
  %v1110 = vadd.f32 0.0, %v1109
  %1111 = vmatmul.bf16.gmra.mxu0 %v320
  %v1112 = vpop.f32.mrf.mxu0
  %v1113 = vadd.f32 0.0, %v1112
  %v1114 = vpop.f32.mrf.mxu0
  %v1115 = vadd.f32 0.0, %v1114
  %1116 = vmatmul.bf16.gmra.mxu0 %v323
  %v1117 = vpop.f32.mrf.mxu0
  %v1118 = vadd.f32 0.0, %v1117
  %v1119 = vpop.f32.mrf.mxu0
  %v1120 = vadd.f32 0.0, %v1119
  %1121 = vmatmul.bf16.gmra.mxu0 %v326
  %v1122 = vpop.f32.mrf.mxu0
  %v1123 = vadd.f32 0.0, %v1122
  %v1124 = vpop.f32.mrf.mxu0
  %v1125 = vadd.f32 0.0, %v1124
  %1126 = vmatmul.bf16.gmra.mxu0 %v329
  %v1127 = vpop.f32.mrf.mxu0
  %v1128 = vadd.f32 0.0, %v1127
  %v1129 = vpop.f32.mrf.mxu0
  %v1130 = vadd.f32 0.0, %v1129
  %1131 = vmatmul.bf16.gmra.mxu0 %v332
  %v1132 = vpop.f32.mrf.mxu0
  %v1133 = vadd.f32 0.0, %v1132
  %v1134 = vpop.f32.mrf.mxu0
  %v1135 = vadd.f32 0.0, %v1134
  %1136 = vmatmul.bf16.gmra.mxu0 %v335
  %v1137 = vpop.f32.mrf.mxu0
  %v1138 = vadd.f32 0.0, %v1137
  %v1139 = vpop.f32.mrf.mxu0
  %v1140 = vadd.f32 0.0, %v1139
  %1141 = vmatmul.bf16.gmra.mxu0 %v338
  %v1142 = vpop.f32.mrf.mxu0
  %v1143 = vadd.f32 0.0, %v1142
  %v1144 = vpop.f32.mrf.mxu0
  %v1145 = vadd.f32 0.0, %v1144
  %1146 = vmatmul.bf16.gmra.mxu0 %v341
  %v1147 = vpop.f32.mrf.mxu0
  %v1148 = vadd.f32 0.0, %v1147
  %v1149 = vpop.f32.mrf.mxu0
  %v1150 = vadd.f32 0.0, %v1149
  %1151 = vmatmul.bf16.gmra.mxu0 %v344
  %v1152 = vpop.f32.mrf.mxu0
  %v1153 = vadd.f32 0.0, %v1152
  %v1154 = vpop.f32.mrf.mxu0
  %v1155 = vadd.f32 0.0, %v1154
  %1156 = vmatmul.bf16.gmra.mxu0 %v347
  %v1157 = vpop.f32.mrf.mxu0
  %v1158 = vadd.f32 0.0, %v1157
  %v1159 = vpop.f32.mrf.mxu0
  %v1160 = vadd.f32 0.0, %v1159
  %1161 = vmatmul.bf16.gmra.mxu0 %v350
  %v1162 = vpop.f32.mrf.mxu0
  %v1163 = vadd.f32 0.0, %v1162
  %v1164 = vpop.f32.mrf.mxu0
  %v1165 = vadd.f32 0.0, %v1164
  %1166 = vmatmul.bf16.gmra.mxu0 %v353
  %v1167 = vpop.f32.mrf.mxu0
  %v1168 = vadd.f32 0.0, %v1167
  %v1169 = vpop.f32.mrf.mxu0
  %v1170 = vadd.f32 0.0, %v1169
  %1171 = vmatmul.bf16.gmra.mxu0 %v356
  %v1172 = vpop.f32.mrf.mxu0
  %v1173 = vadd.f32 0.0, %v1172
  %v1174 = vpop.f32.mrf.mxu0
  %v1175 = vadd.f32 0.0, %v1174
  %1176 = vmatmul.bf16.gmra.mxu0 %v359
  %v1177 = vpop.f32.mrf.mxu0
  %v1178 = vadd.f32 0.0, %v1177
  %v1179 = vpop.f32.mrf.mxu0
  %v1180 = vadd.f32 0.0, %v1179
  %1181 = vmatmul.bf16.gmra.mxu0 %v362
  %v1182 = vpop.f32.mrf.mxu0
  %v1183 = vadd.f32 0.0, %v1182
  %v1184 = vpop.f32.mrf.mxu0
  %v1185 = vadd.f32 0.0, %v1184
  %1186 = vmatmul.bf16.gmra.mxu0 %v365
  %v1187 = vpop.f32.mrf.mxu0
  %v1188 = vadd.f32 0.0, %v1187
  %v1189 = vpop.f32.mrf.mxu0
  %v1190 = vadd.f32 0.0, %v1189
  %1191 = vmatmul.bf16.gmra.mxu0 %v368
  %v1192 = vpop.f32.mrf.mxu0
  %v1193 = vadd.f32 0.0, %v1192
  %v1194 = vpop.f32.mrf.mxu0
  %v1195 = vadd.f32 0.0, %v1194
  %1196 = vmatmul.bf16.gmra.mxu0 %v371
  %v1197 = vpop.f32.mrf.mxu0
  %v1198 = vadd.f32 0.0, %v1197
  %v1199 = vpop.f32.mrf.mxu0
  %v1200 = vadd.f32 0.0, %v1199
  %1201 = vmatmul.bf16.gmra.mxu0 %v374
  %v1202 = vpop.f32.mrf.mxu0
  %v1203 = vadd.f32 0.0, %v1202
  %v1204 = vpop.f32.mrf.mxu0
  %v1205 = vadd.f32 0.0, %v1204
  %1206 = vmatmul.bf16.gmra.mxu0 %v377
  %v1207 = vpop.f32.mrf.mxu0
  %v1208 = vadd.f32 0.0, %v1207
  %v1209 = vpop.f32.mrf.mxu0
  %v1210 = vadd.f32 0.0, %v1209
  %1211 = vmatmul.bf16.gmra.mxu0 %v380
  %v1212 = vpop.f32.mrf.mxu0
  %v1213 = vadd.f32 0.0, %v1212
  %v1214 = vpop.f32.mrf.mxu0
  %v1215 = vadd.f32 0.0, %v1214
  %1216 = vmatmul.bf16.gmra.mxu0 %v383
  %v1217 = vpop.f32.mrf.mxu0
  %v1218 = vadd.f32 0.0, %v1217
  %v1219 = vpop.f32.mrf.mxu0
  %v1220 = vadd.f32 0.0, %v1219
  %1221 = vmatmul.bf16.gmra.mxu0 %v386
  %v1222 = vpop.f32.mrf.mxu0
  %v1223 = vadd.f32 0.0, %v1222
  %v1224 = vpop.f32.mrf.mxu0
  %v1225 = vadd.f32 0.0, %v1224
  %1226 = vmatmul.bf16.gmra.mxu0 %v389
  %v1227 = vpop.f32.mrf.mxu0
  %v1228 = vadd.f32 0.0, %v1227
  %v1229 = vpop.f32.mrf.mxu0
  %v1230 = vadd.f32 0.0, %v1229
  %1231 = vmatmul.bf16.gmra.mxu0 %v392
  %v1232 = vpop.f32.mrf.mxu0
  %v1233 = vadd.f32 0.0, %v1232
  %v1234 = vpop.f32.mrf.mxu0
  %v1235 = vadd.f32 0.0, %v1234
  %1236 = vmatmul.bf16.gmra.mxu0 %v395
  %v1237 = vpop.f32.mrf.mxu0
  %v1238 = vadd.f32 0.0, %v1237
  %v1239 = vpop.f32.mrf.mxu0
  %v1240 = vadd.f32 0.0, %v1239
  %1241 = vdwg.mxu0
  %1242 = vmatpush.bf16.msra.mxu0 0
  %1243 = vmatpush.bf16.msra.mxu0 0
  %1244 = vmatpush.bf16.msra.mxu0 0
  %1245 = vmatpush.bf16.msra.mxu0 0
  %1246 = vmatpush.bf16.msra.mxu0 0
  %1247 = vmatpush.bf16.msra.mxu0 %v273
  %1248 = vmatpush.bf16.msra.mxu0 %v265
  %1249 = vmatpush.bf16.msra.mxu0 %v257
  %1250 = vmatmul.bf16.gmra.mxu0 %v302
  %v1251 = vpop.f32.mrf.mxu0
  %v1252 = vadd.f32 0.0, %v1251
  %v1253 = vpop.f32.mrf.mxu0
  %v1254 = vadd.f32 0.0, %v1253
  %1255 = vmatmul.bf16.gmra.mxu0 %v305
  %v1256 = vpop.f32.mrf.mxu0
  %v1257 = vadd.f32 0.0, %v1256
  %v1258 = vpop.f32.mrf.mxu0
  %v1259 = vadd.f32 0.0, %v1258
  %1260 = vmatmul.bf16.gmra.mxu0 %v308
  %v1261 = vpop.f32.mrf.mxu0
  %v1262 = vadd.f32 0.0, %v1261
  %v1263 = vpop.f32.mrf.mxu0
  %v1264 = vadd.f32 0.0, %v1263
  %1265 = vmatmul.bf16.gmra.mxu0 %v311
  %v1266 = vpop.f32.mrf.mxu0
  %v1267 = vadd.f32 0.0, %v1266
  %v1268 = vpop.f32.mrf.mxu0
  %v1269 = vadd.f32 0.0, %v1268
  %1270 = vmatmul.bf16.gmra.mxu0 %v314
  %v1271 = vpop.f32.mrf.mxu0
  %v1272 = vadd.f32 0.0, %v1271
  %v1273 = vpop.f32.mrf.mxu0
  %v1274 = vadd.f32 0.0, %v1273
  %1275 = vmatmul.bf16.gmra.mxu0 %v317
  %v1276 = vpop.f32.mrf.mxu0
  %v1277 = vadd.f32 0.0, %v1276
  %v1278 = vpop.f32.mrf.mxu0
  %v1279 = vadd.f32 0.0, %v1278
  %1280 = vmatmul.bf16.gmra.mxu0 %v320
  %v1281 = vpop.f32.mrf.mxu0
  %v1282 = vadd.f32 0.0, %v1281
  %v1283 = vpop.f32.mrf.mxu0
  %v1284 = vadd.f32 0.0, %v1283
  %1285 = vmatmul.bf16.gmra.mxu0 %v323
  %v1286 = vpop.f32.mrf.mxu0
  %v1287 = vadd.f32 0.0, %v1286
  %v1288 = vpop.f32.mrf.mxu0
  %v1289 = vadd.f32 0.0, %v1288
  %1290 = vmatmul.bf16.gmra.mxu0 %v326
  %v1291 = vpop.f32.mrf.mxu0
  %v1292 = vadd.f32 0.0, %v1291
  %v1293 = vpop.f32.mrf.mxu0
  %v1294 = vadd.f32 0.0, %v1293
  %1295 = vmatmul.bf16.gmra.mxu0 %v329
  %v1296 = vpop.f32.mrf.mxu0
  %v1297 = vadd.f32 0.0, %v1296
  %v1298 = vpop.f32.mrf.mxu0
  %v1299 = vadd.f32 0.0, %v1298
  %1300 = vmatmul.bf16.gmra.mxu0 %v332
  %v1301 = vpop.f32.mrf.mxu0
  %v1302 = vadd.f32 0.0, %v1301
  %v1303 = vpop.f32.mrf.mxu0
  %v1304 = vadd.f32 0.0, %v1303
  %1305 = vmatmul.bf16.gmra.mxu0 %v335
  %v1306 = vpop.f32.mrf.mxu0
  %v1307 = vadd.f32 0.0, %v1306
  %v1308 = vpop.f32.mrf.mxu0
  %v1309 = vadd.f32 0.0, %v1308
  %1310 = vmatmul.bf16.gmra.mxu0 %v338
  %v1311 = vpop.f32.mrf.mxu0
  %v1312 = vadd.f32 0.0, %v1311
  %v1313 = vpop.f32.mrf.mxu0
  %v1314 = vadd.f32 0.0, %v1313
  %1315 = vmatmul.bf16.gmra.mxu0 %v341
  %v1316 = vpop.f32.mrf.mxu0
  %v1317 = vadd.f32 0.0, %v1316
  %v1318 = vpop.f32.mrf.mxu0
  %v1319 = vadd.f32 0.0, %v1318
  %1320 = vmatmul.bf16.gmra.mxu0 %v344
  %v1321 = vpop.f32.mrf.mxu0
  %v1322 = vadd.f32 0.0, %v1321
  %v1323 = vpop.f32.mrf.mxu0
  %v1324 = vadd.f32 0.0, %v1323
  %1325 = vmatmul.bf16.gmra.mxu0 %v347
  %v1326 = vpop.f32.mrf.mxu0
  %v1327 = vadd.f32 0.0, %v1326
  %v1328 = vpop.f32.mrf.mxu0
  %v1329 = vadd.f32 0.0, %v1328
  %1330 = vmatmul.bf16.gmra.mxu0 %v350
  %v1331 = vpop.f32.mrf.mxu0
  %v1332 = vadd.f32 0.0, %v1331
  %v1333 = vpop.f32.mrf.mxu0
  %v1334 = vadd.f32 0.0, %v1333
  %1335 = vmatmul.bf16.gmra.mxu0 %v353
  %v1336 = vpop.f32.mrf.mxu0
  %v1337 = vadd.f32 0.0, %v1336
  %v1338 = vpop.f32.mrf.mxu0
  %v1339 = vadd.f32 0.0, %v1338
  %1340 = vmatmul.bf16.gmra.mxu0 %v356
  %v1341 = vpop.f32.mrf.mxu0
  %v1342 = vadd.f32 0.0, %v1341
  %v1343 = vpop.f32.mrf.mxu0
  %v1344 = vadd.f32 0.0, %v1343
  %1345 = vmatmul.bf16.gmra.mxu0 %v359
  %v1346 = vpop.f32.mrf.mxu0
  %v1347 = vadd.f32 0.0, %v1346
  %v1348 = vpop.f32.mrf.mxu0
  %v1349 = vadd.f32 0.0, %v1348
  %1350 = vmatmul.bf16.gmra.mxu0 %v362
  %v1351 = vpop.f32.mrf.mxu0
  %v1352 = vadd.f32 0.0, %v1351
  %v1353 = vpop.f32.mrf.mxu0
  %v1354 = vadd.f32 0.0, %v1353
  %1355 = vmatmul.bf16.gmra.mxu0 %v365
  %v1356 = vpop.f32.mrf.mxu0
  %v1357 = vadd.f32 0.0, %v1356
  %v1358 = vpop.f32.mrf.mxu0
  %v1359 = vadd.f32 0.0, %v1358
  %1360 = vmatmul.bf16.gmra.mxu0 %v368
  %v1361 = vpop.f32.mrf.mxu0
  %v1362 = vadd.f32 0.0, %v1361
  %v1363 = vpop.f32.mrf.mxu0
  %v1364 = vadd.f32 0.0, %v1363
  %1365 = vmatmul.bf16.gmra.mxu0 %v371
  %v1366 = vpop.f32.mrf.mxu0
  %v1367 = vadd.f32 0.0, %v1366
  %v1368 = vpop.f32.mrf.mxu0
  %v1369 = vadd.f32 0.0, %v1368
  %1370 = vmatmul.bf16.gmra.mxu0 %v374
  %v1371 = vpop.f32.mrf.mxu0
  %v1372 = vadd.f32 0.0, %v1371
  %v1373 = vpop.f32.mrf.mxu0
  %v1374 = vadd.f32 0.0, %v1373
  %1375 = vmatmul.bf16.gmra.mxu0 %v377
  %v1376 = vpop.f32.mrf.mxu0
  %v1377 = vadd.f32 0.0, %v1376
  %v1378 = vpop.f32.mrf.mxu0
  %v1379 = vadd.f32 0.0, %v1378
  %1380 = vmatmul.bf16.gmra.mxu0 %v380
  %v1381 = vpop.f32.mrf.mxu0
  %v1382 = vadd.f32 0.0, %v1381
  %v1383 = vpop.f32.mrf.mxu0
  %v1384 = vadd.f32 0.0, %v1383
  %1385 = vmatmul.bf16.gmra.mxu0 %v383
  %v1386 = vpop.f32.mrf.mxu0
  %v1387 = vadd.f32 0.0, %v1386
  %v1388 = vpop.f32.mrf.mxu0
  %v1389 = vadd.f32 0.0, %v1388
  %1390 = vmatmul.bf16.gmra.mxu0 %v386
  %v1391 = vpop.f32.mrf.mxu0
  %v1392 = vadd.f32 0.0, %v1391
  %v1393 = vpop.f32.mrf.mxu0
  %v1394 = vadd.f32 0.0, %v1393
  %1395 = vmatmul.bf16.gmra.mxu0 %v389
  %v1396 = vpop.f32.mrf.mxu0
  %v1397 = vadd.f32 0.0, %v1396
  %v1398 = vpop.f32.mrf.mxu0
  %v1399 = vadd.f32 0.0, %v1398
  %1400 = vmatmul.bf16.gmra.mxu0 %v392
  %v1401 = vpop.f32.mrf.mxu0
  %v1402 = vadd.f32 0.0, %v1401
  %v1403 = vpop.f32.mrf.mxu0
  %v1404 = vadd.f32 0.0, %v1403
  %1405 = vmatmul.bf16.gmra.mxu0 %v395
  %v1406 = vpop.f32.mrf.mxu0
  %v1407 = vadd.f32 0.0, %v1406
  %v1408 = vpop.f32.mrf.mxu0
  %v1409 = vadd.f32 0.0, %v1408
  %1410 = vdwg.mxu0
  %1411 = vmatpush.bf16.msra.mxu0 0
  %1412 = vmatpush.bf16.msra.mxu0 0
  %1413 = vmatpush.bf16.msra.mxu0 0
  %1414 = vmatpush.bf16.msra.mxu0 0
  %1415 = vmatpush.bf16.msra.mxu0 0
  %1416 = vmatpush.bf16.msra.mxu0 %v274
  %1417 = vmatpush.bf16.msra.mxu0 %v266
  %1418 = vmatpush.bf16.msra.mxu0 %v258
  %1419 = vmatmul.bf16.gmra.mxu0 %v302
  %v1420 = vpop.f32.mrf.mxu0
  %v1421 = vadd.f32 0.0, %v1420
  %v1422 = vpop.f32.mrf.mxu0
  %v1423 = vadd.f32 0.0, %v1422
  %1424 = vmatmul.bf16.gmra.mxu0 %v305
  %v1425 = vpop.f32.mrf.mxu0
  %v1426 = vadd.f32 0.0, %v1425
  %v1427 = vpop.f32.mrf.mxu0
  %v1428 = vadd.f32 0.0, %v1427
  %1429 = vmatmul.bf16.gmra.mxu0 %v308
  %v1430 = vpop.f32.mrf.mxu0
  %v1431 = vadd.f32 0.0, %v1430
  %v1432 = vpop.f32.mrf.mxu0
  %v1433 = vadd.f32 0.0, %v1432
  %1434 = vmatmul.bf16.gmra.mxu0 %v311
  %v1435 = vpop.f32.mrf.mxu0
  %v1436 = vadd.f32 0.0, %v1435
  %v1437 = vpop.f32.mrf.mxu0
  %v1438 = vadd.f32 0.0, %v1437
  %1439 = vmatmul.bf16.gmra.mxu0 %v314
  %v1440 = vpop.f32.mrf.mxu0
  %v1441 = vadd.f32 0.0, %v1440
  %v1442 = vpop.f32.mrf.mxu0
  %v1443 = vadd.f32 0.0, %v1442
  %1444 = vmatmul.bf16.gmra.mxu0 %v317
  %v1445 = vpop.f32.mrf.mxu0
  %v1446 = vadd.f32 0.0, %v1445
  %v1447 = vpop.f32.mrf.mxu0
  %v1448 = vadd.f32 0.0, %v1447
  %1449 = vmatmul.bf16.gmra.mxu0 %v320
  %v1450 = vpop.f32.mrf.mxu0
  %v1451 = vadd.f32 0.0, %v1450
  %v1452 = vpop.f32.mrf.mxu0
  %v1453 = vadd.f32 0.0, %v1452
  %1454 = vmatmul.bf16.gmra.mxu0 %v323
  %v1455 = vpop.f32.mrf.mxu0
  %v1456 = vadd.f32 0.0, %v1455
  %v1457 = vpop.f32.mrf.mxu0
  %v1458 = vadd.f32 0.0, %v1457
  %1459 = vmatmul.bf16.gmra.mxu0 %v326
  %v1460 = vpop.f32.mrf.mxu0
  %v1461 = vadd.f32 0.0, %v1460
  %v1462 = vpop.f32.mrf.mxu0
  %v1463 = vadd.f32 0.0, %v1462
  %1464 = vmatmul.bf16.gmra.mxu0 %v329
  %v1465 = vpop.f32.mrf.mxu0
  %v1466 = vadd.f32 0.0, %v1465
  %v1467 = vpop.f32.mrf.mxu0
  %v1468 = vadd.f32 0.0, %v1467
  %1469 = vmatmul.bf16.gmra.mxu0 %v332
  %v1470 = vpop.f32.mrf.mxu0
  %v1471 = vadd.f32 0.0, %v1470
  %v1472 = vpop.f32.mrf.mxu0
  %v1473 = vadd.f32 0.0, %v1472
  %1474 = vmatmul.bf16.gmra.mxu0 %v335
  %v1475 = vpop.f32.mrf.mxu0
  %v1476 = vadd.f32 0.0, %v1475
  %v1477 = vpop.f32.mrf.mxu0
  %v1478 = vadd.f32 0.0, %v1477
  %1479 = vmatmul.bf16.gmra.mxu0 %v338
  %v1480 = vpop.f32.mrf.mxu0
  %v1481 = vadd.f32 0.0, %v1480
  %v1482 = vpop.f32.mrf.mxu0
  %v1483 = vadd.f32 0.0, %v1482
  %1484 = vmatmul.bf16.gmra.mxu0 %v341
  %v1485 = vpop.f32.mrf.mxu0
  %v1486 = vadd.f32 0.0, %v1485
  %v1487 = vpop.f32.mrf.mxu0
  %v1488 = vadd.f32 0.0, %v1487
  %1489 = vmatmul.bf16.gmra.mxu0 %v344
  %v1490 = vpop.f32.mrf.mxu0
  %v1491 = vadd.f32 0.0, %v1490
  %v1492 = vpop.f32.mrf.mxu0
  %v1493 = vadd.f32 0.0, %v1492
  %1494 = vmatmul.bf16.gmra.mxu0 %v347
  %v1495 = vpop.f32.mrf.mxu0
  %v1496 = vadd.f32 0.0, %v1495
  %v1497 = vpop.f32.mrf.mxu0
  %v1498 = vadd.f32 0.0, %v1497
  %1499 = vmatmul.bf16.gmra.mxu0 %v350
  %v1500 = vpop.f32.mrf.mxu0
  %v1501 = vadd.f32 0.0, %v1500
  %v1502 = vpop.f32.mrf.mxu0
  %v1503 = vadd.f32 0.0, %v1502
  %1504 = vmatmul.bf16.gmra.mxu0 %v353
  %v1505 = vpop.f32.mrf.mxu0
  %v1506 = vadd.f32 0.0, %v1505
  %v1507 = vpop.f32.mrf.mxu0
  %v1508 = vadd.f32 0.0, %v1507
  %1509 = vmatmul.bf16.gmra.mxu0 %v356
  %v1510 = vpop.f32.mrf.mxu0
  %v1511 = vadd.f32 0.0, %v1510
  %v1512 = vpop.f32.mrf.mxu0
  %v1513 = vadd.f32 0.0, %v1512
  %1514 = vmatmul.bf16.gmra.mxu0 %v359
  %v1515 = vpop.f32.mrf.mxu0
  %v1516 = vadd.f32 0.0, %v1515
  %v1517 = vpop.f32.mrf.mxu0
  %v1518 = vadd.f32 0.0, %v1517
  %1519 = vmatmul.bf16.gmra.mxu0 %v362
  %v1520 = vpop.f32.mrf.mxu0
  %v1521 = vadd.f32 0.0, %v1520
  %v1522 = vpop.f32.mrf.mxu0
  %v1523 = vadd.f32 0.0, %v1522
  %1524 = vmatmul.bf16.gmra.mxu0 %v365
  %v1525 = vpop.f32.mrf.mxu0
  %v1526 = vadd.f32 0.0, %v1525
  %v1527 = vpop.f32.mrf.mxu0
  %v1528 = vadd.f32 0.0, %v1527
  %1529 = vmatmul.bf16.gmra.mxu0 %v368
  %v1530 = vpop.f32.mrf.mxu0
  %v1531 = vadd.f32 0.0, %v1530
  %v1532 = vpop.f32.mrf.mxu0
  %v1533 = vadd.f32 0.0, %v1532
  %1534 = vmatmul.bf16.gmra.mxu0 %v371
  %v1535 = vpop.f32.mrf.mxu0
  %v1536 = vadd.f32 0.0, %v1535
  %v1537 = vpop.f32.mrf.mxu0
  %v1538 = vadd.f32 0.0, %v1537
  %1539 = vmatmul.bf16.gmra.mxu0 %v374
  %v1540 = vpop.f32.mrf.mxu0
  %v1541 = vadd.f32 0.0, %v1540
  %v1542 = vpop.f32.mrf.mxu0
  %v1543 = vadd.f32 0.0, %v1542
  %1544 = vmatmul.bf16.gmra.mxu0 %v377
  %v1545 = vpop.f32.mrf.mxu0
  %v1546 = vadd.f32 0.0, %v1545
  %v1547 = vpop.f32.mrf.mxu0
  %v1548 = vadd.f32 0.0, %v1547
  %1549 = vmatmul.bf16.gmra.mxu0 %v380
  %v1550 = vpop.f32.mrf.mxu0
  %v1551 = vadd.f32 0.0, %v1550
  %v1552 = vpop.f32.mrf.mxu0
  %v1553 = vadd.f32 0.0, %v1552
  %1554 = vmatmul.bf16.gmra.mxu0 %v383
  %v1555 = vpop.f32.mrf.mxu0
  %v1556 = vadd.f32 0.0, %v1555
  %v1557 = vpop.f32.mrf.mxu0
  %v1558 = vadd.f32 0.0, %v1557
  %1559 = vmatmul.bf16.gmra.mxu0 %v386
  %v1560 = vpop.f32.mrf.mxu0
  %v1561 = vadd.f32 0.0, %v1560
  %v1562 = vpop.f32.mrf.mxu0
  %v1563 = vadd.f32 0.0, %v1562
  %1564 = vmatmul.bf16.gmra.mxu0 %v389
  %v1565 = vpop.f32.mrf.mxu0
  %v1566 = vadd.f32 0.0, %v1565
  %v1567 = vpop.f32.mrf.mxu0
  %v1568 = vadd.f32 0.0, %v1567
  %1569 = vmatmul.bf16.gmra.mxu0 %v392
  %v1570 = vpop.f32.mrf.mxu0
  %v1571 = vadd.f32 0.0, %v1570
  %v1572 = vpop.f32.mrf.mxu0
  %v1573 = vadd.f32 0.0, %v1572
  %1574 = vmatmul.bf16.gmra.mxu0 %v395
  %v1575 = vpop.f32.mrf.mxu0
  %v1576 = vadd.f32 0.0, %v1575
  %v1577 = vpop.f32.mrf.mxu0
  %v1578 = vadd.f32 0.0, %v1577
  %1579 = vdwg.mxu0
  %1580 = vmatpush.bf16.msra.mxu0 0
  %1581 = vmatpush.bf16.msra.mxu0 0
  %1582 = vmatpush.bf16.msra.mxu0 0
  %1583 = vmatpush.bf16.msra.mxu0 0
  %1584 = vmatpush.bf16.msra.mxu0 0
  %1585 = vmatpush.bf16.msra.mxu0 %v275
  %1586 = vmatpush.bf16.msra.mxu0 %v267
  %1587 = vmatpush.bf16.msra.mxu0 %v259
  %1588 = vmatmul.bf16.gmra.mxu0 %v302
  %v1589 = vpop.f32.mrf.mxu0
  %v1590 = vadd.f32 0.0, %v1589
  %v1591 = vpop.f32.mrf.mxu0
  %v1592 = vadd.f32 0.0, %v1591
  %1593 = vmatmul.bf16.gmra.mxu0 %v305
  %v1594 = vpop.f32.mrf.mxu0
  %v1595 = vadd.f32 0.0, %v1594
  %v1596 = vpop.f32.mrf.mxu0
  %v1597 = vadd.f32 0.0, %v1596
  %1598 = vmatmul.bf16.gmra.mxu0 %v308
  %v1599 = vpop.f32.mrf.mxu0
  %v1600 = vadd.f32 0.0, %v1599
  %v1601 = vpop.f32.mrf.mxu0
  %v1602 = vadd.f32 0.0, %v1601
  %1603 = vmatmul.bf16.gmra.mxu0 %v311
  %v1604 = vpop.f32.mrf.mxu0
  %v1605 = vadd.f32 0.0, %v1604
  %v1606 = vpop.f32.mrf.mxu0
  %v1607 = vadd.f32 0.0, %v1606
  %1608 = vmatmul.bf16.gmra.mxu0 %v314
  %v1609 = vpop.f32.mrf.mxu0
  %v1610 = vadd.f32 0.0, %v1609
  %v1611 = vpop.f32.mrf.mxu0
  %v1612 = vadd.f32 0.0, %v1611
  %1613 = vmatmul.bf16.gmra.mxu0 %v317
  %v1614 = vpop.f32.mrf.mxu0
  %v1615 = vadd.f32 0.0, %v1614
  %v1616 = vpop.f32.mrf.mxu0
  %v1617 = vadd.f32 0.0, %v1616
  %1618 = vmatmul.bf16.gmra.mxu0 %v320
  %v1619 = vpop.f32.mrf.mxu0
  %v1620 = vadd.f32 0.0, %v1619
  %v1621 = vpop.f32.mrf.mxu0
  %v1622 = vadd.f32 0.0, %v1621
  %1623 = vmatmul.bf16.gmra.mxu0 %v323
  %v1624 = vpop.f32.mrf.mxu0
  %v1625 = vadd.f32 0.0, %v1624
  %v1626 = vpop.f32.mrf.mxu0
  %v1627 = vadd.f32 0.0, %v1626
  %1628 = vmatmul.bf16.gmra.mxu0 %v326
  %v1629 = vpop.f32.mrf.mxu0
  %v1630 = vadd.f32 0.0, %v1629
  %v1631 = vpop.f32.mrf.mxu0
  %v1632 = vadd.f32 0.0, %v1631
  %1633 = vmatmul.bf16.gmra.mxu0 %v329
  %v1634 = vpop.f32.mrf.mxu0
  %v1635 = vadd.f32 0.0, %v1634
  %v1636 = vpop.f32.mrf.mxu0
  %v1637 = vadd.f32 0.0, %v1636
  %1638 = vmatmul.bf16.gmra.mxu0 %v332
  %v1639 = vpop.f32.mrf.mxu0
  %v1640 = vadd.f32 0.0, %v1639
  %v1641 = vpop.f32.mrf.mxu0
  %v1642 = vadd.f32 0.0, %v1641
  %1643 = vmatmul.bf16.gmra.mxu0 %v335
  %v1644 = vpop.f32.mrf.mxu0
  %v1645 = vadd.f32 0.0, %v1644
  %v1646 = vpop.f32.mrf.mxu0
  %v1647 = vadd.f32 0.0, %v1646
  %1648 = vmatmul.bf16.gmra.mxu0 %v338
  %v1649 = vpop.f32.mrf.mxu0
  %v1650 = vadd.f32 0.0, %v1649
  %v1651 = vpop.f32.mrf.mxu0
  %v1652 = vadd.f32 0.0, %v1651
  %1653 = vmatmul.bf16.gmra.mxu0 %v341
  %v1654 = vpop.f32.mrf.mxu0
  %v1655 = vadd.f32 0.0, %v1654
  %v1656 = vpop.f32.mrf.mxu0
  %v1657 = vadd.f32 0.0, %v1656
  %1658 = vmatmul.bf16.gmra.mxu0 %v344
  %v1659 = vpop.f32.mrf.mxu0
  %v1660 = vadd.f32 0.0, %v1659
  %v1661 = vpop.f32.mrf.mxu0
  %v1662 = vadd.f32 0.0, %v1661
  %1663 = vmatmul.bf16.gmra.mxu0 %v347
  %v1664 = vpop.f32.mrf.mxu0
  %v1665 = vadd.f32 0.0, %v1664
  %v1666 = vpop.f32.mrf.mxu0
  %v1667 = vadd.f32 0.0, %v1666
  %1668 = vmatmul.bf16.gmra.mxu0 %v350
  %v1669 = vpop.f32.mrf.mxu0
  %v1670 = vadd.f32 0.0, %v1669
  %v1671 = vpop.f32.mrf.mxu0
  %v1672 = vadd.f32 0.0, %v1671
  %1673 = vmatmul.bf16.gmra.mxu0 %v353
  %v1674 = vpop.f32.mrf.mxu0
  %v1675 = vadd.f32 0.0, %v1674
  %v1676 = vpop.f32.mrf.mxu0
  %v1677 = vadd.f32 0.0, %v1676
  %1678 = vmatmul.bf16.gmra.mxu0 %v356
  %v1679 = vpop.f32.mrf.mxu0
  %v1680 = vadd.f32 0.0, %v1679
  %v1681 = vpop.f32.mrf.mxu0
  %v1682 = vadd.f32 0.0, %v1681
  %1683 = vmatmul.bf16.gmra.mxu0 %v359
  %v1684 = vpop.f32.mrf.mxu0
  %v1685 = vadd.f32 0.0, %v1684
  %v1686 = vpop.f32.mrf.mxu0
  %v1687 = vadd.f32 0.0, %v1686
  %1688 = vmatmul.bf16.gmra.mxu0 %v362
  %v1689 = vpop.f32.mrf.mxu0
  %v1690 = vadd.f32 0.0, %v1689
  %v1691 = vpop.f32.mrf.mxu0
  %v1692 = vadd.f32 0.0, %v1691
  %1693 = vmatmul.bf16.gmra.mxu0 %v365
  %v1694 = vpop.f32.mrf.mxu0
  %v1695 = vadd.f32 0.0, %v1694
  %v1696 = vpop.f32.mrf.mxu0
  %v1697 = vadd.f32 0.0, %v1696
  %1698 = vmatmul.bf16.gmra.mxu0 %v368
  %v1699 = vpop.f32.mrf.mxu0
  %v1700 = vadd.f32 0.0, %v1699
  %v1701 = vpop.f32.mrf.mxu0
  %v1702 = vadd.f32 0.0, %v1701
  %1703 = vmatmul.bf16.gmra.mxu0 %v371
  %v1704 = vpop.f32.mrf.mxu0
  %v1705 = vadd.f32 0.0, %v1704
  %v1706 = vpop.f32.mrf.mxu0
  %v1707 = vadd.f32 0.0, %v1706
  %1708 = vmatmul.bf16.gmra.mxu0 %v374
  %v1709 = vpop.f32.mrf.mxu0
  %v1710 = vadd.f32 0.0, %v1709
  %v1711 = vpop.f32.mrf.mxu0
  %v1712 = vadd.f32 0.0, %v1711
  %1713 = vmatmul.bf16.gmra.mxu0 %v377
  %v1714 = vpop.f32.mrf.mxu0
  %v1715 = vadd.f32 0.0, %v1714
  %v1716 = vpop.f32.mrf.mxu0
  %v1717 = vadd.f32 0.0, %v1716
  %1718 = vmatmul.bf16.gmra.mxu0 %v380
  %v1719 = vpop.f32.mrf.mxu0
  %v1720 = vadd.f32 0.0, %v1719
  %v1721 = vpop.f32.mrf.mxu0
  %v1722 = vadd.f32 0.0, %v1721
  %1723 = vmatmul.bf16.gmra.mxu0 %v383
  %v1724 = vpop.f32.mrf.mxu0
  %v1725 = vadd.f32 0.0, %v1724
  %v1726 = vpop.f32.mrf.mxu0
  %v1727 = vadd.f32 0.0, %v1726
  %1728 = vmatmul.bf16.gmra.mxu0 %v386
  %v1729 = vpop.f32.mrf.mxu0
  %v1730 = vadd.f32 0.0, %v1729
  %v1731 = vpop.f32.mrf.mxu0
  %v1732 = vadd.f32 0.0, %v1731
  %1733 = vmatmul.bf16.gmra.mxu0 %v389
  %v1734 = vpop.f32.mrf.mxu0
  %v1735 = vadd.f32 0.0, %v1734
  %v1736 = vpop.f32.mrf.mxu0
  %v1737 = vadd.f32 0.0, %v1736
  %1738 = vmatmul.bf16.gmra.mxu0 %v392
  %v1739 = vpop.f32.mrf.mxu0
  %v1740 = vadd.f32 0.0, %v1739
  %v1741 = vpop.f32.mrf.mxu0
  %v1742 = vadd.f32 0.0, %v1741
  %1743 = vmatmul.bf16.gmra.mxu0 %v395
  %v1744 = vpop.f32.mrf.mxu0
  %v1745 = vadd.f32 0.0, %v1744
  %v1746 = vpop.f32.mrf.mxu0
  %v1747 = vadd.f32 0.0, %v1746
  %1748 = vdwg.mxu0
  %v1749 = vlaneseq
  %v1750 = vand.u32 %v1749, 127
  %v1751 = vadd.s32 %v1750, 128
  %v1752 = vld [vmem:[%s1] sm:$0xff]
  %v1753 = vld [vmem:[%s1 + $0x8] sm:$0xff]
  %v1754 = vld [vmem:[%s1 + $0x10] sm:$0xff]
  %v1755 = vld [vmem:[%s1 + $0x18] sm:$0xff]
  %v1756 = vld [vmem:[%s1 + $0x20] sm:$0xff]
  %v1757 = vld [vmem:[%s1 + $0x28] sm:$0xff]
  %v1758 = vld [vmem:[%s1 + $0x30] sm:$0xff]
  %v1759 = vld [vmem:[%s1 + $0x38] sm:$0xff]
  %v1760 = vld [vmem:[%s1 + $0x40] sm:$0xff]
  %v1761 = vld [vmem:[%s1 + $0x48] sm:$0xff]
  %v1762 = vld [vmem:[%s1 + $0x50] sm:$0xff]
  %v1763 = vld [vmem:[%s1 + $0x58] sm:$0xff]
  %v1764 = vld [vmem:[%s1 + $0x60] sm:$0xff]
  %v1765 = vld [vmem:[%s1 + $0x68] sm:$0xff]
  %v1766 = vld [vmem:[%s1 + $0x70] sm:$0xff]
  %v1767 = vld [vmem:[%s1 + $0x78] sm:$0xff]
  %v1768 = vld [vmem:[%s1 + $0x80] sm:$0xff]
  %v1769 = vld [vmem:[%s1 + $0x88] sm:$0xff]
  %v1770 = vld [vmem:[%s1 + $0x90] sm:$0xff]
  %v1771 = vld [vmem:[%s1 + $0x98] sm:$0xff]
  %v1772 = vld [vmem:[%s1 + $0xa0] sm:$0xff]
  %v1773 = vld [vmem:[%s1 + $0xa8] sm:$0xff]
  %v1774 = vld [vmem:[%s1 + $0xb0] sm:$0xff]
  %v1775 = vld [vmem:[%s1 + $0xb8] sm:$0xff]
  %v1776 = vld [vmem:[%s1 + $0xc0] sm:$0xff]
  %v1777 = vld [vmem:[%s1 + $0xc8] sm:$0xff]
  %v1778 = vld [vmem:[%s1 + $0xd0] sm:$0xff]
  %v1779 = vld [vmem:[%s1 + $0xd8] sm:$0xff]
  %v1780 = vld [vmem:[%s1 + $0xe0] sm:$0xff]
  %v1781 = vld [vmem:[%s1 + $0xe8] sm:$0xff]
  %v1782 = vld [vmem:[%s1 + $0xf0] sm:$0xff]
  %v1783 = vld [vmem:[%s1 + $0xf8] sm:$0xff]
  %v1784 = vld [vmem:[%s1 + $0x100] sm:$0xff]
  %v1785 = vld [vmem:[%s1 + $0x108] sm:$0xff]
  %v1786 = vld [vmem:[%s1 + $0x110] sm:$0xff]
  %v1787 = vld [vmem:[%s1 + $0x118] sm:$0xff]
  %v1788 = vld [vmem:[%s1 + $0x120] sm:$0xff]
  %v1789 = vld [vmem:[%s1 + $0x128] sm:$0xff]
  %v1790 = vld [vmem:[%s1 + $0x130] sm:$0xff]
  %v1791 = vld [vmem:[%s1 + $0x138] sm:$0xff]
  %v1792 = vld [vmem:[%s1 + $0x140] sm:$0xff]
  %v1793 = vld [vmem:[%s1 + $0x148] sm:$0xff]
  %v1794 = vld [vmem:[%s1 + $0x150] sm:$0xff]
  %v1795 = vld [vmem:[%s1 + $0x158] sm:$0xff]
  %v1796 = vld [vmem:[%s1 + $0x160] sm:$0xff]
  %v1797 = vld [vmem:[%s1 + $0x168] sm:$0xff]
  %v1798 = vld [vmem:[%s1 + $0x170] sm:$0xff]
  %v1799 = vld [vmem:[%s1 + $0x178] sm:$0xff]
  %v1800 = vld [vmem:[%s1 + $0x180] sm:$0xff]
  %v1801 = vld [vmem:[%s1 + $0x188] sm:$0xff]
  %v1802 = vld [vmem:[%s1 + $0x190] sm:$0xff]
  %v1803 = vld [vmem:[%s1 + $0x198] sm:$0xff]
  %v1804 = vld [vmem:[%s1 + $0x1a0] sm:$0xff]
  %v1805 = vld [vmem:[%s1 + $0x1a8] sm:$0xff]
  %v1806 = vld [vmem:[%s1 + $0x1b0] sm:$0xff]
  %v1807 = vld [vmem:[%s1 + $0x1b8] sm:$0xff]
  %v1808 = vld [vmem:[%s1 + $0x1c0] sm:$0xff]
  %v1809 = vld [vmem:[%s1 + $0x1c8] sm:$0xff]
  %v1810 = vld [vmem:[%s1 + $0x1d0] sm:$0xff]
  %v1811 = vld [vmem:[%s1 + $0x1d8] sm:$0xff]
  %v1812 = vld [vmem:[%s1 + $0x1e0] sm:$0xff]
  %v1813 = vld [vmem:[%s1 + $0x1e8] sm:$0xff]
  %v1814 = vld [vmem:[%s1 + $0x1f0] sm:$0xff]
  %v1815 = vld [vmem:[%s1 + $0x1f8] sm:$0xff]
  %1816 = vset.pattern.permute.xlu0 0
  %1817 = vperm.xlu0 %1816, %v1752
  %v1818 = vpop.permute.xlu0 %1817
  %1819 = vset.pattern.permute.xlu0 0
  %1820 = vperm.xlu0 %1819, %v1753
  %v1821 = vpop.permute.xlu0 %1820
  %1822 = vset.pattern.permute.xlu0 0
  %1823 = vperm.xlu0 %1822, %v1754
  %v1824 = vpop.permute.xlu0 %1823
  %1825 = vset.pattern.permute.xlu0 0
  %1826 = vperm.xlu0 %1825, %v1755
  %v1827 = vpop.permute.xlu0 %1826
  %1828 = vset.pattern.permute.xlu0 0
  %1829 = vperm.xlu0 %1828, %v1756
  %v1830 = vpop.permute.xlu0 %1829
  %1831 = vset.pattern.permute.xlu0 0
  %1832 = vperm.xlu0 %1831, %v1757
  %v1833 = vpop.permute.xlu0 %1832
  %1834 = vset.pattern.permute.xlu0 0
  %1835 = vperm.xlu0 %1834, %v1758
  %v1836 = vpop.permute.xlu0 %1835
  %1837 = vset.pattern.permute.xlu0 0
  %1838 = vperm.xlu0 %1837, %v1759
  %v1839 = vpop.permute.xlu0 %1838
  %1840 = vset.pattern.permute.xlu0 0
  %1841 = vperm.xlu0 %1840, %v1760
  %v1842 = vpop.permute.xlu0 %1841
  %1843 = vset.pattern.permute.xlu0 0
  %1844 = vperm.xlu0 %1843, %v1761
  %v1845 = vpop.permute.xlu0 %1844
  %1846 = vset.pattern.permute.xlu0 0
  %1847 = vperm.xlu0 %1846, %v1762
  %v1848 = vpop.permute.xlu0 %1847
  %1849 = vset.pattern.permute.xlu0 0
  %1850 = vperm.xlu0 %1849, %v1763
  %v1851 = vpop.permute.xlu0 %1850
  %1852 = vset.pattern.permute.xlu0 0
  %1853 = vperm.xlu0 %1852, %v1764
  %v1854 = vpop.permute.xlu0 %1853
  %1855 = vset.pattern.permute.xlu0 0
  %1856 = vperm.xlu0 %1855, %v1765
  %v1857 = vpop.permute.xlu0 %1856
  %1858 = vset.pattern.permute.xlu0 0
  %1859 = vperm.xlu0 %1858, %v1766
  %v1860 = vpop.permute.xlu0 %1859
  %1861 = vset.pattern.permute.xlu0 0
  %1862 = vperm.xlu0 %1861, %v1767
  %v1863 = vpop.permute.xlu0 %1862
  %1864 = vset.pattern.permute.xlu0 0
  %1865 = vperm.xlu0 %1864, %v1768
  %v1866 = vpop.permute.xlu0 %1865
  %1867 = vset.pattern.permute.xlu0 0
  %1868 = vperm.xlu0 %1867, %v1769
  %v1869 = vpop.permute.xlu0 %1868
  %1870 = vset.pattern.permute.xlu0 0
  %1871 = vperm.xlu0 %1870, %v1770
  %v1872 = vpop.permute.xlu0 %1871
  %1873 = vset.pattern.permute.xlu0 0
  %1874 = vperm.xlu0 %1873, %v1771
  %v1875 = vpop.permute.xlu0 %1874
  %1876 = vset.pattern.permute.xlu0 0
  %1877 = vperm.xlu0 %1876, %v1772
  %v1878 = vpop.permute.xlu0 %1877
  %1879 = vset.pattern.permute.xlu0 0
  %1880 = vperm.xlu0 %1879, %v1773
  %v1881 = vpop.permute.xlu0 %1880
  %1882 = vset.pattern.permute.xlu0 0
  %1883 = vperm.xlu0 %1882, %v1774
  %v1884 = vpop.permute.xlu0 %1883
  %1885 = vset.pattern.permute.xlu0 0
  %1886 = vperm.xlu0 %1885, %v1775
  %v1887 = vpop.permute.xlu0 %1886
  %1888 = vset.pattern.permute.xlu0 0
  %1889 = vperm.xlu0 %1888, %v1776
  %v1890 = vpop.permute.xlu0 %1889
  %1891 = vset.pattern.permute.xlu0 0
  %1892 = vperm.xlu0 %1891, %v1777
  %v1893 = vpop.permute.xlu0 %1892
  %1894 = vset.pattern.permute.xlu0 0
  %1895 = vperm.xlu0 %1894, %v1778
  %v1896 = vpop.permute.xlu0 %1895
  %1897 = vset.pattern.permute.xlu0 0
  %1898 = vperm.xlu0 %1897, %v1779
  %v1899 = vpop.permute.xlu0 %1898
  %1900 = vset.pattern.permute.xlu0 0
  %1901 = vperm.xlu0 %1900, %v1780
  %v1902 = vpop.permute.xlu0 %1901
  %1903 = vset.pattern.permute.xlu0 0
  %1904 = vperm.xlu0 %1903, %v1781
  %v1905 = vpop.permute.xlu0 %1904
  %1906 = vset.pattern.permute.xlu0 0
  %1907 = vperm.xlu0 %1906, %v1782
  %v1908 = vpop.permute.xlu0 %1907
  %1909 = vset.pattern.permute.xlu0 0
  %1910 = vperm.xlu0 %1909, %v1783
  %v1911 = vpop.permute.xlu0 %1910
  %1912 = vset.pattern.permute.xlu0 0
  %1913 = vperm.xlu0 %1912, %v1784
  %v1914 = vpop.permute.xlu0 %1913
  %1915 = vset.pattern.permute.xlu0 0
  %1916 = vperm.xlu0 %1915, %v1785
  %v1917 = vpop.permute.xlu0 %1916
  %1918 = vset.pattern.permute.xlu0 0
  %1919 = vperm.xlu0 %1918, %v1786
  %v1920 = vpop.permute.xlu0 %1919
  %1921 = vset.pattern.permute.xlu0 0
  %1922 = vperm.xlu0 %1921, %v1787
  %v1923 = vpop.permute.xlu0 %1922
  %1924 = vset.pattern.permute.xlu0 0
  %1925 = vperm.xlu0 %1924, %v1788
  %v1926 = vpop.permute.xlu0 %1925
  %1927 = vset.pattern.permute.xlu0 0
  %1928 = vperm.xlu0 %1927, %v1789
  %v1929 = vpop.permute.xlu0 %1928
  %1930 = vset.pattern.permute.xlu0 0
  %1931 = vperm.xlu0 %1930, %v1790
  %v1932 = vpop.permute.xlu0 %1931
  %1933 = vset.pattern.permute.xlu0 0
  %1934 = vperm.xlu0 %1933, %v1791
  %v1935 = vpop.permute.xlu0 %1934
  %1936 = vset.pattern.permute.xlu0 0
  %1937 = vperm.xlu0 %1936, %v1792
  %v1938 = vpop.permute.xlu0 %1937
  %1939 = vset.pattern.permute.xlu0 0
  %1940 = vperm.xlu0 %1939, %v1793
  %v1941 = vpop.permute.xlu0 %1940
  %1942 = vset.pattern.permute.xlu0 0
  %1943 = vperm.xlu0 %1942, %v1794
  %v1944 = vpop.permute.xlu0 %1943
  %1945 = vset.pattern.permute.xlu0 0
  %1946 = vperm.xlu0 %1945, %v1795
  %v1947 = vpop.permute.xlu0 %1946
  %1948 = vset.pattern.permute.xlu0 0
  %1949 = vperm.xlu0 %1948, %v1796
  %v1950 = vpop.permute.xlu0 %1949
  %1951 = vset.pattern.permute.xlu0 0
  %1952 = vperm.xlu0 %1951, %v1797
  %v1953 = vpop.permute.xlu0 %1952
  %1954 = vset.pattern.permute.xlu0 0
  %1955 = vperm.xlu0 %1954, %v1798
  %v1956 = vpop.permute.xlu0 %1955
  %1957 = vset.pattern.permute.xlu0 0
  %1958 = vperm.xlu0 %1957, %v1799
  %v1959 = vpop.permute.xlu0 %1958
  %1960 = vset.pattern.permute.xlu0 0
  %1961 = vperm.xlu0 %1960, %v1800
  %v1962 = vpop.permute.xlu0 %1961
  %1963 = vset.pattern.permute.xlu0 0
  %1964 = vperm.xlu0 %1963, %v1801
  %v1965 = vpop.permute.xlu0 %1964
  %1966 = vset.pattern.permute.xlu0 0
  %1967 = vperm.xlu0 %1966, %v1802
  %v1968 = vpop.permute.xlu0 %1967
  %1969 = vset.pattern.permute.xlu0 0
  %1970 = vperm.xlu0 %1969, %v1803
  %v1971 = vpop.permute.xlu0 %1970
  %1972 = vset.pattern.permute.xlu0 0
  %1973 = vperm.xlu0 %1972, %v1804
  %v1974 = vpop.permute.xlu0 %1973
  %1975 = vset.pattern.permute.xlu0 0
  %1976 = vperm.xlu0 %1975, %v1805
  %v1977 = vpop.permute.xlu0 %1976
  %1978 = vset.pattern.permute.xlu0 0
  %1979 = vperm.xlu0 %1978, %v1806
  %v1980 = vpop.permute.xlu0 %1979
  %1981 = vset.pattern.permute.xlu0 0
  %1982 = vperm.xlu0 %1981, %v1807
  %v1983 = vpop.permute.xlu0 %1982
  %1984 = vset.pattern.permute.xlu0 0
  %1985 = vperm.xlu0 %1984, %v1808
  %v1986 = vpop.permute.xlu0 %1985
  %1987 = vset.pattern.permute.xlu0 0
  %1988 = vperm.xlu0 %1987, %v1809
  %v1989 = vpop.permute.xlu0 %1988
  %1990 = vset.pattern.permute.xlu0 0
  %1991 = vperm.xlu0 %1990, %v1810
  %v1992 = vpop.permute.xlu0 %1991
  %1993 = vset.pattern.permute.xlu0 0
  %1994 = vperm.xlu0 %1993, %v1811
  %v1995 = vpop.permute.xlu0 %1994
  %1996 = vset.pattern.permute.xlu0 0
  %1997 = vperm.xlu0 %1996, %v1812
  %v1998 = vpop.permute.xlu0 %1997
  %1999 = vset.pattern.permute.xlu0 0
  %2000 = vperm.xlu0 %1999, %v1813
  %v2001 = vpop.permute.xlu0 %2000
  %2002 = vset.pattern.permute.xlu0 0
  %2003 = vperm.xlu0 %2002, %v1814
  %v2004 = vpop.permute.xlu0 %2003
  %2005 = vset.pattern.permute.xlu0 0
  %2006 = vperm.xlu0 %2005, %v1815
  %v2007 = vpop.permute.xlu0 %2006
  %vm2008 = vcmp.eq.s32.totalorder %v1818, %v1750
  %vm2009 = vcmp.eq.s32.totalorder %v1818, %v1751
  %vm2010 = vcmp.eq.s32.totalorder %v1821, %v1750
  %vm2011 = vcmp.eq.s32.totalorder %v1821, %v1751
  %vm2012 = vcmp.eq.s32.totalorder %v1824, %v1750
  %vm2013 = vcmp.eq.s32.totalorder %v1824, %v1751
  %vm2014 = vcmp.eq.s32.totalorder %v1827, %v1750
  %vm2015 = vcmp.eq.s32.totalorder %v1827, %v1751
  %vm2016 = vcmp.eq.s32.totalorder %v1830, %v1750
  %vm2017 = vcmp.eq.s32.totalorder %v1830, %v1751
  %vm2018 = vcmp.eq.s32.totalorder %v1833, %v1750
  %vm2019 = vcmp.eq.s32.totalorder %v1833, %v1751
  %vm2020 = vcmp.eq.s32.totalorder %v1836, %v1750
  %vm2021 = vcmp.eq.s32.totalorder %v1836, %v1751
  %vm2022 = vcmp.eq.s32.totalorder %v1839, %v1750
  %vm2023 = vcmp.eq.s32.totalorder %v1839, %v1751
  %vm2024 = vcmp.eq.s32.totalorder %v1842, %v1750
  %vm2025 = vcmp.eq.s32.totalorder %v1842, %v1751
  %vm2026 = vcmp.eq.s32.totalorder %v1845, %v1750
  %vm2027 = vcmp.eq.s32.totalorder %v1845, %v1751
  %vm2028 = vcmp.eq.s32.totalorder %v1848, %v1750
  %vm2029 = vcmp.eq.s32.totalorder %v1848, %v1751
  %vm2030 = vcmp.eq.s32.totalorder %v1851, %v1750
  %vm2031 = vcmp.eq.s32.totalorder %v1851, %v1751
  %vm2032 = vcmp.eq.s32.totalorder %v1854, %v1750
  %vm2033 = vcmp.eq.s32.totalorder %v1854, %v1751
  %vm2034 = vcmp.eq.s32.totalorder %v1857, %v1750
  %vm2035 = vcmp.eq.s32.totalorder %v1857, %v1751
  %vm2036 = vcmp.eq.s32.totalorder %v1860, %v1750
  %vm2037 = vcmp.eq.s32.totalorder %v1860, %v1751
  %vm2038 = vcmp.eq.s32.totalorder %v1863, %v1750
  %vm2039 = vcmp.eq.s32.totalorder %v1863, %v1751
  %vm2040 = vcmp.eq.s32.totalorder %v1866, %v1750
  %vm2041 = vcmp.eq.s32.totalorder %v1866, %v1751
  %vm2042 = vcmp.eq.s32.totalorder %v1869, %v1750
  %vm2043 = vcmp.eq.s32.totalorder %v1869, %v1751
  %vm2044 = vcmp.eq.s32.totalorder %v1872, %v1750
  %vm2045 = vcmp.eq.s32.totalorder %v1872, %v1751
  %vm2046 = vcmp.eq.s32.totalorder %v1875, %v1750
  %vm2047 = vcmp.eq.s32.totalorder %v1875, %v1751
  %vm2048 = vcmp.eq.s32.totalorder %v1878, %v1750
  %vm2049 = vcmp.eq.s32.totalorder %v1878, %v1751
  %vm2050 = vcmp.eq.s32.totalorder %v1881, %v1750
  %vm2051 = vcmp.eq.s32.totalorder %v1881, %v1751
  %vm2052 = vcmp.eq.s32.totalorder %v1884, %v1750
  %vm2053 = vcmp.eq.s32.totalorder %v1884, %v1751
  %vm2054 = vcmp.eq.s32.totalorder %v1887, %v1750
  %vm2055 = vcmp.eq.s32.totalorder %v1887, %v1751
  %vm2056 = vcmp.eq.s32.totalorder %v1890, %v1750
  %vm2057 = vcmp.eq.s32.totalorder %v1890, %v1751
  %vm2058 = vcmp.eq.s32.totalorder %v1893, %v1750
  %vm2059 = vcmp.eq.s32.totalorder %v1893, %v1751
  %vm2060 = vcmp.eq.s32.totalorder %v1896, %v1750
  %vm2061 = vcmp.eq.s32.totalorder %v1896, %v1751
  %vm2062 = vcmp.eq.s32.totalorder %v1899, %v1750
  %vm2063 = vcmp.eq.s32.totalorder %v1899, %v1751
  %vm2064 = vcmp.eq.s32.totalorder %v1902, %v1750
  %vm2065 = vcmp.eq.s32.totalorder %v1902, %v1751
  %vm2066 = vcmp.eq.s32.totalorder %v1905, %v1750
  %vm2067 = vcmp.eq.s32.totalorder %v1905, %v1751
  %vm2068 = vcmp.eq.s32.totalorder %v1908, %v1750
  %vm2069 = vcmp.eq.s32.totalorder %v1908, %v1751
  %vm2070 = vcmp.eq.s32.totalorder %v1911, %v1750
  %vm2071 = vcmp.eq.s32.totalorder %v1911, %v1751
  %vm2072 = vcmp.eq.s32.totalorder %v1914, %v1750
  %vm2073 = vcmp.eq.s32.totalorder %v1914, %v1751
  %vm2074 = vcmp.eq.s32.totalorder %v1917, %v1750
  %vm2075 = vcmp.eq.s32.totalorder %v1917, %v1751
  %vm2076 = vcmp.eq.s32.totalorder %v1920, %v1750
  %vm2077 = vcmp.eq.s32.totalorder %v1920, %v1751
  %vm2078 = vcmp.eq.s32.totalorder %v1923, %v1750
  %vm2079 = vcmp.eq.s32.totalorder %v1923, %v1751
  %vm2080 = vcmp.eq.s32.totalorder %v1926, %v1750
  %vm2081 = vcmp.eq.s32.totalorder %v1926, %v1751
  %vm2082 = vcmp.eq.s32.totalorder %v1929, %v1750
  %vm2083 = vcmp.eq.s32.totalorder %v1929, %v1751
  %vm2084 = vcmp.eq.s32.totalorder %v1932, %v1750
  %vm2085 = vcmp.eq.s32.totalorder %v1932, %v1751
  %vm2086 = vcmp.eq.s32.totalorder %v1935, %v1750
  %vm2087 = vcmp.eq.s32.totalorder %v1935, %v1751
  %vm2088 = vcmp.eq.s32.totalorder %v1938, %v1750
  %vm2089 = vcmp.eq.s32.totalorder %v1938, %v1751
  %vm2090 = vcmp.eq.s32.totalorder %v1941, %v1750
  %vm2091 = vcmp.eq.s32.totalorder %v1941, %v1751
  %vm2092 = vcmp.eq.s32.totalorder %v1944, %v1750
  %vm2093 = vcmp.eq.s32.totalorder %v1944, %v1751
  %vm2094 = vcmp.eq.s32.totalorder %v1947, %v1750
  %vm2095 = vcmp.eq.s32.totalorder %v1947, %v1751
  %vm2096 = vcmp.eq.s32.totalorder %v1950, %v1750
  %vm2097 = vcmp.eq.s32.totalorder %v1950, %v1751
  %vm2098 = vcmp.eq.s32.totalorder %v1953, %v1750
  %vm2099 = vcmp.eq.s32.totalorder %v1953, %v1751
  %vm2100 = vcmp.eq.s32.totalorder %v1956, %v1750
  %vm2101 = vcmp.eq.s32.totalorder %v1956, %v1751
  %vm2102 = vcmp.eq.s32.totalorder %v1959, %v1750
  %vm2103 = vcmp.eq.s32.totalorder %v1959, %v1751
  %vm2104 = vcmp.eq.s32.totalorder %v1962, %v1750
  %vm2105 = vcmp.eq.s32.totalorder %v1962, %v1751
  %vm2106 = vcmp.eq.s32.totalorder %v1965, %v1750
  %vm2107 = vcmp.eq.s32.totalorder %v1965, %v1751
  %vm2108 = vcmp.eq.s32.totalorder %v1968, %v1750
  %vm2109 = vcmp.eq.s32.totalorder %v1968, %v1751
  %vm2110 = vcmp.eq.s32.totalorder %v1971, %v1750
  %vm2111 = vcmp.eq.s32.totalorder %v1971, %v1751
  %vm2112 = vcmp.eq.s32.totalorder %v1974, %v1750
  %vm2113 = vcmp.eq.s32.totalorder %v1974, %v1751
  %vm2114 = vcmp.eq.s32.totalorder %v1977, %v1750
  %vm2115 = vcmp.eq.s32.totalorder %v1977, %v1751
  %vm2116 = vcmp.eq.s32.totalorder %v1980, %v1750
  %vm2117 = vcmp.eq.s32.totalorder %v1980, %v1751
  %vm2118 = vcmp.eq.s32.totalorder %v1983, %v1750
  %vm2119 = vcmp.eq.s32.totalorder %v1983, %v1751
  %vm2120 = vcmp.eq.s32.totalorder %v1986, %v1750
  %vm2121 = vcmp.eq.s32.totalorder %v1986, %v1751
  %vm2122 = vcmp.eq.s32.totalorder %v1989, %v1750
  %vm2123 = vcmp.eq.s32.totalorder %v1989, %v1751
  %vm2124 = vcmp.eq.s32.totalorder %v1992, %v1750
  %vm2125 = vcmp.eq.s32.totalorder %v1992, %v1751
  %vm2126 = vcmp.eq.s32.totalorder %v1995, %v1750
  %vm2127 = vcmp.eq.s32.totalorder %v1995, %v1751
  %vm2128 = vcmp.eq.s32.totalorder %v1998, %v1750
  %vm2129 = vcmp.eq.s32.totalorder %v1998, %v1751
  %vm2130 = vcmp.eq.s32.totalorder %v2001, %v1750
  %vm2131 = vcmp.eq.s32.totalorder %v2001, %v1751
  %vm2132 = vcmp.eq.s32.totalorder %v2004, %v1750
  %vm2133 = vcmp.eq.s32.totalorder %v2004, %v1751
  %vm2134 = vcmp.eq.s32.totalorder %v2007, %v1750
  %vm2135 = vcmp.eq.s32.totalorder %v2007, %v1751
  %v2136 = vsel %vm2008, 1.0, 0.0
  %v2137 = vsel %vm2009, 1.0, 0.0
  %v2138 = vsel %vm2010, 1.0, 0.0
  %v2139 = vsel %vm2011, 1.0, 0.0
  %v2140 = vsel %vm2012, 1.0, 0.0
  %v2141 = vsel %vm2013, 1.0, 0.0
  %v2142 = vsel %vm2014, 1.0, 0.0
  %v2143 = vsel %vm2015, 1.0, 0.0
  %v2144 = vsel %vm2016, 1.0, 0.0
  %v2145 = vsel %vm2017, 1.0, 0.0
  %v2146 = vsel %vm2018, 1.0, 0.0
  %v2147 = vsel %vm2019, 1.0, 0.0
  %v2148 = vsel %vm2020, 1.0, 0.0
  %v2149 = vsel %vm2021, 1.0, 0.0
  %v2150 = vsel %vm2022, 1.0, 0.0
  %v2151 = vsel %vm2023, 1.0, 0.0
  %v2152 = vsel %vm2024, 1.0, 0.0
  %v2153 = vsel %vm2025, 1.0, 0.0
  %v2154 = vsel %vm2026, 1.0, 0.0
  %v2155 = vsel %vm2027, 1.0, 0.0
  %v2156 = vsel %vm2028, 1.0, 0.0
  %v2157 = vsel %vm2029, 1.0, 0.0
  %v2158 = vsel %vm2030, 1.0, 0.0
  %v2159 = vsel %vm2031, 1.0, 0.0
  %v2160 = vsel %vm2032, 1.0, 0.0
  %v2161 = vsel %vm2033, 1.0, 0.0
  %v2162 = vsel %vm2034, 1.0, 0.0
  %v2163 = vsel %vm2035, 1.0, 0.0
  %v2164 = vsel %vm2036, 1.0, 0.0
  %v2165 = vsel %vm2037, 1.0, 0.0
  %v2166 = vsel %vm2038, 1.0, 0.0
  %v2167 = vsel %vm2039, 1.0, 0.0
  %v2168 = vsel %vm2040, 1.0, 0.0
  %v2169 = vsel %vm2041, 1.0, 0.0
  %v2170 = vsel %vm2042, 1.0, 0.0
  %v2171 = vsel %vm2043, 1.0, 0.0
  %v2172 = vsel %vm2044, 1.0, 0.0
  %v2173 = vsel %vm2045, 1.0, 0.0
  %v2174 = vsel %vm2046, 1.0, 0.0
  %v2175 = vsel %vm2047, 1.0, 0.0
  %v2176 = vsel %vm2048, 1.0, 0.0
  %v2177 = vsel %vm2049, 1.0, 0.0
  %v2178 = vsel %vm2050, 1.0, 0.0
  %v2179 = vsel %vm2051, 1.0, 0.0
  %v2180 = vsel %vm2052, 1.0, 0.0
  %v2181 = vsel %vm2053, 1.0, 0.0
  %v2182 = vsel %vm2054, 1.0, 0.0
  %v2183 = vsel %vm2055, 1.0, 0.0
  %v2184 = vsel %vm2056, 1.0, 0.0
  %v2185 = vsel %vm2057, 1.0, 0.0
  %v2186 = vsel %vm2058, 1.0, 0.0
  %v2187 = vsel %vm2059, 1.0, 0.0
  %v2188 = vsel %vm2060, 1.0, 0.0
  %v2189 = vsel %vm2061, 1.0, 0.0
  %v2190 = vsel %vm2062, 1.0, 0.0
  %v2191 = vsel %vm2063, 1.0, 0.0
  %v2192 = vsel %vm2064, 1.0, 0.0
  %v2193 = vsel %vm2065, 1.0, 0.0
  %v2194 = vsel %vm2066, 1.0, 0.0
  %v2195 = vsel %vm2067, 1.0, 0.0
  %v2196 = vsel %vm2068, 1.0, 0.0
  %v2197 = vsel %vm2069, 1.0, 0.0
  %v2198 = vsel %vm2070, 1.0, 0.0
  %v2199 = vsel %vm2071, 1.0, 0.0
  %v2200 = vsel %vm2072, 1.0, 0.0
  %v2201 = vsel %vm2073, 1.0, 0.0
  %v2202 = vsel %vm2074, 1.0, 0.0
  %v2203 = vsel %vm2075, 1.0, 0.0
  %v2204 = vsel %vm2076, 1.0, 0.0
  %v2205 = vsel %vm2077, 1.0, 0.0
  %v2206 = vsel %vm2078, 1.0, 0.0
  %v2207 = vsel %vm2079, 1.0, 0.0
  %v2208 = vsel %vm2080, 1.0, 0.0
  %v2209 = vsel %vm2081, 1.0, 0.0
  %v2210 = vsel %vm2082, 1.0, 0.0
  %v2211 = vsel %vm2083, 1.0, 0.0
  %v2212 = vsel %vm2084, 1.0, 0.0
  %v2213 = vsel %vm2085, 1.0, 0.0
  %v2214 = vsel %vm2086, 1.0, 0.0
  %v2215 = vsel %vm2087, 1.0, 0.0
  %v2216 = vsel %vm2088, 1.0, 0.0
  %v2217 = vsel %vm2089, 1.0, 0.0
  %v2218 = vsel %vm2090, 1.0, 0.0
  %v2219 = vsel %vm2091, 1.0, 0.0
  %v2220 = vsel %vm2092, 1.0, 0.0
  %v2221 = vsel %vm2093, 1.0, 0.0
  %v2222 = vsel %vm2094, 1.0, 0.0
  %v2223 = vsel %vm2095, 1.0, 0.0
  %v2224 = vsel %vm2096, 1.0, 0.0
  %v2225 = vsel %vm2097, 1.0, 0.0
  %v2226 = vsel %vm2098, 1.0, 0.0
  %v2227 = vsel %vm2099, 1.0, 0.0
  %v2228 = vsel %vm2100, 1.0, 0.0
  %v2229 = vsel %vm2101, 1.0, 0.0
  %v2230 = vsel %vm2102, 1.0, 0.0
  %v2231 = vsel %vm2103, 1.0, 0.0
  %v2232 = vsel %vm2104, 1.0, 0.0
  %v2233 = vsel %vm2105, 1.0, 0.0
  %v2234 = vsel %vm2106, 1.0, 0.0
  %v2235 = vsel %vm2107, 1.0, 0.0
  %v2236 = vsel %vm2108, 1.0, 0.0
  %v2237 = vsel %vm2109, 1.0, 0.0
  %v2238 = vsel %vm2110, 1.0, 0.0
  %v2239 = vsel %vm2111, 1.0, 0.0
  %v2240 = vsel %vm2112, 1.0, 0.0
  %v2241 = vsel %vm2113, 1.0, 0.0
  %v2242 = vsel %vm2114, 1.0, 0.0
  %v2243 = vsel %vm2115, 1.0, 0.0
  %v2244 = vsel %vm2116, 1.0, 0.0
  %v2245 = vsel %vm2117, 1.0, 0.0
  %v2246 = vsel %vm2118, 1.0, 0.0
  %v2247 = vsel %vm2119, 1.0, 0.0
  %v2248 = vsel %vm2120, 1.0, 0.0
  %v2249 = vsel %vm2121, 1.0, 0.0
  %v2250 = vsel %vm2122, 1.0, 0.0
  %v2251 = vsel %vm2123, 1.0, 0.0
  %v2252 = vsel %vm2124, 1.0, 0.0
  %v2253 = vsel %vm2125, 1.0, 0.0
  %v2254 = vsel %vm2126, 1.0, 0.0
  %v2255 = vsel %vm2127, 1.0, 0.0
  %v2256 = vsel %vm2128, 1.0, 0.0
  %v2257 = vsel %vm2129, 1.0, 0.0
  %v2258 = vsel %vm2130, 1.0, 0.0
  %v2259 = vsel %vm2131, 1.0, 0.0
  %v2260 = vsel %vm2132, 1.0, 0.0
  %v2261 = vsel %vm2133, 1.0, 0.0
  %v2262 = vsel %vm2134, 1.0, 0.0
  %v2263 = vsel %vm2135, 1.0, 0.0
  %v2264 = vpack.c.bf16 %v2138, %v2136
  %v2265 = vpack.c.bf16 %v2139, %v2137
  %v2266 = vpack.c.bf16 %v2142, %v2140
  %v2267 = vpack.c.bf16 %v2143, %v2141
  %v2268 = vpack.c.bf16 %v2146, %v2144
  %v2269 = vpack.c.bf16 %v2147, %v2145
  %v2270 = vpack.c.bf16 %v2150, %v2148
  %v2271 = vpack.c.bf16 %v2151, %v2149
  %v2272 = vpack.c.bf16 %v2154, %v2152
  %v2273 = vpack.c.bf16 %v2155, %v2153
  %v2274 = vpack.c.bf16 %v2158, %v2156
  %v2275 = vpack.c.bf16 %v2159, %v2157
  %v2276 = vpack.c.bf16 %v2162, %v2160
  %v2277 = vpack.c.bf16 %v2163, %v2161
  %v2278 = vpack.c.bf16 %v2166, %v2164
  %v2279 = vpack.c.bf16 %v2167, %v2165
  %v2280 = vpack.c.bf16 %v2170, %v2168
  %v2281 = vpack.c.bf16 %v2171, %v2169
  %v2282 = vpack.c.bf16 %v2174, %v2172
  %v2283 = vpack.c.bf16 %v2175, %v2173
  %v2284 = vpack.c.bf16 %v2178, %v2176
  %v2285 = vpack.c.bf16 %v2179, %v2177
  %v2286 = vpack.c.bf16 %v2182, %v2180
  %v2287 = vpack.c.bf16 %v2183, %v2181
  %v2288 = vpack.c.bf16 %v2186, %v2184
  %v2289 = vpack.c.bf16 %v2187, %v2185
  %v2290 = vpack.c.bf16 %v2190, %v2188
  %v2291 = vpack.c.bf16 %v2191, %v2189
  %v2292 = vpack.c.bf16 %v2194, %v2192
  %v2293 = vpack.c.bf16 %v2195, %v2193
  %v2294 = vpack.c.bf16 %v2198, %v2196
  %v2295 = vpack.c.bf16 %v2199, %v2197
  %v2296 = vpack.c.bf16 %v2202, %v2200
  %v2297 = vpack.c.bf16 %v2203, %v2201
  %v2298 = vpack.c.bf16 %v2206, %v2204
  %v2299 = vpack.c.bf16 %v2207, %v2205
  %v2300 = vpack.c.bf16 %v2210, %v2208
  %v2301 = vpack.c.bf16 %v2211, %v2209
  %v2302 = vpack.c.bf16 %v2214, %v2212
  %v2303 = vpack.c.bf16 %v2215, %v2213
  %v2304 = vpack.c.bf16 %v2218, %v2216
  %v2305 = vpack.c.bf16 %v2219, %v2217
  %v2306 = vpack.c.bf16 %v2222, %v2220
  %v2307 = vpack.c.bf16 %v2223, %v2221
  %v2308 = vpack.c.bf16 %v2226, %v2224
  %v2309 = vpack.c.bf16 %v2227, %v2225
  %v2310 = vpack.c.bf16 %v2230, %v2228
  %v2311 = vpack.c.bf16 %v2231, %v2229
  %v2312 = vpack.c.bf16 %v2234, %v2232
  %v2313 = vpack.c.bf16 %v2235, %v2233
  %v2314 = vpack.c.bf16 %v2238, %v2236
  %v2315 = vpack.c.bf16 %v2239, %v2237
  %v2316 = vpack.c.bf16 %v2242, %v2240
  %v2317 = vpack.c.bf16 %v2243, %v2241
  %v2318 = vpack.c.bf16 %v2246, %v2244
  %v2319 = vpack.c.bf16 %v2247, %v2245
  %v2320 = vpack.c.bf16 %v2250, %v2248
  %v2321 = vpack.c.bf16 %v2251, %v2249
  %v2322 = vpack.c.bf16 %v2254, %v2252
  %v2323 = vpack.c.bf16 %v2255, %v2253
  %v2324 = vpack.c.bf16 %v2258, %v2256
  %v2325 = vpack.c.bf16 %v2259, %v2257
  %v2326 = vpack.c.bf16 %v2262, %v2260
  %v2327 = vpack.c.bf16 %v2263, %v2261
  %v2328 = vld [vmem:[%s3] sm:$0xf]
  %v2329 = vld [vmem:[%s3 + $0x4] sm:$0xf]
  %v2330 = vld [vmem:[%s3 + $0x8] sm:$0xf]
  %v2331 = vld [vmem:[%s3 + $0xc] sm:$0xf]
  %v2332 = vld [vmem:[%s3 + $0x10] sm:$0xf]
  %v2333 = vld [vmem:[%s3 + $0x14] sm:$0xf]
  %v2334 = vld [vmem:[%s3 + $0x18] sm:$0xf]
  %v2335 = vld [vmem:[%s3 + $0x1c] sm:$0xf]
  %v2336 = vld [vmem:[%s3 + $0x20] sm:$0xf]
  %v2337 = vld [vmem:[%s3 + $0x24] sm:$0xf]
  %v2338 = vld [vmem:[%s3 + $0x28] sm:$0xf]
  %v2339 = vld [vmem:[%s3 + $0x2c] sm:$0xf]
  %v2340 = vld [vmem:[%s3 + $0x30] sm:$0xf]
  %v2341 = vld [vmem:[%s3 + $0x34] sm:$0xf]
  %v2342 = vld [vmem:[%s3 + $0x38] sm:$0xf]
  %v2343 = vld [vmem:[%s3 + $0x3c] sm:$0xf]
  %v2344 = vld [vmem:[%s3 + $0x40] sm:$0xf]
  %v2345 = vld [vmem:[%s3 + $0x44] sm:$0xf]
  %v2346 = vld [vmem:[%s3 + $0x48] sm:$0xf]
  %v2347 = vld [vmem:[%s3 + $0x4c] sm:$0xf]
  %v2348 = vld [vmem:[%s3 + $0x50] sm:$0xf]
  %v2349 = vld [vmem:[%s3 + $0x54] sm:$0xf]
  %v2350 = vld [vmem:[%s3 + $0x58] sm:$0xf]
  %v2351 = vld [vmem:[%s3 + $0x5c] sm:$0xf]
  %v2352 = vld [vmem:[%s3 + $0x60] sm:$0xf]
  %v2353 = vld [vmem:[%s3 + $0x64] sm:$0xf]
  %v2354 = vld [vmem:[%s3 + $0x68] sm:$0xf]
  %v2355 = vld [vmem:[%s3 + $0x6c] sm:$0xf]
  %v2356 = vld [vmem:[%s3 + $0x70] sm:$0xf]
  %v2357 = vld [vmem:[%s3 + $0x74] sm:$0xf]
  %v2358 = vld [vmem:[%s3 + $0x78] sm:$0xf]
  %v2359 = vld [vmem:[%s3 + $0x7c] sm:$0xf]
  %v2392 = vunpack.c.l.b16 %v2328
  %v2393 = vunpack.c.l.b16 %v2329
  %v2394 = vunpack.c.l.b16 %v2330
  %v2395 = vunpack.c.l.b16 %v2331
  %v2396 = vunpack.c.l.b16 %v2332
  %v2397 = vunpack.c.l.b16 %v2333
  %v2398 = vunpack.c.l.b16 %v2334
  %v2399 = vunpack.c.l.b16 %v2335
  %v2400 = vunpack.c.l.b16 %v2336
  %v2401 = vunpack.c.l.b16 %v2337
  %v2402 = vunpack.c.l.b16 %v2338
  %v2403 = vunpack.c.l.b16 %v2339
  %v2404 = vunpack.c.l.b16 %v2340
  %v2405 = vunpack.c.l.b16 %v2341
  %v2406 = vunpack.c.l.b16 %v2342
  %v2407 = vunpack.c.l.b16 %v2343
  %v2408 = vunpack.c.l.b16 %v2344
  %v2409 = vunpack.c.l.b16 %v2345
  %v2410 = vunpack.c.l.b16 %v2346
  %v2411 = vunpack.c.l.b16 %v2347
  %v2412 = vunpack.c.l.b16 %v2348
  %v2413 = vunpack.c.l.b16 %v2349
  %v2414 = vunpack.c.l.b16 %v2350
  %v2415 = vunpack.c.l.b16 %v2351
  %v2416 = vunpack.c.l.b16 %v2352
  %v2417 = vunpack.c.l.b16 %v2353
  %v2418 = vunpack.c.l.b16 %v2354
  %v2419 = vunpack.c.l.b16 %v2355
  %v2420 = vunpack.c.l.b16 %v2356
  %v2421 = vunpack.c.l.b16 %v2357
  %v2422 = vunpack.c.l.b16 %v2358
  %v2423 = vunpack.c.l.b16 %v2359
  %v2424 = vpack.c.b16 %v2393, %v2392
  %v2425 = vpack.c.b16 %v2395, %v2394
  %v2426 = vpack.c.b16 %v2397, %v2396
  %v2427 = vpack.c.b16 %v2399, %v2398
  %v2428 = vpack.c.b16 %v2401, %v2400
  %v2429 = vpack.c.b16 %v2403, %v2402
  %v2430 = vpack.c.b16 %v2405, %v2404
  %v2431 = vpack.c.b16 %v2407, %v2406
  %v2432 = vpack.c.b16 %v2409, %v2408
  %v2433 = vpack.c.b16 %v2411, %v2410
  %v2434 = vpack.c.b16 %v2413, %v2412
  %v2435 = vpack.c.b16 %v2415, %v2414
  %v2436 = vpack.c.b16 %v2417, %v2416
  %v2437 = vpack.c.b16 %v2419, %v2418
  %v2438 = vpack.c.b16 %v2421, %v2420
  %v2439 = vpack.c.b16 %v2423, %v2422
  %2456 = vmatpush.bf16.msra.mxu0 %v2431
  %2457 = vmatpush.bf16.msra.mxu0 %v2430
  %2458 = vmatpush.bf16.msra.mxu0 %v2429
  %2459 = vmatpush.bf16.msra.mxu0 %v2428
  %2460 = vmatpush.bf16.msra.mxu0 %v2427
  %2461 = vmatpush.bf16.msra.mxu0 %v2426
  %2462 = vmatpush.bf16.msra.mxu0 %v2425
  %2463 = vmatpush.bf16.msra.mxu0 %v2424
  %2464 = vmatmul.bf16.gmra.mxu0 %v2264
  %v2465 = vpop.f32.mrf.mxu0
  %v2466 = vadd.f32 0.0, %v2465
  %v2467 = vpop.f32.mrf.mxu0
  %v2468 = vadd.f32 0.0, %v2467
  %2469 = vmatmul.bf16.gmra.mxu0 %v2266
  %v2470 = vpop.f32.mrf.mxu0
  %v2471 = vadd.f32 0.0, %v2470
  %v2472 = vpop.f32.mrf.mxu0
  %v2473 = vadd.f32 0.0, %v2472
  %2474 = vmatmul.bf16.gmra.mxu0 %v2268
  %v2475 = vpop.f32.mrf.mxu0
  %v2476 = vadd.f32 0.0, %v2475
  %v2477 = vpop.f32.mrf.mxu0
  %v2478 = vadd.f32 0.0, %v2477
  %2479 = vmatmul.bf16.gmra.mxu0 %v2270
  %v2480 = vpop.f32.mrf.mxu0
  %v2481 = vadd.f32 0.0, %v2480
  %v2482 = vpop.f32.mrf.mxu0
  %v2483 = vadd.f32 0.0, %v2482
  %2484 = vmatmul.bf16.gmra.mxu0 %v2272
  %v2485 = vpop.f32.mrf.mxu0
  %v2486 = vadd.f32 0.0, %v2485
  %v2487 = vpop.f32.mrf.mxu0
  %v2488 = vadd.f32 0.0, %v2487
  %2489 = vmatmul.bf16.gmra.mxu0 %v2274
  %v2490 = vpop.f32.mrf.mxu0
  %v2491 = vadd.f32 0.0, %v2490
  %v2492 = vpop.f32.mrf.mxu0
  %v2493 = vadd.f32 0.0, %v2492
  %2494 = vmatmul.bf16.gmra.mxu0 %v2276
  %v2495 = vpop.f32.mrf.mxu0
  %v2496 = vadd.f32 0.0, %v2495
  %v2497 = vpop.f32.mrf.mxu0
  %v2498 = vadd.f32 0.0, %v2497
  %2499 = vmatmul.bf16.gmra.mxu0 %v2278
  %v2500 = vpop.f32.mrf.mxu0
  %v2501 = vadd.f32 0.0, %v2500
  %v2502 = vpop.f32.mrf.mxu0
  %v2503 = vadd.f32 0.0, %v2502
  %2504 = vmatmul.bf16.gmra.mxu0 %v2280
  %v2505 = vpop.f32.mrf.mxu0
  %v2506 = vadd.f32 0.0, %v2505
  %v2507 = vpop.f32.mrf.mxu0
  %v2508 = vadd.f32 0.0, %v2507
  %2509 = vmatmul.bf16.gmra.mxu0 %v2282
  %v2510 = vpop.f32.mrf.mxu0
  %v2511 = vadd.f32 0.0, %v2510
  %v2512 = vpop.f32.mrf.mxu0
  %v2513 = vadd.f32 0.0, %v2512
  %2514 = vmatmul.bf16.gmra.mxu0 %v2284
  %v2515 = vpop.f32.mrf.mxu0
  %v2516 = vadd.f32 0.0, %v2515
  %v2517 = vpop.f32.mrf.mxu0
  %v2518 = vadd.f32 0.0, %v2517
  %2519 = vmatmul.bf16.gmra.mxu0 %v2286
  %v2520 = vpop.f32.mrf.mxu0
  %v2521 = vadd.f32 0.0, %v2520
  %v2522 = vpop.f32.mrf.mxu0
  %v2523 = vadd.f32 0.0, %v2522
  %2524 = vmatmul.bf16.gmra.mxu0 %v2288
  %v2525 = vpop.f32.mrf.mxu0
  %v2526 = vadd.f32 0.0, %v2525
  %v2527 = vpop.f32.mrf.mxu0
  %v2528 = vadd.f32 0.0, %v2527
  %2529 = vmatmul.bf16.gmra.mxu0 %v2290
  %v2530 = vpop.f32.mrf.mxu0
  %v2531 = vadd.f32 0.0, %v2530
  %v2532 = vpop.f32.mrf.mxu0
  %v2533 = vadd.f32 0.0, %v2532
  %2534 = vmatmul.bf16.gmra.mxu0 %v2292
  %v2535 = vpop.f32.mrf.mxu0
  %v2536 = vadd.f32 0.0, %v2535
  %v2537 = vpop.f32.mrf.mxu0
  %v2538 = vadd.f32 0.0, %v2537
  %2539 = vmatmul.bf16.gmra.mxu0 %v2294
  %v2540 = vpop.f32.mrf.mxu0
  %v2541 = vadd.f32 0.0, %v2540
  %v2542 = vpop.f32.mrf.mxu0
  %v2543 = vadd.f32 0.0, %v2542
  %2544 = vmatmul.bf16.gmra.mxu0 %v2296
  %v2545 = vpop.f32.mrf.mxu0
  %v2546 = vadd.f32 0.0, %v2545
  %v2547 = vpop.f32.mrf.mxu0
  %v2548 = vadd.f32 0.0, %v2547
  %2549 = vmatmul.bf16.gmra.mxu0 %v2298
  %v2550 = vpop.f32.mrf.mxu0
  %v2551 = vadd.f32 0.0, %v2550
  %v2552 = vpop.f32.mrf.mxu0
  %v2553 = vadd.f32 0.0, %v2552
  %2554 = vmatmul.bf16.gmra.mxu0 %v2300
  %v2555 = vpop.f32.mrf.mxu0
  %v2556 = vadd.f32 0.0, %v2555
  %v2557 = vpop.f32.mrf.mxu0
  %v2558 = vadd.f32 0.0, %v2557
  %2559 = vmatmul.bf16.gmra.mxu0 %v2302
  %v2560 = vpop.f32.mrf.mxu0
  %v2561 = vadd.f32 0.0, %v2560
  %v2562 = vpop.f32.mrf.mxu0
  %v2563 = vadd.f32 0.0, %v2562
  %2564 = vmatmul.bf16.gmra.mxu0 %v2304
  %v2565 = vpop.f32.mrf.mxu0
  %v2566 = vadd.f32 0.0, %v2565
  %v2567 = vpop.f32.mrf.mxu0
  %v2568 = vadd.f32 0.0, %v2567
  %2569 = vmatmul.bf16.gmra.mxu0 %v2306
  %v2570 = vpop.f32.mrf.mxu0
  %v2571 = vadd.f32 0.0, %v2570
  %v2572 = vpop.f32.mrf.mxu0
  %v2573 = vadd.f32 0.0, %v2572
  %2574 = vmatmul.bf16.gmra.mxu0 %v2308
  %v2575 = vpop.f32.mrf.mxu0
  %v2576 = vadd.f32 0.0, %v2575
  %v2577 = vpop.f32.mrf.mxu0
  %v2578 = vadd.f32 0.0, %v2577
  %2579 = vmatmul.bf16.gmra.mxu0 %v2310
  %v2580 = vpop.f32.mrf.mxu0
  %v2581 = vadd.f32 0.0, %v2580
  %v2582 = vpop.f32.mrf.mxu0
  %v2583 = vadd.f32 0.0, %v2582
  %2584 = vmatmul.bf16.gmra.mxu0 %v2312
  %v2585 = vpop.f32.mrf.mxu0
  %v2586 = vadd.f32 0.0, %v2585
  %v2587 = vpop.f32.mrf.mxu0
  %v2588 = vadd.f32 0.0, %v2587
  %2589 = vmatmul.bf16.gmra.mxu0 %v2314
  %v2590 = vpop.f32.mrf.mxu0
  %v2591 = vadd.f32 0.0, %v2590
  %v2592 = vpop.f32.mrf.mxu0
  %v2593 = vadd.f32 0.0, %v2592
  %2594 = vmatmul.bf16.gmra.mxu0 %v2316
  %v2595 = vpop.f32.mrf.mxu0
  %v2596 = vadd.f32 0.0, %v2595
  %v2597 = vpop.f32.mrf.mxu0
  %v2598 = vadd.f32 0.0, %v2597
  %2599 = vmatmul.bf16.gmra.mxu0 %v2318
  %v2600 = vpop.f32.mrf.mxu0
  %v2601 = vadd.f32 0.0, %v2600
  %v2602 = vpop.f32.mrf.mxu0
  %v2603 = vadd.f32 0.0, %v2602
  %2604 = vmatmul.bf16.gmra.mxu0 %v2320
  %v2605 = vpop.f32.mrf.mxu0
  %v2606 = vadd.f32 0.0, %v2605
  %v2607 = vpop.f32.mrf.mxu0
  %v2608 = vadd.f32 0.0, %v2607
  %2609 = vmatmul.bf16.gmra.mxu0 %v2322
  %v2610 = vpop.f32.mrf.mxu0
  %v2611 = vadd.f32 0.0, %v2610
  %v2612 = vpop.f32.mrf.mxu0
  %v2613 = vadd.f32 0.0, %v2612
  %2614 = vmatmul.bf16.gmra.mxu0 %v2324
  %v2615 = vpop.f32.mrf.mxu0
  %v2616 = vadd.f32 0.0, %v2615
  %v2617 = vpop.f32.mrf.mxu0
  %v2618 = vadd.f32 0.0, %v2617
  %2619 = vmatmul.bf16.gmra.mxu0 %v2326
  %v2620 = vpop.f32.mrf.mxu0
  %v2621 = vadd.f32 0.0, %v2620
  %v2622 = vpop.f32.mrf.mxu0
  %v2623 = vadd.f32 0.0, %v2622
  %2624 = vdwg.mxu0
  %2625 = vmatpush.bf16.msra.mxu0 %v2439
  %2626 = vmatpush.bf16.msra.mxu0 %v2438
  %2627 = vmatpush.bf16.msra.mxu0 %v2437
  %2628 = vmatpush.bf16.msra.mxu0 %v2436
  %2629 = vmatpush.bf16.msra.mxu0 %v2435
  %2630 = vmatpush.bf16.msra.mxu0 %v2434
  %2631 = vmatpush.bf16.msra.mxu0 %v2433
  %2632 = vmatpush.bf16.msra.mxu0 %v2432
  %2633 = vmatmul.bf16.gmra.mxu0 %v2265
  %v2634 = vpop.f32.mrf.mxu0
  %v2635 = vadd.f32 %v2466, %v2634
  %v2636 = vpop.f32.mrf.mxu0
  %v2637 = vadd.f32 %v2468, %v2636
  %2638 = vmatmul.bf16.gmra.mxu0 %v2267
  %v2639 = vpop.f32.mrf.mxu0
  %v2640 = vadd.f32 %v2471, %v2639
  %v2641 = vpop.f32.mrf.mxu0
  %v2642 = vadd.f32 %v2473, %v2641
  %2643 = vmatmul.bf16.gmra.mxu0 %v2269
  %v2644 = vpop.f32.mrf.mxu0
  %v2645 = vadd.f32 %v2476, %v2644
  %v2646 = vpop.f32.mrf.mxu0
  %v2647 = vadd.f32 %v2478, %v2646
  %2648 = vmatmul.bf16.gmra.mxu0 %v2271
  %v2649 = vpop.f32.mrf.mxu0
  %v2650 = vadd.f32 %v2481, %v2649
  %v2651 = vpop.f32.mrf.mxu0
  %v2652 = vadd.f32 %v2483, %v2651
  %2653 = vmatmul.bf16.gmra.mxu0 %v2273
  %v2654 = vpop.f32.mrf.mxu0
  %v2655 = vadd.f32 %v2486, %v2654
  %v2656 = vpop.f32.mrf.mxu0
  %v2657 = vadd.f32 %v2488, %v2656
  %2658 = vmatmul.bf16.gmra.mxu0 %v2275
  %v2659 = vpop.f32.mrf.mxu0
  %v2660 = vadd.f32 %v2491, %v2659
  %v2661 = vpop.f32.mrf.mxu0
  %v2662 = vadd.f32 %v2493, %v2661
  %2663 = vmatmul.bf16.gmra.mxu0 %v2277
  %v2664 = vpop.f32.mrf.mxu0
  %v2665 = vadd.f32 %v2496, %v2664
  %v2666 = vpop.f32.mrf.mxu0
  %v2667 = vadd.f32 %v2498, %v2666
  %2668 = vmatmul.bf16.gmra.mxu0 %v2279
  %v2669 = vpop.f32.mrf.mxu0
  %v2670 = vadd.f32 %v2501, %v2669
  %v2671 = vpop.f32.mrf.mxu0
  %v2672 = vadd.f32 %v2503, %v2671
  %2673 = vmatmul.bf16.gmra.mxu0 %v2281
  %v2674 = vpop.f32.mrf.mxu0
  %v2675 = vadd.f32 %v2506, %v2674
  %v2676 = vpop.f32.mrf.mxu0
  %v2677 = vadd.f32 %v2508, %v2676
  %2678 = vmatmul.bf16.gmra.mxu0 %v2283
  %v2679 = vpop.f32.mrf.mxu0
  %v2680 = vadd.f32 %v2511, %v2679
  %v2681 = vpop.f32.mrf.mxu0
  %v2682 = vadd.f32 %v2513, %v2681
  %2683 = vmatmul.bf16.gmra.mxu0 %v2285
  %v2684 = vpop.f32.mrf.mxu0
  %v2685 = vadd.f32 %v2516, %v2684
  %v2686 = vpop.f32.mrf.mxu0
  %v2687 = vadd.f32 %v2518, %v2686
  %2688 = vmatmul.bf16.gmra.mxu0 %v2287
  %v2689 = vpop.f32.mrf.mxu0
  %v2690 = vadd.f32 %v2521, %v2689
  %v2691 = vpop.f32.mrf.mxu0
  %v2692 = vadd.f32 %v2523, %v2691
  %2693 = vmatmul.bf16.gmra.mxu0 %v2289
  %v2694 = vpop.f32.mrf.mxu0
  %v2695 = vadd.f32 %v2526, %v2694
  %v2696 = vpop.f32.mrf.mxu0
  %v2697 = vadd.f32 %v2528, %v2696
  %2698 = vmatmul.bf16.gmra.mxu0 %v2291
  %v2699 = vpop.f32.mrf.mxu0
  %v2700 = vadd.f32 %v2531, %v2699
  %v2701 = vpop.f32.mrf.mxu0
  %v2702 = vadd.f32 %v2533, %v2701
  %2703 = vmatmul.bf16.gmra.mxu0 %v2293
  %v2704 = vpop.f32.mrf.mxu0
  %v2705 = vadd.f32 %v2536, %v2704
  %v2706 = vpop.f32.mrf.mxu0
  %v2707 = vadd.f32 %v2538, %v2706
  %2708 = vmatmul.bf16.gmra.mxu0 %v2295
  %v2709 = vpop.f32.mrf.mxu0
  %v2710 = vadd.f32 %v2541, %v2709
  %v2711 = vpop.f32.mrf.mxu0
  %v2712 = vadd.f32 %v2543, %v2711
  %2713 = vmatmul.bf16.gmra.mxu0 %v2297
  %v2714 = vpop.f32.mrf.mxu0
  %v2715 = vadd.f32 %v2546, %v2714
  %v2716 = vpop.f32.mrf.mxu0
  %v2717 = vadd.f32 %v2548, %v2716
  %2718 = vmatmul.bf16.gmra.mxu0 %v2299
  %v2719 = vpop.f32.mrf.mxu0
  %v2720 = vadd.f32 %v2551, %v2719
  %v2721 = vpop.f32.mrf.mxu0
  %v2722 = vadd.f32 %v2553, %v2721
  %2723 = vmatmul.bf16.gmra.mxu0 %v2301
  %v2724 = vpop.f32.mrf.mxu0
  %v2725 = vadd.f32 %v2556, %v2724
  %v2726 = vpop.f32.mrf.mxu0
  %v2727 = vadd.f32 %v2558, %v2726
  %2728 = vmatmul.bf16.gmra.mxu0 %v2303
  %v2729 = vpop.f32.mrf.mxu0
  %v2730 = vadd.f32 %v2561, %v2729
  %v2731 = vpop.f32.mrf.mxu0
  %v2732 = vadd.f32 %v2563, %v2731
  %2733 = vmatmul.bf16.gmra.mxu0 %v2305
  %v2734 = vpop.f32.mrf.mxu0
  %v2735 = vadd.f32 %v2566, %v2734
  %v2736 = vpop.f32.mrf.mxu0
  %v2737 = vadd.f32 %v2568, %v2736
  %2738 = vmatmul.bf16.gmra.mxu0 %v2307
  %v2739 = vpop.f32.mrf.mxu0
  %v2740 = vadd.f32 %v2571, %v2739
  %v2741 = vpop.f32.mrf.mxu0
  %v2742 = vadd.f32 %v2573, %v2741
  %2743 = vmatmul.bf16.gmra.mxu0 %v2309
  %v2744 = vpop.f32.mrf.mxu0
  %v2745 = vadd.f32 %v2576, %v2744
  %v2746 = vpop.f32.mrf.mxu0
  %v2747 = vadd.f32 %v2578, %v2746
  %2748 = vmatmul.bf16.gmra.mxu0 %v2311
  %v2749 = vpop.f32.mrf.mxu0
  %v2750 = vadd.f32 %v2581, %v2749
  %v2751 = vpop.f32.mrf.mxu0
  %v2752 = vadd.f32 %v2583, %v2751
  %2753 = vmatmul.bf16.gmra.mxu0 %v2313
  %v2754 = vpop.f32.mrf.mxu0
  %v2755 = vadd.f32 %v2586, %v2754
  %v2756 = vpop.f32.mrf.mxu0
  %v2757 = vadd.f32 %v2588, %v2756
  %2758 = vmatmul.bf16.gmra.mxu0 %v2315
  %v2759 = vpop.f32.mrf.mxu0
  %v2760 = vadd.f32 %v2591, %v2759
  %v2761 = vpop.f32.mrf.mxu0
  %v2762 = vadd.f32 %v2593, %v2761
  %2763 = vmatmul.bf16.gmra.mxu0 %v2317
  %v2764 = vpop.f32.mrf.mxu0
  %v2765 = vadd.f32 %v2596, %v2764
  %v2766 = vpop.f32.mrf.mxu0
  %v2767 = vadd.f32 %v2598, %v2766
  %2768 = vmatmul.bf16.gmra.mxu0 %v2319
  %v2769 = vpop.f32.mrf.mxu0
  %v2770 = vadd.f32 %v2601, %v2769
  %v2771 = vpop.f32.mrf.mxu0
  %v2772 = vadd.f32 %v2603, %v2771
  %2773 = vmatmul.bf16.gmra.mxu0 %v2321
  %v2774 = vpop.f32.mrf.mxu0
  %v2775 = vadd.f32 %v2606, %v2774
  %v2776 = vpop.f32.mrf.mxu0
  %v2777 = vadd.f32 %v2608, %v2776
  %2778 = vmatmul.bf16.gmra.mxu0 %v2323
  %v2779 = vpop.f32.mrf.mxu0
  %v2780 = vadd.f32 %v2611, %v2779
  %v2781 = vpop.f32.mrf.mxu0
  %v2782 = vadd.f32 %v2613, %v2781
  %2783 = vmatmul.bf16.gmra.mxu0 %v2325
  %v2784 = vpop.f32.mrf.mxu0
  %v2785 = vadd.f32 %v2616, %v2784
  %v2786 = vpop.f32.mrf.mxu0
  %v2787 = vadd.f32 %v2618, %v2786
  %2788 = vmatmul.bf16.gmra.mxu0 %v2327
  %v2789 = vpop.f32.mrf.mxu0
  %v2790 = vadd.f32 %v2621, %v2789
  %v2791 = vpop.f32.mrf.mxu0
  %v2792 = vadd.f32 %v2623, %v2791
  %2793 = vdwg.mxu0
  %v2794 = vmul.f32 %v407, %v2635
  %v2795 = vmul.f32 %v576, %v2635
  %v2796 = vmul.f32 %v745, %v2635
  %v2797 = vmul.f32 %v914, %v2635
  %v2798 = vmul.f32 %v1083, %v2635
  %v2799 = vmul.f32 %v1252, %v2635
  %v2800 = vmul.f32 %v1421, %v2635
  %v2801 = vmul.f32 %v1590, %v2635
  %v2802 = vmul.f32 %v409, %v2637
  %v2803 = vmul.f32 %v578, %v2637
  %v2804 = vmul.f32 %v747, %v2637
  %v2805 = vmul.f32 %v916, %v2637
  %v2806 = vmul.f32 %v1085, %v2637
  %v2807 = vmul.f32 %v1254, %v2637
  %v2808 = vmul.f32 %v1423, %v2637
  %v2809 = vmul.f32 %v1592, %v2637
  %v2810 = vmul.f32 %v412, %v2640
  %v2811 = vmul.f32 %v581, %v2640
  %v2812 = vmul.f32 %v750, %v2640
  %v2813 = vmul.f32 %v919, %v2640
  %v2814 = vmul.f32 %v1088, %v2640
  %v2815 = vmul.f32 %v1257, %v2640
  %v2816 = vmul.f32 %v1426, %v2640
  %v2817 = vmul.f32 %v1595, %v2640
  %v2818 = vmul.f32 %v414, %v2642
  %v2819 = vmul.f32 %v583, %v2642
  %v2820 = vmul.f32 %v752, %v2642
  %v2821 = vmul.f32 %v921, %v2642
  %v2822 = vmul.f32 %v1090, %v2642
  %v2823 = vmul.f32 %v1259, %v2642
  %v2824 = vmul.f32 %v1428, %v2642
  %v2825 = vmul.f32 %v1597, %v2642
  %v2826 = vmul.f32 %v417, %v2645
  %v2827 = vmul.f32 %v586, %v2645
  %v2828 = vmul.f32 %v755, %v2645
  %v2829 = vmul.f32 %v924, %v2645
  %v2830 = vmul.f32 %v1093, %v2645
  %v2831 = vmul.f32 %v1262, %v2645
  %v2832 = vmul.f32 %v1431, %v2645
  %v2833 = vmul.f32 %v1600, %v2645
  %v2834 = vmul.f32 %v419, %v2647
  %v2835 = vmul.f32 %v588, %v2647
  %v2836 = vmul.f32 %v757, %v2647
  %v2837 = vmul.f32 %v926, %v2647
  %v2838 = vmul.f32 %v1095, %v2647
  %v2839 = vmul.f32 %v1264, %v2647
  %v2840 = vmul.f32 %v1433, %v2647
  %v2841 = vmul.f32 %v1602, %v2647
  %v2842 = vmul.f32 %v422, %v2650
  %v2843 = vmul.f32 %v591, %v2650
  %v2844 = vmul.f32 %v760, %v2650
  %v2845 = vmul.f32 %v929, %v2650
  %v2846 = vmul.f32 %v1098, %v2650
  %v2847 = vmul.f32 %v1267, %v2650
  %v2848 = vmul.f32 %v1436, %v2650
  %v2849 = vmul.f32 %v1605, %v2650
  %v2850 = vmul.f32 %v424, %v2652
  %v2851 = vmul.f32 %v593, %v2652
  %v2852 = vmul.f32 %v762, %v2652
  %v2853 = vmul.f32 %v931, %v2652
  %v2854 = vmul.f32 %v1100, %v2652
  %v2855 = vmul.f32 %v1269, %v2652
  %v2856 = vmul.f32 %v1438, %v2652
  %v2857 = vmul.f32 %v1607, %v2652
  %v2858 = vmul.f32 %v427, %v2655
  %v2859 = vmul.f32 %v596, %v2655
  %v2860 = vmul.f32 %v765, %v2655
  %v2861 = vmul.f32 %v934, %v2655
  %v2862 = vmul.f32 %v1103, %v2655
  %v2863 = vmul.f32 %v1272, %v2655
  %v2864 = vmul.f32 %v1441, %v2655
  %v2865 = vmul.f32 %v1610, %v2655
  %v2866 = vmul.f32 %v429, %v2657
  %v2867 = vmul.f32 %v598, %v2657
  %v2868 = vmul.f32 %v767, %v2657
  %v2869 = vmul.f32 %v936, %v2657
  %v2870 = vmul.f32 %v1105, %v2657
  %v2871 = vmul.f32 %v1274, %v2657
  %v2872 = vmul.f32 %v1443, %v2657
  %v2873 = vmul.f32 %v1612, %v2657
  %v2874 = vmul.f32 %v432, %v2660
  %v2875 = vmul.f32 %v601, %v2660
  %v2876 = vmul.f32 %v770, %v2660
  %v2877 = vmul.f32 %v939, %v2660
  %v2878 = vmul.f32 %v1108, %v2660
  %v2879 = vmul.f32 %v1277, %v2660
  %v2880 = vmul.f32 %v1446, %v2660
  %v2881 = vmul.f32 %v1615, %v2660
  %v2882 = vmul.f32 %v434, %v2662
  %v2883 = vmul.f32 %v603, %v2662
  %v2884 = vmul.f32 %v772, %v2662
  %v2885 = vmul.f32 %v941, %v2662
  %v2886 = vmul.f32 %v1110, %v2662
  %v2887 = vmul.f32 %v1279, %v2662
  %v2888 = vmul.f32 %v1448, %v2662
  %v2889 = vmul.f32 %v1617, %v2662
  %v2890 = vmul.f32 %v437, %v2665
  %v2891 = vmul.f32 %v606, %v2665
  %v2892 = vmul.f32 %v775, %v2665
  %v2893 = vmul.f32 %v944, %v2665
  %v2894 = vmul.f32 %v1113, %v2665
  %v2895 = vmul.f32 %v1282, %v2665
  %v2896 = vmul.f32 %v1451, %v2665
  %v2897 = vmul.f32 %v1620, %v2665
  %v2898 = vmul.f32 %v439, %v2667
  %v2899 = vmul.f32 %v608, %v2667
  %v2900 = vmul.f32 %v777, %v2667
  %v2901 = vmul.f32 %v946, %v2667
  %v2902 = vmul.f32 %v1115, %v2667
  %v2903 = vmul.f32 %v1284, %v2667
  %v2904 = vmul.f32 %v1453, %v2667
  %v2905 = vmul.f32 %v1622, %v2667
  %v2906 = vmul.f32 %v442, %v2670
  %v2907 = vmul.f32 %v611, %v2670
  %v2908 = vmul.f32 %v780, %v2670
  %v2909 = vmul.f32 %v949, %v2670
  %v2910 = vmul.f32 %v1118, %v2670
  %v2911 = vmul.f32 %v1287, %v2670
  %v2912 = vmul.f32 %v1456, %v2670
  %v2913 = vmul.f32 %v1625, %v2670
  %v2914 = vmul.f32 %v444, %v2672
  %v2915 = vmul.f32 %v613, %v2672
  %v2916 = vmul.f32 %v782, %v2672
  %v2917 = vmul.f32 %v951, %v2672
  %v2918 = vmul.f32 %v1120, %v2672
  %v2919 = vmul.f32 %v1289, %v2672
  %v2920 = vmul.f32 %v1458, %v2672
  %v2921 = vmul.f32 %v1627, %v2672
  %v2922 = vmul.f32 %v447, %v2675
  %v2923 = vmul.f32 %v616, %v2675
  %v2924 = vmul.f32 %v785, %v2675
  %v2925 = vmul.f32 %v954, %v2675
  %v2926 = vmul.f32 %v1123, %v2675
  %v2927 = vmul.f32 %v1292, %v2675
  %v2928 = vmul.f32 %v1461, %v2675
  %v2929 = vmul.f32 %v1630, %v2675
  %v2930 = vmul.f32 %v449, %v2677
  %v2931 = vmul.f32 %v618, %v2677
  %v2932 = vmul.f32 %v787, %v2677
  %v2933 = vmul.f32 %v956, %v2677
  %v2934 = vmul.f32 %v1125, %v2677
  %v2935 = vmul.f32 %v1294, %v2677
  %v2936 = vmul.f32 %v1463, %v2677
  %v2937 = vmul.f32 %v1632, %v2677
  %v2938 = vmul.f32 %v452, %v2680
  %v2939 = vmul.f32 %v621, %v2680
  %v2940 = vmul.f32 %v790, %v2680
  %v2941 = vmul.f32 %v959, %v2680
  %v2942 = vmul.f32 %v1128, %v2680
  %v2943 = vmul.f32 %v1297, %v2680
  %v2944 = vmul.f32 %v1466, %v2680
  %v2945 = vmul.f32 %v1635, %v2680
  %v2946 = vmul.f32 %v454, %v2682
  %v2947 = vmul.f32 %v623, %v2682
  %v2948 = vmul.f32 %v792, %v2682
  %v2949 = vmul.f32 %v961, %v2682
  %v2950 = vmul.f32 %v1130, %v2682
  %v2951 = vmul.f32 %v1299, %v2682
  %v2952 = vmul.f32 %v1468, %v2682
  %v2953 = vmul.f32 %v1637, %v2682
  %v2954 = vmul.f32 %v457, %v2685
  %v2955 = vmul.f32 %v626, %v2685
  %v2956 = vmul.f32 %v795, %v2685
  %v2957 = vmul.f32 %v964, %v2685
  %v2958 = vmul.f32 %v1133, %v2685
  %v2959 = vmul.f32 %v1302, %v2685
  %v2960 = vmul.f32 %v1471, %v2685
  %v2961 = vmul.f32 %v1640, %v2685
  %v2962 = vmul.f32 %v459, %v2687
  %v2963 = vmul.f32 %v628, %v2687
  %v2964 = vmul.f32 %v797, %v2687
  %v2965 = vmul.f32 %v966, %v2687
  %v2966 = vmul.f32 %v1135, %v2687
  %v2967 = vmul.f32 %v1304, %v2687
  %v2968 = vmul.f32 %v1473, %v2687
  %v2969 = vmul.f32 %v1642, %v2687
  %v2970 = vmul.f32 %v462, %v2690
  %v2971 = vmul.f32 %v631, %v2690
  %v2972 = vmul.f32 %v800, %v2690
  %v2973 = vmul.f32 %v969, %v2690
  %v2974 = vmul.f32 %v1138, %v2690
  %v2975 = vmul.f32 %v1307, %v2690
  %v2976 = vmul.f32 %v1476, %v2690
  %v2977 = vmul.f32 %v1645, %v2690
  %v2978 = vmul.f32 %v464, %v2692
  %v2979 = vmul.f32 %v633, %v2692
  %v2980 = vmul.f32 %v802, %v2692
  %v2981 = vmul.f32 %v971, %v2692
  %v2982 = vmul.f32 %v1140, %v2692
  %v2983 = vmul.f32 %v1309, %v2692
  %v2984 = vmul.f32 %v1478, %v2692
  %v2985 = vmul.f32 %v1647, %v2692
  %v2986 = vmul.f32 %v467, %v2695
  %v2987 = vmul.f32 %v636, %v2695
  %v2988 = vmul.f32 %v805, %v2695
  %v2989 = vmul.f32 %v974, %v2695
  %v2990 = vmul.f32 %v1143, %v2695
  %v2991 = vmul.f32 %v1312, %v2695
  %v2992 = vmul.f32 %v1481, %v2695
  %v2993 = vmul.f32 %v1650, %v2695
  %v2994 = vmul.f32 %v469, %v2697
  %v2995 = vmul.f32 %v638, %v2697
  %v2996 = vmul.f32 %v807, %v2697
  %v2997 = vmul.f32 %v976, %v2697
  %v2998 = vmul.f32 %v1145, %v2697
  %v2999 = vmul.f32 %v1314, %v2697
  %v3000 = vmul.f32 %v1483, %v2697
  %v3001 = vmul.f32 %v1652, %v2697
  %v3002 = vmul.f32 %v472, %v2700
  %v3003 = vmul.f32 %v641, %v2700
  %v3004 = vmul.f32 %v810, %v2700
  %v3005 = vmul.f32 %v979, %v2700
  %v3006 = vmul.f32 %v1148, %v2700
  %v3007 = vmul.f32 %v1317, %v2700
  %v3008 = vmul.f32 %v1486, %v2700
  %v3009 = vmul.f32 %v1655, %v2700
  %v3010 = vmul.f32 %v474, %v2702
  %v3011 = vmul.f32 %v643, %v2702
  %v3012 = vmul.f32 %v812, %v2702
  %v3013 = vmul.f32 %v981, %v2702
  %v3014 = vmul.f32 %v1150, %v2702
  %v3015 = vmul.f32 %v1319, %v2702
  %v3016 = vmul.f32 %v1488, %v2702
  %v3017 = vmul.f32 %v1657, %v2702
  %v3018 = vmul.f32 %v477, %v2705
  %v3019 = vmul.f32 %v646, %v2705
  %v3020 = vmul.f32 %v815, %v2705
  %v3021 = vmul.f32 %v984, %v2705
  %v3022 = vmul.f32 %v1153, %v2705
  %v3023 = vmul.f32 %v1322, %v2705
  %v3024 = vmul.f32 %v1491, %v2705
  %v3025 = vmul.f32 %v1660, %v2705
  %v3026 = vmul.f32 %v479, %v2707
  %v3027 = vmul.f32 %v648, %v2707
  %v3028 = vmul.f32 %v817, %v2707
  %v3029 = vmul.f32 %v986, %v2707
  %v3030 = vmul.f32 %v1155, %v2707
  %v3031 = vmul.f32 %v1324, %v2707
  %v3032 = vmul.f32 %v1493, %v2707
  %v3033 = vmul.f32 %v1662, %v2707
  %v3034 = vmul.f32 %v482, %v2710
  %v3035 = vmul.f32 %v651, %v2710
  %v3036 = vmul.f32 %v820, %v2710
  %v3037 = vmul.f32 %v989, %v2710
  %v3038 = vmul.f32 %v1158, %v2710
  %v3039 = vmul.f32 %v1327, %v2710
  %v3040 = vmul.f32 %v1496, %v2710
  %v3041 = vmul.f32 %v1665, %v2710
  %v3042 = vmul.f32 %v484, %v2712
  %v3043 = vmul.f32 %v653, %v2712
  %v3044 = vmul.f32 %v822, %v2712
  %v3045 = vmul.f32 %v991, %v2712
  %v3046 = vmul.f32 %v1160, %v2712
  %v3047 = vmul.f32 %v1329, %v2712
  %v3048 = vmul.f32 %v1498, %v2712
  %v3049 = vmul.f32 %v1667, %v2712
  %v3050 = vmul.f32 %v487, %v2715
  %v3051 = vmul.f32 %v656, %v2715
  %v3052 = vmul.f32 %v825, %v2715
  %v3053 = vmul.f32 %v994, %v2715
  %v3054 = vmul.f32 %v1163, %v2715
  %v3055 = vmul.f32 %v1332, %v2715
  %v3056 = vmul.f32 %v1501, %v2715
  %v3057 = vmul.f32 %v1670, %v2715
  %v3058 = vmul.f32 %v489, %v2717
  %v3059 = vmul.f32 %v658, %v2717
  %v3060 = vmul.f32 %v827, %v2717
  %v3061 = vmul.f32 %v996, %v2717
  %v3062 = vmul.f32 %v1165, %v2717
  %v3063 = vmul.f32 %v1334, %v2717
  %v3064 = vmul.f32 %v1503, %v2717
  %v3065 = vmul.f32 %v1672, %v2717
  %v3066 = vmul.f32 %v492, %v2720
  %v3067 = vmul.f32 %v661, %v2720
  %v3068 = vmul.f32 %v830, %v2720
  %v3069 = vmul.f32 %v999, %v2720
  %v3070 = vmul.f32 %v1168, %v2720
  %v3071 = vmul.f32 %v1337, %v2720
  %v3072 = vmul.f32 %v1506, %v2720
  %v3073 = vmul.f32 %v1675, %v2720
  %v3074 = vmul.f32 %v494, %v2722
  %v3075 = vmul.f32 %v663, %v2722
  %v3076 = vmul.f32 %v832, %v2722
  %v3077 = vmul.f32 %v1001, %v2722
  %v3078 = vmul.f32 %v1170, %v2722
  %v3079 = vmul.f32 %v1339, %v2722
  %v3080 = vmul.f32 %v1508, %v2722
  %v3081 = vmul.f32 %v1677, %v2722
  %v3082 = vmul.f32 %v497, %v2725
  %v3083 = vmul.f32 %v666, %v2725
  %v3084 = vmul.f32 %v835, %v2725
  %v3085 = vmul.f32 %v1004, %v2725
  %v3086 = vmul.f32 %v1173, %v2725
  %v3087 = vmul.f32 %v1342, %v2725
  %v3088 = vmul.f32 %v1511, %v2725
  %v3089 = vmul.f32 %v1680, %v2725
  %v3090 = vmul.f32 %v499, %v2727
  %v3091 = vmul.f32 %v668, %v2727
  %v3092 = vmul.f32 %v837, %v2727
  %v3093 = vmul.f32 %v1006, %v2727
  %v3094 = vmul.f32 %v1175, %v2727
  %v3095 = vmul.f32 %v1344, %v2727
  %v3096 = vmul.f32 %v1513, %v2727
  %v3097 = vmul.f32 %v1682, %v2727
  %v3098 = vmul.f32 %v502, %v2730
  %v3099 = vmul.f32 %v671, %v2730
  %v3100 = vmul.f32 %v840, %v2730
  %v3101 = vmul.f32 %v1009, %v2730
  %v3102 = vmul.f32 %v1178, %v2730
  %v3103 = vmul.f32 %v1347, %v2730
  %v3104 = vmul.f32 %v1516, %v2730
  %v3105 = vmul.f32 %v1685, %v2730
  %v3106 = vmul.f32 %v504, %v2732
  %v3107 = vmul.f32 %v673, %v2732
  %v3108 = vmul.f32 %v842, %v2732
  %v3109 = vmul.f32 %v1011, %v2732
  %v3110 = vmul.f32 %v1180, %v2732
  %v3111 = vmul.f32 %v1349, %v2732
  %v3112 = vmul.f32 %v1518, %v2732
  %v3113 = vmul.f32 %v1687, %v2732
  %v3114 = vmul.f32 %v507, %v2735
  %v3115 = vmul.f32 %v676, %v2735
  %v3116 = vmul.f32 %v845, %v2735
  %v3117 = vmul.f32 %v1014, %v2735
  %v3118 = vmul.f32 %v1183, %v2735
  %v3119 = vmul.f32 %v1352, %v2735
  %v3120 = vmul.f32 %v1521, %v2735
  %v3121 = vmul.f32 %v1690, %v2735
  %v3122 = vmul.f32 %v509, %v2737
  %v3123 = vmul.f32 %v678, %v2737
  %v3124 = vmul.f32 %v847, %v2737
  %v3125 = vmul.f32 %v1016, %v2737
  %v3126 = vmul.f32 %v1185, %v2737
  %v3127 = vmul.f32 %v1354, %v2737
  %v3128 = vmul.f32 %v1523, %v2737
  %v3129 = vmul.f32 %v1692, %v2737
  %v3130 = vmul.f32 %v512, %v2740
  %v3131 = vmul.f32 %v681, %v2740
  %v3132 = vmul.f32 %v850, %v2740
  %v3133 = vmul.f32 %v1019, %v2740
  %v3134 = vmul.f32 %v1188, %v2740
  %v3135 = vmul.f32 %v1357, %v2740
  %v3136 = vmul.f32 %v1526, %v2740
  %v3137 = vmul.f32 %v1695, %v2740
  %v3138 = vmul.f32 %v514, %v2742
  %v3139 = vmul.f32 %v683, %v2742
  %v3140 = vmul.f32 %v852, %v2742
  %v3141 = vmul.f32 %v1021, %v2742
  %v3142 = vmul.f32 %v1190, %v2742
  %v3143 = vmul.f32 %v1359, %v2742
  %v3144 = vmul.f32 %v1528, %v2742
  %v3145 = vmul.f32 %v1697, %v2742
  %v3146 = vmul.f32 %v517, %v2745
  %v3147 = vmul.f32 %v686, %v2745
  %v3148 = vmul.f32 %v855, %v2745
  %v3149 = vmul.f32 %v1024, %v2745
  %v3150 = vmul.f32 %v1193, %v2745
  %v3151 = vmul.f32 %v1362, %v2745
  %v3152 = vmul.f32 %v1531, %v2745
  %v3153 = vmul.f32 %v1700, %v2745
  %v3154 = vmul.f32 %v519, %v2747
  %v3155 = vmul.f32 %v688, %v2747
  %v3156 = vmul.f32 %v857, %v2747
  %v3157 = vmul.f32 %v1026, %v2747
  %v3158 = vmul.f32 %v1195, %v2747
  %v3159 = vmul.f32 %v1364, %v2747
  %v3160 = vmul.f32 %v1533, %v2747
  %v3161 = vmul.f32 %v1702, %v2747
  %v3162 = vmul.f32 %v522, %v2750
  %v3163 = vmul.f32 %v691, %v2750
  %v3164 = vmul.f32 %v860, %v2750
  %v3165 = vmul.f32 %v1029, %v2750
  %v3166 = vmul.f32 %v1198, %v2750
  %v3167 = vmul.f32 %v1367, %v2750
  %v3168 = vmul.f32 %v1536, %v2750
  %v3169 = vmul.f32 %v1705, %v2750
  %v3170 = vmul.f32 %v524, %v2752
  %v3171 = vmul.f32 %v693, %v2752
  %v3172 = vmul.f32 %v862, %v2752
  %v3173 = vmul.f32 %v1031, %v2752
  %v3174 = vmul.f32 %v1200, %v2752
  %v3175 = vmul.f32 %v1369, %v2752
  %v3176 = vmul.f32 %v1538, %v2752
  %v3177 = vmul.f32 %v1707, %v2752
  %v3178 = vmul.f32 %v527, %v2755
  %v3179 = vmul.f32 %v696, %v2755
  %v3180 = vmul.f32 %v865, %v2755
  %v3181 = vmul.f32 %v1034, %v2755
  %v3182 = vmul.f32 %v1203, %v2755
  %v3183 = vmul.f32 %v1372, %v2755
  %v3184 = vmul.f32 %v1541, %v2755
  %v3185 = vmul.f32 %v1710, %v2755
  %v3186 = vmul.f32 %v529, %v2757
  %v3187 = vmul.f32 %v698, %v2757
  %v3188 = vmul.f32 %v867, %v2757
  %v3189 = vmul.f32 %v1036, %v2757
  %v3190 = vmul.f32 %v1205, %v2757
  %v3191 = vmul.f32 %v1374, %v2757
  %v3192 = vmul.f32 %v1543, %v2757
  %v3193 = vmul.f32 %v1712, %v2757
  %v3194 = vmul.f32 %v532, %v2760
  %v3195 = vmul.f32 %v701, %v2760
  %v3196 = vmul.f32 %v870, %v2760
  %v3197 = vmul.f32 %v1039, %v2760
  %v3198 = vmul.f32 %v1208, %v2760
  %v3199 = vmul.f32 %v1377, %v2760
  %v3200 = vmul.f32 %v1546, %v2760
  %v3201 = vmul.f32 %v1715, %v2760
  %v3202 = vmul.f32 %v534, %v2762
  %v3203 = vmul.f32 %v703, %v2762
  %v3204 = vmul.f32 %v872, %v2762
  %v3205 = vmul.f32 %v1041, %v2762
  %v3206 = vmul.f32 %v1210, %v2762
  %v3207 = vmul.f32 %v1379, %v2762
  %v3208 = vmul.f32 %v1548, %v2762
  %v3209 = vmul.f32 %v1717, %v2762
  %v3210 = vmul.f32 %v537, %v2765
  %v3211 = vmul.f32 %v706, %v2765
  %v3212 = vmul.f32 %v875, %v2765
  %v3213 = vmul.f32 %v1044, %v2765
  %v3214 = vmul.f32 %v1213, %v2765
  %v3215 = vmul.f32 %v1382, %v2765
  %v3216 = vmul.f32 %v1551, %v2765
  %v3217 = vmul.f32 %v1720, %v2765
  %v3218 = vmul.f32 %v539, %v2767
  %v3219 = vmul.f32 %v708, %v2767
  %v3220 = vmul.f32 %v877, %v2767
  %v3221 = vmul.f32 %v1046, %v2767
  %v3222 = vmul.f32 %v1215, %v2767
  %v3223 = vmul.f32 %v1384, %v2767
  %v3224 = vmul.f32 %v1553, %v2767
  %v3225 = vmul.f32 %v1722, %v2767
  %v3226 = vmul.f32 %v542, %v2770
  %v3227 = vmul.f32 %v711, %v2770
  %v3228 = vmul.f32 %v880, %v2770
  %v3229 = vmul.f32 %v1049, %v2770
  %v3230 = vmul.f32 %v1218, %v2770
  %v3231 = vmul.f32 %v1387, %v2770
  %v3232 = vmul.f32 %v1556, %v2770
  %v3233 = vmul.f32 %v1725, %v2770
  %v3234 = vmul.f32 %v544, %v2772
  %v3235 = vmul.f32 %v713, %v2772
  %v3236 = vmul.f32 %v882, %v2772
  %v3237 = vmul.f32 %v1051, %v2772
  %v3238 = vmul.f32 %v1220, %v2772
  %v3239 = vmul.f32 %v1389, %v2772
  %v3240 = vmul.f32 %v1558, %v2772
  %v3241 = vmul.f32 %v1727, %v2772
  %v3242 = vmul.f32 %v547, %v2775
  %v3243 = vmul.f32 %v716, %v2775
  %v3244 = vmul.f32 %v885, %v2775
  %v3245 = vmul.f32 %v1054, %v2775
  %v3246 = vmul.f32 %v1223, %v2775
  %v3247 = vmul.f32 %v1392, %v2775
  %v3248 = vmul.f32 %v1561, %v2775
  %v3249 = vmul.f32 %v1730, %v2775
  %v3250 = vmul.f32 %v549, %v2777
  %v3251 = vmul.f32 %v718, %v2777
  %v3252 = vmul.f32 %v887, %v2777
  %v3253 = vmul.f32 %v1056, %v2777
  %v3254 = vmul.f32 %v1225, %v2777
  %v3255 = vmul.f32 %v1394, %v2777
  %v3256 = vmul.f32 %v1563, %v2777
  %v3257 = vmul.f32 %v1732, %v2777
  %v3258 = vmul.f32 %v552, %v2780
  %v3259 = vmul.f32 %v721, %v2780
  %v3260 = vmul.f32 %v890, %v2780
  %v3261 = vmul.f32 %v1059, %v2780
  %v3262 = vmul.f32 %v1228, %v2780
  %v3263 = vmul.f32 %v1397, %v2780
  %v3264 = vmul.f32 %v1566, %v2780
  %v3265 = vmul.f32 %v1735, %v2780
  %v3266 = vmul.f32 %v554, %v2782
  %v3267 = vmul.f32 %v723, %v2782
  %v3268 = vmul.f32 %v892, %v2782
  %v3269 = vmul.f32 %v1061, %v2782
  %v3270 = vmul.f32 %v1230, %v2782
  %v3271 = vmul.f32 %v1399, %v2782
  %v3272 = vmul.f32 %v1568, %v2782
  %v3273 = vmul.f32 %v1737, %v2782
  %v3274 = vmul.f32 %v557, %v2785
  %v3275 = vmul.f32 %v726, %v2785
  %v3276 = vmul.f32 %v895, %v2785
  %v3277 = vmul.f32 %v1064, %v2785
  %v3278 = vmul.f32 %v1233, %v2785
  %v3279 = vmul.f32 %v1402, %v2785
  %v3280 = vmul.f32 %v1571, %v2785
  %v3281 = vmul.f32 %v1740, %v2785
  %v3282 = vmul.f32 %v559, %v2787
  %v3283 = vmul.f32 %v728, %v2787
  %v3284 = vmul.f32 %v897, %v2787
  %v3285 = vmul.f32 %v1066, %v2787
  %v3286 = vmul.f32 %v1235, %v2787
  %v3287 = vmul.f32 %v1404, %v2787
  %v3288 = vmul.f32 %v1573, %v2787
  %v3289 = vmul.f32 %v1742, %v2787
  %v3290 = vmul.f32 %v562, %v2790
  %v3291 = vmul.f32 %v731, %v2790
  %v3292 = vmul.f32 %v900, %v2790
  %v3293 = vmul.f32 %v1069, %v2790
  %v3294 = vmul.f32 %v1238, %v2790
  %v3295 = vmul.f32 %v1407, %v2790
  %v3296 = vmul.f32 %v1576, %v2790
  %v3297 = vmul.f32 %v1745, %v2790
  %v3298 = vmul.f32 %v564, %v2792
  %v3299 = vmul.f32 %v733, %v2792
  %v3300 = vmul.f32 %v902, %v2792
  %v3301 = vmul.f32 %v1071, %v2792
  %v3302 = vmul.f32 %v1240, %v2792
  %v3303 = vmul.f32 %v1409, %v2792
  %v3304 = vmul.f32 %v1578, %v2792
  %v3305 = vmul.f32 %v1747, %v2792
  %v3306 = vpack.c.bf16 %v2802, %v2794
  %v3307 = vpack.c.bf16 %v2803, %v2795
  %v3308 = vpack.c.bf16 %v2804, %v2796
  %v3309 = vpack.c.bf16 %v2805, %v2797
  %v3310 = vpack.c.bf16 %v2806, %v2798
  %v3311 = vpack.c.bf16 %v2807, %v2799
  %v3312 = vpack.c.bf16 %v2808, %v2800
  %v3313 = vpack.c.bf16 %v2809, %v2801
  %v3314 = vpack.c.bf16 %v2818, %v2810
  %v3315 = vpack.c.bf16 %v2819, %v2811
  %v3316 = vpack.c.bf16 %v2820, %v2812
  %v3317 = vpack.c.bf16 %v2821, %v2813
  %v3318 = vpack.c.bf16 %v2822, %v2814
  %v3319 = vpack.c.bf16 %v2823, %v2815
  %v3320 = vpack.c.bf16 %v2824, %v2816
  %v3321 = vpack.c.bf16 %v2825, %v2817
  %v3322 = vpack.c.bf16 %v2834, %v2826
  %v3323 = vpack.c.bf16 %v2835, %v2827
  %v3324 = vpack.c.bf16 %v2836, %v2828
  %v3325 = vpack.c.bf16 %v2837, %v2829
  %v3326 = vpack.c.bf16 %v2838, %v2830
  %v3327 = vpack.c.bf16 %v2839, %v2831
  %v3328 = vpack.c.bf16 %v2840, %v2832
  %v3329 = vpack.c.bf16 %v2841, %v2833
  %v3330 = vpack.c.bf16 %v2850, %v2842
  %v3331 = vpack.c.bf16 %v2851, %v2843
  %v3332 = vpack.c.bf16 %v2852, %v2844
  %v3333 = vpack.c.bf16 %v2853, %v2845
  %v3334 = vpack.c.bf16 %v2854, %v2846
  %v3335 = vpack.c.bf16 %v2855, %v2847
  %v3336 = vpack.c.bf16 %v2856, %v2848
  %v3337 = vpack.c.bf16 %v2857, %v2849
  %v3338 = vpack.c.bf16 %v2866, %v2858
  %v3339 = vpack.c.bf16 %v2867, %v2859
  %v3340 = vpack.c.bf16 %v2868, %v2860
  %v3341 = vpack.c.bf16 %v2869, %v2861
  %v3342 = vpack.c.bf16 %v2870, %v2862
  %v3343 = vpack.c.bf16 %v2871, %v2863
  %v3344 = vpack.c.bf16 %v2872, %v2864
  %v3345 = vpack.c.bf16 %v2873, %v2865
  %v3346 = vpack.c.bf16 %v2882, %v2874
  %v3347 = vpack.c.bf16 %v2883, %v2875
  %v3348 = vpack.c.bf16 %v2884, %v2876
  %v3349 = vpack.c.bf16 %v2885, %v2877
  %v3350 = vpack.c.bf16 %v2886, %v2878
  %v3351 = vpack.c.bf16 %v2887, %v2879
  %v3352 = vpack.c.bf16 %v2888, %v2880
  %v3353 = vpack.c.bf16 %v2889, %v2881
  %v3354 = vpack.c.bf16 %v2898, %v2890
  %v3355 = vpack.c.bf16 %v2899, %v2891
  %v3356 = vpack.c.bf16 %v2900, %v2892
  %v3357 = vpack.c.bf16 %v2901, %v2893
  %v3358 = vpack.c.bf16 %v2902, %v2894
  %v3359 = vpack.c.bf16 %v2903, %v2895
  %v3360 = vpack.c.bf16 %v2904, %v2896
  %v3361 = vpack.c.bf16 %v2905, %v2897
  %v3362 = vpack.c.bf16 %v2914, %v2906
  %v3363 = vpack.c.bf16 %v2915, %v2907
  %v3364 = vpack.c.bf16 %v2916, %v2908
  %v3365 = vpack.c.bf16 %v2917, %v2909
  %v3366 = vpack.c.bf16 %v2918, %v2910
  %v3367 = vpack.c.bf16 %v2919, %v2911
  %v3368 = vpack.c.bf16 %v2920, %v2912
  %v3369 = vpack.c.bf16 %v2921, %v2913
  %v3370 = vpack.c.bf16 %v2930, %v2922
  %v3371 = vpack.c.bf16 %v2931, %v2923
  %v3372 = vpack.c.bf16 %v2932, %v2924
  %v3373 = vpack.c.bf16 %v2933, %v2925
  %v3374 = vpack.c.bf16 %v2934, %v2926
  %v3375 = vpack.c.bf16 %v2935, %v2927
  %v3376 = vpack.c.bf16 %v2936, %v2928
  %v3377 = vpack.c.bf16 %v2937, %v2929
  %v3378 = vpack.c.bf16 %v2946, %v2938
  %v3379 = vpack.c.bf16 %v2947, %v2939
  %v3380 = vpack.c.bf16 %v2948, %v2940
  %v3381 = vpack.c.bf16 %v2949, %v2941
  %v3382 = vpack.c.bf16 %v2950, %v2942
  %v3383 = vpack.c.bf16 %v2951, %v2943
  %v3384 = vpack.c.bf16 %v2952, %v2944
  %v3385 = vpack.c.bf16 %v2953, %v2945
  %v3386 = vpack.c.bf16 %v2962, %v2954
  %v3387 = vpack.c.bf16 %v2963, %v2955
  %v3388 = vpack.c.bf16 %v2964, %v2956
  %v3389 = vpack.c.bf16 %v2965, %v2957
  %v3390 = vpack.c.bf16 %v2966, %v2958
  %v3391 = vpack.c.bf16 %v2967, %v2959
  %v3392 = vpack.c.bf16 %v2968, %v2960
  %v3393 = vpack.c.bf16 %v2969, %v2961
  %v3394 = vpack.c.bf16 %v2978, %v2970
  %v3395 = vpack.c.bf16 %v2979, %v2971
  %v3396 = vpack.c.bf16 %v2980, %v2972
  %v3397 = vpack.c.bf16 %v2981, %v2973
  %v3398 = vpack.c.bf16 %v2982, %v2974
  %v3399 = vpack.c.bf16 %v2983, %v2975
  %v3400 = vpack.c.bf16 %v2984, %v2976
  %v3401 = vpack.c.bf16 %v2985, %v2977
  %v3402 = vpack.c.bf16 %v2994, %v2986
  %v3403 = vpack.c.bf16 %v2995, %v2987
  %v3404 = vpack.c.bf16 %v2996, %v2988
  %v3405 = vpack.c.bf16 %v2997, %v2989
  %v3406 = vpack.c.bf16 %v2998, %v2990
  %v3407 = vpack.c.bf16 %v2999, %v2991
  %v3408 = vpack.c.bf16 %v3000, %v2992
  %v3409 = vpack.c.bf16 %v3001, %v2993
  %v3410 = vpack.c.bf16 %v3010, %v3002
  %v3411 = vpack.c.bf16 %v3011, %v3003
  %v3412 = vpack.c.bf16 %v3012, %v3004
  %v3413 = vpack.c.bf16 %v3013, %v3005
  %v3414 = vpack.c.bf16 %v3014, %v3006
  %v3415 = vpack.c.bf16 %v3015, %v3007
  %v3416 = vpack.c.bf16 %v3016, %v3008
  %v3417 = vpack.c.bf16 %v3017, %v3009
  %v3418 = vpack.c.bf16 %v3026, %v3018
  %v3419 = vpack.c.bf16 %v3027, %v3019
  %v3420 = vpack.c.bf16 %v3028, %v3020
  %v3421 = vpack.c.bf16 %v3029, %v3021
  %v3422 = vpack.c.bf16 %v3030, %v3022
  %v3423 = vpack.c.bf16 %v3031, %v3023
  %v3424 = vpack.c.bf16 %v3032, %v3024
  %v3425 = vpack.c.bf16 %v3033, %v3025
  %v3426 = vpack.c.bf16 %v3042, %v3034
  %v3427 = vpack.c.bf16 %v3043, %v3035
  %v3428 = vpack.c.bf16 %v3044, %v3036
  %v3429 = vpack.c.bf16 %v3045, %v3037
  %v3430 = vpack.c.bf16 %v3046, %v3038
  %v3431 = vpack.c.bf16 %v3047, %v3039
  %v3432 = vpack.c.bf16 %v3048, %v3040
  %v3433 = vpack.c.bf16 %v3049, %v3041
  %v3434 = vpack.c.bf16 %v3058, %v3050
  %v3435 = vpack.c.bf16 %v3059, %v3051
  %v3436 = vpack.c.bf16 %v3060, %v3052
  %v3437 = vpack.c.bf16 %v3061, %v3053
  %v3438 = vpack.c.bf16 %v3062, %v3054
  %v3439 = vpack.c.bf16 %v3063, %v3055
  %v3440 = vpack.c.bf16 %v3064, %v3056
  %v3441 = vpack.c.bf16 %v3065, %v3057
  %v3442 = vpack.c.bf16 %v3074, %v3066
  %v3443 = vpack.c.bf16 %v3075, %v3067
  %v3444 = vpack.c.bf16 %v3076, %v3068
  %v3445 = vpack.c.bf16 %v3077, %v3069
  %v3446 = vpack.c.bf16 %v3078, %v3070
  %v3447 = vpack.c.bf16 %v3079, %v3071
  %v3448 = vpack.c.bf16 %v3080, %v3072
  %v3449 = vpack.c.bf16 %v3081, %v3073
  %v3450 = vpack.c.bf16 %v3090, %v3082
  %v3451 = vpack.c.bf16 %v3091, %v3083
  %v3452 = vpack.c.bf16 %v3092, %v3084
  %v3453 = vpack.c.bf16 %v3093, %v3085
  %v3454 = vpack.c.bf16 %v3094, %v3086
  %v3455 = vpack.c.bf16 %v3095, %v3087
  %v3456 = vpack.c.bf16 %v3096, %v3088
  %v3457 = vpack.c.bf16 %v3097, %v3089
  %v3458 = vpack.c.bf16 %v3106, %v3098
  %v3459 = vpack.c.bf16 %v3107, %v3099
  %v3460 = vpack.c.bf16 %v3108, %v3100
  %v3461 = vpack.c.bf16 %v3109, %v3101
  %v3462 = vpack.c.bf16 %v3110, %v3102
  %v3463 = vpack.c.bf16 %v3111, %v3103
  %v3464 = vpack.c.bf16 %v3112, %v3104
  %v3465 = vpack.c.bf16 %v3113, %v3105
  %v3466 = vpack.c.bf16 %v3122, %v3114
  %v3467 = vpack.c.bf16 %v3123, %v3115
  %v3468 = vpack.c.bf16 %v3124, %v3116
  %v3469 = vpack.c.bf16 %v3125, %v3117
  %v3470 = vpack.c.bf16 %v3126, %v3118
  %v3471 = vpack.c.bf16 %v3127, %v3119
  %v3472 = vpack.c.bf16 %v3128, %v3120
  %v3473 = vpack.c.bf16 %v3129, %v3121
  %v3474 = vpack.c.bf16 %v3138, %v3130
  %v3475 = vpack.c.bf16 %v3139, %v3131
  %v3476 = vpack.c.bf16 %v3140, %v3132
  %v3477 = vpack.c.bf16 %v3141, %v3133
  %v3478 = vpack.c.bf16 %v3142, %v3134
  %v3479 = vpack.c.bf16 %v3143, %v3135
  %v3480 = vpack.c.bf16 %v3144, %v3136
  %v3481 = vpack.c.bf16 %v3145, %v3137
  %v3482 = vpack.c.bf16 %v3154, %v3146
  %v3483 = vpack.c.bf16 %v3155, %v3147
  %v3484 = vpack.c.bf16 %v3156, %v3148
  %v3485 = vpack.c.bf16 %v3157, %v3149
  %v3486 = vpack.c.bf16 %v3158, %v3150
  %v3487 = vpack.c.bf16 %v3159, %v3151
  %v3488 = vpack.c.bf16 %v3160, %v3152
  %v3489 = vpack.c.bf16 %v3161, %v3153
  %v3490 = vpack.c.bf16 %v3170, %v3162
  %v3491 = vpack.c.bf16 %v3171, %v3163
  %v3492 = vpack.c.bf16 %v3172, %v3164
  %v3493 = vpack.c.bf16 %v3173, %v3165
  %v3494 = vpack.c.bf16 %v3174, %v3166
  %v3495 = vpack.c.bf16 %v3175, %v3167
  %v3496 = vpack.c.bf16 %v3176, %v3168
  %v3497 = vpack.c.bf16 %v3177, %v3169
  %v3498 = vpack.c.bf16 %v3186, %v3178
  %v3499 = vpack.c.bf16 %v3187, %v3179
  %v3500 = vpack.c.bf16 %v3188, %v3180
  %v3501 = vpack.c.bf16 %v3189, %v3181
  %v3502 = vpack.c.bf16 %v3190, %v3182
  %v3503 = vpack.c.bf16 %v3191, %v3183
  %v3504 = vpack.c.bf16 %v3192, %v3184
  %v3505 = vpack.c.bf16 %v3193, %v3185
  %v3506 = vpack.c.bf16 %v3202, %v3194
  %v3507 = vpack.c.bf16 %v3203, %v3195
  %v3508 = vpack.c.bf16 %v3204, %v3196
  %v3509 = vpack.c.bf16 %v3205, %v3197
  %v3510 = vpack.c.bf16 %v3206, %v3198
  %v3511 = vpack.c.bf16 %v3207, %v3199
  %v3512 = vpack.c.bf16 %v3208, %v3200
  %v3513 = vpack.c.bf16 %v3209, %v3201
  %v3514 = vpack.c.bf16 %v3218, %v3210
  %v3515 = vpack.c.bf16 %v3219, %v3211
  %v3516 = vpack.c.bf16 %v3220, %v3212
  %v3517 = vpack.c.bf16 %v3221, %v3213
  %v3518 = vpack.c.bf16 %v3222, %v3214
  %v3519 = vpack.c.bf16 %v3223, %v3215
  %v3520 = vpack.c.bf16 %v3224, %v3216
  %v3521 = vpack.c.bf16 %v3225, %v3217
  %v3522 = vpack.c.bf16 %v3234, %v3226
  %v3523 = vpack.c.bf16 %v3235, %v3227
  %v3524 = vpack.c.bf16 %v3236, %v3228
  %v3525 = vpack.c.bf16 %v3237, %v3229
  %v3526 = vpack.c.bf16 %v3238, %v3230
  %v3527 = vpack.c.bf16 %v3239, %v3231
  %v3528 = vpack.c.bf16 %v3240, %v3232
  %v3529 = vpack.c.bf16 %v3241, %v3233
  %v3530 = vpack.c.bf16 %v3250, %v3242
  %v3531 = vpack.c.bf16 %v3251, %v3243
  %v3532 = vpack.c.bf16 %v3252, %v3244
  %v3533 = vpack.c.bf16 %v3253, %v3245
  %v3534 = vpack.c.bf16 %v3254, %v3246
  %v3535 = vpack.c.bf16 %v3255, %v3247
  %v3536 = vpack.c.bf16 %v3256, %v3248
  %v3537 = vpack.c.bf16 %v3257, %v3249
  %v3538 = vpack.c.bf16 %v3266, %v3258
  %v3539 = vpack.c.bf16 %v3267, %v3259
  %v3540 = vpack.c.bf16 %v3268, %v3260
  %v3541 = vpack.c.bf16 %v3269, %v3261
  %v3542 = vpack.c.bf16 %v3270, %v3262
  %v3543 = vpack.c.bf16 %v3271, %v3263
  %v3544 = vpack.c.bf16 %v3272, %v3264
  %v3545 = vpack.c.bf16 %v3273, %v3265
  %v3546 = vpack.c.bf16 %v3282, %v3274
  %v3547 = vpack.c.bf16 %v3283, %v3275
  %v3548 = vpack.c.bf16 %v3284, %v3276
  %v3549 = vpack.c.bf16 %v3285, %v3277
  %v3550 = vpack.c.bf16 %v3286, %v3278
  %v3551 = vpack.c.bf16 %v3287, %v3279
  %v3552 = vpack.c.bf16 %v3288, %v3280
  %v3553 = vpack.c.bf16 %v3289, %v3281
  %v3554 = vpack.c.bf16 %v3298, %v3290
  %v3555 = vpack.c.bf16 %v3299, %v3291
  %v3556 = vpack.c.bf16 %v3300, %v3292
  %v3557 = vpack.c.bf16 %v3301, %v3293
  %v3558 = vpack.c.bf16 %v3302, %v3294
  %v3559 = vpack.c.bf16 %v3303, %v3295
  %v3560 = vpack.c.bf16 %v3304, %v3296
  %v3561 = vpack.c.bf16 %v3305, %v3297
  %v3562 = vld [vmem:[%s5] sm:$0xf]
  %v3563 = vld [vmem:[%s5 + $0x4] sm:$0xf]
  %v3564 = vld [vmem:[%s5 + $0x8] sm:$0xf]
  %v3565 = vld [vmem:[%s5 + $0xc] sm:$0xf]
  %v3566 = vld [vmem:[%s5 + $0x10] sm:$0xf]
  %v3567 = vld [vmem:[%s5 + $0x14] sm:$0xf]
  %v3568 = vld [vmem:[%s5 + $0x18] sm:$0xf]
  %v3569 = vld [vmem:[%s5 + $0x1c] sm:$0xf]
  %v3570 = vld [vmem:[%s5 + $0x20] sm:$0xf]
  %v3571 = vld [vmem:[%s5 + $0x24] sm:$0xf]
  %v3572 = vld [vmem:[%s5 + $0x28] sm:$0xf]
  %v3573 = vld [vmem:[%s5 + $0x2c] sm:$0xf]
  %v3574 = vld [vmem:[%s5 + $0x30] sm:$0xf]
  %v3575 = vld [vmem:[%s5 + $0x34] sm:$0xf]
  %v3576 = vld [vmem:[%s5 + $0x38] sm:$0xf]
  %v3577 = vld [vmem:[%s5 + $0x3c] sm:$0xf]
  %v3578 = vld [vmem:[%s5 + $0x40] sm:$0xf]
  %v3579 = vld [vmem:[%s5 + $0x44] sm:$0xf]
  %v3580 = vld [vmem:[%s5 + $0x48] sm:$0xf]
  %v3581 = vld [vmem:[%s5 + $0x4c] sm:$0xf]
  %v3582 = vld [vmem:[%s5 + $0x50] sm:$0xf]
  %v3583 = vld [vmem:[%s5 + $0x54] sm:$0xf]
  %v3584 = vld [vmem:[%s5 + $0x58] sm:$0xf]
  %v3585 = vld [vmem:[%s5 + $0x5c] sm:$0xf]
  %v3586 = vld [vmem:[%s5 + $0x60] sm:$0xf]
  %v3587 = vld [vmem:[%s5 + $0x64] sm:$0xf]
  %v3588 = vld [vmem:[%s5 + $0x68] sm:$0xf]
  %v3589 = vld [vmem:[%s5 + $0x6c] sm:$0xf]
  %v3590 = vld [vmem:[%s5 + $0x70] sm:$0xf]
  %v3591 = vld [vmem:[%s5 + $0x74] sm:$0xf]
  %v3592 = vld [vmem:[%s5 + $0x78] sm:$0xf]
  %v3593 = vld [vmem:[%s5 + $0x7c] sm:$0xf]
  %v3594 = vld [vmem:[%s5 + $0x80] sm:$0xf]
  %v3595 = vld [vmem:[%s5 + $0x84] sm:$0xf]
  %v3596 = vld [vmem:[%s5 + $0x88] sm:$0xf]
  %v3597 = vld [vmem:[%s5 + $0x8c] sm:$0xf]
  %v3598 = vld [vmem:[%s5 + $0x90] sm:$0xf]
  %v3599 = vld [vmem:[%s5 + $0x94] sm:$0xf]
  %v3600 = vld [vmem:[%s5 + $0x98] sm:$0xf]
  %v3601 = vld [vmem:[%s5 + $0x9c] sm:$0xf]
  %v3602 = vld [vmem:[%s5 + $0xa0] sm:$0xf]
  %v3603 = vld [vmem:[%s5 + $0xa4] sm:$0xf]
  %v3604 = vld [vmem:[%s5 + $0xa8] sm:$0xf]
  %v3605 = vld [vmem:[%s5 + $0xac] sm:$0xf]
  %v3606 = vld [vmem:[%s5 + $0xb0] sm:$0xf]
  %v3607 = vld [vmem:[%s5 + $0xb4] sm:$0xf]
  %v3608 = vld [vmem:[%s5 + $0xb8] sm:$0xf]
  %v3609 = vld [vmem:[%s5 + $0xbc] sm:$0xf]
  %v3610 = vld [vmem:[%s5 + $0xc0] sm:$0xf]
  %v3611 = vld [vmem:[%s5 + $0xc4] sm:$0xf]
  %v3612 = vld [vmem:[%s5 + $0xc8] sm:$0xf]
  %v3613 = vld [vmem:[%s5 + $0xcc] sm:$0xf]
  %v3614 = vld [vmem:[%s5 + $0xd0] sm:$0xf]
  %v3615 = vld [vmem:[%s5 + $0xd4] sm:$0xf]
  %v3616 = vld [vmem:[%s5 + $0xd8] sm:$0xf]
  %v3617 = vld [vmem:[%s5 + $0xdc] sm:$0xf]
  %v3618 = vld [vmem:[%s5 + $0xe0] sm:$0xf]
  %v3619 = vld [vmem:[%s5 + $0xe4] sm:$0xf]
  %v3620 = vld [vmem:[%s5 + $0xe8] sm:$0xf]
  %v3621 = vld [vmem:[%s5 + $0xec] sm:$0xf]
  %v3622 = vld [vmem:[%s5 + $0xf0] sm:$0xf]
  %v3623 = vld [vmem:[%s5 + $0xf4] sm:$0xf]
  %v3624 = vld [vmem:[%s5 + $0xf8] sm:$0xf]
  %v3625 = vld [vmem:[%s5 + $0xfc] sm:$0xf]
  %v3626 = vld [vmem:[%s5 + $0x100] sm:$0xf]
  %v3627 = vld [vmem:[%s5 + $0x104] sm:$0xf]
  %v3628 = vld [vmem:[%s5 + $0x108] sm:$0xf]
  %v3629 = vld [vmem:[%s5 + $0x10c] sm:$0xf]
  %v3630 = vld [vmem:[%s5 + $0x110] sm:$0xf]
  %v3631 = vld [vmem:[%s5 + $0x114] sm:$0xf]
  %v3632 = vld [vmem:[%s5 + $0x118] sm:$0xf]
  %v3633 = vld [vmem:[%s5 + $0x11c] sm:$0xf]
  %v3634 = vld [vmem:[%s5 + $0x120] sm:$0xf]
  %v3635 = vld [vmem:[%s5 + $0x124] sm:$0xf]
  %v3636 = vld [vmem:[%s5 + $0x128] sm:$0xf]
  %v3637 = vld [vmem:[%s5 + $0x12c] sm:$0xf]
  %v3638 = vld [vmem:[%s5 + $0x130] sm:$0xf]
  %v3639 = vld [vmem:[%s5 + $0x134] sm:$0xf]
  %v3640 = vld [vmem:[%s5 + $0x138] sm:$0xf]
  %v3641 = vld [vmem:[%s5 + $0x13c] sm:$0xf]
  %v3642 = vld [vmem:[%s5 + $0x140] sm:$0xf]
  %v3643 = vld [vmem:[%s5 + $0x144] sm:$0xf]
  %v3644 = vld [vmem:[%s5 + $0x148] sm:$0xf]
  %v3645 = vld [vmem:[%s5 + $0x14c] sm:$0xf]
  %v3646 = vld [vmem:[%s5 + $0x150] sm:$0xf]
  %v3647 = vld [vmem:[%s5 + $0x154] sm:$0xf]
  %v3648 = vld [vmem:[%s5 + $0x158] sm:$0xf]
  %v3649 = vld [vmem:[%s5 + $0x15c] sm:$0xf]
  %v3650 = vld [vmem:[%s5 + $0x160] sm:$0xf]
  %v3651 = vld [vmem:[%s5 + $0x164] sm:$0xf]
  %v3652 = vld [vmem:[%s5 + $0x168] sm:$0xf]
  %v3653 = vld [vmem:[%s5 + $0x16c] sm:$0xf]
  %v3654 = vld [vmem:[%s5 + $0x170] sm:$0xf]
  %v3655 = vld [vmem:[%s5 + $0x174] sm:$0xf]
  %v3656 = vld [vmem:[%s5 + $0x178] sm:$0xf]
  %v3657 = vld [vmem:[%s5 + $0x17c] sm:$0xf]
  %v3658 = vld [vmem:[%s5 + $0x180] sm:$0xf]
  %v3659 = vld [vmem:[%s5 + $0x184] sm:$0xf]
  %v3660 = vld [vmem:[%s5 + $0x188] sm:$0xf]
  %v3661 = vld [vmem:[%s5 + $0x18c] sm:$0xf]
  %v3662 = vld [vmem:[%s5 + $0x190] sm:$0xf]
  %v3663 = vld [vmem:[%s5 + $0x194] sm:$0xf]
  %v3664 = vld [vmem:[%s5 + $0x198] sm:$0xf]
  %v3665 = vld [vmem:[%s5 + $0x19c] sm:$0xf]
  %v3666 = vld [vmem:[%s5 + $0x1a0] sm:$0xf]
  %v3667 = vld [vmem:[%s5 + $0x1a4] sm:$0xf]
  %v3668 = vld [vmem:[%s5 + $0x1a8] sm:$0xf]
  %v3669 = vld [vmem:[%s5 + $0x1ac] sm:$0xf]
  %v3670 = vld [vmem:[%s5 + $0x1b0] sm:$0xf]
  %v3671 = vld [vmem:[%s5 + $0x1b4] sm:$0xf]
  %v3672 = vld [vmem:[%s5 + $0x1b8] sm:$0xf]
  %v3673 = vld [vmem:[%s5 + $0x1bc] sm:$0xf]
  %v3674 = vld [vmem:[%s5 + $0x1c0] sm:$0xf]
  %v3675 = vld [vmem:[%s5 + $0x1c4] sm:$0xf]
  %v3676 = vld [vmem:[%s5 + $0x1c8] sm:$0xf]
  %v3677 = vld [vmem:[%s5 + $0x1cc] sm:$0xf]
  %v3678 = vld [vmem:[%s5 + $0x1d0] sm:$0xf]
  %v3679 = vld [vmem:[%s5 + $0x1d4] sm:$0xf]
  %v3680 = vld [vmem:[%s5 + $0x1d8] sm:$0xf]
  %v3681 = vld [vmem:[%s5 + $0x1dc] sm:$0xf]
  %v3682 = vld [vmem:[%s5 + $0x1e0] sm:$0xf]
  %v3683 = vld [vmem:[%s5 + $0x1e4] sm:$0xf]
  %v3684 = vld [vmem:[%s5 + $0x1e8] sm:$0xf]
  %v3685 = vld [vmem:[%s5 + $0x1ec] sm:$0xf]
  %v3686 = vld [vmem:[%s5 + $0x1f0] sm:$0xf]
  %v3687 = vld [vmem:[%s5 + $0x1f4] sm:$0xf]
  %v3688 = vld [vmem:[%s5 + $0x1f8] sm:$0xf]
  %v3689 = vld [vmem:[%s5 + $0x1fc] sm:$0xf]
  %v3818 = vunpack.c.l.b16 %v3562
  %v3819 = vunpack.c.l.b16 %v3563
  %v3820 = vunpack.c.l.b16 %v3564
  %v3821 = vunpack.c.l.b16 %v3565
  %v3822 = vunpack.c.l.b16 %v3566
  %v3823 = vunpack.c.l.b16 %v3567
  %v3824 = vunpack.c.l.b16 %v3568
  %v3825 = vunpack.c.l.b16 %v3569
  %v3826 = vunpack.c.l.b16 %v3570
  %v3827 = vunpack.c.l.b16 %v3571
  %v3828 = vunpack.c.l.b16 %v3572
  %v3829 = vunpack.c.l.b16 %v3573
  %v3830 = vunpack.c.l.b16 %v3574
  %v3831 = vunpack.c.l.b16 %v3575
  %v3832 = vunpack.c.l.b16 %v3576
  %v3833 = vunpack.c.l.b16 %v3577
  %v3834 = vunpack.c.l.b16 %v3578
  %v3835 = vunpack.c.l.b16 %v3579
  %v3836 = vunpack.c.l.b16 %v3580
  %v3837 = vunpack.c.l.b16 %v3581
  %v3838 = vunpack.c.l.b16 %v3582
  %v3839 = vunpack.c.l.b16 %v3583
  %v3840 = vunpack.c.l.b16 %v3584
  %v3841 = vunpack.c.l.b16 %v3585
  %v3842 = vunpack.c.l.b16 %v3586
  %v3843 = vunpack.c.l.b16 %v3587
  %v3844 = vunpack.c.l.b16 %v3588
  %v3845 = vunpack.c.l.b16 %v3589
  %v3846 = vunpack.c.l.b16 %v3590
  %v3847 = vunpack.c.l.b16 %v3591
  %v3848 = vunpack.c.l.b16 %v3592
  %v3849 = vunpack.c.l.b16 %v3593
  %v3850 = vunpack.c.l.b16 %v3594
  %v3851 = vunpack.c.l.b16 %v3595
  %v3852 = vunpack.c.l.b16 %v3596
  %v3853 = vunpack.c.l.b16 %v3597
  %v3854 = vunpack.c.l.b16 %v3598
  %v3855 = vunpack.c.l.b16 %v3599
  %v3856 = vunpack.c.l.b16 %v3600
  %v3857 = vunpack.c.l.b16 %v3601
  %v3858 = vunpack.c.l.b16 %v3602
  %v3859 = vunpack.c.l.b16 %v3603
  %v3860 = vunpack.c.l.b16 %v3604
  %v3861 = vunpack.c.l.b16 %v3605
  %v3862 = vunpack.c.l.b16 %v3606
  %v3863 = vunpack.c.l.b16 %v3607
  %v3864 = vunpack.c.l.b16 %v3608
  %v3865 = vunpack.c.l.b16 %v3609
  %v3866 = vunpack.c.l.b16 %v3610
  %v3867 = vunpack.c.l.b16 %v3611
  %v3868 = vunpack.c.l.b16 %v3612
  %v3869 = vunpack.c.l.b16 %v3613
  %v3870 = vunpack.c.l.b16 %v3614
  %v3871 = vunpack.c.l.b16 %v3615
  %v3872 = vunpack.c.l.b16 %v3616
  %v3873 = vunpack.c.l.b16 %v3617
  %v3874 = vunpack.c.l.b16 %v3618
  %v3875 = vunpack.c.l.b16 %v3619
  %v3876 = vunpack.c.l.b16 %v3620
  %v3877 = vunpack.c.l.b16 %v3621
  %v3878 = vunpack.c.l.b16 %v3622
  %v3879 = vunpack.c.l.b16 %v3623
  %v3880 = vunpack.c.l.b16 %v3624
  %v3881 = vunpack.c.l.b16 %v3625
  %v3882 = vunpack.c.l.b16 %v3626
  %v3883 = vunpack.c.l.b16 %v3627
  %v3884 = vunpack.c.l.b16 %v3628
  %v3885 = vunpack.c.l.b16 %v3629
  %v3886 = vunpack.c.l.b16 %v3630
  %v3887 = vunpack.c.l.b16 %v3631
  %v3888 = vunpack.c.l.b16 %v3632
  %v3889 = vunpack.c.l.b16 %v3633
  %v3890 = vunpack.c.l.b16 %v3634
  %v3891 = vunpack.c.l.b16 %v3635
  %v3892 = vunpack.c.l.b16 %v3636
  %v3893 = vunpack.c.l.b16 %v3637
  %v3894 = vunpack.c.l.b16 %v3638
  %v3895 = vunpack.c.l.b16 %v3639
  %v3896 = vunpack.c.l.b16 %v3640
  %v3897 = vunpack.c.l.b16 %v3641
  %v3898 = vunpack.c.l.b16 %v3642
  %v3899 = vunpack.c.l.b16 %v3643
  %v3900 = vunpack.c.l.b16 %v3644
  %v3901 = vunpack.c.l.b16 %v3645
  %v3902 = vunpack.c.l.b16 %v3646
  %v3903 = vunpack.c.l.b16 %v3647
  %v3904 = vunpack.c.l.b16 %v3648
  %v3905 = vunpack.c.l.b16 %v3649
  %v3906 = vunpack.c.l.b16 %v3650
  %v3907 = vunpack.c.l.b16 %v3651
  %v3908 = vunpack.c.l.b16 %v3652
  %v3909 = vunpack.c.l.b16 %v3653
  %v3910 = vunpack.c.l.b16 %v3654
  %v3911 = vunpack.c.l.b16 %v3655
  %v3912 = vunpack.c.l.b16 %v3656
  %v3913 = vunpack.c.l.b16 %v3657
  %v3914 = vunpack.c.l.b16 %v3658
  %v3915 = vunpack.c.l.b16 %v3659
  %v3916 = vunpack.c.l.b16 %v3660
  %v3917 = vunpack.c.l.b16 %v3661
  %v3918 = vunpack.c.l.b16 %v3662
  %v3919 = vunpack.c.l.b16 %v3663
  %v3920 = vunpack.c.l.b16 %v3664
  %v3921 = vunpack.c.l.b16 %v3665
  %v3922 = vunpack.c.l.b16 %v3666
  %v3923 = vunpack.c.l.b16 %v3667
  %v3924 = vunpack.c.l.b16 %v3668
  %v3925 = vunpack.c.l.b16 %v3669
  %v3926 = vunpack.c.l.b16 %v3670
  %v3927 = vunpack.c.l.b16 %v3671
  %v3928 = vunpack.c.l.b16 %v3672
  %v3929 = vunpack.c.l.b16 %v3673
  %v3930 = vunpack.c.l.b16 %v3674
  %v3931 = vunpack.c.l.b16 %v3675
  %v3932 = vunpack.c.l.b16 %v3676
  %v3933 = vunpack.c.l.b16 %v3677
  %v3934 = vunpack.c.l.b16 %v3678
  %v3935 = vunpack.c.l.b16 %v3679
  %v3936 = vunpack.c.l.b16 %v3680
  %v3937 = vunpack.c.l.b16 %v3681
  %v3938 = vunpack.c.l.b16 %v3682
  %v3939 = vunpack.c.l.b16 %v3683
  %v3940 = vunpack.c.l.b16 %v3684
  %v3941 = vunpack.c.l.b16 %v3685
  %v3942 = vunpack.c.l.b16 %v3686
  %v3943 = vunpack.c.l.b16 %v3687
  %v3944 = vunpack.c.l.b16 %v3688
  %v3945 = vunpack.c.l.b16 %v3689
  %v3946 = vpack.c.b16 %v3819, %v3818
  %v3947 = vpack.c.b16 %v3821, %v3820
  %v3948 = vpack.c.b16 %v3823, %v3822
  %v3949 = vpack.c.b16 %v3825, %v3824
  %v3950 = vpack.c.b16 %v3827, %v3826
  %v3951 = vpack.c.b16 %v3829, %v3828
  %v3952 = vpack.c.b16 %v3831, %v3830
  %v3953 = vpack.c.b16 %v3833, %v3832
  %v3954 = vpack.c.b16 %v3835, %v3834
  %v3955 = vpack.c.b16 %v3837, %v3836
  %v3956 = vpack.c.b16 %v3839, %v3838
  %v3957 = vpack.c.b16 %v3841, %v3840
  %v3958 = vpack.c.b16 %v3843, %v3842
  %v3959 = vpack.c.b16 %v3845, %v3844
  %v3960 = vpack.c.b16 %v3847, %v3846
  %v3961 = vpack.c.b16 %v3849, %v3848
  %v3962 = vpack.c.b16 %v3851, %v3850
  %v3963 = vpack.c.b16 %v3853, %v3852
  %v3964 = vpack.c.b16 %v3855, %v3854
  %v3965 = vpack.c.b16 %v3857, %v3856
  %v3966 = vpack.c.b16 %v3859, %v3858
  %v3967 = vpack.c.b16 %v3861, %v3860
  %v3968 = vpack.c.b16 %v3863, %v3862
  %v3969 = vpack.c.b16 %v3865, %v3864
  %v3970 = vpack.c.b16 %v3867, %v3866
  %v3971 = vpack.c.b16 %v3869, %v3868
  %v3972 = vpack.c.b16 %v3871, %v3870
  %v3973 = vpack.c.b16 %v3873, %v3872
  %v3974 = vpack.c.b16 %v3875, %v3874
  %v3975 = vpack.c.b16 %v3877, %v3876
  %v3976 = vpack.c.b16 %v3879, %v3878
  %v3977 = vpack.c.b16 %v3881, %v3880
  %v3978 = vpack.c.b16 %v3883, %v3882
  %v3979 = vpack.c.b16 %v3885, %v3884
  %v3980 = vpack.c.b16 %v3887, %v3886
  %v3981 = vpack.c.b16 %v3889, %v3888
  %v3982 = vpack.c.b16 %v3891, %v3890
  %v3983 = vpack.c.b16 %v3893, %v3892
  %v3984 = vpack.c.b16 %v3895, %v3894
  %v3985 = vpack.c.b16 %v3897, %v3896
  %v3986 = vpack.c.b16 %v3899, %v3898
  %v3987 = vpack.c.b16 %v3901, %v3900
  %v3988 = vpack.c.b16 %v3903, %v3902
  %v3989 = vpack.c.b16 %v3905, %v3904
  %v3990 = vpack.c.b16 %v3907, %v3906
  %v3991 = vpack.c.b16 %v3909, %v3908
  %v3992 = vpack.c.b16 %v3911, %v3910
  %v3993 = vpack.c.b16 %v3913, %v3912
  %v3994 = vpack.c.b16 %v3915, %v3914
  %v3995 = vpack.c.b16 %v3917, %v3916
  %v3996 = vpack.c.b16 %v3919, %v3918
  %v3997 = vpack.c.b16 %v3921, %v3920
  %v3998 = vpack.c.b16 %v3923, %v3922
  %v3999 = vpack.c.b16 %v3925, %v3924
  %v4000 = vpack.c.b16 %v3927, %v3926
  %v4001 = vpack.c.b16 %v3929, %v3928
  %v4002 = vpack.c.b16 %v3931, %v3930
  %v4003 = vpack.c.b16 %v3933, %v3932
  %v4004 = vpack.c.b16 %v3935, %v3934
  %v4005 = vpack.c.b16 %v3937, %v3936
  %v4006 = vpack.c.b16 %v3939, %v3938
  %v4007 = vpack.c.b16 %v3941, %v3940
  %v4008 = vpack.c.b16 %v3943, %v3942
  %v4009 = vpack.c.b16 %v3945, %v3944
  %4074 = vmatpush.bf16.msra.mxu0 %v3953
  %4075 = vmatpush.bf16.msra.mxu0 %v3952
  %4076 = vmatpush.bf16.msra.mxu0 %v3951
  %4077 = vmatpush.bf16.msra.mxu0 %v3950
  %4078 = vmatpush.bf16.msra.mxu0 %v3949
  %4079 = vmatpush.bf16.msra.mxu0 %v3948
  %4080 = vmatpush.bf16.msra.mxu0 %v3947
  %4081 = vmatpush.bf16.msra.mxu0 %v3946
  %4082 = vmatmul.bf16.gmra.mxu0 %v3306
  %v4083 = vpop.f32.mrf.mxu0
  %v4084 = vadd.f32 0.0, %v4083
  %v4085 = vpop.f32.mrf.mxu0
  %v4086 = vadd.f32 0.0, %v4085
  %4087 = vmatmul.bf16.gmra.mxu0 %v3314
  %v4088 = vpop.f32.mrf.mxu0
  %v4089 = vadd.f32 0.0, %v4088
  %v4090 = vpop.f32.mrf.mxu0
  %v4091 = vadd.f32 0.0, %v4090
  %4092 = vmatmul.bf16.gmra.mxu0 %v3322
  %v4093 = vpop.f32.mrf.mxu0
  %v4094 = vadd.f32 0.0, %v4093
  %v4095 = vpop.f32.mrf.mxu0
  %v4096 = vadd.f32 0.0, %v4095
  %4097 = vmatmul.bf16.gmra.mxu0 %v3330
  %v4098 = vpop.f32.mrf.mxu0
  %v4099 = vadd.f32 0.0, %v4098
  %v4100 = vpop.f32.mrf.mxu0
  %v4101 = vadd.f32 0.0, %v4100
  %4102 = vmatmul.bf16.gmra.mxu0 %v3338
  %v4103 = vpop.f32.mrf.mxu0
  %v4104 = vadd.f32 0.0, %v4103
  %v4105 = vpop.f32.mrf.mxu0
  %v4106 = vadd.f32 0.0, %v4105
  %4107 = vmatmul.bf16.gmra.mxu0 %v3346
  %v4108 = vpop.f32.mrf.mxu0
  %v4109 = vadd.f32 0.0, %v4108
  %v4110 = vpop.f32.mrf.mxu0
  %v4111 = vadd.f32 0.0, %v4110
  %4112 = vmatmul.bf16.gmra.mxu0 %v3354
  %v4113 = vpop.f32.mrf.mxu0
  %v4114 = vadd.f32 0.0, %v4113
  %v4115 = vpop.f32.mrf.mxu0
  %v4116 = vadd.f32 0.0, %v4115
  %4117 = vmatmul.bf16.gmra.mxu0 %v3362
  %v4118 = vpop.f32.mrf.mxu0
  %v4119 = vadd.f32 0.0, %v4118
  %v4120 = vpop.f32.mrf.mxu0
  %v4121 = vadd.f32 0.0, %v4120
  %4122 = vmatmul.bf16.gmra.mxu0 %v3370
  %v4123 = vpop.f32.mrf.mxu0
  %v4124 = vadd.f32 0.0, %v4123
  %v4125 = vpop.f32.mrf.mxu0
  %v4126 = vadd.f32 0.0, %v4125
  %4127 = vmatmul.bf16.gmra.mxu0 %v3378
  %v4128 = vpop.f32.mrf.mxu0
  %v4129 = vadd.f32 0.0, %v4128
  %v4130 = vpop.f32.mrf.mxu0
  %v4131 = vadd.f32 0.0, %v4130
  %4132 = vmatmul.bf16.gmra.mxu0 %v3386
  %v4133 = vpop.f32.mrf.mxu0
  %v4134 = vadd.f32 0.0, %v4133
  %v4135 = vpop.f32.mrf.mxu0
  %v4136 = vadd.f32 0.0, %v4135
  %4137 = vmatmul.bf16.gmra.mxu0 %v3394
  %v4138 = vpop.f32.mrf.mxu0
  %v4139 = vadd.f32 0.0, %v4138
  %v4140 = vpop.f32.mrf.mxu0
  %v4141 = vadd.f32 0.0, %v4140
  %4142 = vmatmul.bf16.gmra.mxu0 %v3402
  %v4143 = vpop.f32.mrf.mxu0
  %v4144 = vadd.f32 0.0, %v4143
  %v4145 = vpop.f32.mrf.mxu0
  %v4146 = vadd.f32 0.0, %v4145
  %4147 = vmatmul.bf16.gmra.mxu0 %v3410
  %v4148 = vpop.f32.mrf.mxu0
  %v4149 = vadd.f32 0.0, %v4148
  %v4150 = vpop.f32.mrf.mxu0
  %v4151 = vadd.f32 0.0, %v4150
  %4152 = vmatmul.bf16.gmra.mxu0 %v3418
  %v4153 = vpop.f32.mrf.mxu0
  %v4154 = vadd.f32 0.0, %v4153
  %v4155 = vpop.f32.mrf.mxu0
  %v4156 = vadd.f32 0.0, %v4155
  %4157 = vmatmul.bf16.gmra.mxu0 %v3426
  %v4158 = vpop.f32.mrf.mxu0
  %v4159 = vadd.f32 0.0, %v4158
  %v4160 = vpop.f32.mrf.mxu0
  %v4161 = vadd.f32 0.0, %v4160
  %4162 = vmatmul.bf16.gmra.mxu0 %v3434
  %v4163 = vpop.f32.mrf.mxu0
  %v4164 = vadd.f32 0.0, %v4163
  %v4165 = vpop.f32.mrf.mxu0
  %v4166 = vadd.f32 0.0, %v4165
  %4167 = vmatmul.bf16.gmra.mxu0 %v3442
  %v4168 = vpop.f32.mrf.mxu0
  %v4169 = vadd.f32 0.0, %v4168
  %v4170 = vpop.f32.mrf.mxu0
  %v4171 = vadd.f32 0.0, %v4170
  %4172 = vmatmul.bf16.gmra.mxu0 %v3450
  %v4173 = vpop.f32.mrf.mxu0
  %v4174 = vadd.f32 0.0, %v4173
  %v4175 = vpop.f32.mrf.mxu0
  %v4176 = vadd.f32 0.0, %v4175
  %4177 = vmatmul.bf16.gmra.mxu0 %v3458
  %v4178 = vpop.f32.mrf.mxu0
  %v4179 = vadd.f32 0.0, %v4178
  %v4180 = vpop.f32.mrf.mxu0
  %v4181 = vadd.f32 0.0, %v4180
  %4182 = vmatmul.bf16.gmra.mxu0 %v3466
  %v4183 = vpop.f32.mrf.mxu0
  %v4184 = vadd.f32 0.0, %v4183
  %v4185 = vpop.f32.mrf.mxu0
  %v4186 = vadd.f32 0.0, %v4185
  %4187 = vmatmul.bf16.gmra.mxu0 %v3474
  %v4188 = vpop.f32.mrf.mxu0
  %v4189 = vadd.f32 0.0, %v4188
  %v4190 = vpop.f32.mrf.mxu0
  %v4191 = vadd.f32 0.0, %v4190
  %4192 = vmatmul.bf16.gmra.mxu0 %v3482
  %v4193 = vpop.f32.mrf.mxu0
  %v4194 = vadd.f32 0.0, %v4193
  %v4195 = vpop.f32.mrf.mxu0
  %v4196 = vadd.f32 0.0, %v4195
  %4197 = vmatmul.bf16.gmra.mxu0 %v3490
  %v4198 = vpop.f32.mrf.mxu0
  %v4199 = vadd.f32 0.0, %v4198
  %v4200 = vpop.f32.mrf.mxu0
  %v4201 = vadd.f32 0.0, %v4200
  %4202 = vmatmul.bf16.gmra.mxu0 %v3498
  %v4203 = vpop.f32.mrf.mxu0
  %v4204 = vadd.f32 0.0, %v4203
  %v4205 = vpop.f32.mrf.mxu0
  %v4206 = vadd.f32 0.0, %v4205
  %4207 = vmatmul.bf16.gmra.mxu0 %v3506
  %v4208 = vpop.f32.mrf.mxu0
  %v4209 = vadd.f32 0.0, %v4208
  %v4210 = vpop.f32.mrf.mxu0
  %v4211 = vadd.f32 0.0, %v4210
  %4212 = vmatmul.bf16.gmra.mxu0 %v3514
  %v4213 = vpop.f32.mrf.mxu0
  %v4214 = vadd.f32 0.0, %v4213
  %v4215 = vpop.f32.mrf.mxu0
  %v4216 = vadd.f32 0.0, %v4215
  %4217 = vmatmul.bf16.gmra.mxu0 %v3522
  %v4218 = vpop.f32.mrf.mxu0
  %v4219 = vadd.f32 0.0, %v4218
  %v4220 = vpop.f32.mrf.mxu0
  %v4221 = vadd.f32 0.0, %v4220
  %4222 = vmatmul.bf16.gmra.mxu0 %v3530
  %v4223 = vpop.f32.mrf.mxu0
  %v4224 = vadd.f32 0.0, %v4223
  %v4225 = vpop.f32.mrf.mxu0
  %v4226 = vadd.f32 0.0, %v4225
  %4227 = vmatmul.bf16.gmra.mxu0 %v3538
  %v4228 = vpop.f32.mrf.mxu0
  %v4229 = vadd.f32 0.0, %v4228
  %v4230 = vpop.f32.mrf.mxu0
  %v4231 = vadd.f32 0.0, %v4230
  %4232 = vmatmul.bf16.gmra.mxu0 %v3546
  %v4233 = vpop.f32.mrf.mxu0
  %v4234 = vadd.f32 0.0, %v4233
  %v4235 = vpop.f32.mrf.mxu0
  %v4236 = vadd.f32 0.0, %v4235
  %4237 = vmatmul.bf16.gmra.mxu0 %v3554
  %v4238 = vpop.f32.mrf.mxu0
  %v4239 = vadd.f32 0.0, %v4238
  %v4240 = vpop.f32.mrf.mxu0
  %v4241 = vadd.f32 0.0, %v4240
  %4242 = vdwg.mxu0
  %4243 = vmatpush.bf16.msra.mxu0 %v3961
  %4244 = vmatpush.bf16.msra.mxu0 %v3960
  %4245 = vmatpush.bf16.msra.mxu0 %v3959
  %4246 = vmatpush.bf16.msra.mxu0 %v3958
  %4247 = vmatpush.bf16.msra.mxu0 %v3957
  %4248 = vmatpush.bf16.msra.mxu0 %v3956
  %4249 = vmatpush.bf16.msra.mxu0 %v3955
  %4250 = vmatpush.bf16.msra.mxu0 %v3954
  %4251 = vmatmul.bf16.gmra.mxu0 %v3307
  %v4252 = vpop.f32.mrf.mxu0
  %v4253 = vadd.f32 %v4084, %v4252
  %v4254 = vpop.f32.mrf.mxu0
  %v4255 = vadd.f32 %v4086, %v4254
  %4256 = vmatmul.bf16.gmra.mxu0 %v3315
  %v4257 = vpop.f32.mrf.mxu0
  %v4258 = vadd.f32 %v4089, %v4257
  %v4259 = vpop.f32.mrf.mxu0
  %v4260 = vadd.f32 %v4091, %v4259
  %4261 = vmatmul.bf16.gmra.mxu0 %v3323
  %v4262 = vpop.f32.mrf.mxu0
  %v4263 = vadd.f32 %v4094, %v4262
  %v4264 = vpop.f32.mrf.mxu0
  %v4265 = vadd.f32 %v4096, %v4264
  %4266 = vmatmul.bf16.gmra.mxu0 %v3331
  %v4267 = vpop.f32.mrf.mxu0
  %v4268 = vadd.f32 %v4099, %v4267
  %v4269 = vpop.f32.mrf.mxu0
  %v4270 = vadd.f32 %v4101, %v4269
  %4271 = vmatmul.bf16.gmra.mxu0 %v3339
  %v4272 = vpop.f32.mrf.mxu0
  %v4273 = vadd.f32 %v4104, %v4272
  %v4274 = vpop.f32.mrf.mxu0
  %v4275 = vadd.f32 %v4106, %v4274
  %4276 = vmatmul.bf16.gmra.mxu0 %v3347
  %v4277 = vpop.f32.mrf.mxu0
  %v4278 = vadd.f32 %v4109, %v4277
  %v4279 = vpop.f32.mrf.mxu0
  %v4280 = vadd.f32 %v4111, %v4279
  %4281 = vmatmul.bf16.gmra.mxu0 %v3355
  %v4282 = vpop.f32.mrf.mxu0
  %v4283 = vadd.f32 %v4114, %v4282
  %v4284 = vpop.f32.mrf.mxu0
  %v4285 = vadd.f32 %v4116, %v4284
  %4286 = vmatmul.bf16.gmra.mxu0 %v3363
  %v4287 = vpop.f32.mrf.mxu0
  %v4288 = vadd.f32 %v4119, %v4287
  %v4289 = vpop.f32.mrf.mxu0
  %v4290 = vadd.f32 %v4121, %v4289
  %4291 = vmatmul.bf16.gmra.mxu0 %v3371
  %v4292 = vpop.f32.mrf.mxu0
  %v4293 = vadd.f32 %v4124, %v4292
  %v4294 = vpop.f32.mrf.mxu0
  %v4295 = vadd.f32 %v4126, %v4294
  %4296 = vmatmul.bf16.gmra.mxu0 %v3379
  %v4297 = vpop.f32.mrf.mxu0
  %v4298 = vadd.f32 %v4129, %v4297
  %v4299 = vpop.f32.mrf.mxu0
  %v4300 = vadd.f32 %v4131, %v4299
  %4301 = vmatmul.bf16.gmra.mxu0 %v3387
  %v4302 = vpop.f32.mrf.mxu0
  %v4303 = vadd.f32 %v4134, %v4302
  %v4304 = vpop.f32.mrf.mxu0
  %v4305 = vadd.f32 %v4136, %v4304
  %4306 = vmatmul.bf16.gmra.mxu0 %v3395
  %v4307 = vpop.f32.mrf.mxu0
  %v4308 = vadd.f32 %v4139, %v4307
  %v4309 = vpop.f32.mrf.mxu0
  %v4310 = vadd.f32 %v4141, %v4309
  %4311 = vmatmul.bf16.gmra.mxu0 %v3403
  %v4312 = vpop.f32.mrf.mxu0
  %v4313 = vadd.f32 %v4144, %v4312
  %v4314 = vpop.f32.mrf.mxu0
  %v4315 = vadd.f32 %v4146, %v4314
  %4316 = vmatmul.bf16.gmra.mxu0 %v3411
  %v4317 = vpop.f32.mrf.mxu0
  %v4318 = vadd.f32 %v4149, %v4317
  %v4319 = vpop.f32.mrf.mxu0
  %v4320 = vadd.f32 %v4151, %v4319
  %4321 = vmatmul.bf16.gmra.mxu0 %v3419
  %v4322 = vpop.f32.mrf.mxu0
  %v4323 = vadd.f32 %v4154, %v4322
  %v4324 = vpop.f32.mrf.mxu0
  %v4325 = vadd.f32 %v4156, %v4324
  %4326 = vmatmul.bf16.gmra.mxu0 %v3427
  %v4327 = vpop.f32.mrf.mxu0
  %v4328 = vadd.f32 %v4159, %v4327
  %v4329 = vpop.f32.mrf.mxu0
  %v4330 = vadd.f32 %v4161, %v4329
  %4331 = vmatmul.bf16.gmra.mxu0 %v3435
  %v4332 = vpop.f32.mrf.mxu0
  %v4333 = vadd.f32 %v4164, %v4332
  %v4334 = vpop.f32.mrf.mxu0
  %v4335 = vadd.f32 %v4166, %v4334
  %4336 = vmatmul.bf16.gmra.mxu0 %v3443
  %v4337 = vpop.f32.mrf.mxu0
  %v4338 = vadd.f32 %v4169, %v4337
  %v4339 = vpop.f32.mrf.mxu0
  %v4340 = vadd.f32 %v4171, %v4339
  %4341 = vmatmul.bf16.gmra.mxu0 %v3451
  %v4342 = vpop.f32.mrf.mxu0
  %v4343 = vadd.f32 %v4174, %v4342
  %v4344 = vpop.f32.mrf.mxu0
  %v4345 = vadd.f32 %v4176, %v4344
  %4346 = vmatmul.bf16.gmra.mxu0 %v3459
  %v4347 = vpop.f32.mrf.mxu0
  %v4348 = vadd.f32 %v4179, %v4347
  %v4349 = vpop.f32.mrf.mxu0
  %v4350 = vadd.f32 %v4181, %v4349
  %4351 = vmatmul.bf16.gmra.mxu0 %v3467
  %v4352 = vpop.f32.mrf.mxu0
  %v4353 = vadd.f32 %v4184, %v4352
  %v4354 = vpop.f32.mrf.mxu0
  %v4355 = vadd.f32 %v4186, %v4354
  %4356 = vmatmul.bf16.gmra.mxu0 %v3475
  %v4357 = vpop.f32.mrf.mxu0
  %v4358 = vadd.f32 %v4189, %v4357
  %v4359 = vpop.f32.mrf.mxu0
  %v4360 = vadd.f32 %v4191, %v4359
  %4361 = vmatmul.bf16.gmra.mxu0 %v3483
  %v4362 = vpop.f32.mrf.mxu0
  %v4363 = vadd.f32 %v4194, %v4362
  %v4364 = vpop.f32.mrf.mxu0
  %v4365 = vadd.f32 %v4196, %v4364
  %4366 = vmatmul.bf16.gmra.mxu0 %v3491
  %v4367 = vpop.f32.mrf.mxu0
  %v4368 = vadd.f32 %v4199, %v4367
  %v4369 = vpop.f32.mrf.mxu0
  %v4370 = vadd.f32 %v4201, %v4369
  %4371 = vmatmul.bf16.gmra.mxu0 %v3499
  %v4372 = vpop.f32.mrf.mxu0
  %v4373 = vadd.f32 %v4204, %v4372
  %v4374 = vpop.f32.mrf.mxu0
  %v4375 = vadd.f32 %v4206, %v4374
  %4376 = vmatmul.bf16.gmra.mxu0 %v3507
  %v4377 = vpop.f32.mrf.mxu0
  %v4378 = vadd.f32 %v4209, %v4377
  %v4379 = vpop.f32.mrf.mxu0
  %v4380 = vadd.f32 %v4211, %v4379
  %4381 = vmatmul.bf16.gmra.mxu0 %v3515
  %v4382 = vpop.f32.mrf.mxu0
  %v4383 = vadd.f32 %v4214, %v4382
  %v4384 = vpop.f32.mrf.mxu0
  %v4385 = vadd.f32 %v4216, %v4384
  %4386 = vmatmul.bf16.gmra.mxu0 %v3523
  %v4387 = vpop.f32.mrf.mxu0
  %v4388 = vadd.f32 %v4219, %v4387
  %v4389 = vpop.f32.mrf.mxu0
  %v4390 = vadd.f32 %v4221, %v4389
  %4391 = vmatmul.bf16.gmra.mxu0 %v3531
  %v4392 = vpop.f32.mrf.mxu0
  %v4393 = vadd.f32 %v4224, %v4392
  %v4394 = vpop.f32.mrf.mxu0
  %v4395 = vadd.f32 %v4226, %v4394
  %4396 = vmatmul.bf16.gmra.mxu0 %v3539
  %v4397 = vpop.f32.mrf.mxu0
  %v4398 = vadd.f32 %v4229, %v4397
  %v4399 = vpop.f32.mrf.mxu0
  %v4400 = vadd.f32 %v4231, %v4399
  %4401 = vmatmul.bf16.gmra.mxu0 %v3547
  %v4402 = vpop.f32.mrf.mxu0
  %v4403 = vadd.f32 %v4234, %v4402
  %v4404 = vpop.f32.mrf.mxu0
  %v4405 = vadd.f32 %v4236, %v4404
  %4406 = vmatmul.bf16.gmra.mxu0 %v3555
  %v4407 = vpop.f32.mrf.mxu0
  %v4408 = vadd.f32 %v4239, %v4407
  %v4409 = vpop.f32.mrf.mxu0
  %v4410 = vadd.f32 %v4241, %v4409
  %4411 = vdwg.mxu0
  %4412 = vmatpush.bf16.msra.mxu0 %v3969
  %4413 = vmatpush.bf16.msra.mxu0 %v3968
  %4414 = vmatpush.bf16.msra.mxu0 %v3967
  %4415 = vmatpush.bf16.msra.mxu0 %v3966
  %4416 = vmatpush.bf16.msra.mxu0 %v3965
  %4417 = vmatpush.bf16.msra.mxu0 %v3964
  %4418 = vmatpush.bf16.msra.mxu0 %v3963
  %4419 = vmatpush.bf16.msra.mxu0 %v3962
  %4420 = vmatmul.bf16.gmra.mxu0 %v3308
  %v4421 = vpop.f32.mrf.mxu0
  %v4422 = vadd.f32 %v4253, %v4421
  %v4423 = vpop.f32.mrf.mxu0
  %v4424 = vadd.f32 %v4255, %v4423
  %4425 = vmatmul.bf16.gmra.mxu0 %v3316
  %v4426 = vpop.f32.mrf.mxu0
  %v4427 = vadd.f32 %v4258, %v4426
  %v4428 = vpop.f32.mrf.mxu0
  %v4429 = vadd.f32 %v4260, %v4428
  %4430 = vmatmul.bf16.gmra.mxu0 %v3324
  %v4431 = vpop.f32.mrf.mxu0
  %v4432 = vadd.f32 %v4263, %v4431
  %v4433 = vpop.f32.mrf.mxu0
  %v4434 = vadd.f32 %v4265, %v4433
  %4435 = vmatmul.bf16.gmra.mxu0 %v3332
  %v4436 = vpop.f32.mrf.mxu0
  %v4437 = vadd.f32 %v4268, %v4436
  %v4438 = vpop.f32.mrf.mxu0
  %v4439 = vadd.f32 %v4270, %v4438
  %4440 = vmatmul.bf16.gmra.mxu0 %v3340
  %v4441 = vpop.f32.mrf.mxu0
  %v4442 = vadd.f32 %v4273, %v4441
  %v4443 = vpop.f32.mrf.mxu0
  %v4444 = vadd.f32 %v4275, %v4443
  %4445 = vmatmul.bf16.gmra.mxu0 %v3348
  %v4446 = vpop.f32.mrf.mxu0
  %v4447 = vadd.f32 %v4278, %v4446
  %v4448 = vpop.f32.mrf.mxu0
  %v4449 = vadd.f32 %v4280, %v4448
  %4450 = vmatmul.bf16.gmra.mxu0 %v3356
  %v4451 = vpop.f32.mrf.mxu0
  %v4452 = vadd.f32 %v4283, %v4451
  %v4453 = vpop.f32.mrf.mxu0
  %v4454 = vadd.f32 %v4285, %v4453
  %4455 = vmatmul.bf16.gmra.mxu0 %v3364
  %v4456 = vpop.f32.mrf.mxu0
  %v4457 = vadd.f32 %v4288, %v4456
  %v4458 = vpop.f32.mrf.mxu0
  %v4459 = vadd.f32 %v4290, %v4458
  %4460 = vmatmul.bf16.gmra.mxu0 %v3372
  %v4461 = vpop.f32.mrf.mxu0
  %v4462 = vadd.f32 %v4293, %v4461
  %v4463 = vpop.f32.mrf.mxu0
  %v4464 = vadd.f32 %v4295, %v4463
  %4465 = vmatmul.bf16.gmra.mxu0 %v3380
  %v4466 = vpop.f32.mrf.mxu0
  %v4467 = vadd.f32 %v4298, %v4466
  %v4468 = vpop.f32.mrf.mxu0
  %v4469 = vadd.f32 %v4300, %v4468
  %4470 = vmatmul.bf16.gmra.mxu0 %v3388
  %v4471 = vpop.f32.mrf.mxu0
  %v4472 = vadd.f32 %v4303, %v4471
  %v4473 = vpop.f32.mrf.mxu0
  %v4474 = vadd.f32 %v4305, %v4473
  %4475 = vmatmul.bf16.gmra.mxu0 %v3396
  %v4476 = vpop.f32.mrf.mxu0
  %v4477 = vadd.f32 %v4308, %v4476
  %v4478 = vpop.f32.mrf.mxu0
  %v4479 = vadd.f32 %v4310, %v4478
  %4480 = vmatmul.bf16.gmra.mxu0 %v3404
  %v4481 = vpop.f32.mrf.mxu0
  %v4482 = vadd.f32 %v4313, %v4481
  %v4483 = vpop.f32.mrf.mxu0
  %v4484 = vadd.f32 %v4315, %v4483
  %4485 = vmatmul.bf16.gmra.mxu0 %v3412
  %v4486 = vpop.f32.mrf.mxu0
  %v4487 = vadd.f32 %v4318, %v4486
  %v4488 = vpop.f32.mrf.mxu0
  %v4489 = vadd.f32 %v4320, %v4488
  %4490 = vmatmul.bf16.gmra.mxu0 %v3420
  %v4491 = vpop.f32.mrf.mxu0
  %v4492 = vadd.f32 %v4323, %v4491
  %v4493 = vpop.f32.mrf.mxu0
  %v4494 = vadd.f32 %v4325, %v4493
  %4495 = vmatmul.bf16.gmra.mxu0 %v3428
  %v4496 = vpop.f32.mrf.mxu0
  %v4497 = vadd.f32 %v4328, %v4496
  %v4498 = vpop.f32.mrf.mxu0
  %v4499 = vadd.f32 %v4330, %v4498
  %4500 = vmatmul.bf16.gmra.mxu0 %v3436
  %v4501 = vpop.f32.mrf.mxu0
  %v4502 = vadd.f32 %v4333, %v4501
  %v4503 = vpop.f32.mrf.mxu0
  %v4504 = vadd.f32 %v4335, %v4503
  %4505 = vmatmul.bf16.gmra.mxu0 %v3444
  %v4506 = vpop.f32.mrf.mxu0
  %v4507 = vadd.f32 %v4338, %v4506
  %v4508 = vpop.f32.mrf.mxu0
  %v4509 = vadd.f32 %v4340, %v4508
  %4510 = vmatmul.bf16.gmra.mxu0 %v3452
  %v4511 = vpop.f32.mrf.mxu0
  %v4512 = vadd.f32 %v4343, %v4511
  %v4513 = vpop.f32.mrf.mxu0
  %v4514 = vadd.f32 %v4345, %v4513
  %4515 = vmatmul.bf16.gmra.mxu0 %v3460
  %v4516 = vpop.f32.mrf.mxu0
  %v4517 = vadd.f32 %v4348, %v4516
  %v4518 = vpop.f32.mrf.mxu0
  %v4519 = vadd.f32 %v4350, %v4518
  %4520 = vmatmul.bf16.gmra.mxu0 %v3468
  %v4521 = vpop.f32.mrf.mxu0
  %v4522 = vadd.f32 %v4353, %v4521
  %v4523 = vpop.f32.mrf.mxu0
  %v4524 = vadd.f32 %v4355, %v4523
  %4525 = vmatmul.bf16.gmra.mxu0 %v3476
  %v4526 = vpop.f32.mrf.mxu0
  %v4527 = vadd.f32 %v4358, %v4526
  %v4528 = vpop.f32.mrf.mxu0
  %v4529 = vadd.f32 %v4360, %v4528
  %4530 = vmatmul.bf16.gmra.mxu0 %v3484
  %v4531 = vpop.f32.mrf.mxu0
  %v4532 = vadd.f32 %v4363, %v4531
  %v4533 = vpop.f32.mrf.mxu0
  %v4534 = vadd.f32 %v4365, %v4533
  %4535 = vmatmul.bf16.gmra.mxu0 %v3492
  %v4536 = vpop.f32.mrf.mxu0
  %v4537 = vadd.f32 %v4368, %v4536
  %v4538 = vpop.f32.mrf.mxu0
  %v4539 = vadd.f32 %v4370, %v4538
  %4540 = vmatmul.bf16.gmra.mxu0 %v3500
  %v4541 = vpop.f32.mrf.mxu0
  %v4542 = vadd.f32 %v4373, %v4541
  %v4543 = vpop.f32.mrf.mxu0
  %v4544 = vadd.f32 %v4375, %v4543
  %4545 = vmatmul.bf16.gmra.mxu0 %v3508
  %v4546 = vpop.f32.mrf.mxu0
  %v4547 = vadd.f32 %v4378, %v4546
  %v4548 = vpop.f32.mrf.mxu0
  %v4549 = vadd.f32 %v4380, %v4548
  %4550 = vmatmul.bf16.gmra.mxu0 %v3516
  %v4551 = vpop.f32.mrf.mxu0
  %v4552 = vadd.f32 %v4383, %v4551
  %v4553 = vpop.f32.mrf.mxu0
  %v4554 = vadd.f32 %v4385, %v4553
  %4555 = vmatmul.bf16.gmra.mxu0 %v3524
  %v4556 = vpop.f32.mrf.mxu0
  %v4557 = vadd.f32 %v4388, %v4556
  %v4558 = vpop.f32.mrf.mxu0
  %v4559 = vadd.f32 %v4390, %v4558
  %4560 = vmatmul.bf16.gmra.mxu0 %v3532
  %v4561 = vpop.f32.mrf.mxu0
  %v4562 = vadd.f32 %v4393, %v4561
  %v4563 = vpop.f32.mrf.mxu0
  %v4564 = vadd.f32 %v4395, %v4563
  %4565 = vmatmul.bf16.gmra.mxu0 %v3540
  %v4566 = vpop.f32.mrf.mxu0
  %v4567 = vadd.f32 %v4398, %v4566
  %v4568 = vpop.f32.mrf.mxu0
  %v4569 = vadd.f32 %v4400, %v4568
  %4570 = vmatmul.bf16.gmra.mxu0 %v3548
  %v4571 = vpop.f32.mrf.mxu0
  %v4572 = vadd.f32 %v4403, %v4571
  %v4573 = vpop.f32.mrf.mxu0
  %v4574 = vadd.f32 %v4405, %v4573
  %4575 = vmatmul.bf16.gmra.mxu0 %v3556
  %v4576 = vpop.f32.mrf.mxu0
  %v4577 = vadd.f32 %v4408, %v4576
  %v4578 = vpop.f32.mrf.mxu0
  %v4579 = vadd.f32 %v4410, %v4578
  %4580 = vdwg.mxu0
  %4581 = vmatpush.bf16.msra.mxu0 %v3977
  %4582 = vmatpush.bf16.msra.mxu0 %v3976
  %4583 = vmatpush.bf16.msra.mxu0 %v3975
  %4584 = vmatpush.bf16.msra.mxu0 %v3974
  %4585 = vmatpush.bf16.msra.mxu0 %v3973
  %4586 = vmatpush.bf16.msra.mxu0 %v3972
  %4587 = vmatpush.bf16.msra.mxu0 %v3971
  %4588 = vmatpush.bf16.msra.mxu0 %v3970
  %4589 = vmatmul.bf16.gmra.mxu0 %v3309
  %v4590 = vpop.f32.mrf.mxu0
  %v4591 = vadd.f32 %v4422, %v4590
  %v4592 = vpop.f32.mrf.mxu0
  %v4593 = vadd.f32 %v4424, %v4592
  %4594 = vmatmul.bf16.gmra.mxu0 %v3317
  %v4595 = vpop.f32.mrf.mxu0
  %v4596 = vadd.f32 %v4427, %v4595
  %v4597 = vpop.f32.mrf.mxu0
  %v4598 = vadd.f32 %v4429, %v4597
  %4599 = vmatmul.bf16.gmra.mxu0 %v3325
  %v4600 = vpop.f32.mrf.mxu0
  %v4601 = vadd.f32 %v4432, %v4600
  %v4602 = vpop.f32.mrf.mxu0
  %v4603 = vadd.f32 %v4434, %v4602
  %4604 = vmatmul.bf16.gmra.mxu0 %v3333
  %v4605 = vpop.f32.mrf.mxu0
  %v4606 = vadd.f32 %v4437, %v4605
  %v4607 = vpop.f32.mrf.mxu0
  %v4608 = vadd.f32 %v4439, %v4607
  %4609 = vmatmul.bf16.gmra.mxu0 %v3341
  %v4610 = vpop.f32.mrf.mxu0
  %v4611 = vadd.f32 %v4442, %v4610
  %v4612 = vpop.f32.mrf.mxu0
  %v4613 = vadd.f32 %v4444, %v4612
  %4614 = vmatmul.bf16.gmra.mxu0 %v3349
  %v4615 = vpop.f32.mrf.mxu0
  %v4616 = vadd.f32 %v4447, %v4615
  %v4617 = vpop.f32.mrf.mxu0
  %v4618 = vadd.f32 %v4449, %v4617
  %4619 = vmatmul.bf16.gmra.mxu0 %v3357
  %v4620 = vpop.f32.mrf.mxu0
  %v4621 = vadd.f32 %v4452, %v4620
  %v4622 = vpop.f32.mrf.mxu0
  %v4623 = vadd.f32 %v4454, %v4622
  %4624 = vmatmul.bf16.gmra.mxu0 %v3365
  %v4625 = vpop.f32.mrf.mxu0
  %v4626 = vadd.f32 %v4457, %v4625
  %v4627 = vpop.f32.mrf.mxu0
  %v4628 = vadd.f32 %v4459, %v4627
  %4629 = vmatmul.bf16.gmra.mxu0 %v3373
  %v4630 = vpop.f32.mrf.mxu0
  %v4631 = vadd.f32 %v4462, %v4630
  %v4632 = vpop.f32.mrf.mxu0
  %v4633 = vadd.f32 %v4464, %v4632
  %4634 = vmatmul.bf16.gmra.mxu0 %v3381
  %v4635 = vpop.f32.mrf.mxu0
  %v4636 = vadd.f32 %v4467, %v4635
  %v4637 = vpop.f32.mrf.mxu0
  %v4638 = vadd.f32 %v4469, %v4637
  %4639 = vmatmul.bf16.gmra.mxu0 %v3389
  %v4640 = vpop.f32.mrf.mxu0
  %v4641 = vadd.f32 %v4472, %v4640
  %v4642 = vpop.f32.mrf.mxu0
  %v4643 = vadd.f32 %v4474, %v4642
  %4644 = vmatmul.bf16.gmra.mxu0 %v3397
  %v4645 = vpop.f32.mrf.mxu0
  %v4646 = vadd.f32 %v4477, %v4645
  %v4647 = vpop.f32.mrf.mxu0
  %v4648 = vadd.f32 %v4479, %v4647
  %4649 = vmatmul.bf16.gmra.mxu0 %v3405
  %v4650 = vpop.f32.mrf.mxu0
  %v4651 = vadd.f32 %v4482, %v4650
  %v4652 = vpop.f32.mrf.mxu0
  %v4653 = vadd.f32 %v4484, %v4652
  %4654 = vmatmul.bf16.gmra.mxu0 %v3413
  %v4655 = vpop.f32.mrf.mxu0
  %v4656 = vadd.f32 %v4487, %v4655
  %v4657 = vpop.f32.mrf.mxu0
  %v4658 = vadd.f32 %v4489, %v4657
  %4659 = vmatmul.bf16.gmra.mxu0 %v3421
  %v4660 = vpop.f32.mrf.mxu0
  %v4661 = vadd.f32 %v4492, %v4660
  %v4662 = vpop.f32.mrf.mxu0
  %v4663 = vadd.f32 %v4494, %v4662
  %4664 = vmatmul.bf16.gmra.mxu0 %v3429
  %v4665 = vpop.f32.mrf.mxu0
  %v4666 = vadd.f32 %v4497, %v4665
  %v4667 = vpop.f32.mrf.mxu0
  %v4668 = vadd.f32 %v4499, %v4667
  %4669 = vmatmul.bf16.gmra.mxu0 %v3437
  %v4670 = vpop.f32.mrf.mxu0
  %v4671 = vadd.f32 %v4502, %v4670
  %v4672 = vpop.f32.mrf.mxu0
  %v4673 = vadd.f32 %v4504, %v4672
  %4674 = vmatmul.bf16.gmra.mxu0 %v3445
  %v4675 = vpop.f32.mrf.mxu0
  %v4676 = vadd.f32 %v4507, %v4675
  %v4677 = vpop.f32.mrf.mxu0
  %v4678 = vadd.f32 %v4509, %v4677
  %4679 = vmatmul.bf16.gmra.mxu0 %v3453
  %v4680 = vpop.f32.mrf.mxu0
  %v4681 = vadd.f32 %v4512, %v4680
  %v4682 = vpop.f32.mrf.mxu0
  %v4683 = vadd.f32 %v4514, %v4682
  %4684 = vmatmul.bf16.gmra.mxu0 %v3461
  %v4685 = vpop.f32.mrf.mxu0
  %v4686 = vadd.f32 %v4517, %v4685
  %v4687 = vpop.f32.mrf.mxu0
  %v4688 = vadd.f32 %v4519, %v4687
  %4689 = vmatmul.bf16.gmra.mxu0 %v3469
  %v4690 = vpop.f32.mrf.mxu0
  %v4691 = vadd.f32 %v4522, %v4690
  %v4692 = vpop.f32.mrf.mxu0
  %v4693 = vadd.f32 %v4524, %v4692
  %4694 = vmatmul.bf16.gmra.mxu0 %v3477
  %v4695 = vpop.f32.mrf.mxu0
  %v4696 = vadd.f32 %v4527, %v4695
  %v4697 = vpop.f32.mrf.mxu0
  %v4698 = vadd.f32 %v4529, %v4697
  %4699 = vmatmul.bf16.gmra.mxu0 %v3485
  %v4700 = vpop.f32.mrf.mxu0
  %v4701 = vadd.f32 %v4532, %v4700
  %v4702 = vpop.f32.mrf.mxu0
  %v4703 = vadd.f32 %v4534, %v4702
  %4704 = vmatmul.bf16.gmra.mxu0 %v3493
  %v4705 = vpop.f32.mrf.mxu0
  %v4706 = vadd.f32 %v4537, %v4705
  %v4707 = vpop.f32.mrf.mxu0
  %v4708 = vadd.f32 %v4539, %v4707
  %4709 = vmatmul.bf16.gmra.mxu0 %v3501
  %v4710 = vpop.f32.mrf.mxu0
  %v4711 = vadd.f32 %v4542, %v4710
  %v4712 = vpop.f32.mrf.mxu0
  %v4713 = vadd.f32 %v4544, %v4712
  %4714 = vmatmul.bf16.gmra.mxu0 %v3509
  %v4715 = vpop.f32.mrf.mxu0
  %v4716 = vadd.f32 %v4547, %v4715
  %v4717 = vpop.f32.mrf.mxu0
  %v4718 = vadd.f32 %v4549, %v4717
  %4719 = vmatmul.bf16.gmra.mxu0 %v3517
  %v4720 = vpop.f32.mrf.mxu0
  %v4721 = vadd.f32 %v4552, %v4720
  %v4722 = vpop.f32.mrf.mxu0
  %v4723 = vadd.f32 %v4554, %v4722
  %4724 = vmatmul.bf16.gmra.mxu0 %v3525
  %v4725 = vpop.f32.mrf.mxu0
  %v4726 = vadd.f32 %v4557, %v4725
  %v4727 = vpop.f32.mrf.mxu0
  %v4728 = vadd.f32 %v4559, %v4727
  %4729 = vmatmul.bf16.gmra.mxu0 %v3533
  %v4730 = vpop.f32.mrf.mxu0
  %v4731 = vadd.f32 %v4562, %v4730
  %v4732 = vpop.f32.mrf.mxu0
  %v4733 = vadd.f32 %v4564, %v4732
  %4734 = vmatmul.bf16.gmra.mxu0 %v3541
  %v4735 = vpop.f32.mrf.mxu0
  %v4736 = vadd.f32 %v4567, %v4735
  %v4737 = vpop.f32.mrf.mxu0
  %v4738 = vadd.f32 %v4569, %v4737
  %4739 = vmatmul.bf16.gmra.mxu0 %v3549
  %v4740 = vpop.f32.mrf.mxu0
  %v4741 = vadd.f32 %v4572, %v4740
  %v4742 = vpop.f32.mrf.mxu0
  %v4743 = vadd.f32 %v4574, %v4742
  %4744 = vmatmul.bf16.gmra.mxu0 %v3557
  %v4745 = vpop.f32.mrf.mxu0
  %v4746 = vadd.f32 %v4577, %v4745
  %v4747 = vpop.f32.mrf.mxu0
  %v4748 = vadd.f32 %v4579, %v4747
  %4749 = vdwg.mxu0
  %4750 = vmatpush.bf16.msra.mxu0 %v3985
  %4751 = vmatpush.bf16.msra.mxu0 %v3984
  %4752 = vmatpush.bf16.msra.mxu0 %v3983
  %4753 = vmatpush.bf16.msra.mxu0 %v3982
  %4754 = vmatpush.bf16.msra.mxu0 %v3981
  %4755 = vmatpush.bf16.msra.mxu0 %v3980
  %4756 = vmatpush.bf16.msra.mxu0 %v3979
  %4757 = vmatpush.bf16.msra.mxu0 %v3978
  %4758 = vmatmul.bf16.gmra.mxu0 %v3310
  %v4759 = vpop.f32.mrf.mxu0
  %v4760 = vadd.f32 %v4591, %v4759
  %v4761 = vpop.f32.mrf.mxu0
  %v4762 = vadd.f32 %v4593, %v4761
  %4763 = vmatmul.bf16.gmra.mxu0 %v3318
  %v4764 = vpop.f32.mrf.mxu0
  %v4765 = vadd.f32 %v4596, %v4764
  %v4766 = vpop.f32.mrf.mxu0
  %v4767 = vadd.f32 %v4598, %v4766
  %4768 = vmatmul.bf16.gmra.mxu0 %v3326
  %v4769 = vpop.f32.mrf.mxu0
  %v4770 = vadd.f32 %v4601, %v4769
  %v4771 = vpop.f32.mrf.mxu0
  %v4772 = vadd.f32 %v4603, %v4771
  %4773 = vmatmul.bf16.gmra.mxu0 %v3334
  %v4774 = vpop.f32.mrf.mxu0
  %v4775 = vadd.f32 %v4606, %v4774
  %v4776 = vpop.f32.mrf.mxu0
  %v4777 = vadd.f32 %v4608, %v4776
  %4778 = vmatmul.bf16.gmra.mxu0 %v3342
  %v4779 = vpop.f32.mrf.mxu0
  %v4780 = vadd.f32 %v4611, %v4779
  %v4781 = vpop.f32.mrf.mxu0
  %v4782 = vadd.f32 %v4613, %v4781
  %4783 = vmatmul.bf16.gmra.mxu0 %v3350
  %v4784 = vpop.f32.mrf.mxu0
  %v4785 = vadd.f32 %v4616, %v4784
  %v4786 = vpop.f32.mrf.mxu0
  %v4787 = vadd.f32 %v4618, %v4786
  %4788 = vmatmul.bf16.gmra.mxu0 %v3358
  %v4789 = vpop.f32.mrf.mxu0
  %v4790 = vadd.f32 %v4621, %v4789
  %v4791 = vpop.f32.mrf.mxu0
  %v4792 = vadd.f32 %v4623, %v4791
  %4793 = vmatmul.bf16.gmra.mxu0 %v3366
  %v4794 = vpop.f32.mrf.mxu0
  %v4795 = vadd.f32 %v4626, %v4794
  %v4796 = vpop.f32.mrf.mxu0
  %v4797 = vadd.f32 %v4628, %v4796
  %4798 = vmatmul.bf16.gmra.mxu0 %v3374
  %v4799 = vpop.f32.mrf.mxu0
  %v4800 = vadd.f32 %v4631, %v4799
  %v4801 = vpop.f32.mrf.mxu0
  %v4802 = vadd.f32 %v4633, %v4801
  %4803 = vmatmul.bf16.gmra.mxu0 %v3382
  %v4804 = vpop.f32.mrf.mxu0
  %v4805 = vadd.f32 %v4636, %v4804
  %v4806 = vpop.f32.mrf.mxu0
  %v4807 = vadd.f32 %v4638, %v4806
  %4808 = vmatmul.bf16.gmra.mxu0 %v3390
  %v4809 = vpop.f32.mrf.mxu0
  %v4810 = vadd.f32 %v4641, %v4809
  %v4811 = vpop.f32.mrf.mxu0
  %v4812 = vadd.f32 %v4643, %v4811
  %4813 = vmatmul.bf16.gmra.mxu0 %v3398
  %v4814 = vpop.f32.mrf.mxu0
  %v4815 = vadd.f32 %v4646, %v4814
  %v4816 = vpop.f32.mrf.mxu0
  %v4817 = vadd.f32 %v4648, %v4816
  %4818 = vmatmul.bf16.gmra.mxu0 %v3406
  %v4819 = vpop.f32.mrf.mxu0
  %v4820 = vadd.f32 %v4651, %v4819
  %v4821 = vpop.f32.mrf.mxu0
  %v4822 = vadd.f32 %v4653, %v4821
  %4823 = vmatmul.bf16.gmra.mxu0 %v3414
  %v4824 = vpop.f32.mrf.mxu0
  %v4825 = vadd.f32 %v4656, %v4824
  %v4826 = vpop.f32.mrf.mxu0
  %v4827 = vadd.f32 %v4658, %v4826
  %4828 = vmatmul.bf16.gmra.mxu0 %v3422
  %v4829 = vpop.f32.mrf.mxu0
  %v4830 = vadd.f32 %v4661, %v4829
  %v4831 = vpop.f32.mrf.mxu0
  %v4832 = vadd.f32 %v4663, %v4831
  %4833 = vmatmul.bf16.gmra.mxu0 %v3430
  %v4834 = vpop.f32.mrf.mxu0
  %v4835 = vadd.f32 %v4666, %v4834
  %v4836 = vpop.f32.mrf.mxu0
  %v4837 = vadd.f32 %v4668, %v4836
  %4838 = vmatmul.bf16.gmra.mxu0 %v3438
  %v4839 = vpop.f32.mrf.mxu0
  %v4840 = vadd.f32 %v4671, %v4839
  %v4841 = vpop.f32.mrf.mxu0
  %v4842 = vadd.f32 %v4673, %v4841
  %4843 = vmatmul.bf16.gmra.mxu0 %v3446
  %v4844 = vpop.f32.mrf.mxu0
  %v4845 = vadd.f32 %v4676, %v4844
  %v4846 = vpop.f32.mrf.mxu0
  %v4847 = vadd.f32 %v4678, %v4846
  %4848 = vmatmul.bf16.gmra.mxu0 %v3454
  %v4849 = vpop.f32.mrf.mxu0
  %v4850 = vadd.f32 %v4681, %v4849
  %v4851 = vpop.f32.mrf.mxu0
  %v4852 = vadd.f32 %v4683, %v4851
  %4853 = vmatmul.bf16.gmra.mxu0 %v3462
  %v4854 = vpop.f32.mrf.mxu0
  %v4855 = vadd.f32 %v4686, %v4854
  %v4856 = vpop.f32.mrf.mxu0
  %v4857 = vadd.f32 %v4688, %v4856
  %4858 = vmatmul.bf16.gmra.mxu0 %v3470
  %v4859 = vpop.f32.mrf.mxu0
  %v4860 = vadd.f32 %v4691, %v4859
  %v4861 = vpop.f32.mrf.mxu0
  %v4862 = vadd.f32 %v4693, %v4861
  %4863 = vmatmul.bf16.gmra.mxu0 %v3478
  %v4864 = vpop.f32.mrf.mxu0
  %v4865 = vadd.f32 %v4696, %v4864
  %v4866 = vpop.f32.mrf.mxu0
  %v4867 = vadd.f32 %v4698, %v4866
  %4868 = vmatmul.bf16.gmra.mxu0 %v3486
  %v4869 = vpop.f32.mrf.mxu0
  %v4870 = vadd.f32 %v4701, %v4869
  %v4871 = vpop.f32.mrf.mxu0
  %v4872 = vadd.f32 %v4703, %v4871
  %4873 = vmatmul.bf16.gmra.mxu0 %v3494
  %v4874 = vpop.f32.mrf.mxu0
  %v4875 = vadd.f32 %v4706, %v4874
  %v4876 = vpop.f32.mrf.mxu0
  %v4877 = vadd.f32 %v4708, %v4876
  %4878 = vmatmul.bf16.gmra.mxu0 %v3502
  %v4879 = vpop.f32.mrf.mxu0
  %v4880 = vadd.f32 %v4711, %v4879
  %v4881 = vpop.f32.mrf.mxu0
  %v4882 = vadd.f32 %v4713, %v4881
  %4883 = vmatmul.bf16.gmra.mxu0 %v3510
  %v4884 = vpop.f32.mrf.mxu0
  %v4885 = vadd.f32 %v4716, %v4884
  %v4886 = vpop.f32.mrf.mxu0
  %v4887 = vadd.f32 %v4718, %v4886
  %4888 = vmatmul.bf16.gmra.mxu0 %v3518
  %v4889 = vpop.f32.mrf.mxu0
  %v4890 = vadd.f32 %v4721, %v4889
  %v4891 = vpop.f32.mrf.mxu0
  %v4892 = vadd.f32 %v4723, %v4891
  %4893 = vmatmul.bf16.gmra.mxu0 %v3526
  %v4894 = vpop.f32.mrf.mxu0
  %v4895 = vadd.f32 %v4726, %v4894
  %v4896 = vpop.f32.mrf.mxu0
  %v4897 = vadd.f32 %v4728, %v4896
  %4898 = vmatmul.bf16.gmra.mxu0 %v3534
  %v4899 = vpop.f32.mrf.mxu0
  %v4900 = vadd.f32 %v4731, %v4899
  %v4901 = vpop.f32.mrf.mxu0
  %v4902 = vadd.f32 %v4733, %v4901
  %4903 = vmatmul.bf16.gmra.mxu0 %v3542
  %v4904 = vpop.f32.mrf.mxu0
  %v4905 = vadd.f32 %v4736, %v4904
  %v4906 = vpop.f32.mrf.mxu0
  %v4907 = vadd.f32 %v4738, %v4906
  %4908 = vmatmul.bf16.gmra.mxu0 %v3550
  %v4909 = vpop.f32.mrf.mxu0
  %v4910 = vadd.f32 %v4741, %v4909
  %v4911 = vpop.f32.mrf.mxu0
  %v4912 = vadd.f32 %v4743, %v4911
  %4913 = vmatmul.bf16.gmra.mxu0 %v3558
  %v4914 = vpop.f32.mrf.mxu0
  %v4915 = vadd.f32 %v4746, %v4914
  %v4916 = vpop.f32.mrf.mxu0
  %v4917 = vadd.f32 %v4748, %v4916
  %4918 = vdwg.mxu0
  %4919 = vmatpush.bf16.msra.mxu0 %v3993
  %4920 = vmatpush.bf16.msra.mxu0 %v3992
  %4921 = vmatpush.bf16.msra.mxu0 %v3991
  %4922 = vmatpush.bf16.msra.mxu0 %v3990
  %4923 = vmatpush.bf16.msra.mxu0 %v3989
  %4924 = vmatpush.bf16.msra.mxu0 %v3988
  %4925 = vmatpush.bf16.msra.mxu0 %v3987
  %4926 = vmatpush.bf16.msra.mxu0 %v3986
  %4927 = vmatmul.bf16.gmra.mxu0 %v3311
  %v4928 = vpop.f32.mrf.mxu0
  %v4929 = vadd.f32 %v4760, %v4928
  %v4930 = vpop.f32.mrf.mxu0
  %v4931 = vadd.f32 %v4762, %v4930
  %4932 = vmatmul.bf16.gmra.mxu0 %v3319
  %v4933 = vpop.f32.mrf.mxu0
  %v4934 = vadd.f32 %v4765, %v4933
  %v4935 = vpop.f32.mrf.mxu0
  %v4936 = vadd.f32 %v4767, %v4935
  %4937 = vmatmul.bf16.gmra.mxu0 %v3327
  %v4938 = vpop.f32.mrf.mxu0
  %v4939 = vadd.f32 %v4770, %v4938
  %v4940 = vpop.f32.mrf.mxu0
  %v4941 = vadd.f32 %v4772, %v4940
  %4942 = vmatmul.bf16.gmra.mxu0 %v3335
  %v4943 = vpop.f32.mrf.mxu0
  %v4944 = vadd.f32 %v4775, %v4943
  %v4945 = vpop.f32.mrf.mxu0
  %v4946 = vadd.f32 %v4777, %v4945
  %4947 = vmatmul.bf16.gmra.mxu0 %v3343
  %v4948 = vpop.f32.mrf.mxu0
  %v4949 = vadd.f32 %v4780, %v4948
  %v4950 = vpop.f32.mrf.mxu0
  %v4951 = vadd.f32 %v4782, %v4950
  %4952 = vmatmul.bf16.gmra.mxu0 %v3351
  %v4953 = vpop.f32.mrf.mxu0
  %v4954 = vadd.f32 %v4785, %v4953
  %v4955 = vpop.f32.mrf.mxu0
  %v4956 = vadd.f32 %v4787, %v4955
  %4957 = vmatmul.bf16.gmra.mxu0 %v3359
  %v4958 = vpop.f32.mrf.mxu0
  %v4959 = vadd.f32 %v4790, %v4958
  %v4960 = vpop.f32.mrf.mxu0
  %v4961 = vadd.f32 %v4792, %v4960
  %4962 = vmatmul.bf16.gmra.mxu0 %v3367
  %v4963 = vpop.f32.mrf.mxu0
  %v4964 = vadd.f32 %v4795, %v4963
  %v4965 = vpop.f32.mrf.mxu0
  %v4966 = vadd.f32 %v4797, %v4965
  %4967 = vmatmul.bf16.gmra.mxu0 %v3375
  %v4968 = vpop.f32.mrf.mxu0
  %v4969 = vadd.f32 %v4800, %v4968
  %v4970 = vpop.f32.mrf.mxu0
  %v4971 = vadd.f32 %v4802, %v4970
  %4972 = vmatmul.bf16.gmra.mxu0 %v3383
  %v4973 = vpop.f32.mrf.mxu0
  %v4974 = vadd.f32 %v4805, %v4973
  %v4975 = vpop.f32.mrf.mxu0
  %v4976 = vadd.f32 %v4807, %v4975
  %4977 = vmatmul.bf16.gmra.mxu0 %v3391
  %v4978 = vpop.f32.mrf.mxu0
  %v4979 = vadd.f32 %v4810, %v4978
  %v4980 = vpop.f32.mrf.mxu0
  %v4981 = vadd.f32 %v4812, %v4980
  %4982 = vmatmul.bf16.gmra.mxu0 %v3399
  %v4983 = vpop.f32.mrf.mxu0
  %v4984 = vadd.f32 %v4815, %v4983
  %v4985 = vpop.f32.mrf.mxu0
  %v4986 = vadd.f32 %v4817, %v4985
  %4987 = vmatmul.bf16.gmra.mxu0 %v3407
  %v4988 = vpop.f32.mrf.mxu0
  %v4989 = vadd.f32 %v4820, %v4988
  %v4990 = vpop.f32.mrf.mxu0
  %v4991 = vadd.f32 %v4822, %v4990
  %4992 = vmatmul.bf16.gmra.mxu0 %v3415
  %v4993 = vpop.f32.mrf.mxu0
  %v4994 = vadd.f32 %v4825, %v4993
  %v4995 = vpop.f32.mrf.mxu0
  %v4996 = vadd.f32 %v4827, %v4995
  %4997 = vmatmul.bf16.gmra.mxu0 %v3423
  %v4998 = vpop.f32.mrf.mxu0
  %v4999 = vadd.f32 %v4830, %v4998
  %v5000 = vpop.f32.mrf.mxu0
  %v5001 = vadd.f32 %v4832, %v5000
  %5002 = vmatmul.bf16.gmra.mxu0 %v3431
  %v5003 = vpop.f32.mrf.mxu0
  %v5004 = vadd.f32 %v4835, %v5003
  %v5005 = vpop.f32.mrf.mxu0
  %v5006 = vadd.f32 %v4837, %v5005
  %5007 = vmatmul.bf16.gmra.mxu0 %v3439
  %v5008 = vpop.f32.mrf.mxu0
  %v5009 = vadd.f32 %v4840, %v5008
  %v5010 = vpop.f32.mrf.mxu0
  %v5011 = vadd.f32 %v4842, %v5010
  %5012 = vmatmul.bf16.gmra.mxu0 %v3447
  %v5013 = vpop.f32.mrf.mxu0
  %v5014 = vadd.f32 %v4845, %v5013
  %v5015 = vpop.f32.mrf.mxu0
  %v5016 = vadd.f32 %v4847, %v5015
  %5017 = vmatmul.bf16.gmra.mxu0 %v3455
  %v5018 = vpop.f32.mrf.mxu0
  %v5019 = vadd.f32 %v4850, %v5018
  %v5020 = vpop.f32.mrf.mxu0
  %v5021 = vadd.f32 %v4852, %v5020
  %5022 = vmatmul.bf16.gmra.mxu0 %v3463
  %v5023 = vpop.f32.mrf.mxu0
  %v5024 = vadd.f32 %v4855, %v5023
  %v5025 = vpop.f32.mrf.mxu0
  %v5026 = vadd.f32 %v4857, %v5025
  %5027 = vmatmul.bf16.gmra.mxu0 %v3471
  %v5028 = vpop.f32.mrf.mxu0
  %v5029 = vadd.f32 %v4860, %v5028
  %v5030 = vpop.f32.mrf.mxu0
  %v5031 = vadd.f32 %v4862, %v5030
  %5032 = vmatmul.bf16.gmra.mxu0 %v3479
  %v5033 = vpop.f32.mrf.mxu0
  %v5034 = vadd.f32 %v4865, %v5033
  %v5035 = vpop.f32.mrf.mxu0
  %v5036 = vadd.f32 %v4867, %v5035
  %5037 = vmatmul.bf16.gmra.mxu0 %v3487
  %v5038 = vpop.f32.mrf.mxu0
  %v5039 = vadd.f32 %v4870, %v5038
  %v5040 = vpop.f32.mrf.mxu0
  %v5041 = vadd.f32 %v4872, %v5040
  %5042 = vmatmul.bf16.gmra.mxu0 %v3495
  %v5043 = vpop.f32.mrf.mxu0
  %v5044 = vadd.f32 %v4875, %v5043
  %v5045 = vpop.f32.mrf.mxu0
  %v5046 = vadd.f32 %v4877, %v5045
  %5047 = vmatmul.bf16.gmra.mxu0 %v3503
  %v5048 = vpop.f32.mrf.mxu0
  %v5049 = vadd.f32 %v4880, %v5048
  %v5050 = vpop.f32.mrf.mxu0
  %v5051 = vadd.f32 %v4882, %v5050
  %5052 = vmatmul.bf16.gmra.mxu0 %v3511
  %v5053 = vpop.f32.mrf.mxu0
  %v5054 = vadd.f32 %v4885, %v5053
  %v5055 = vpop.f32.mrf.mxu0
  %v5056 = vadd.f32 %v4887, %v5055
  %5057 = vmatmul.bf16.gmra.mxu0 %v3519
  %v5058 = vpop.f32.mrf.mxu0
  %v5059 = vadd.f32 %v4890, %v5058
  %v5060 = vpop.f32.mrf.mxu0
  %v5061 = vadd.f32 %v4892, %v5060
  %5062 = vmatmul.bf16.gmra.mxu0 %v3527
  %v5063 = vpop.f32.mrf.mxu0
  %v5064 = vadd.f32 %v4895, %v5063
  %v5065 = vpop.f32.mrf.mxu0
  %v5066 = vadd.f32 %v4897, %v5065
  %5067 = vmatmul.bf16.gmra.mxu0 %v3535
  %v5068 = vpop.f32.mrf.mxu0
  %v5069 = vadd.f32 %v4900, %v5068
  %v5070 = vpop.f32.mrf.mxu0
  %v5071 = vadd.f32 %v4902, %v5070
  %5072 = vmatmul.bf16.gmra.mxu0 %v3543
  %v5073 = vpop.f32.mrf.mxu0
  %v5074 = vadd.f32 %v4905, %v5073
  %v5075 = vpop.f32.mrf.mxu0
  %v5076 = vadd.f32 %v4907, %v5075
  %5077 = vmatmul.bf16.gmra.mxu0 %v3551
  %v5078 = vpop.f32.mrf.mxu0
  %v5079 = vadd.f32 %v4910, %v5078
  %v5080 = vpop.f32.mrf.mxu0
  %v5081 = vadd.f32 %v4912, %v5080
  %5082 = vmatmul.bf16.gmra.mxu0 %v3559
  %v5083 = vpop.f32.mrf.mxu0
  %v5084 = vadd.f32 %v4915, %v5083
  %v5085 = vpop.f32.mrf.mxu0
  %v5086 = vadd.f32 %v4917, %v5085
  %5087 = vdwg.mxu0
  %5088 = vmatpush.bf16.msra.mxu0 %v4001
  %5089 = vmatpush.bf16.msra.mxu0 %v4000
  %5090 = vmatpush.bf16.msra.mxu0 %v3999
  %5091 = vmatpush.bf16.msra.mxu0 %v3998
  %5092 = vmatpush.bf16.msra.mxu0 %v3997
  %5093 = vmatpush.bf16.msra.mxu0 %v3996
  %5094 = vmatpush.bf16.msra.mxu0 %v3995
  %5095 = vmatpush.bf16.msra.mxu0 %v3994
  %5096 = vmatmul.bf16.gmra.mxu0 %v3312
  %v5097 = vpop.f32.mrf.mxu0
  %v5098 = vadd.f32 %v4929, %v5097
  %v5099 = vpop.f32.mrf.mxu0
  %v5100 = vadd.f32 %v4931, %v5099
  %5101 = vmatmul.bf16.gmra.mxu0 %v3320
  %v5102 = vpop.f32.mrf.mxu0
  %v5103 = vadd.f32 %v4934, %v5102
  %v5104 = vpop.f32.mrf.mxu0
  %v5105 = vadd.f32 %v4936, %v5104
  %5106 = vmatmul.bf16.gmra.mxu0 %v3328
  %v5107 = vpop.f32.mrf.mxu0
  %v5108 = vadd.f32 %v4939, %v5107
  %v5109 = vpop.f32.mrf.mxu0
  %v5110 = vadd.f32 %v4941, %v5109
  %5111 = vmatmul.bf16.gmra.mxu0 %v3336
  %v5112 = vpop.f32.mrf.mxu0
  %v5113 = vadd.f32 %v4944, %v5112
  %v5114 = vpop.f32.mrf.mxu0
  %v5115 = vadd.f32 %v4946, %v5114
  %5116 = vmatmul.bf16.gmra.mxu0 %v3344
  %v5117 = vpop.f32.mrf.mxu0
  %v5118 = vadd.f32 %v4949, %v5117
  %v5119 = vpop.f32.mrf.mxu0
  %v5120 = vadd.f32 %v4951, %v5119
  %5121 = vmatmul.bf16.gmra.mxu0 %v3352
  %v5122 = vpop.f32.mrf.mxu0
  %v5123 = vadd.f32 %v4954, %v5122
  %v5124 = vpop.f32.mrf.mxu0
  %v5125 = vadd.f32 %v4956, %v5124
  %5126 = vmatmul.bf16.gmra.mxu0 %v3360
  %v5127 = vpop.f32.mrf.mxu0
  %v5128 = vadd.f32 %v4959, %v5127
  %v5129 = vpop.f32.mrf.mxu0
  %v5130 = vadd.f32 %v4961, %v5129
  %5131 = vmatmul.bf16.gmra.mxu0 %v3368
  %v5132 = vpop.f32.mrf.mxu0
  %v5133 = vadd.f32 %v4964, %v5132
  %v5134 = vpop.f32.mrf.mxu0
  %v5135 = vadd.f32 %v4966, %v5134
  %5136 = vmatmul.bf16.gmra.mxu0 %v3376
  %v5137 = vpop.f32.mrf.mxu0
  %v5138 = vadd.f32 %v4969, %v5137
  %v5139 = vpop.f32.mrf.mxu0
  %v5140 = vadd.f32 %v4971, %v5139
  %5141 = vmatmul.bf16.gmra.mxu0 %v3384
  %v5142 = vpop.f32.mrf.mxu0
  %v5143 = vadd.f32 %v4974, %v5142
  %v5144 = vpop.f32.mrf.mxu0
  %v5145 = vadd.f32 %v4976, %v5144
  %5146 = vmatmul.bf16.gmra.mxu0 %v3392
  %v5147 = vpop.f32.mrf.mxu0
  %v5148 = vadd.f32 %v4979, %v5147
  %v5149 = vpop.f32.mrf.mxu0
  %v5150 = vadd.f32 %v4981, %v5149
  %5151 = vmatmul.bf16.gmra.mxu0 %v3400
  %v5152 = vpop.f32.mrf.mxu0
  %v5153 = vadd.f32 %v4984, %v5152
  %v5154 = vpop.f32.mrf.mxu0
  %v5155 = vadd.f32 %v4986, %v5154
  %5156 = vmatmul.bf16.gmra.mxu0 %v3408
  %v5157 = vpop.f32.mrf.mxu0
  %v5158 = vadd.f32 %v4989, %v5157
  %v5159 = vpop.f32.mrf.mxu0
  %v5160 = vadd.f32 %v4991, %v5159
  %5161 = vmatmul.bf16.gmra.mxu0 %v3416
  %v5162 = vpop.f32.mrf.mxu0
  %v5163 = vadd.f32 %v4994, %v5162
  %v5164 = vpop.f32.mrf.mxu0
  %v5165 = vadd.f32 %v4996, %v5164
  %5166 = vmatmul.bf16.gmra.mxu0 %v3424
  %v5167 = vpop.f32.mrf.mxu0
  %v5168 = vadd.f32 %v4999, %v5167
  %v5169 = vpop.f32.mrf.mxu0
  %v5170 = vadd.f32 %v5001, %v5169
  %5171 = vmatmul.bf16.gmra.mxu0 %v3432
  %v5172 = vpop.f32.mrf.mxu0
  %v5173 = vadd.f32 %v5004, %v5172
  %v5174 = vpop.f32.mrf.mxu0
  %v5175 = vadd.f32 %v5006, %v5174
  %5176 = vmatmul.bf16.gmra.mxu0 %v3440
  %v5177 = vpop.f32.mrf.mxu0
  %v5178 = vadd.f32 %v5009, %v5177
  %v5179 = vpop.f32.mrf.mxu0
  %v5180 = vadd.f32 %v5011, %v5179
  %5181 = vmatmul.bf16.gmra.mxu0 %v3448
  %v5182 = vpop.f32.mrf.mxu0
  %v5183 = vadd.f32 %v5014, %v5182
  %v5184 = vpop.f32.mrf.mxu0
  %v5185 = vadd.f32 %v5016, %v5184
  %5186 = vmatmul.bf16.gmra.mxu0 %v3456
  %v5187 = vpop.f32.mrf.mxu0
  %v5188 = vadd.f32 %v5019, %v5187
  %v5189 = vpop.f32.mrf.mxu0
  %v5190 = vadd.f32 %v5021, %v5189
  %5191 = vmatmul.bf16.gmra.mxu0 %v3464
  %v5192 = vpop.f32.mrf.mxu0
  %v5193 = vadd.f32 %v5024, %v5192
  %v5194 = vpop.f32.mrf.mxu0
  %v5195 = vadd.f32 %v5026, %v5194
  %5196 = vmatmul.bf16.gmra.mxu0 %v3472
  %v5197 = vpop.f32.mrf.mxu0
  %v5198 = vadd.f32 %v5029, %v5197
  %v5199 = vpop.f32.mrf.mxu0
  %v5200 = vadd.f32 %v5031, %v5199
  %5201 = vmatmul.bf16.gmra.mxu0 %v3480
  %v5202 = vpop.f32.mrf.mxu0
  %v5203 = vadd.f32 %v5034, %v5202
  %v5204 = vpop.f32.mrf.mxu0
  %v5205 = vadd.f32 %v5036, %v5204
  %5206 = vmatmul.bf16.gmra.mxu0 %v3488
  %v5207 = vpop.f32.mrf.mxu0
  %v5208 = vadd.f32 %v5039, %v5207
  %v5209 = vpop.f32.mrf.mxu0
  %v5210 = vadd.f32 %v5041, %v5209
  %5211 = vmatmul.bf16.gmra.mxu0 %v3496
  %v5212 = vpop.f32.mrf.mxu0
  %v5213 = vadd.f32 %v5044, %v5212
  %v5214 = vpop.f32.mrf.mxu0
  %v5215 = vadd.f32 %v5046, %v5214
  %5216 = vmatmul.bf16.gmra.mxu0 %v3504
  %v5217 = vpop.f32.mrf.mxu0
  %v5218 = vadd.f32 %v5049, %v5217
  %v5219 = vpop.f32.mrf.mxu0
  %v5220 = vadd.f32 %v5051, %v5219
  %5221 = vmatmul.bf16.gmra.mxu0 %v3512
  %v5222 = vpop.f32.mrf.mxu0
  %v5223 = vadd.f32 %v5054, %v5222
  %v5224 = vpop.f32.mrf.mxu0
  %v5225 = vadd.f32 %v5056, %v5224
  %5226 = vmatmul.bf16.gmra.mxu0 %v3520
  %v5227 = vpop.f32.mrf.mxu0
  %v5228 = vadd.f32 %v5059, %v5227
  %v5229 = vpop.f32.mrf.mxu0
  %v5230 = vadd.f32 %v5061, %v5229
  %5231 = vmatmul.bf16.gmra.mxu0 %v3528
  %v5232 = vpop.f32.mrf.mxu0
  %v5233 = vadd.f32 %v5064, %v5232
  %v5234 = vpop.f32.mrf.mxu0
  %v5235 = vadd.f32 %v5066, %v5234
  %5236 = vmatmul.bf16.gmra.mxu0 %v3536
  %v5237 = vpop.f32.mrf.mxu0
  %v5238 = vadd.f32 %v5069, %v5237
  %v5239 = vpop.f32.mrf.mxu0
  %v5240 = vadd.f32 %v5071, %v5239
  %5241 = vmatmul.bf16.gmra.mxu0 %v3544
  %v5242 = vpop.f32.mrf.mxu0
  %v5243 = vadd.f32 %v5074, %v5242
  %v5244 = vpop.f32.mrf.mxu0
  %v5245 = vadd.f32 %v5076, %v5244
  %5246 = vmatmul.bf16.gmra.mxu0 %v3552
  %v5247 = vpop.f32.mrf.mxu0
  %v5248 = vadd.f32 %v5079, %v5247
  %v5249 = vpop.f32.mrf.mxu0
  %v5250 = vadd.f32 %v5081, %v5249
  %5251 = vmatmul.bf16.gmra.mxu0 %v3560
  %v5252 = vpop.f32.mrf.mxu0
  %v5253 = vadd.f32 %v5084, %v5252
  %v5254 = vpop.f32.mrf.mxu0
  %v5255 = vadd.f32 %v5086, %v5254
  %5256 = vdwg.mxu0
  %5257 = vmatpush.bf16.msra.mxu0 %v4009
  %5258 = vmatpush.bf16.msra.mxu0 %v4008
  %5259 = vmatpush.bf16.msra.mxu0 %v4007
  %5260 = vmatpush.bf16.msra.mxu0 %v4006
  %5261 = vmatpush.bf16.msra.mxu0 %v4005
  %5262 = vmatpush.bf16.msra.mxu0 %v4004
  %5263 = vmatpush.bf16.msra.mxu0 %v4003
  %5264 = vmatpush.bf16.msra.mxu0 %v4002
  %5265 = vmatmul.bf16.gmra.mxu0 %v3313
  %v5266 = vpop.f32.mrf.mxu0
  %v5267 = vadd.f32 %v5098, %v5266
  %v5268 = vpop.f32.mrf.mxu0
  %v5269 = vadd.f32 %v5100, %v5268
  %5270 = vmatmul.bf16.gmra.mxu0 %v3321
  %v5271 = vpop.f32.mrf.mxu0
  %v5272 = vadd.f32 %v5103, %v5271
  %v5273 = vpop.f32.mrf.mxu0
  %v5274 = vadd.f32 %v5105, %v5273
  %5275 = vmatmul.bf16.gmra.mxu0 %v3329
  %v5276 = vpop.f32.mrf.mxu0
  %v5277 = vadd.f32 %v5108, %v5276
  %v5278 = vpop.f32.mrf.mxu0
  %v5279 = vadd.f32 %v5110, %v5278
  %5280 = vmatmul.bf16.gmra.mxu0 %v3337
  %v5281 = vpop.f32.mrf.mxu0
  %v5282 = vadd.f32 %v5113, %v5281
  %v5283 = vpop.f32.mrf.mxu0
  %v5284 = vadd.f32 %v5115, %v5283
  %5285 = vmatmul.bf16.gmra.mxu0 %v3345
  %v5286 = vpop.f32.mrf.mxu0
  %v5287 = vadd.f32 %v5118, %v5286
  %v5288 = vpop.f32.mrf.mxu0
  %v5289 = vadd.f32 %v5120, %v5288
  %5290 = vmatmul.bf16.gmra.mxu0 %v3353
  %v5291 = vpop.f32.mrf.mxu0
  %v5292 = vadd.f32 %v5123, %v5291
  %v5293 = vpop.f32.mrf.mxu0
  %v5294 = vadd.f32 %v5125, %v5293
  %5295 = vmatmul.bf16.gmra.mxu0 %v3361
  %v5296 = vpop.f32.mrf.mxu0
  %v5297 = vadd.f32 %v5128, %v5296
  %v5298 = vpop.f32.mrf.mxu0
  %v5299 = vadd.f32 %v5130, %v5298
  %5300 = vmatmul.bf16.gmra.mxu0 %v3369
  %v5301 = vpop.f32.mrf.mxu0
  %v5302 = vadd.f32 %v5133, %v5301
  %v5303 = vpop.f32.mrf.mxu0
  %v5304 = vadd.f32 %v5135, %v5303
  %5305 = vmatmul.bf16.gmra.mxu0 %v3377
  %v5306 = vpop.f32.mrf.mxu0
  %v5307 = vadd.f32 %v5138, %v5306
  %v5308 = vpop.f32.mrf.mxu0
  %v5309 = vadd.f32 %v5140, %v5308
  %5310 = vmatmul.bf16.gmra.mxu0 %v3385
  %v5311 = vpop.f32.mrf.mxu0
  %v5312 = vadd.f32 %v5143, %v5311
  %v5313 = vpop.f32.mrf.mxu0
  %v5314 = vadd.f32 %v5145, %v5313
  %5315 = vmatmul.bf16.gmra.mxu0 %v3393
  %v5316 = vpop.f32.mrf.mxu0
  %v5317 = vadd.f32 %v5148, %v5316
  %v5318 = vpop.f32.mrf.mxu0
  %v5319 = vadd.f32 %v5150, %v5318
  %5320 = vmatmul.bf16.gmra.mxu0 %v3401
  %v5321 = vpop.f32.mrf.mxu0
  %v5322 = vadd.f32 %v5153, %v5321
  %v5323 = vpop.f32.mrf.mxu0
  %v5324 = vadd.f32 %v5155, %v5323
  %5325 = vmatmul.bf16.gmra.mxu0 %v3409
  %v5326 = vpop.f32.mrf.mxu0
  %v5327 = vadd.f32 %v5158, %v5326
  %v5328 = vpop.f32.mrf.mxu0
  %v5329 = vadd.f32 %v5160, %v5328
  %5330 = vmatmul.bf16.gmra.mxu0 %v3417
  %v5331 = vpop.f32.mrf.mxu0
  %v5332 = vadd.f32 %v5163, %v5331
  %v5333 = vpop.f32.mrf.mxu0
  %v5334 = vadd.f32 %v5165, %v5333
  %5335 = vmatmul.bf16.gmra.mxu0 %v3425
  %v5336 = vpop.f32.mrf.mxu0
  %v5337 = vadd.f32 %v5168, %v5336
  %v5338 = vpop.f32.mrf.mxu0
  %v5339 = vadd.f32 %v5170, %v5338
  %5340 = vmatmul.bf16.gmra.mxu0 %v3433
  %v5341 = vpop.f32.mrf.mxu0
  %v5342 = vadd.f32 %v5173, %v5341
  %v5343 = vpop.f32.mrf.mxu0
  %v5344 = vadd.f32 %v5175, %v5343
  %5345 = vmatmul.bf16.gmra.mxu0 %v3441
  %v5346 = vpop.f32.mrf.mxu0
  %v5347 = vadd.f32 %v5178, %v5346
  %v5348 = vpop.f32.mrf.mxu0
  %v5349 = vadd.f32 %v5180, %v5348
  %5350 = vmatmul.bf16.gmra.mxu0 %v3449
  %v5351 = vpop.f32.mrf.mxu0
  %v5352 = vadd.f32 %v5183, %v5351
  %v5353 = vpop.f32.mrf.mxu0
  %v5354 = vadd.f32 %v5185, %v5353
  %5355 = vmatmul.bf16.gmra.mxu0 %v3457
  %v5356 = vpop.f32.mrf.mxu0
  %v5357 = vadd.f32 %v5188, %v5356
  %v5358 = vpop.f32.mrf.mxu0
  %v5359 = vadd.f32 %v5190, %v5358
  %5360 = vmatmul.bf16.gmra.mxu0 %v3465
  %v5361 = vpop.f32.mrf.mxu0
  %v5362 = vadd.f32 %v5193, %v5361
  %v5363 = vpop.f32.mrf.mxu0
  %v5364 = vadd.f32 %v5195, %v5363
  %5365 = vmatmul.bf16.gmra.mxu0 %v3473
  %v5366 = vpop.f32.mrf.mxu0
  %v5367 = vadd.f32 %v5198, %v5366
  %v5368 = vpop.f32.mrf.mxu0
  %v5369 = vadd.f32 %v5200, %v5368
  %5370 = vmatmul.bf16.gmra.mxu0 %v3481
  %v5371 = vpop.f32.mrf.mxu0
  %v5372 = vadd.f32 %v5203, %v5371
  %v5373 = vpop.f32.mrf.mxu0
  %v5374 = vadd.f32 %v5205, %v5373
  %5375 = vmatmul.bf16.gmra.mxu0 %v3489
  %v5376 = vpop.f32.mrf.mxu0
  %v5377 = vadd.f32 %v5208, %v5376
  %v5378 = vpop.f32.mrf.mxu0
  %v5379 = vadd.f32 %v5210, %v5378
  %5380 = vmatmul.bf16.gmra.mxu0 %v3497
  %v5381 = vpop.f32.mrf.mxu0
  %v5382 = vadd.f32 %v5213, %v5381
  %v5383 = vpop.f32.mrf.mxu0
  %v5384 = vadd.f32 %v5215, %v5383
  %5385 = vmatmul.bf16.gmra.mxu0 %v3505
  %v5386 = vpop.f32.mrf.mxu0
  %v5387 = vadd.f32 %v5218, %v5386
  %v5388 = vpop.f32.mrf.mxu0
  %v5389 = vadd.f32 %v5220, %v5388
  %5390 = vmatmul.bf16.gmra.mxu0 %v3513
  %v5391 = vpop.f32.mrf.mxu0
  %v5392 = vadd.f32 %v5223, %v5391
  %v5393 = vpop.f32.mrf.mxu0
  %v5394 = vadd.f32 %v5225, %v5393
  %5395 = vmatmul.bf16.gmra.mxu0 %v3521
  %v5396 = vpop.f32.mrf.mxu0
  %v5397 = vadd.f32 %v5228, %v5396
  %v5398 = vpop.f32.mrf.mxu0
  %v5399 = vadd.f32 %v5230, %v5398
  %5400 = vmatmul.bf16.gmra.mxu0 %v3529
  %v5401 = vpop.f32.mrf.mxu0
  %v5402 = vadd.f32 %v5233, %v5401
  %v5403 = vpop.f32.mrf.mxu0
  %v5404 = vadd.f32 %v5235, %v5403
  %5405 = vmatmul.bf16.gmra.mxu0 %v3537
  %v5406 = vpop.f32.mrf.mxu0
  %v5407 = vadd.f32 %v5238, %v5406
  %v5408 = vpop.f32.mrf.mxu0
  %v5409 = vadd.f32 %v5240, %v5408
  %5410 = vmatmul.bf16.gmra.mxu0 %v3545
  %v5411 = vpop.f32.mrf.mxu0
  %v5412 = vadd.f32 %v5243, %v5411
  %v5413 = vpop.f32.mrf.mxu0
  %v5414 = vadd.f32 %v5245, %v5413
  %5415 = vmatmul.bf16.gmra.mxu0 %v3553
  %v5416 = vpop.f32.mrf.mxu0
  %v5417 = vadd.f32 %v5248, %v5416
  %v5418 = vpop.f32.mrf.mxu0
  %v5419 = vadd.f32 %v5250, %v5418
  %5420 = vmatmul.bf16.gmra.mxu0 %v3561
  %v5421 = vpop.f32.mrf.mxu0
  %v5422 = vadd.f32 %v5253, %v5421
  %v5423 = vpop.f32.mrf.mxu0
  %v5424 = vadd.f32 %v5255, %v5423
  %5425 = vdwg.mxu0
  %v5426 = vlaneseq
  %v5427 = vshrl.u32 %v5426, 7
  %v5428 = vadd.s32 %v5427, 8
  %v5429 = vadd.s32 %v5427, 16
  %v5430 = vadd.s32 %v5427, 24
  %v5431 = vadd.s32 %v5427, 32
  %v5432 = vadd.s32 %v5427, 40
  %v5433 = vadd.s32 %v5427, 48
  %v5434 = vadd.s32 %v5427, 56
  %v5435 = vadd.s32 %v5427, 64
  %v5436 = vadd.s32 %v5427, 72
  %v5437 = vadd.s32 %v5427, 80
  %v5438 = vadd.s32 %v5427, 88
  %v5439 = vadd.s32 %v5427, 96
  %v5440 = vadd.s32 %v5427, 104
  %v5441 = vadd.s32 %v5427, 112
  %v5442 = vadd.s32 %v5427, 120
  %v5443 = vadd.s32 %v5427, 128
  %v5444 = vadd.s32 %v5427, 136
  %v5445 = vadd.s32 %v5427, 144
  %v5446 = vadd.s32 %v5427, 152
  %v5447 = vadd.s32 %v5427, 160
  %v5448 = vadd.s32 %v5427, 168
  %v5449 = vadd.s32 %v5427, 176
  %v5450 = vadd.s32 %v5427, 184
  %v5451 = vadd.s32 %v5427, 192
  %v5452 = vadd.s32 %v5427, 200
  %v5453 = vadd.s32 %v5427, 208
  %v5454 = vadd.s32 %v5427, 216
  %v5455 = vadd.s32 %v5427, 224
  %v5456 = vadd.s32 %v5427, 232
  %v5457 = vadd.s32 %v5427, 240
  %v5458 = vadd.s32 %v5427, 248
  %v5459 = vld [vmem:[%s2] sm:$0xf]
  %v5460 = vperm.slane %v5459, 0
  %v5461 = vperm.slane %v5459, 1
  %v5462 = vperm.slane %v5459, 2
  %v5463 = vperm.slane %v5459, 3
  %vm5464 = vcmp.eq.s32.totalorder %v5427, %v5460
  %vm5465 = vcmp.eq.s32.totalorder %v5427, %v5461
  %vm5466 = vcmp.eq.s32.totalorder %v5427, %v5462
  %vm5467 = vcmp.eq.s32.totalorder %v5427, %v5463
  %vm5468 = vcmp.eq.s32.totalorder %v5428, %v5460
  %vm5469 = vcmp.eq.s32.totalorder %v5428, %v5461
  %vm5470 = vcmp.eq.s32.totalorder %v5428, %v5462
  %vm5471 = vcmp.eq.s32.totalorder %v5428, %v5463
  %vm5472 = vcmp.eq.s32.totalorder %v5429, %v5460
  %vm5473 = vcmp.eq.s32.totalorder %v5429, %v5461
  %vm5474 = vcmp.eq.s32.totalorder %v5429, %v5462
  %vm5475 = vcmp.eq.s32.totalorder %v5429, %v5463
  %vm5476 = vcmp.eq.s32.totalorder %v5430, %v5460
  %vm5477 = vcmp.eq.s32.totalorder %v5430, %v5461
  %vm5478 = vcmp.eq.s32.totalorder %v5430, %v5462
  %vm5479 = vcmp.eq.s32.totalorder %v5430, %v5463
  %vm5480 = vcmp.eq.s32.totalorder %v5431, %v5460
  %vm5481 = vcmp.eq.s32.totalorder %v5431, %v5461
  %vm5482 = vcmp.eq.s32.totalorder %v5431, %v5462
  %vm5483 = vcmp.eq.s32.totalorder %v5431, %v5463
  %vm5484 = vcmp.eq.s32.totalorder %v5432, %v5460
  %vm5485 = vcmp.eq.s32.totalorder %v5432, %v5461
  %vm5486 = vcmp.eq.s32.totalorder %v5432, %v5462
  %vm5487 = vcmp.eq.s32.totalorder %v5432, %v5463
  %vm5488 = vcmp.eq.s32.totalorder %v5433, %v5460
  %vm5489 = vcmp.eq.s32.totalorder %v5433, %v5461
  %vm5490 = vcmp.eq.s32.totalorder %v5433, %v5462
  %vm5491 = vcmp.eq.s32.totalorder %v5433, %v5463
  %vm5492 = vcmp.eq.s32.totalorder %v5434, %v5460
  %vm5493 = vcmp.eq.s32.totalorder %v5434, %v5461
  %vm5494 = vcmp.eq.s32.totalorder %v5434, %v5462
  %vm5495 = vcmp.eq.s32.totalorder %v5434, %v5463
  %vm5496 = vcmp.eq.s32.totalorder %v5435, %v5460
  %vm5497 = vcmp.eq.s32.totalorder %v5435, %v5461
  %vm5498 = vcmp.eq.s32.totalorder %v5435, %v5462
  %vm5499 = vcmp.eq.s32.totalorder %v5435, %v5463
  %vm5500 = vcmp.eq.s32.totalorder %v5436, %v5460
  %vm5501 = vcmp.eq.s32.totalorder %v5436, %v5461
  %vm5502 = vcmp.eq.s32.totalorder %v5436, %v5462
  %vm5503 = vcmp.eq.s32.totalorder %v5436, %v5463
  %vm5504 = vcmp.eq.s32.totalorder %v5437, %v5460
  %vm5505 = vcmp.eq.s32.totalorder %v5437, %v5461
  %vm5506 = vcmp.eq.s32.totalorder %v5437, %v5462
  %vm5507 = vcmp.eq.s32.totalorder %v5437, %v5463
  %vm5508 = vcmp.eq.s32.totalorder %v5438, %v5460
  %vm5509 = vcmp.eq.s32.totalorder %v5438, %v5461
  %vm5510 = vcmp.eq.s32.totalorder %v5438, %v5462
  %vm5511 = vcmp.eq.s32.totalorder %v5438, %v5463
  %vm5512 = vcmp.eq.s32.totalorder %v5439, %v5460
  %vm5513 = vcmp.eq.s32.totalorder %v5439, %v5461
  %vm5514 = vcmp.eq.s32.totalorder %v5439, %v5462
  %vm5515 = vcmp.eq.s32.totalorder %v5439, %v5463
  %vm5516 = vcmp.eq.s32.totalorder %v5440, %v5460
  %vm5517 = vcmp.eq.s32.totalorder %v5440, %v5461
  %vm5518 = vcmp.eq.s32.totalorder %v5440, %v5462
  %vm5519 = vcmp.eq.s32.totalorder %v5440, %v5463
  %vm5520 = vcmp.eq.s32.totalorder %v5441, %v5460
  %vm5521 = vcmp.eq.s32.totalorder %v5441, %v5461
  %vm5522 = vcmp.eq.s32.totalorder %v5441, %v5462
  %vm5523 = vcmp.eq.s32.totalorder %v5441, %v5463
  %vm5524 = vcmp.eq.s32.totalorder %v5442, %v5460
  %vm5525 = vcmp.eq.s32.totalorder %v5442, %v5461
  %vm5526 = vcmp.eq.s32.totalorder %v5442, %v5462
  %vm5527 = vcmp.eq.s32.totalorder %v5442, %v5463
  %vm5528 = vcmp.eq.s32.totalorder %v5443, %v5460
  %vm5529 = vcmp.eq.s32.totalorder %v5443, %v5461
  %vm5530 = vcmp.eq.s32.totalorder %v5443, %v5462
  %vm5531 = vcmp.eq.s32.totalorder %v5443, %v5463
  %vm5532 = vcmp.eq.s32.totalorder %v5444, %v5460
  %vm5533 = vcmp.eq.s32.totalorder %v5444, %v5461
  %vm5534 = vcmp.eq.s32.totalorder %v5444, %v5462
  %vm5535 = vcmp.eq.s32.totalorder %v5444, %v5463
  %vm5536 = vcmp.eq.s32.totalorder %v5445, %v5460
  %vm5537 = vcmp.eq.s32.totalorder %v5445, %v5461
  %vm5538 = vcmp.eq.s32.totalorder %v5445, %v5462
  %vm5539 = vcmp.eq.s32.totalorder %v5445, %v5463
  %vm5540 = vcmp.eq.s32.totalorder %v5446, %v5460
  %vm5541 = vcmp.eq.s32.totalorder %v5446, %v5461
  %vm5542 = vcmp.eq.s32.totalorder %v5446, %v5462
  %vm5543 = vcmp.eq.s32.totalorder %v5446, %v5463
  %vm5544 = vcmp.eq.s32.totalorder %v5447, %v5460
  %vm5545 = vcmp.eq.s32.totalorder %v5447, %v5461
  %vm5546 = vcmp.eq.s32.totalorder %v5447, %v5462
  %vm5547 = vcmp.eq.s32.totalorder %v5447, %v5463
  %vm5548 = vcmp.eq.s32.totalorder %v5448, %v5460
  %vm5549 = vcmp.eq.s32.totalorder %v5448, %v5461
  %vm5550 = vcmp.eq.s32.totalorder %v5448, %v5462
  %vm5551 = vcmp.eq.s32.totalorder %v5448, %v5463
  %vm5552 = vcmp.eq.s32.totalorder %v5449, %v5460
  %vm5553 = vcmp.eq.s32.totalorder %v5449, %v5461
  %vm5554 = vcmp.eq.s32.totalorder %v5449, %v5462
  %vm5555 = vcmp.eq.s32.totalorder %v5449, %v5463
  %vm5556 = vcmp.eq.s32.totalorder %v5450, %v5460
  %vm5557 = vcmp.eq.s32.totalorder %v5450, %v5461
  %vm5558 = vcmp.eq.s32.totalorder %v5450, %v5462
  %vm5559 = vcmp.eq.s32.totalorder %v5450, %v5463
  %vm5560 = vcmp.eq.s32.totalorder %v5451, %v5460
  %vm5561 = vcmp.eq.s32.totalorder %v5451, %v5461
  %vm5562 = vcmp.eq.s32.totalorder %v5451, %v5462
  %vm5563 = vcmp.eq.s32.totalorder %v5451, %v5463
  %vm5564 = vcmp.eq.s32.totalorder %v5452, %v5460
  %vm5565 = vcmp.eq.s32.totalorder %v5452, %v5461
  %vm5566 = vcmp.eq.s32.totalorder %v5452, %v5462
  %vm5567 = vcmp.eq.s32.totalorder %v5452, %v5463
  %vm5568 = vcmp.eq.s32.totalorder %v5453, %v5460
  %vm5569 = vcmp.eq.s32.totalorder %v5453, %v5461
  %vm5570 = vcmp.eq.s32.totalorder %v5453, %v5462
  %vm5571 = vcmp.eq.s32.totalorder %v5453, %v5463
  %vm5572 = vcmp.eq.s32.totalorder %v5454, %v5460
  %vm5573 = vcmp.eq.s32.totalorder %v5454, %v5461
  %vm5574 = vcmp.eq.s32.totalorder %v5454, %v5462
  %vm5575 = vcmp.eq.s32.totalorder %v5454, %v5463
  %vm5576 = vcmp.eq.s32.totalorder %v5455, %v5460
  %vm5577 = vcmp.eq.s32.totalorder %v5455, %v5461
  %vm5578 = vcmp.eq.s32.totalorder %v5455, %v5462
  %vm5579 = vcmp.eq.s32.totalorder %v5455, %v5463
  %vm5580 = vcmp.eq.s32.totalorder %v5456, %v5460
  %vm5581 = vcmp.eq.s32.totalorder %v5456, %v5461
  %vm5582 = vcmp.eq.s32.totalorder %v5456, %v5462
  %vm5583 = vcmp.eq.s32.totalorder %v5456, %v5463
  %vm5584 = vcmp.eq.s32.totalorder %v5457, %v5460
  %vm5585 = vcmp.eq.s32.totalorder %v5457, %v5461
  %vm5586 = vcmp.eq.s32.totalorder %v5457, %v5462
  %vm5587 = vcmp.eq.s32.totalorder %v5457, %v5463
  %vm5588 = vcmp.eq.s32.totalorder %v5458, %v5460
  %vm5589 = vcmp.eq.s32.totalorder %v5458, %v5461
  %vm5590 = vcmp.eq.s32.totalorder %v5458, %v5462
  %vm5591 = vcmp.eq.s32.totalorder %v5458, %v5463
  %v5592 = vsel %vm5464, 1.0, 0.0
  %v5593 = vsel %vm5465, 1.0, 0.0
  %v5594 = vsel %vm5466, 1.0, 0.0
  %v5595 = vsel %vm5467, 1.0, 0.0
  %v5596 = vsel %vm5468, 1.0, 0.0
  %v5597 = vsel %vm5469, 1.0, 0.0
  %v5598 = vsel %vm5470, 1.0, 0.0
  %v5599 = vsel %vm5471, 1.0, 0.0
  %v5600 = vsel %vm5472, 1.0, 0.0
  %v5601 = vsel %vm5473, 1.0, 0.0
  %v5602 = vsel %vm5474, 1.0, 0.0
  %v5603 = vsel %vm5475, 1.0, 0.0
  %v5604 = vsel %vm5476, 1.0, 0.0
  %v5605 = vsel %vm5477, 1.0, 0.0
  %v5606 = vsel %vm5478, 1.0, 0.0
  %v5607 = vsel %vm5479, 1.0, 0.0
  %v5608 = vsel %vm5480, 1.0, 0.0
  %v5609 = vsel %vm5481, 1.0, 0.0
  %v5610 = vsel %vm5482, 1.0, 0.0
  %v5611 = vsel %vm5483, 1.0, 0.0
  %v5612 = vsel %vm5484, 1.0, 0.0
  %v5613 = vsel %vm5485, 1.0, 0.0
  %v5614 = vsel %vm5486, 1.0, 0.0
  %v5615 = vsel %vm5487, 1.0, 0.0
  %v5616 = vsel %vm5488, 1.0, 0.0
  %v5617 = vsel %vm5489, 1.0, 0.0
  %v5618 = vsel %vm5490, 1.0, 0.0
  %v5619 = vsel %vm5491, 1.0, 0.0
  %v5620 = vsel %vm5492, 1.0, 0.0
  %v5621 = vsel %vm5493, 1.0, 0.0
  %v5622 = vsel %vm5494, 1.0, 0.0
  %v5623 = vsel %vm5495, 1.0, 0.0
  %v5624 = vsel %vm5496, 1.0, 0.0
  %v5625 = vsel %vm5497, 1.0, 0.0
  %v5626 = vsel %vm5498, 1.0, 0.0
  %v5627 = vsel %vm5499, 1.0, 0.0
  %v5628 = vsel %vm5500, 1.0, 0.0
  %v5629 = vsel %vm5501, 1.0, 0.0
  %v5630 = vsel %vm5502, 1.0, 0.0
  %v5631 = vsel %vm5503, 1.0, 0.0
  %v5632 = vsel %vm5504, 1.0, 0.0
  %v5633 = vsel %vm5505, 1.0, 0.0
  %v5634 = vsel %vm5506, 1.0, 0.0
  %v5635 = vsel %vm5507, 1.0, 0.0
  %v5636 = vsel %vm5508, 1.0, 0.0
  %v5637 = vsel %vm5509, 1.0, 0.0
  %v5638 = vsel %vm5510, 1.0, 0.0
  %v5639 = vsel %vm5511, 1.0, 0.0
  %v5640 = vsel %vm5512, 1.0, 0.0
  %v5641 = vsel %vm5513, 1.0, 0.0
  %v5642 = vsel %vm5514, 1.0, 0.0
  %v5643 = vsel %vm5515, 1.0, 0.0
  %v5644 = vsel %vm5516, 1.0, 0.0
  %v5645 = vsel %vm5517, 1.0, 0.0
  %v5646 = vsel %vm5518, 1.0, 0.0
  %v5647 = vsel %vm5519, 1.0, 0.0
  %v5648 = vsel %vm5520, 1.0, 0.0
  %v5649 = vsel %vm5521, 1.0, 0.0
  %v5650 = vsel %vm5522, 1.0, 0.0
  %v5651 = vsel %vm5523, 1.0, 0.0
  %v5652 = vsel %vm5524, 1.0, 0.0
  %v5653 = vsel %vm5525, 1.0, 0.0
  %v5654 = vsel %vm5526, 1.0, 0.0
  %v5655 = vsel %vm5527, 1.0, 0.0
  %v5656 = vsel %vm5528, 1.0, 0.0
  %v5657 = vsel %vm5529, 1.0, 0.0
  %v5658 = vsel %vm5530, 1.0, 0.0
  %v5659 = vsel %vm5531, 1.0, 0.0
  %v5660 = vsel %vm5532, 1.0, 0.0
  %v5661 = vsel %vm5533, 1.0, 0.0
  %v5662 = vsel %vm5534, 1.0, 0.0
  %v5663 = vsel %vm5535, 1.0, 0.0
  %v5664 = vsel %vm5536, 1.0, 0.0
  %v5665 = vsel %vm5537, 1.0, 0.0
  %v5666 = vsel %vm5538, 1.0, 0.0
  %v5667 = vsel %vm5539, 1.0, 0.0
  %v5668 = vsel %vm5540, 1.0, 0.0
  %v5669 = vsel %vm5541, 1.0, 0.0
  %v5670 = vsel %vm5542, 1.0, 0.0
  %v5671 = vsel %vm5543, 1.0, 0.0
  %v5672 = vsel %vm5544, 1.0, 0.0
  %v5673 = vsel %vm5545, 1.0, 0.0
  %v5674 = vsel %vm5546, 1.0, 0.0
  %v5675 = vsel %vm5547, 1.0, 0.0
  %v5676 = vsel %vm5548, 1.0, 0.0
  %v5677 = vsel %vm5549, 1.0, 0.0
  %v5678 = vsel %vm5550, 1.0, 0.0
  %v5679 = vsel %vm5551, 1.0, 0.0
  %v5680 = vsel %vm5552, 1.0, 0.0
  %v5681 = vsel %vm5553, 1.0, 0.0
  %v5682 = vsel %vm5554, 1.0, 0.0
  %v5683 = vsel %vm5555, 1.0, 0.0
  %v5684 = vsel %vm5556, 1.0, 0.0
  %v5685 = vsel %vm5557, 1.0, 0.0
  %v5686 = vsel %vm5558, 1.0, 0.0
  %v5687 = vsel %vm5559, 1.0, 0.0
  %v5688 = vsel %vm5560, 1.0, 0.0
  %v5689 = vsel %vm5561, 1.0, 0.0
  %v5690 = vsel %vm5562, 1.0, 0.0
  %v5691 = vsel %vm5563, 1.0, 0.0
  %v5692 = vsel %vm5564, 1.0, 0.0
  %v5693 = vsel %vm5565, 1.0, 0.0
  %v5694 = vsel %vm5566, 1.0, 0.0
  %v5695 = vsel %vm5567, 1.0, 0.0
  %v5696 = vsel %vm5568, 1.0, 0.0
  %v5697 = vsel %vm5569, 1.0, 0.0
  %v5698 = vsel %vm5570, 1.0, 0.0
  %v5699 = vsel %vm5571, 1.0, 0.0
  %v5700 = vsel %vm5572, 1.0, 0.0
  %v5701 = vsel %vm5573, 1.0, 0.0
  %v5702 = vsel %vm5574, 1.0, 0.0
  %v5703 = vsel %vm5575, 1.0, 0.0
  %v5704 = vsel %vm5576, 1.0, 0.0
  %v5705 = vsel %vm5577, 1.0, 0.0
  %v5706 = vsel %vm5578, 1.0, 0.0
  %v5707 = vsel %vm5579, 1.0, 0.0
  %v5708 = vsel %vm5580, 1.0, 0.0
  %v5709 = vsel %vm5581, 1.0, 0.0
  %v5710 = vsel %vm5582, 1.0, 0.0
  %v5711 = vsel %vm5583, 1.0, 0.0
  %v5712 = vsel %vm5584, 1.0, 0.0
  %v5713 = vsel %vm5585, 1.0, 0.0
  %v5714 = vsel %vm5586, 1.0, 0.0
  %v5715 = vsel %vm5587, 1.0, 0.0
  %v5716 = vsel %vm5588, 1.0, 0.0
  %v5717 = vsel %vm5589, 1.0, 0.0
  %v5718 = vsel %vm5590, 1.0, 0.0
  %v5719 = vsel %vm5591, 1.0, 0.0
  %v5720 = vpack.c.bf16 %v5596, %v5592
  %v5721 = vpack.c.bf16 %v5597, %v5593
  %v5722 = vpack.c.bf16 %v5598, %v5594
  %v5723 = vpack.c.bf16 %v5599, %v5595
  %v5724 = vpack.c.bf16 %v5604, %v5600
  %v5725 = vpack.c.bf16 %v5605, %v5601
  %v5726 = vpack.c.bf16 %v5606, %v5602
  %v5727 = vpack.c.bf16 %v5607, %v5603
  %v5728 = vpack.c.bf16 %v5612, %v5608
  %v5729 = vpack.c.bf16 %v5613, %v5609
  %v5730 = vpack.c.bf16 %v5614, %v5610
  %v5731 = vpack.c.bf16 %v5615, %v5611
  %v5732 = vpack.c.bf16 %v5620, %v5616
  %v5733 = vpack.c.bf16 %v5621, %v5617
  %v5734 = vpack.c.bf16 %v5622, %v5618
  %v5735 = vpack.c.bf16 %v5623, %v5619
  %v5736 = vpack.c.bf16 %v5628, %v5624
  %v5737 = vpack.c.bf16 %v5629, %v5625
  %v5738 = vpack.c.bf16 %v5630, %v5626
  %v5739 = vpack.c.bf16 %v5631, %v5627
  %v5740 = vpack.c.bf16 %v5636, %v5632
  %v5741 = vpack.c.bf16 %v5637, %v5633
  %v5742 = vpack.c.bf16 %v5638, %v5634
  %v5743 = vpack.c.bf16 %v5639, %v5635
  %v5744 = vpack.c.bf16 %v5644, %v5640
  %v5745 = vpack.c.bf16 %v5645, %v5641
  %v5746 = vpack.c.bf16 %v5646, %v5642
  %v5747 = vpack.c.bf16 %v5647, %v5643
  %v5748 = vpack.c.bf16 %v5652, %v5648
  %v5749 = vpack.c.bf16 %v5653, %v5649
  %v5750 = vpack.c.bf16 %v5654, %v5650
  %v5751 = vpack.c.bf16 %v5655, %v5651
  %v5752 = vpack.c.bf16 %v5660, %v5656
  %v5753 = vpack.c.bf16 %v5661, %v5657
  %v5754 = vpack.c.bf16 %v5662, %v5658
  %v5755 = vpack.c.bf16 %v5663, %v5659
  %v5756 = vpack.c.bf16 %v5668, %v5664
  %v5757 = vpack.c.bf16 %v5669, %v5665
  %v5758 = vpack.c.bf16 %v5670, %v5666
  %v5759 = vpack.c.bf16 %v5671, %v5667
  %v5760 = vpack.c.bf16 %v5676, %v5672
  %v5761 = vpack.c.bf16 %v5677, %v5673
  %v5762 = vpack.c.bf16 %v5678, %v5674
  %v5763 = vpack.c.bf16 %v5679, %v5675
  %v5764 = vpack.c.bf16 %v5684, %v5680
  %v5765 = vpack.c.bf16 %v5685, %v5681
  %v5766 = vpack.c.bf16 %v5686, %v5682
  %v5767 = vpack.c.bf16 %v5687, %v5683
  %v5768 = vpack.c.bf16 %v5692, %v5688
  %v5769 = vpack.c.bf16 %v5693, %v5689
  %v5770 = vpack.c.bf16 %v5694, %v5690
  %v5771 = vpack.c.bf16 %v5695, %v5691
  %v5772 = vpack.c.bf16 %v5700, %v5696
  %v5773 = vpack.c.bf16 %v5701, %v5697
  %v5774 = vpack.c.bf16 %v5702, %v5698
  %v5775 = vpack.c.bf16 %v5703, %v5699
  %v5776 = vpack.c.bf16 %v5708, %v5704
  %v5777 = vpack.c.bf16 %v5709, %v5705
  %v5778 = vpack.c.bf16 %v5710, %v5706
  %v5779 = vpack.c.bf16 %v5711, %v5707
  %v5780 = vpack.c.bf16 %v5716, %v5712
  %v5781 = vpack.c.bf16 %v5717, %v5713
  %v5782 = vpack.c.bf16 %v5718, %v5714
  %v5783 = vpack.c.bf16 %v5719, %v5715
  %v5784 = vld [vmem:[%s6] sm:$0xff]
  %v5785 = vld [vmem:[%s6 + $0x8] sm:$0xff]
  %v5786 = vld [vmem:[%s6 + $0x10] sm:$0xff]
  %v5787 = vld [vmem:[%s6 + $0x18] sm:$0xff]
  %v5788 = vld [vmem:[%s6 + $0x20] sm:$0xff]
  %v5789 = vld [vmem:[%s6 + $0x28] sm:$0xff]
  %v5790 = vld [vmem:[%s6 + $0x30] sm:$0xff]
  %v5791 = vld [vmem:[%s6 + $0x38] sm:$0xff]
  %v5792 = vld [vmem:[%s6 + $0x40] sm:$0xff]
  %v5793 = vld [vmem:[%s6 + $0x48] sm:$0xff]
  %v5794 = vld [vmem:[%s6 + $0x50] sm:$0xff]
  %v5795 = vld [vmem:[%s6 + $0x58] sm:$0xff]
  %v5796 = vld [vmem:[%s6 + $0x60] sm:$0xff]
  %v5797 = vld [vmem:[%s6 + $0x68] sm:$0xff]
  %v5798 = vld [vmem:[%s6 + $0x70] sm:$0xff]
  %v5799 = vld [vmem:[%s6 + $0x78] sm:$0xff]
  %v5800 = vld [vmem:[%s6 + $0x80] sm:$0xff]
  %v5801 = vld [vmem:[%s6 + $0x88] sm:$0xff]
  %v5802 = vld [vmem:[%s6 + $0x90] sm:$0xff]
  %v5803 = vld [vmem:[%s6 + $0x98] sm:$0xff]
  %v5804 = vld [vmem:[%s6 + $0xa0] sm:$0xff]
  %v5805 = vld [vmem:[%s6 + $0xa8] sm:$0xff]
  %v5806 = vld [vmem:[%s6 + $0xb0] sm:$0xff]
  %v5807 = vld [vmem:[%s6 + $0xb8] sm:$0xff]
  %v5808 = vld [vmem:[%s6 + $0xc0] sm:$0xff]
  %v5809 = vld [vmem:[%s6 + $0xc8] sm:$0xff]
  %v5810 = vld [vmem:[%s6 + $0xd0] sm:$0xff]
  %v5811 = vld [vmem:[%s6 + $0xd8] sm:$0xff]
  %v5812 = vld [vmem:[%s6 + $0xe0] sm:$0xff]
  %v5813 = vld [vmem:[%s6 + $0xe8] sm:$0xff]
  %v5814 = vld [vmem:[%s6 + $0xf0] sm:$0xff]
  %v5815 = vld [vmem:[%s6 + $0xf8] sm:$0xff]
  %v5816 = vpack.c.bf16 %v5269, %v5267
  %v5817 = vpack.c.bf16 %v5274, %v5272
  %v5818 = vpack.c.bf16 %v5279, %v5277
  %v5819 = vpack.c.bf16 %v5284, %v5282
  %v5820 = vpack.c.bf16 %v5289, %v5287
  %v5821 = vpack.c.bf16 %v5294, %v5292
  %v5822 = vpack.c.bf16 %v5299, %v5297
  %v5823 = vpack.c.bf16 %v5304, %v5302
  %v5824 = vpack.c.bf16 %v5309, %v5307
  %v5825 = vpack.c.bf16 %v5314, %v5312
  %v5826 = vpack.c.bf16 %v5319, %v5317
  %v5827 = vpack.c.bf16 %v5324, %v5322
  %v5828 = vpack.c.bf16 %v5329, %v5327
  %v5829 = vpack.c.bf16 %v5334, %v5332
  %v5830 = vpack.c.bf16 %v5339, %v5337
  %v5831 = vpack.c.bf16 %v5344, %v5342
  %v5832 = vpack.c.bf16 %v5349, %v5347
  %v5833 = vpack.c.bf16 %v5354, %v5352
  %v5834 = vpack.c.bf16 %v5359, %v5357
  %v5835 = vpack.c.bf16 %v5364, %v5362
  %v5836 = vpack.c.bf16 %v5369, %v5367
  %v5837 = vpack.c.bf16 %v5374, %v5372
  %v5838 = vpack.c.bf16 %v5379, %v5377
  %v5839 = vpack.c.bf16 %v5384, %v5382
  %v5840 = vpack.c.bf16 %v5389, %v5387
  %v5841 = vpack.c.bf16 %v5394, %v5392
  %v5842 = vpack.c.bf16 %v5399, %v5397
  %v5843 = vpack.c.bf16 %v5404, %v5402
  %v5844 = vpack.c.bf16 %v5409, %v5407
  %v5845 = vpack.c.bf16 %v5414, %v5412
  %v5846 = vpack.c.bf16 %v5419, %v5417
  %v5847 = vpack.c.bf16 %v5424, %v5422
  %5848 = vmatpush.bf16.msra.mxu0 %v5823
  %5849 = vmatpush.bf16.msra.mxu0 %v5822
  %5850 = vmatpush.bf16.msra.mxu0 %v5821
  %5851 = vmatpush.bf16.msra.mxu0 %v5820
  %5852 = vmatpush.bf16.msra.mxu0 %v5819
  %5853 = vmatpush.bf16.msra.mxu0 %v5818
  %5854 = vmatpush.bf16.msra.mxu0 %v5817
  %5855 = vmatpush.bf16.msra.mxu0 %v5816
  %5856 = vmatmul.bf16.gmra.mxu0 %v5720
  %v5857 = vpop.f32.mrf.mxu0
  %v5858 = vadd.f32 0.0, %v5857
  %v5859 = vpop.f32.mrf.mxu0
  %v5860 = vadd.f32 0.0, %v5859
  %5861 = vmatmul.bf16.gmra.mxu0 %v5724
  %v5862 = vpop.f32.mrf.mxu0
  %v5863 = vadd.f32 0.0, %v5862
  %v5864 = vpop.f32.mrf.mxu0
  %v5865 = vadd.f32 0.0, %v5864
  %5866 = vmatmul.bf16.gmra.mxu0 %v5728
  %v5867 = vpop.f32.mrf.mxu0
  %v5868 = vadd.f32 0.0, %v5867
  %v5869 = vpop.f32.mrf.mxu0
  %v5870 = vadd.f32 0.0, %v5869
  %5871 = vmatmul.bf16.gmra.mxu0 %v5732
  %v5872 = vpop.f32.mrf.mxu0
  %v5873 = vadd.f32 0.0, %v5872
  %v5874 = vpop.f32.mrf.mxu0
  %v5875 = vadd.f32 0.0, %v5874
  %5876 = vmatmul.bf16.gmra.mxu0 %v5736
  %v5877 = vpop.f32.mrf.mxu0
  %v5878 = vadd.f32 0.0, %v5877
  %v5879 = vpop.f32.mrf.mxu0
  %v5880 = vadd.f32 0.0, %v5879
  %5881 = vmatmul.bf16.gmra.mxu0 %v5740
  %v5882 = vpop.f32.mrf.mxu0
  %v5883 = vadd.f32 0.0, %v5882
  %v5884 = vpop.f32.mrf.mxu0
  %v5885 = vadd.f32 0.0, %v5884
  %5886 = vmatmul.bf16.gmra.mxu0 %v5744
  %v5887 = vpop.f32.mrf.mxu0
  %v5888 = vadd.f32 0.0, %v5887
  %v5889 = vpop.f32.mrf.mxu0
  %v5890 = vadd.f32 0.0, %v5889
  %5891 = vmatmul.bf16.gmra.mxu0 %v5748
  %v5892 = vpop.f32.mrf.mxu0
  %v5893 = vadd.f32 0.0, %v5892
  %v5894 = vpop.f32.mrf.mxu0
  %v5895 = vadd.f32 0.0, %v5894
  %5896 = vmatmul.bf16.gmra.mxu0 %v5752
  %v5897 = vpop.f32.mrf.mxu0
  %v5898 = vadd.f32 0.0, %v5897
  %v5899 = vpop.f32.mrf.mxu0
  %v5900 = vadd.f32 0.0, %v5899
  %5901 = vmatmul.bf16.gmra.mxu0 %v5756
  %v5902 = vpop.f32.mrf.mxu0
  %v5903 = vadd.f32 0.0, %v5902
  %v5904 = vpop.f32.mrf.mxu0
  %v5905 = vadd.f32 0.0, %v5904
  %5906 = vmatmul.bf16.gmra.mxu0 %v5760
  %v5907 = vpop.f32.mrf.mxu0
  %v5908 = vadd.f32 0.0, %v5907
  %v5909 = vpop.f32.mrf.mxu0
  %v5910 = vadd.f32 0.0, %v5909
  %5911 = vmatmul.bf16.gmra.mxu0 %v5764
  %v5912 = vpop.f32.mrf.mxu0
  %v5913 = vadd.f32 0.0, %v5912
  %v5914 = vpop.f32.mrf.mxu0
  %v5915 = vadd.f32 0.0, %v5914
  %5916 = vmatmul.bf16.gmra.mxu0 %v5768
  %v5917 = vpop.f32.mrf.mxu0
  %v5918 = vadd.f32 0.0, %v5917
  %v5919 = vpop.f32.mrf.mxu0
  %v5920 = vadd.f32 0.0, %v5919
  %5921 = vmatmul.bf16.gmra.mxu0 %v5772
  %v5922 = vpop.f32.mrf.mxu0
  %v5923 = vadd.f32 0.0, %v5922
  %v5924 = vpop.f32.mrf.mxu0
  %v5925 = vadd.f32 0.0, %v5924
  %5926 = vmatmul.bf16.gmra.mxu0 %v5776
  %v5927 = vpop.f32.mrf.mxu0
  %v5928 = vadd.f32 0.0, %v5927
  %v5929 = vpop.f32.mrf.mxu0
  %v5930 = vadd.f32 0.0, %v5929
  %5931 = vmatmul.bf16.gmra.mxu0 %v5780
  %v5932 = vpop.f32.mrf.mxu0
  %v5933 = vadd.f32 0.0, %v5932
  %v5934 = vpop.f32.mrf.mxu0
  %v5935 = vadd.f32 0.0, %v5934
  %5936 = vdwg.mxu0
  %5937 = vmatpush.bf16.msra.mxu0 %v5831
  %5938 = vmatpush.bf16.msra.mxu0 %v5830
  %5939 = vmatpush.bf16.msra.mxu0 %v5829
  %5940 = vmatpush.bf16.msra.mxu0 %v5828
  %5941 = vmatpush.bf16.msra.mxu0 %v5827
  %5942 = vmatpush.bf16.msra.mxu0 %v5826
  %5943 = vmatpush.bf16.msra.mxu0 %v5825
  %5944 = vmatpush.bf16.msra.mxu0 %v5824
  %5945 = vmatmul.bf16.gmra.mxu0 %v5721
  %v5946 = vpop.f32.mrf.mxu0
  %v5947 = vadd.f32 %v5858, %v5946
  %v5948 = vpop.f32.mrf.mxu0
  %v5949 = vadd.f32 %v5860, %v5948
  %5950 = vmatmul.bf16.gmra.mxu0 %v5725
  %v5951 = vpop.f32.mrf.mxu0
  %v5952 = vadd.f32 %v5863, %v5951
  %v5953 = vpop.f32.mrf.mxu0
  %v5954 = vadd.f32 %v5865, %v5953
  %5955 = vmatmul.bf16.gmra.mxu0 %v5729
  %v5956 = vpop.f32.mrf.mxu0
  %v5957 = vadd.f32 %v5868, %v5956
  %v5958 = vpop.f32.mrf.mxu0
  %v5959 = vadd.f32 %v5870, %v5958
  %5960 = vmatmul.bf16.gmra.mxu0 %v5733
  %v5961 = vpop.f32.mrf.mxu0
  %v5962 = vadd.f32 %v5873, %v5961
  %v5963 = vpop.f32.mrf.mxu0
  %v5964 = vadd.f32 %v5875, %v5963
  %5965 = vmatmul.bf16.gmra.mxu0 %v5737
  %v5966 = vpop.f32.mrf.mxu0
  %v5967 = vadd.f32 %v5878, %v5966
  %v5968 = vpop.f32.mrf.mxu0
  %v5969 = vadd.f32 %v5880, %v5968
  %5970 = vmatmul.bf16.gmra.mxu0 %v5741
  %v5971 = vpop.f32.mrf.mxu0
  %v5972 = vadd.f32 %v5883, %v5971
  %v5973 = vpop.f32.mrf.mxu0
  %v5974 = vadd.f32 %v5885, %v5973
  %5975 = vmatmul.bf16.gmra.mxu0 %v5745
  %v5976 = vpop.f32.mrf.mxu0
  %v5977 = vadd.f32 %v5888, %v5976
  %v5978 = vpop.f32.mrf.mxu0
  %v5979 = vadd.f32 %v5890, %v5978
  %5980 = vmatmul.bf16.gmra.mxu0 %v5749
  %v5981 = vpop.f32.mrf.mxu0
  %v5982 = vadd.f32 %v5893, %v5981
  %v5983 = vpop.f32.mrf.mxu0
  %v5984 = vadd.f32 %v5895, %v5983
  %5985 = vmatmul.bf16.gmra.mxu0 %v5753
  %v5986 = vpop.f32.mrf.mxu0
  %v5987 = vadd.f32 %v5898, %v5986
  %v5988 = vpop.f32.mrf.mxu0
  %v5989 = vadd.f32 %v5900, %v5988
  %5990 = vmatmul.bf16.gmra.mxu0 %v5757
  %v5991 = vpop.f32.mrf.mxu0
  %v5992 = vadd.f32 %v5903, %v5991
  %v5993 = vpop.f32.mrf.mxu0
  %v5994 = vadd.f32 %v5905, %v5993
  %5995 = vmatmul.bf16.gmra.mxu0 %v5761
  %v5996 = vpop.f32.mrf.mxu0
  %v5997 = vadd.f32 %v5908, %v5996
  %v5998 = vpop.f32.mrf.mxu0
  %v5999 = vadd.f32 %v5910, %v5998
  %6000 = vmatmul.bf16.gmra.mxu0 %v5765
  %v6001 = vpop.f32.mrf.mxu0
  %v6002 = vadd.f32 %v5913, %v6001
  %v6003 = vpop.f32.mrf.mxu0
  %v6004 = vadd.f32 %v5915, %v6003
  %6005 = vmatmul.bf16.gmra.mxu0 %v5769
  %v6006 = vpop.f32.mrf.mxu0
  %v6007 = vadd.f32 %v5918, %v6006
  %v6008 = vpop.f32.mrf.mxu0
  %v6009 = vadd.f32 %v5920, %v6008
  %6010 = vmatmul.bf16.gmra.mxu0 %v5773
  %v6011 = vpop.f32.mrf.mxu0
  %v6012 = vadd.f32 %v5923, %v6011
  %v6013 = vpop.f32.mrf.mxu0
  %v6014 = vadd.f32 %v5925, %v6013
  %6015 = vmatmul.bf16.gmra.mxu0 %v5777
  %v6016 = vpop.f32.mrf.mxu0
  %v6017 = vadd.f32 %v5928, %v6016
  %v6018 = vpop.f32.mrf.mxu0
  %v6019 = vadd.f32 %v5930, %v6018
  %6020 = vmatmul.bf16.gmra.mxu0 %v5781
  %v6021 = vpop.f32.mrf.mxu0
  %v6022 = vadd.f32 %v5933, %v6021
  %v6023 = vpop.f32.mrf.mxu0
  %v6024 = vadd.f32 %v5935, %v6023
  %6025 = vdwg.mxu0
  %6026 = vmatpush.bf16.msra.mxu0 %v5839
  %6027 = vmatpush.bf16.msra.mxu0 %v5838
  %6028 = vmatpush.bf16.msra.mxu0 %v5837
  %6029 = vmatpush.bf16.msra.mxu0 %v5836
  %6030 = vmatpush.bf16.msra.mxu0 %v5835
  %6031 = vmatpush.bf16.msra.mxu0 %v5834
  %6032 = vmatpush.bf16.msra.mxu0 %v5833
  %6033 = vmatpush.bf16.msra.mxu0 %v5832
  %6034 = vmatmul.bf16.gmra.mxu0 %v5722
  %v6035 = vpop.f32.mrf.mxu0
  %v6036 = vadd.f32 %v5947, %v6035
  %v6037 = vpop.f32.mrf.mxu0
  %v6038 = vadd.f32 %v5949, %v6037
  %6039 = vmatmul.bf16.gmra.mxu0 %v5726
  %v6040 = vpop.f32.mrf.mxu0
  %v6041 = vadd.f32 %v5952, %v6040
  %v6042 = vpop.f32.mrf.mxu0
  %v6043 = vadd.f32 %v5954, %v6042
  %6044 = vmatmul.bf16.gmra.mxu0 %v5730
  %v6045 = vpop.f32.mrf.mxu0
  %v6046 = vadd.f32 %v5957, %v6045
  %v6047 = vpop.f32.mrf.mxu0
  %v6048 = vadd.f32 %v5959, %v6047
  %6049 = vmatmul.bf16.gmra.mxu0 %v5734
  %v6050 = vpop.f32.mrf.mxu0
  %v6051 = vadd.f32 %v5962, %v6050
  %v6052 = vpop.f32.mrf.mxu0
  %v6053 = vadd.f32 %v5964, %v6052
  %6054 = vmatmul.bf16.gmra.mxu0 %v5738
  %v6055 = vpop.f32.mrf.mxu0
  %v6056 = vadd.f32 %v5967, %v6055
  %v6057 = vpop.f32.mrf.mxu0
  %v6058 = vadd.f32 %v5969, %v6057
  %6059 = vmatmul.bf16.gmra.mxu0 %v5742
  %v6060 = vpop.f32.mrf.mxu0
  %v6061 = vadd.f32 %v5972, %v6060
  %v6062 = vpop.f32.mrf.mxu0
  %v6063 = vadd.f32 %v5974, %v6062
  %6064 = vmatmul.bf16.gmra.mxu0 %v5746
  %v6065 = vpop.f32.mrf.mxu0
  %v6066 = vadd.f32 %v5977, %v6065
  %v6067 = vpop.f32.mrf.mxu0
  %v6068 = vadd.f32 %v5979, %v6067
  %6069 = vmatmul.bf16.gmra.mxu0 %v5750
  %v6070 = vpop.f32.mrf.mxu0
  %v6071 = vadd.f32 %v5982, %v6070
  %v6072 = vpop.f32.mrf.mxu0
  %v6073 = vadd.f32 %v5984, %v6072
  %6074 = vmatmul.bf16.gmra.mxu0 %v5754
  %v6075 = vpop.f32.mrf.mxu0
  %v6076 = vadd.f32 %v5987, %v6075
  %v6077 = vpop.f32.mrf.mxu0
  %v6078 = vadd.f32 %v5989, %v6077
  %6079 = vmatmul.bf16.gmra.mxu0 %v5758
  %v6080 = vpop.f32.mrf.mxu0
  %v6081 = vadd.f32 %v5992, %v6080
  %v6082 = vpop.f32.mrf.mxu0
  %v6083 = vadd.f32 %v5994, %v6082
  %6084 = vmatmul.bf16.gmra.mxu0 %v5762
  %v6085 = vpop.f32.mrf.mxu0
  %v6086 = vadd.f32 %v5997, %v6085
  %v6087 = vpop.f32.mrf.mxu0
  %v6088 = vadd.f32 %v5999, %v6087
  %6089 = vmatmul.bf16.gmra.mxu0 %v5766
  %v6090 = vpop.f32.mrf.mxu0
  %v6091 = vadd.f32 %v6002, %v6090
  %v6092 = vpop.f32.mrf.mxu0
  %v6093 = vadd.f32 %v6004, %v6092
  %6094 = vmatmul.bf16.gmra.mxu0 %v5770
  %v6095 = vpop.f32.mrf.mxu0
  %v6096 = vadd.f32 %v6007, %v6095
  %v6097 = vpop.f32.mrf.mxu0
  %v6098 = vadd.f32 %v6009, %v6097
  %6099 = vmatmul.bf16.gmra.mxu0 %v5774
  %v6100 = vpop.f32.mrf.mxu0
  %v6101 = vadd.f32 %v6012, %v6100
  %v6102 = vpop.f32.mrf.mxu0
  %v6103 = vadd.f32 %v6014, %v6102
  %6104 = vmatmul.bf16.gmra.mxu0 %v5778
  %v6105 = vpop.f32.mrf.mxu0
  %v6106 = vadd.f32 %v6017, %v6105
  %v6107 = vpop.f32.mrf.mxu0
  %v6108 = vadd.f32 %v6019, %v6107
  %6109 = vmatmul.bf16.gmra.mxu0 %v5782
  %v6110 = vpop.f32.mrf.mxu0
  %v6111 = vadd.f32 %v6022, %v6110
  %v6112 = vpop.f32.mrf.mxu0
  %v6113 = vadd.f32 %v6024, %v6112
  %6114 = vdwg.mxu0
  %6115 = vmatpush.bf16.msra.mxu0 %v5847
  %6116 = vmatpush.bf16.msra.mxu0 %v5846
  %6117 = vmatpush.bf16.msra.mxu0 %v5845
  %6118 = vmatpush.bf16.msra.mxu0 %v5844
  %6119 = vmatpush.bf16.msra.mxu0 %v5843
  %6120 = vmatpush.bf16.msra.mxu0 %v5842
  %6121 = vmatpush.bf16.msra.mxu0 %v5841
  %6122 = vmatpush.bf16.msra.mxu0 %v5840
  %6123 = vmatmul.bf16.gmra.mxu0 %v5723
  %v6124 = vpop.f32.mrf.mxu0
  %v6125 = vadd.f32 %v6036, %v6124
  %v6126 = vpop.f32.mrf.mxu0
  %v6127 = vadd.f32 %v6038, %v6126
  %6128 = vmatmul.bf16.gmra.mxu0 %v5727
  %v6129 = vpop.f32.mrf.mxu0
  %v6130 = vadd.f32 %v6041, %v6129
  %v6131 = vpop.f32.mrf.mxu0
  %v6132 = vadd.f32 %v6043, %v6131
  %6133 = vmatmul.bf16.gmra.mxu0 %v5731
  %v6134 = vpop.f32.mrf.mxu0
  %v6135 = vadd.f32 %v6046, %v6134
  %v6136 = vpop.f32.mrf.mxu0
  %v6137 = vadd.f32 %v6048, %v6136
  %6138 = vmatmul.bf16.gmra.mxu0 %v5735
  %v6139 = vpop.f32.mrf.mxu0
  %v6140 = vadd.f32 %v6051, %v6139
  %v6141 = vpop.f32.mrf.mxu0
  %v6142 = vadd.f32 %v6053, %v6141
  %6143 = vmatmul.bf16.gmra.mxu0 %v5739
  %v6144 = vpop.f32.mrf.mxu0
  %v6145 = vadd.f32 %v6056, %v6144
  %v6146 = vpop.f32.mrf.mxu0
  %v6147 = vadd.f32 %v6058, %v6146
  %6148 = vmatmul.bf16.gmra.mxu0 %v5743
  %v6149 = vpop.f32.mrf.mxu0
  %v6150 = vadd.f32 %v6061, %v6149
  %v6151 = vpop.f32.mrf.mxu0
  %v6152 = vadd.f32 %v6063, %v6151
  %6153 = vmatmul.bf16.gmra.mxu0 %v5747
  %v6154 = vpop.f32.mrf.mxu0
  %v6155 = vadd.f32 %v6066, %v6154
  %v6156 = vpop.f32.mrf.mxu0
  %v6157 = vadd.f32 %v6068, %v6156
  %6158 = vmatmul.bf16.gmra.mxu0 %v5751
  %v6159 = vpop.f32.mrf.mxu0
  %v6160 = vadd.f32 %v6071, %v6159
  %v6161 = vpop.f32.mrf.mxu0
  %v6162 = vadd.f32 %v6073, %v6161
  %6163 = vmatmul.bf16.gmra.mxu0 %v5755
  %v6164 = vpop.f32.mrf.mxu0
  %v6165 = vadd.f32 %v6076, %v6164
  %v6166 = vpop.f32.mrf.mxu0
  %v6167 = vadd.f32 %v6078, %v6166
  %6168 = vmatmul.bf16.gmra.mxu0 %v5759
  %v6169 = vpop.f32.mrf.mxu0
  %v6170 = vadd.f32 %v6081, %v6169
  %v6171 = vpop.f32.mrf.mxu0
  %v6172 = vadd.f32 %v6083, %v6171
  %6173 = vmatmul.bf16.gmra.mxu0 %v5763
  %v6174 = vpop.f32.mrf.mxu0
  %v6175 = vadd.f32 %v6086, %v6174
  %v6176 = vpop.f32.mrf.mxu0
  %v6177 = vadd.f32 %v6088, %v6176
  %6178 = vmatmul.bf16.gmra.mxu0 %v5767
  %v6179 = vpop.f32.mrf.mxu0
  %v6180 = vadd.f32 %v6091, %v6179
  %v6181 = vpop.f32.mrf.mxu0
  %v6182 = vadd.f32 %v6093, %v6181
  %6183 = vmatmul.bf16.gmra.mxu0 %v5771
  %v6184 = vpop.f32.mrf.mxu0
  %v6185 = vadd.f32 %v6096, %v6184
  %v6186 = vpop.f32.mrf.mxu0
  %v6187 = vadd.f32 %v6098, %v6186
  %6188 = vmatmul.bf16.gmra.mxu0 %v5775
  %v6189 = vpop.f32.mrf.mxu0
  %v6190 = vadd.f32 %v6101, %v6189
  %v6191 = vpop.f32.mrf.mxu0
  %v6192 = vadd.f32 %v6103, %v6191
  %6193 = vmatmul.bf16.gmra.mxu0 %v5779
  %v6194 = vpop.f32.mrf.mxu0
  %v6195 = vadd.f32 %v6106, %v6194
  %v6196 = vpop.f32.mrf.mxu0
  %v6197 = vadd.f32 %v6108, %v6196
  %6198 = vmatmul.bf16.gmra.mxu0 %v5783
  %v6199 = vpop.f32.mrf.mxu0
  %v6200 = vadd.f32 %v6111, %v6199
  %v6201 = vpop.f32.mrf.mxu0
  %v6202 = vadd.f32 %v6113, %v6201
  %6203 = vdwg.mxu0
  %v6204 = vadd.f32 %v5784, %v6125
  %v6205 = vadd.f32 %v5785, %v6127
  %v6206 = vadd.f32 %v5786, %v6130
  %v6207 = vadd.f32 %v5787, %v6132
  %v6208 = vadd.f32 %v5788, %v6135
  %v6209 = vadd.f32 %v5789, %v6137
  %v6210 = vadd.f32 %v5790, %v6140
  %v6211 = vadd.f32 %v5791, %v6142
  %v6212 = vadd.f32 %v5792, %v6145
  %v6213 = vadd.f32 %v5793, %v6147
  %v6214 = vadd.f32 %v5794, %v6150
  %v6215 = vadd.f32 %v5795, %v6152
  %v6216 = vadd.f32 %v5796, %v6155
  %v6217 = vadd.f32 %v5797, %v6157
  %v6218 = vadd.f32 %v5798, %v6160
  %v6219 = vadd.f32 %v5799, %v6162
  %v6220 = vadd.f32 %v5800, %v6165
  %v6221 = vadd.f32 %v5801, %v6167
  %v6222 = vadd.f32 %v5802, %v6170
  %v6223 = vadd.f32 %v5803, %v6172
  %v6224 = vadd.f32 %v5804, %v6175
  %v6225 = vadd.f32 %v5805, %v6177
  %v6226 = vadd.f32 %v5806, %v6180
  %v6227 = vadd.f32 %v5807, %v6182
  %v6228 = vadd.f32 %v5808, %v6185
  %v6229 = vadd.f32 %v5809, %v6187
  %v6230 = vadd.f32 %v5810, %v6190
  %v6231 = vadd.f32 %v5811, %v6192
  %v6232 = vadd.f32 %v5812, %v6195
  %v6233 = vadd.f32 %v5813, %v6197
  %v6234 = vadd.f32 %v5814, %v6200
  %v6235 = vadd.f32 %v5815, %v6202
  %6236 = vst [vmem:[%s6] sm:$0xff] %v6204
  %6237 = vst [vmem:[%s6 + $0x8] sm:$0xff] %v6205
  %6238 = vst [vmem:[%s6 + $0x10] sm:$0xff] %v6206
  %6239 = vst [vmem:[%s6 + $0x18] sm:$0xff] %v6207
  %6240 = vst [vmem:[%s6 + $0x20] sm:$0xff] %v6208
  %6241 = vst [vmem:[%s6 + $0x28] sm:$0xff] %v6209
  %6242 = vst [vmem:[%s6 + $0x30] sm:$0xff] %v6210
  %6243 = vst [vmem:[%s6 + $0x38] sm:$0xff] %v6211
  %6244 = vst [vmem:[%s6 + $0x40] sm:$0xff] %v6212
  %6245 = vst [vmem:[%s6 + $0x48] sm:$0xff] %v6213
  %6246 = vst [vmem:[%s6 + $0x50] sm:$0xff] %v6214
  %6247 = vst [vmem:[%s6 + $0x58] sm:$0xff] %v6215
  %6248 = vst [vmem:[%s6 + $0x60] sm:$0xff] %v6216
  %6249 = vst [vmem:[%s6 + $0x68] sm:$0xff] %v6217
  %6250 = vst [vmem:[%s6 + $0x70] sm:$0xff] %v6218
  %6251 = vst [vmem:[%s6 + $0x78] sm:$0xff] %v6219
  %6252 = vst [vmem:[%s6 + $0x80] sm:$0xff] %v6220
  %6253 = vst [vmem:[%s6 + $0x88] sm:$0xff] %v6221
  %6254 = vst [vmem:[%s6 + $0x90] sm:$0xff] %v6222
  %6255 = vst [vmem:[%s6 + $0x98] sm:$0xff] %v6223
  %6256 = vst [vmem:[%s6 + $0xa0] sm:$0xff] %v6224
  %6257 = vst [vmem:[%s6 + $0xa8] sm:$0xff] %v6225
  %6258 = vst [vmem:[%s6 + $0xb0] sm:$0xff] %v6226
  %6259 = vst [vmem:[%s6 + $0xb8] sm:$0xff] %v6227
  %6260 = vst [vmem:[%s6 + $0xc0] sm:$0xff] %v6228
  %6261 = vst [vmem:[%s6 + $0xc8] sm:$0xff] %v6229
  %6262 = vst [vmem:[%s6 + $0xd0] sm:$0xff] %v6230
  %6263 = vst [vmem:[%s6 + $0xd8] sm:$0xff] %v6231
  %6264 = vst [vmem:[%s6 + $0xe0] sm:$0xff] %v6232
  %6265 = vst [vmem:[%s6 + $0xe8] sm:$0xff] %v6233
  %6266 = vst [vmem:[%s6 + $0xf0] sm:$0xff] %v6234
  %6267 = vst [vmem:[%s6 + $0xf8] sm:$0xff] %v6235
  // Predicated region
  $region30: #{interaction_block_forward.4} parent=0 // pred_check
    _
  $region31: #{interaction_block_forward.4} parent=0 // pred_check_branch
    %6269 = sbr.rel (0) target = $region33
  $region32: #{interaction_block_forward.4} parent=0 // pred_region
    _
  $region33: #{interaction_block_forward.4} parent=0 // pred_fallthru
    _
  // Predicated region
  $region34: #{interaction_block_forward.4} parent=0 // pred_check
    _
  $region35: #{interaction_block_forward.4} parent=0 // pred_check_branch
    %6271 = sbr.rel (0) target = $region37
  $region36: #{interaction_block_forward.4} parent=0 // pred_region
    _
  $region37: #{interaction_block_forward.4} parent=0 // pred_fallthru
    _

</llo_original>
